<compile_context>
chip_gen: v7x
topology: tpu7x:2x2x1
jax: 0.10.0
libtpu: 0.0.40
codegen_flags: <defaults>
</compile_context>

<pallas_src>
import math
from functools import partial

import jax
import jax.numpy as jnp
from jax.experimental import pallas as pl
from jax.experimental.pallas import tpu as pltpu

LN_EPS = 1e-12       # espnet LayerNorm eps
ROW_TILE = 256       # preferred rows of flattened tokens per grid step
SEQ_TILE = 256       # preferred query rows per attention grid step
VOCAB_TILE = 2048    # preferred vocab chunk in the fused loss kernel
NEG_INF = -1e30
PE_MAX_LEN = 512


def _divisor_tile(n, pref):
    """Largest power-of-two tile (>=8, <=pref) dividing n, else n itself."""
    t = pref
    while t >= 8:
        if n % t == 0:
            return t
        t //= 2
    return n


def _mosaic(dims):
    return pltpu.CompilerParams(
        dimension_semantics=dims,
        vmem_limit_bytes=32 * 1024 * 1024,
    )


# --------------------------------------------------------------------------
# In-kernel helpers
# --------------------------------------------------------------------------
def _ln_inline(x, g, b):
    mean = jnp.mean(x, axis=-1, keepdims=True)
    var = jnp.mean(jnp.square(x - mean), axis=-1, keepdims=True)
    return (x - mean) * jax.lax.rsqrt(var + LN_EPS) * g + b


def _attention_core(q, k, v, maskb, res, wo, bo, heads):
    # q,k,v: bf16 (Tq,D)/(Tk,D); maskb: bool (Tq,Tk); res: bf16 (Tq,D)
    # wo: bf16 (D,D); bo: f32 (1,D). Scale is already folded into q.
    Tq, D = q.shape
    dk = D // heads
    ctx = []
    for h in range(heads):
        lo = h * dk
        s = jax.lax.dot_general(q[:, lo:lo + dk], k[:, lo:lo + dk],
                                (((1,), (1,)), ((), ())),
                                preferred_element_type=jnp.float32)
        s = jnp.where(maskb, s, NEG_INF)
        s = s - jnp.max(s, axis=-1, keepdims=True)
        e = jnp.exp(s)                         # masked entries underflow to 0
        p = (e * pl.reciprocal(jnp.sum(e, axis=-1, keepdims=True), approx=True)
             ).astype(jnp.bfloat16)
        ctx.append(jnp.dot(p, v[:, lo:lo + dk],
                           preferred_element_type=jnp.float32))
    ctx = jnp.concatenate(ctx, axis=-1).astype(jnp.bfloat16)       # (Tq, D)
    out = (res.astype(jnp.float32)
           + jnp.dot(ctx, wo, preferred_element_type=jnp.float32) + bo)
    return out.astype(jnp.bfloat16)


# --------------------------------------------------------------------------
# Pallas kernels
# --------------------------------------------------------------------------
def _ln_kernel(x_ref, g_ref, b_ref, o_ref):
    o_ref[...] = _ln_inline(x_ref[...].astype(jnp.float32),
                            g_ref[...], b_ref[...]).astype(jnp.bfloat16)


def _ln_qkv_kernel(x_ref, g_ref, b_ref, wq_ref, bq_ref, wkv_ref, bkv_ref,
                   q_ref, kv_ref, *, scale):
    xn = _ln_inline(x_ref[...].astype(jnp.float32), g_ref[...], b_ref[...])
    xn = xn.astype(jnp.bfloat16)
    q = jnp.dot(xn, wq_ref[...], preferred_element_type=jnp.float32) + bq_ref[...]
    q_ref[...] = (q * scale).astype(jnp.bfloat16)
    kv = jnp.dot(xn, wkv_ref[...], preferred_element_type=jnp.float32) + bkv_ref[...]
    kv_ref[...] = kv.astype(jnp.bfloat16)


def _ln_linear_kernel(x_ref, g_ref, b_ref, w_ref, bias_ref, o_ref, *, scale):
    xn = _ln_inline(x_ref[...].astype(jnp.float32), g_ref[...], b_ref[...])
    xn = xn.astype(jnp.bfloat16)
    o = jnp.dot(xn, w_ref[...], preferred_element_type=jnp.float32) + bias_ref[...]
    o_ref[...] = (o * scale).astype(jnp.bfloat16)


def _linear_kernel(x_ref, w_ref, bias_ref, o_ref):
    o = jnp.dot(x_ref[...], w_ref[...],
                preferred_element_type=jnp.float32) + bias_ref[...]
    o_ref[...] = o.astype(jnp.bfloat16)


def _ln_ffn_residual_kernel(x_ref, g_ref, b_ref, w1_ref, b1_ref,
                            w2_ref, b2_ref, o_ref):
    x = x_ref[...].astype(jnp.float32)
    xn = _ln_inline(x, g_ref[...], b_ref[...]).astype(jnp.bfloat16)
    h = jnp.dot(xn, w1_ref[...], preferred_element_type=jnp.float32) + b1_ref[...]
    h = jnp.maximum(h, 0.0).astype(jnp.bfloat16)      # ReLU (espnet FFN)
    out = x + jnp.dot(h, w2_ref[...],
                      preferred_element_type=jnp.float32) + b2_ref[...]
    o_ref[...] = out.astype(jnp.bfloat16)


def _len_attn_kernel(lens_ref, q_ref, kv_ref, res_ref, wo_ref, bo_ref, o_ref,
                     *, heads):
    # Key-length-masked attention (encoder self-attn, decoder cross-attn).
    b = pl.program_id(0)
    D = res_ref.shape[-1]
    kv = kv_ref[0]
    tq = q_ref.shape[1]
    Tk = kv.shape[0]
    colk = jax.lax.broadcasted_iota(jnp.int32, (tq, Tk), 1)
    maskb = colk < lens_ref[b]
    o_ref[0] = _attention_core(q_ref[0], kv[:, :D], kv[:, D:], maskb,
                               res_ref[0], wo_ref[...], bo_ref[...], heads)


def _causal_attn_kernel(q_ref, kv_ref, res_ref, wo_ref, bo_ref, o_ref,
                        *, heads, tq):
    # Causal attention (decoder self-attn; ys_in is padded with eos so the
    # espnet target_mask degenerates to the subsequent mask only).
    qi = pl.program_id(1)
    D = res_ref.shape[-1]
    kv = kv_ref[0]
    Tk = kv.shape[0]
    row = qi * tq + jax.lax.broadcasted_iota(jnp.int32, (tq, Tk), 0)
    colk = jax.lax.broadcasted_iota(jnp.int32, (tq, Tk), 1)
    maskb = colk <= row
    o_ref[0] = _attention_core(q_ref[0], kv[:, :D], kv[:, D:], maskb,
                               res_ref[0], wo_ref[...], bo_ref[...], heads)


def _proj_loss_kernel(x_ref, w_ref, b_ref, tgt_ref, loss_ref, pred_ref,
                      m_sc, l_sc, slog_sc, zt_sc, bval_sc, bidx_sc,
                      *, vocab, vchunk, confidence, smooth_val, norm_const,
                      ignore_id):
    # Fused output projection + closed-form label-smoothing KL + argmax,
    # vocab-tiled with an online logsumexp (logits never leave VMEM).
    v = pl.program_id(1)
    nv = pl.num_programs(1)

    @pl.when(v == 0)
    def _():
        m_sc[...] = jnp.full_like(m_sc, -jnp.inf)
        l_sc[...] = jnp.zeros_like(l_sc)
        slog_sc[...] = jnp.zeros_like(slog_sc)
        zt_sc[...] = jnp.zeros_like(zt_sc)
        bval_sc[...] = jnp.full_like(bval_sc, -jnp.inf)
        bidx_sc[...] = jnp.zeros_like(bidx_sc)

    logits = (jnp.dot(x_ref[...], w_ref[...],
                      preferred_element_type=jnp.float32) + b_ref[...])
    col = v * vchunk + jax.lax.broadcasted_iota(jnp.int32, logits.shape, 1)
    valid = col < vocab
    logits = jnp.where(valid, logits, -jnp.inf)

    cmax = jnp.max(logits, axis=-1, keepdims=True)
    m_new = jnp.maximum(m_sc[...], cmax)
    alpha = jnp.exp(m_sc[...] - m_new)
    l_sc[...] = alpha * l_sc[...] + jnp.sum(jnp.exp(logits - m_new),
                                            axis=-1, keepdims=True)
    m_sc[...] = m_new
    slog_sc[...] += jnp.sum(jnp.where(valid, logits, 0.0),
                            axis=-1, keepdims=True)

    tgt = tgt_ref[...]                                      # (tm,1) int32
    zt_sc[...] += jnp.sum(jnp.where(col == tgt, logits, 0.0),
                          axis=-1, keepdims=True)

    cidx = jnp.min(jnp.where(logits == cmax, col, jnp.int32(vocab)),
                   axis=-1, keepdims=True)
    better = cmax > bval_sc[...]
    bidx_sc[...] = jnp.where(better, cidx, bidx_sc[...]).astype(jnp.int32)
    bval_sc[...] = jnp.where(better, cmax, bval_sc[...])

    @pl.when(v == nv - 1)
    def _():
        lse = m_sc[...] + jnp.log(l_sc[...])
        lp_t = zt_sc[...] - lse                              # log p(target)
        lp_sum = slog_sc[...] - vocab * lse                  # sum_j log p_j
        row_loss = norm_const - confidence * lp_t - smooth_val * (lp_sum - lp_t)
        loss_ref[...] = jnp.where(tgt == ignore_id, 0.0, row_loss)
        pred_ref[...] = bidx_sc[...]


# --------------------------------------------------------------------------
# Pallas wrappers (grids / BlockSpecs)
# --------------------------------------------------------------------------
def layer_norm(x, g, b):
    M, D = x.shape
    tm = _divisor_tile(M, ROW_TILE)
    return pl.pallas_call(
        _ln_kernel,
        out_shape=jax.ShapeDtypeStruct((M, D), jnp.bfloat16),
        grid=(M // tm,),
        in_specs=[pl.BlockSpec((tm, D), lambda i: (i, 0)),
                  pl.BlockSpec((1, D), lambda i: (0, 0)),
                  pl.BlockSpec((1, D), lambda i: (0, 0))],
        out_specs=pl.BlockSpec((tm, D), lambda i: (i, 0)),
        compiler_params=_mosaic(("parallel",)),
    )(x, g, b)


def ln_qkv(x, g, b, wq, bq, wkv, bkv, scale):
    M, D = x.shape
    tm = _divisor_tile(M, ROW_TILE)
    return pl.pallas_call(
        partial(_ln_qkv_kernel, scale=scale),
        out_shape=(jax.ShapeDtypeStruct((M, D), jnp.bfloat16),
                   jax.ShapeDtypeStruct((M, 2 * D), jnp.bfloat16)),
        grid=(M // tm,),
        in_specs=[pl.BlockSpec((tm, D), lambda i: (i, 0)),
                  pl.BlockSpec((1, D), lambda i: (0, 0)),
                  pl.BlockSpec((1, D), lambda i: (0, 0)),
                  pl.BlockSpec((D, D), lambda i: (0, 0)),
                  pl.BlockSpec((1, D), lambda i: (0, 0)),
                  pl.BlockSpec((D, 2 * D), lambda i: (0, 0)),
                  pl.BlockSpec((1, 2 * D), lambda i: (0, 0))],
        out_specs=(pl.BlockSpec((tm, D), lambda i: (i, 0)),
                   pl.BlockSpec((tm, 2 * D), lambda i: (i, 0))),
        compiler_params=_mosaic(("parallel",)),
        cost_estimate=pl.CostEstimate(
            flops=6 * M * D * D, transcendentals=0,
            bytes_accessed=2 * (4 * M * D + 3 * D * D)),
    )(x, g, b, wq, bq, wkv, bkv)


def ln_linear(x, g, b, w, bias, scale=1.0):
    M, D = x.shape
    N = w.shape[1]
    tm = _divisor_tile(M, ROW_TILE)
    return pl.pallas_call(
        partial(_ln_linear_kernel, scale=scale),
        out_shape=jax.ShapeDtypeStruct((M, N), jnp.bfloat16),
        grid=(M // tm,),
        in_specs=[pl.BlockSpec((tm, D), lambda i: (i, 0)),
                  pl.BlockSpec((1, D), lambda i: (0, 0)),
                  pl.BlockSpec((1, D), lambda i: (0, 0)),
                  pl.BlockSpec((D, N), lambda i: (0, 0)),
                  pl.BlockSpec((1, N), lambda i: (0, 0))],
        out_specs=pl.BlockSpec((tm, N), lambda i: (i, 0)),
        compiler_params=_mosaic(("parallel",)),
    )(x, g, b, w, bias)


def linear(x, w, bias):
    M, D = x.shape
    N = w.shape[1]
    tm = _divisor_tile(M, ROW_TILE)
    return pl.pallas_call(
        _linear_kernel,
        out_shape=jax.ShapeDtypeStruct((M, N), jnp.bfloat16),
        grid=(M // tm,),
        in_specs=[pl.BlockSpec((tm, D), lambda i: (i, 0)),
                  pl.BlockSpec((D, N), lambda i: (0, 0)),
                  pl.BlockSpec((1, N), lambda i: (0, 0))],
        out_specs=pl.BlockSpec((tm, N), lambda i: (i, 0)),
        compiler_params=_mosaic(("parallel",)),
    )(x, w, bias)


def ln_ffn_residual(x, g, b, w1, b1, w2, b2):
    M, D = x.shape
    F = w1.shape[1]
    tm = _divisor_tile(M, ROW_TILE)
    return pl.pallas_call(
        _ln_ffn_residual_kernel,
        out_shape=jax.ShapeDtypeStruct((M, D), jnp.bfloat16),
        grid=(M // tm,),
        in_specs=[pl.BlockSpec((tm, D), lambda i: (i, 0)),
                  pl.BlockSpec((1, D), lambda i: (0, 0)),
                  pl.BlockSpec((1, D), lambda i: (0, 0)),
                  pl.BlockSpec((D, F), lambda i: (0, 0)),
                  pl.BlockSpec((1, F), lambda i: (0, 0)),
                  pl.BlockSpec((F, D), lambda i: (0, 0)),
                  pl.BlockSpec((1, D), lambda i: (0, 0))],
        out_specs=pl.BlockSpec((tm, D), lambda i: (i, 0)),
        compiler_params=_mosaic(("parallel",)),
        cost_estimate=pl.CostEstimate(
            flops=4 * M * D * F, transcendentals=0,
            bytes_accessed=2 * (2 * M * D + 2 * D * F)),
    )(x, g, b, w1, b1, w2, b2)


def attention_len_masked(q, kv, lens, residual, out_w, out_b, heads):
    # q,residual: (B,Tq,D) bf16; kv: (B,Tk,2D) bf16; lens: (B,) int32 key lens
    B, Tq, D = q.shape
    Tk = kv.shape[1]
    tq = _divisor_tile(Tq, SEQ_TILE)
    kernel = partial(_len_attn_kernel, heads=heads)
    return pl.pallas_call(
        kernel,
        out_shape=jax.ShapeDtypeStruct((B, Tq, D), jnp.bfloat16),
        grid_spec=pltpu.PrefetchScalarGridSpec(
            num_scalar_prefetch=1,
            grid=(B, Tq // tq),
            in_specs=[pl.BlockSpec((1, tq, D), lambda b, qi, lens: (b, qi, 0)),
                      pl.BlockSpec((1, Tk, 2 * D), lambda b, qi, lens: (b, 0, 0)),
                      pl.BlockSpec((1, tq, D), lambda b, qi, lens: (b, qi, 0)),
                      pl.BlockSpec((D, D), lambda b, qi, lens: (0, 0)),
                      pl.BlockSpec((1, D), lambda b, qi, lens: (0, 0))],
            out_specs=pl.BlockSpec((1, tq, D), lambda b, qi, lens: (b, qi, 0)),
        ),
        compiler_params=_mosaic(("parallel", "parallel")),
    )(lens, q, kv, residual, out_w, out_b)


def attention_causal(q, kv, residual, out_w, out_b, heads):
    B, Tq, D = q.shape
    tq = _divisor_tile(Tq, SEQ_TILE)
    kernel = partial(_causal_attn_kernel, heads=heads, tq=tq)
    return pl.pallas_call(
        kernel,
        out_shape=jax.ShapeDtypeStruct((B, Tq, D), jnp.bfloat16),
        grid=(B, Tq // tq),
        in_specs=[pl.BlockSpec((1, tq, D), lambda b, qi: (b, qi, 0)),
                  pl.BlockSpec((1, Tq, 2 * D), lambda b, qi: (b, 0, 0)),
                  pl.BlockSpec((1, tq, D), lambda b, qi: (b, qi, 0)),
                  pl.BlockSpec((D, D), lambda b, qi: (0, 0)),
                  pl.BlockSpec((1, D), lambda b, qi: (0, 0))],
        out_specs=pl.BlockSpec((1, tq, D), lambda b, qi: (b, qi, 0)),
        compiler_params=_mosaic(("parallel", "parallel")),
    )(q, kv, residual, out_w, out_b)


def projected_lsm_loss(x, w, b, targets, *, vocab, smoothing, ignore_id,
                       normalize_length, batch_size):
    # x: (N, D) bf16 decoder hidden; w: (D, V) bf16; targets: (N,) int32
    M, D = x.shape
    tm = _divisor_tile(M, ROW_TILE)
    tv = vocab if vocab <= VOCAB_TILE else VOCAB_TILE
    nv = pl.cdiv(vocab, tv)
    confidence = 1.0 - smoothing
    smooth_val = smoothing / (vocab - 1) if vocab > 1 else 0.0
    norm_const = confidence * math.log(confidence) if confidence > 0 else 0.0
    if smooth_val > 0:
        norm_const += (vocab - 1) * smooth_val * math.log(smooth_val)
    kernel = partial(_proj_loss_kernel, vocab=vocab, vchunk=tv,
                     confidence=confidence, smooth_val=smooth_val,
                     norm_const=norm_const, ignore_id=ignore_id)
    tgt2 = targets.reshape(M, 1).astype(jnp.int32)
    row_loss, pred = pl.pallas_call(
        kernel,
        out_shape=(jax.ShapeDtypeStruct((M, 1), jnp.float32),
                   jax.ShapeDtypeStruct((M, 1), jnp.int32)),
        grid=(M // tm, nv),
        in_specs=[pl.BlockSpec((tm, D), lambda i, v: (i, 0)),
                  pl.BlockSpec((D, tv), lambda i, v: (0, v)),
                  pl.BlockSpec((1, tv), lambda i, v: (0, v)),
                  pl.BlockSpec((tm, 1), lambda i, v: (i, 0))],
        out_specs=(pl.BlockSpec((tm, 1), lambda i, v: (i, 0)),
                   pl.BlockSpec((tm, 1), lambda i, v: (i, 0))),
        scratch_shapes=[pltpu.VMEM((tm, 1), jnp.float32)] * 5
                      + [pltpu.VMEM((tm, 1), jnp.int32)],
        compiler_params=_mosaic(("parallel", "arbitrary")),
        cost_estimate=pl.CostEstimate(
            flops=2 * M * D * vocab, transcendentals=M * vocab,
            bytes_accessed=2 * (M * D + D * vocab) + 16 * M),
    )(x, w, b, tgt2)

    keep = targets != ignore_id
    total = jnp.sum(keep).astype(jnp.float32)
    denom = total if normalize_length else jnp.float32(batch_size)
    loss = jnp.sum(row_loss) / denom
    pred = pred.reshape(M)
    acc = (jnp.sum((pred == targets) & keep).astype(jnp.float32)
           / jnp.maximum(total, 1.0))
    return loss, acc


# --------------------------------------------------------------------------
# Model glue (pure JAX: embedding gather, sos/eos, reshapes)
# --------------------------------------------------------------------------
def positional_encoding(T, d):
    pos = jnp.arange(T, dtype=jnp.float32)[:, None]
    div = jnp.exp(jnp.arange(0, d, 2, dtype=jnp.float32)
                  * -(math.log(10000.0) / d))
    pe = jnp.zeros((T, d), dtype=jnp.float32)
    pe = pe.at[:, 0::2].set(jnp.sin(pos * div))
    pe = pe.at[:, 1::2].set(jnp.cos(pos * div))
    return pe


def encoder_forward(params, xs, ilens, D, heads):
    B, T = xs.shape
    # embed table is pre-scaled by sqrt(D); pe table precomputed in params
    x = (jnp.take(params['enc_embed'], xs, axis=0)
         + params['pe'][:T][None]).astype(jnp.bfloat16)
    scale = 1.0 / math.sqrt(D // heads)
    for layer in params['enc_layers']:
        xf = x.reshape(B * T, D)
        q, kv = ln_qkv(xf, layer['ln1_g'], layer['ln1_b'],
                       layer['q_w'], layer['q_b'],
                       layer['kv_w'], layer['kv_b'], scale)
        x = attention_len_masked(q.reshape(B, T, D), kv.reshape(B, T, 2 * D),
                                 ilens, x, layer['out_w'], layer['out_b'],
                                 heads)
        x = ln_ffn_residual(x.reshape(B * T, D), layer['ln2_g'], layer['ln2_b'],
                            layer['ff_w1'], layer['ff_b1'],
                            layer['ff_w2'], layer['ff_b2']).reshape(B, T, D)
    return layer_norm(x.reshape(B * T, D), params['enc_norm_g'],
                      params['enc_norm_b']).reshape(B, T, D)


def decoder_forward(params, ys_in, ilens, memory, D, heads):
    B, L = ys_in.shape
    Tk = memory.shape[1]
    x = (jnp.take(params['dec_embed'], ys_in, axis=0)
         + params['pe'][:L][None]).astype(jnp.bfloat16)
    scale = 1.0 / math.sqrt(D // heads)
    mem_flat = memory.reshape(B * Tk, D)
    for layer in params['dec_layers']:
        xf = x.reshape(B * L, D)
        q, kv = ln_qkv(xf, layer['ln1_g'], layer['ln1_b'],
                       layer['q_w'], layer['q_b'],
                       layer['kv_w'], layer['kv_b'], scale)
        x = attention_causal(q.reshape(B, L, D), kv.reshape(B, L, 2 * D), x,
                             layer['out_w'], layer['out_b'], heads)
        q2 = ln_linear(x.reshape(B * L, D), layer['ln2_g'], layer['ln2_b'],
                       layer['src_q_w'], layer['src_q_b'], scale)
        kv2 = linear(mem_flat, layer['src_kv_w'], layer['src_kv_b'])
        x = attention_len_masked(q2.reshape(B, L, D),
                                 kv2.reshape(B, Tk, 2 * D), ilens, x,
                                 layer['src_out_w'], layer['src_out_b'], heads)
        x = ln_ffn_residual(x.reshape(B * L, D), layer['ln3_g'], layer['ln3_b'],
                            layer['ff_w1'], layer['ff_b1'],
                            layer['ff_w2'], layer['ff_b2']).reshape(B, L, D)
    # final norm; output projection is fused into the loss kernel
    return layer_norm(x.reshape(B * L, D), params['dec_norm_g'],
                      params['dec_norm_b'])


def add_sos_eos(ys_pad, sos, eos, ignore_id):
    B, L = ys_pad.shape
    ylens = jnp.sum(ys_pad != ignore_id, axis=1)
    ys_in = jnp.concatenate(
        [jnp.full((B, 1), sos, dtype=ys_pad.dtype),
         jnp.where(ys_pad == ignore_id, eos, ys_pad)], axis=1)
    base = jnp.concatenate(
        [ys_pad, jnp.full((B, 1), ignore_id, dtype=ys_pad.dtype)], axis=1)
    idx = jnp.arange(L + 1)[None, :]
    ys_out = jnp.where(idx < ylens[:, None], base,
                       jnp.where(idx == ylens[:, None], eos, ignore_id))
    return ys_in, ys_out


def e2e_forward(params, xs_pad, ilens, ys_pad, cfg):
    B, _ = xs_pad.shape
    D, heads = cfg['adim'], cfg['aheads']
    ilens = ilens.astype(jnp.int32)
    # multilingual=False -> target_forcing is identity.  Padded Tmax is kept
    # (jittable); padded keys are masked in-kernel, loss-identical to the
    # torch-side xs_pad[:, :max(ilens)] slice.
    hs = encoder_forward(params, xs_pad, ilens, D, heads)
    ys_in, ys_out = add_sos_eos(ys_pad, cfg['sos'], cfg['eos'], cfg['ignore_id'])
    hidden = decoder_forward(params, ys_in, ilens, hs, D, heads)
    loss, acc = projected_lsm_loss(
        hidden, params['out_w'], params['out_b'], ys_out.reshape(-1),
        vocab=cfg['odim'], smoothing=cfg['lsm_weight'],
        ignore_id=cfg['ignore_id'], normalize_length=cfg['normalize_length'],
        batch_size=B)
    return loss, acc


# --------------------------------------------------------------------------
# Deterministic parameter initialization (shapes from E2E.__init__)
# --------------------------------------------------------------------------
class _KeyGen:
    def __init__(self, key):
        self.key = key

    def __call__(self):
        self.key, sub = jax.random.split(self.key)
        return sub


def _init_linear(kg, fan_in, fan_out):
    w = (jax.random.normal(kg(), (fan_in, fan_out), jnp.float32)
         / math.sqrt(fan_in)).astype(jnp.bfloat16)           # bf16 weights
    b = jnp.zeros((1, fan_out), jnp.float32)                  # f32 biases
    return w, b


def init_params(seed, idim, odim, adim, heads, eunits, dunits, elayers, dlayers):
    kg = _KeyGen(jax.random.PRNGKey(seed))
    enc_embed = jax.random.normal(kg(), (idim, adim), jnp.float32) * (adim ** -0.5)
    enc_embed = enc_embed.at[0].set(0.0) * math.sqrt(adim)    # fold xscale
    dec_embed = jax.random.normal(kg(), (odim, adim), jnp.float32) * (adim ** -0.5)
    dec_embed = dec_embed.at[0].set(0.0) * math.sqrt(adim)

    ones = lambda n: jnp.ones((1, n), jnp.float32)
    zeros = lambda n: jnp.zeros((1, n), jnp.float32)

    def enc_layer():
        q_w, q_b = _init_linear(kg, adim, adim)
        kv_w, kv_b = _init_linear(kg, adim, 2 * adim)
        out_w, out_b = _init_linear(kg, adim, adim)
        ff_w1, ff_b1 = _init_linear(kg, adim, eunits)
        ff_w2, ff_b2 = _init_linear(kg, eunits, adim)
        return dict(ln1_g=ones(adim), ln1_b=zeros(adim),
                    q_w=q_w, q_b=q_b, kv_w=kv_w, kv_b=kv_b,
                    out_w=out_w, out_b=out_b,
                    ln2_g=ones(adim), ln2_b=zeros(adim),
                    ff_w1=ff_w1, ff_b1=ff_b1, ff_w2=ff_w2, ff_b2=ff_b2)

    def dec_layer():
        q_w, q_b = _init_linear(kg, adim, adim)
        kv_w, kv_b = _init_linear(kg, adim, 2 * adim)
        out_w, out_b = _init_linear(kg, adim, adim)
        sq_w, sq_b = _init_linear(kg, adim, adim)
        skv_w, skv_b = _init_linear(kg, adim, 2 * adim)
        sout_w, sout_b = _init_linear(kg, adim, adim)
        ff_w1, ff_b1 = _init_linear(kg, adim, dunits)
        ff_w2, ff_b2 = _init_linear(kg, dunits, adim)
        return dict(ln1_g=ones(adim), ln1_b=zeros(adim),
                    q_w=q_w, q_b=q_b, kv_w=kv_w, kv_b=kv_b,
                    out_w=out_w, out_b=out_b,
                    ln2_g=ones(adim), ln2_b=zeros(adim),
                    src_q_w=sq_w, src_q_b=sq_b,
                    src_kv_w=skv_w, src_kv_b=skv_b,
                    src_out_w=sout_w, src_out_b=sout_b,
                    ln3_g=ones(adim), ln3_b=zeros(adim),
                    ff_w1=ff_w1, ff_b1=ff_b1, ff_w2=ff_w2, ff_b2=ff_b2)

    out_w, out_b = _init_linear(kg, adim, odim)
    return dict(
        enc_embed=enc_embed, dec_embed=dec_embed,
        pe=positional_encoding(PE_MAX_LEN, adim),
        enc_layers=[enc_layer() for _ in range(elayers)],
        dec_layers=[dec_layer() for _ in range(dlayers)],
        enc_norm_g=ones(adim), enc_norm_b=zeros(adim),
        dec_norm_g=ones(adim), dec_norm_b=zeros(adim),
        out_w=out_w, out_b=out_b,
    )


# TODO(synk): dropout, Reporter/BLEU/ppl reporting, and beam-search
# translate() are host-side / stochastic and are intentionally omitted
# (eval-mode, deterministic semantics).

if __name__ == "__main__":
    idim, odim = 19, 17
    adim, heads = 32, 4
    eunits = dunits = 64
    elayers = dlayers = 2
    cfg = dict(sos=odim - 1, eos=odim - 1, odim=odim, ignore_id=-1,
               lsm_weight=0.1, normalize_length=False,
               adim=adim, aheads=heads)

    params = init_params(0, idim, odim, adim, heads, eunits, dunits,
                         elayers, dlayers)

    key = jax.random.PRNGKey(0)
    k1, k2 = jax.random.split(key)
    B, Tmax, Lmax = 2, 8, 5
    xs_pad = jax.random.randint(k1, (B, Tmax), 1, idim, dtype=jnp.int32)
    ilens = jnp.array([8, 6], dtype=jnp.int32)
    xs_pad = jnp.where(jnp.arange(Tmax)[None, :] < ilens[:, None], xs_pad, 0)
    ys_raw = jax.random.randint(k2, (B, Lmax), 1, odim - 1, dtype=jnp.int32)
    ylens = jnp.array([5, 3], dtype=jnp.int32)
    ys_pad = jnp.where(jnp.arange(Lmax)[None, :] < ylens[:, None], ys_raw, -1)

    fwd = jax.jit(lambda p, x, i, y: e2e_forward(p, x, i, y, cfg))
    loss, acc = fwd(params, xs_pad, ilens, ys_pad)
    loss = jax.block_until_ready(loss)
    acc = jax.block_until_ready(acc)
    assert jnp.isfinite(loss), "loss is not finite"
    assert jnp.isfinite(acc), "accuracy is not finite"
    print("KERNEL_OK")
</pallas_src>

<mosaic_0001>
module attributes {stable_mosaic.version = 11 : i64} {
  func.func @_ln_qkv_kernel(%arg0: i32, %arg1: memref<12x32xbf16, #tpu.memory_space<vmem>>, %arg2: memref<1x32xf32, #tpu.memory_space<vmem>>, %arg3: memref<1x32xf32, #tpu.memory_space<vmem>>, %arg4: memref<32x32xbf16, #tpu.memory_space<vmem>>, %arg5: memref<1x32xf32, #tpu.memory_space<vmem>>, %arg6: memref<32x64xbf16, #tpu.memory_space<vmem>>, %arg7: memref<1x64xf32, #tpu.memory_space<vmem>>, %arg8: memref<12x32xbf16, #tpu.memory_space<vmem>>, %arg9: memref<12x64xbf16, #tpu.memory_space<vmem>>) attributes {dimension_semantics = [#tpu.dimension_semantics<parallel>], iteration_bounds = array<i64: 1>, scalar_prefetch = 0 : i64, scratch_operands = 0 : i64, tpu.core_type = #tpu.core_type<tc>, window_params = [{transform_indices = @transform_0, window_bounds = array<i64: 12, 32>}, {pipeline_mode = #tpu.pipeline_mode<synchronous>, transform_indices = @transform_1, window_bounds = array<i64: 1, 32>}, {pipeline_mode = #tpu.pipeline_mode<synchronous>, transform_indices = @transform_2, window_bounds = array<i64: 1, 32>}, {pipeline_mode = #tpu.pipeline_mode<synchronous>, transform_indices = @transform_3, window_bounds = array<i64: 32, 32>}, {pipeline_mode = #tpu.pipeline_mode<synchronous>, transform_indices = @transform_4, window_bounds = array<i64: 1, 32>}, {pipeline_mode = #tpu.pipeline_mode<synchronous>, transform_indices = @transform_5, window_bounds = array<i64: 32, 64>}, {pipeline_mode = #tpu.pipeline_mode<synchronous>, transform_indices = @transform_6, window_bounds = array<i64: 1, 64>}, {transform_indices = @transform_7, window_bounds = array<i64: 12, 32>}, {transform_indices = @transform_8, window_bounds = array<i64: 12, 64>}]} {
    %c0 = arith.constant 0 : index
    %c0_0 = arith.constant 0 : index
    %0 = vector.load %arg1[%c0, %c0_0] : memref<12x32xbf16, #tpu.memory_space<vmem>>, vector<12x32xbf16>
    %1 = arith.extf %0 : vector<12x32xbf16> to vector<12x32xf32>
    %c0_1 = arith.constant 0 : index
    %c0_2 = arith.constant 0 : index
    %2 = vector.load %arg2[%c0_1, %c0_2] : memref<1x32xf32, #tpu.memory_space<vmem>>, vector<1x32xf32>
    %c0_3 = arith.constant 0 : index
    %c0_4 = arith.constant 0 : index
    %3 = vector.load %arg3[%c0_3, %c0_4] : memref<1x32xf32, #tpu.memory_space<vmem>>, vector<1x32xf32>
    %cst = arith.constant dense<0.000000e+00> : vector<12xf32>
    %4 = vector.multi_reduction <add>, %1, %cst [1] : vector<12x32xf32> to vector<12xf32>
    %5 = vector.shape_cast %4 : vector<12xf32> to vector<12x1xf32>
    %cst_5 = arith.constant 3.200000e+01 : f32
    %6 = vector.broadcast %cst_5 : f32 to vector<12x1xf32>
    %7 = arith.divf %5, %6 : vector<12x1xf32>
    %8 = vector.broadcast %7 : vector<12x1xf32> to vector<12x32xf32>
    %9 = arith.subf %1, %8 : vector<12x32xf32>
    %10 = arith.mulf %9, %9 : vector<12x32xf32>
    %cst_6 = arith.constant dense<0.000000e+00> : vector<12xf32>
    %11 = vector.multi_reduction <add>, %10, %cst_6 [1] : vector<12x32xf32> to vector<12xf32>
    %12 = vector.shape_cast %11 : vector<12xf32> to vector<12x1xf32>
    %cst_7 = arith.constant 3.200000e+01 : f32
    %13 = vector.broadcast %cst_7 : f32 to vector<12x1xf32>
    %14 = arith.divf %12, %13 : vector<12x1xf32>
    %15 = vector.broadcast %7 : vector<12x1xf32> to vector<12x32xf32>
    %16 = arith.subf %1, %15 : vector<12x32xf32>
    %cst_8 = arith.constant 9.99999996E-13 : f32
    %17 = vector.broadcast %cst_8 : f32 to vector<12x1xf32>
    %18 = arith.addf %14, %17 : vector<12x1xf32>
    %19 = math.rsqrt %18 : vector<12x1xf32>
    %20 = vector.broadcast %19 : vector<12x1xf32> to vector<12x32xf32>
    %21 = arith.mulf %16, %20 : vector<12x32xf32>
    %22 = vector.broadcast %2 : vector<1x32xf32> to vector<12x32xf32>
    %23 = arith.mulf %21, %22 : vector<12x32xf32>
    %24 = vector.broadcast %3 : vector<1x32xf32> to vector<12x32xf32>
    %25 = arith.addf %23, %24 : vector<12x32xf32>
    %26 = arith.truncf %25 : vector<12x32xf32> to vector<12x32xbf16>
    %c0_9 = arith.constant 0 : index
    %c0_10 = arith.constant 0 : index
    %27 = vector.load %arg4[%c0_9, %c0_10] : memref<32x32xbf16, #tpu.memory_space<vmem>>, vector<32x32xbf16>
    %cst_11 = arith.constant dense<0.000000e+00> : vector<12x32xf32>
    %28 = tpu.matmul %26, %27, %cst_11 {dimension_numbers = #tpu.dot_dimension_numbers<[1], [0], [0], [1], [0, 0, 1, 1], [], []>} : vector<12x32xbf16>, vector<32x32xbf16>, vector<12x32xf32> -> vector<12x32xf32>
    %c0_12 = arith.constant 0 : index
    %c0_13 = arith.constant 0 : index
    %29 = vector.load %arg5[%c0_12, %c0_13] : memref<1x32xf32, #tpu.memory_space<vmem>>, vector<1x32xf32>
    %30 = vector.broadcast %29 : vector<1x32xf32> to vector<12x32xf32>
    %31 = arith.addf %28, %30 : vector<12x32xf32>
    %cst_14 = arith.constant 0.353553385 : f32
    %32 = vector.broadcast %cst_14 : f32 to vector<12x32xf32>
    %33 = arith.mulf %31, %32 : vector<12x32xf32>
    %34 = arith.truncf %33 : vector<12x32xf32> to vector<12x32xbf16>
    %c0_15 = arith.constant 0 : index
    %c0_16 = arith.constant 0 : index
    %35 = vector.load %arg8[%c0_15, %c0_16] : memref<12x32xbf16, #tpu.memory_space<vmem>>, vector<12x32xbf16>
    tpu.vector_store %arg8[%c0_15, %c0_16], %34 {strides = array<i32>} : memref<12x32xbf16, #tpu.memory_space<vmem>>, vector<12x32xbf16>,
    %c0_17 = arith.constant 0 : index
    %c0_18 = arith.constant 0 : index
    %36 = vector.load %arg6[%c0_17, %c0_18] : memref<32x64xbf16, #tpu.memory_space<vmem>>, vector<32x64xbf16>
    %cst_19 = arith.constant dense<0.000000e+00> : vector<12x64xf32>
    %37 = tpu.matmul %26, %36, %cst_19 {dimension_numbers = #tpu.dot_dimension_numbers<[1], [0], [0], [1], [0, 0, 1, 1], [], []>} : vector<12x32xbf16>, vector<32x64xbf16>, vector<12x64xf32> -> vector<12x64xf32>
    %c0_20 = arith.constant 0 : index
    %c0_21 = arith.constant 0 : index
    %38 = vector.load %arg7[%c0_20, %c0_21] : memref<1x64xf32, #tpu.memory_space<vmem>>, vector<1x64xf32>
    %39 = vector.broadcast %38 : vector<1x64xf32> to vector<12x64xf32>
    %40 = arith.addf %37, %39 : vector<12x64xf32>
    %41 = arith.truncf %40 : vector<12x64xf32> to vector<12x64xbf16>
    %c0_22 = arith.constant 0 : index
    %c0_23 = arith.constant 0 : index
    %42 = vector.load %arg9[%c0_22, %c0_23] : memref<12x64xbf16, #tpu.memory_space<vmem>>, vector<12x64xbf16>
    tpu.vector_store %arg9[%c0_22, %c0_23], %41 {strides = array<i32>} : memref<12x64xbf16, #tpu.memory_space<vmem>>, vector<12x64xbf16>,
    return
  }
  func.func @transform_0(%arg0: i32) -> (i32, i32) {
    %c0_i32 = arith.constant 0 : i32
    %c0_i32_0 = arith.constant 0 : i32
    return %arg0, %c0_i32 : i32, i32
  }
  func.func @transform_1(%arg0: i32) -> (i32, i32) {
    %c0_i32 = arith.constant 0 : i32
    %c0_i32_0 = arith.constant 0 : i32
    %c0_i32_1 = arith.constant 0 : i32
    return %c0_i32, %c0_i32_0 : i32, i32
  }
  func.func @transform_2(%arg0: i32) -> (i32, i32) {
    %c0_i32 = arith.constant 0 : i32
    %c0_i32_0 = arith.constant 0 : i32
    %c0_i32_1 = arith.constant 0 : i32
    return %c0_i32, %c0_i32_0 : i32, i32
  }
  func.func @transform_3(%arg0: i32) -> (i32, i32) {
    %c0_i32 = arith.constant 0 : i32
    %c0_i32_0 = arith.constant 0 : i32
    %c0_i32_1 = arith.constant 0 : i32
    return %c0_i32, %c0_i32_0 : i32, i32
  }
  func.func @transform_4(%arg0: i32) -> (i32, i32) {
    %c0_i32 = arith.constant 0 : i32
    %c0_i32_0 = arith.constant 0 : i32
    %c0_i32_1 = arith.constant 0 : i32
    return %c0_i32, %c0_i32_0 : i32, i32
  }
  func.func @transform_5(%arg0: i32) -> (i32, i32) {
    %c0_i32 = arith.constant 0 : i32
    %c0_i32_0 = arith.constant 0 : i32
    %c0_i32_1 = arith.constant 0 : i32
    return %c0_i32, %c0_i32_0 : i32, i32
  }
  func.func @transform_6(%arg0: i32) -> (i32, i32) {
    %c0_i32 = arith.constant 0 : i32
    %c0_i32_0 = arith.constant 0 : i32
    %c0_i32_1 = arith.constant 0 : i32
    return %c0_i32, %c0_i32_0 : i32, i32
  }
  func.func @transform_7(%arg0: i32) -> (i32, i32) {
    %c0_i32 = arith.constant 0 : i32
    %c0_i32_0 = arith.constant 0 : i32
    return %arg0, %c0_i32 : i32, i32
  }
  func.func @transform_8(%arg0: i32) -> (i32, i32) {
    %c0_i32 = arith.constant 0 : i32
    %c0_i32_0 = arith.constant 0 : i32
    return %arg0, %c0_i32 : i32, i32
  }
}

module attributes {stable_mosaic.version = 11 : i64} {
  func.func @_ln_linear_kernel(%arg0: i32, %arg1: memref<12x32xbf16, #tpu.memory_space<vmem>>, %arg2: memref<1x32xf32, #tpu.memory_space<vmem>>, %arg3: memref<1x32xf32, #tpu.memory_space<vmem>>, %arg4: memref<32x32xbf16, #tpu.memory_space<vmem>>, %arg5: memref<1x32xf32, #tpu.memory_space<vmem>>, %arg6: memref<12x32xbf16, #tpu.memory_space<vmem>>) attributes {dimension_semantics = [#tpu.dimension_semantics<parallel>], iteration_bounds = array<i64: 1>, scalar_prefetch = 0 : i64, scratch_operands = 0 : i64, tpu.core_type = #tpu.core_type<tc>, window_params = [{transform_indices = @transform_0, window_bounds = array<i64: 12, 32>}, {pipeline_mode = #tpu.pipeline_mode<synchronous>, transform_indices = @transform_1, window_bounds = array<i64: 1, 32>}, {pipeline_mode = #tpu.pipeline_mode<synchronous>, transform_indices = @transform_2, window_bounds = array<i64: 1, 32>}, {pipeline_mode = #tpu.pipeline_mode<synchronous>, transform_indices = @transform_3, window_bounds = array<i64: 32, 32>}, {pipeline_mode = #tpu.pipeline_mode<synchronous>, transform_indices = @transform_4, window_bounds = array<i64: 1, 32>}, {transform_indices = @transform_5, window_bounds = array<i64: 12, 32>}]} {
    %c0 = arith.constant 0 : index
    %c0_0 = arith.constant 0 : index
    %0 = vector.load %arg1[%c0, %c0_0] : memref<12x32xbf16, #tpu.memory_space<vmem>>, vector<12x32xbf16>
    %1 = arith.extf %0 : vector<12x32xbf16> to vector<12x32xf32>
    %c0_1 = arith.constant 0 : index
    %c0_2 = arith.constant 0 : index
    %2 = vector.load %arg2[%c0_1, %c0_2] : memref<1x32xf32, #tpu.memory_space<vmem>>, vector<1x32xf32>
    %c0_3 = arith.constant 0 : index
    %c0_4 = arith.constant 0 : index
    %3 = vector.load %arg3[%c0_3, %c0_4] : memref<1x32xf32, #tpu.memory_space<vmem>>, vector<1x32xf32>
    %cst = arith.constant dense<0.000000e+00> : vector<12xf32>
    %4 = vector.multi_reduction <add>, %1, %cst [1] : vector<12x32xf32> to vector<12xf32>
    %5 = vector.shape_cast %4 : vector<12xf32> to vector<12x1xf32>
    %cst_5 = arith.constant 3.200000e+01 : f32
    %6 = vector.broadcast %cst_5 : f32 to vector<12x1xf32>
    %7 = arith.divf %5, %6 : vector<12x1xf32>
    %8 = vector.broadcast %7 : vector<12x1xf32> to vector<12x32xf32>
    %9 = arith.subf %1, %8 : vector<12x32xf32>
    %10 = arith.mulf %9, %9 : vector<12x32xf32>
    %cst_6 = arith.constant dense<0.000000e+00> : vector<12xf32>
    %11 = vector.multi_reduction <add>, %10, %cst_6 [1] : vector<12x32xf32> to vector<12xf32>
    %12 = vector.shape_cast %11 : vector<12xf32> to vector<12x1xf32>
    %cst_7 = arith.constant 3.200000e+01 : f32
    %13 = vector.broadcast %cst_7 : f32 to vector<12x1xf32>
    %14 = arith.divf %12, %13 : vector<12x1xf32>
    %15 = vector.broadcast %7 : vector<12x1xf32> to vector<12x32xf32>
    %16 = arith.subf %1, %15 : vector<12x32xf32>
    %cst_8 = arith.constant 9.99999996E-13 : f32
    %17 = vector.broadcast %cst_8 : f32 to vector<12x1xf32>
    %18 = arith.addf %14, %17 : vector<12x1xf32>
    %19 = math.rsqrt %18 : vector<12x1xf32>
    %20 = vector.broadcast %19 : vector<12x1xf32> to vector<12x32xf32>
    %21 = arith.mulf %16, %20 : vector<12x32xf32>
    %22 = vector.broadcast %2 : vector<1x32xf32> to vector<12x32xf32>
    %23 = arith.mulf %21, %22 : vector<12x32xf32>
    %24 = vector.broadcast %3 : vector<1x32xf32> to vector<12x32xf32>
    %25 = arith.addf %23, %24 : vector<12x32xf32>
    %26 = arith.truncf %25 : vector<12x32xf32> to vector<12x32xbf16>
    %c0_9 = arith.constant 0 : index
    %c0_10 = arith.constant 0 : index
    %27 = vector.load %arg4[%c0_9, %c0_10] : memref<32x32xbf16, #tpu.memory_space<vmem>>, vector<32x32xbf16>
    %cst_11 = arith.constant dense<0.000000e+00> : vector<12x32xf32>
    %28 = tpu.matmul %26, %27, %cst_11 {dimension_numbers = #tpu.dot_dimension_numbers<[1], [0], [0], [1], [0, 0, 1, 1], [], []>} : vector<12x32xbf16>, vector<32x32xbf16>, vector<12x32xf32> -> vector<12x32xf32>
    %c0_12 = arith.constant 0 : index
    %c0_13 = arith.constant 0 : index
    %29 = vector.load %arg5[%c0_12, %c0_13] : memref<1x32xf32, #tpu.memory_space<vmem>>, vector<1x32xf32>
    %30 = vector.broadcast %29 : vector<1x32xf32> to vector<12x32xf32>
    %31 = arith.addf %28, %30 : vector<12x32xf32>
    %cst_14 = arith.constant 0.353553385 : f32
    %32 = vector.broadcast %cst_14 : f32 to vector<12x32xf32>
    %33 = arith.mulf %31, %32 : vector<12x32xf32>
    %34 = arith.truncf %33 : vector<12x32xf32> to vector<12x32xbf16>
    %c0_15 = arith.constant 0 : index
    %c0_16 = arith.constant 0 : index
    %35 = vector.load %arg6[%c0_15, %c0_16] : memref<12x32xbf16, #tpu.memory_space<vmem>>, vector<12x32xbf16>
    tpu.vector_store %arg6[%c0_15, %c0_16], %34 {strides = array<i32>} : memref<12x32xbf16, #tpu.memory_space<vmem>>, vector<12x32xbf16>,
    return
  }
  func.func @transform_0(%arg0: i32) -> (i32, i32) {
    %c0_i32 = arith.constant 0 : i32
    %c0_i32_0 = arith.constant 0 : i32
    return %arg0, %c0_i32 : i32, i32
  }
  func.func @transform_1(%arg0: i32) -> (i32, i32) {
    %c0_i32 = arith.constant 0 : i32
    %c0_i32_0 = arith.constant 0 : i32
    %c0_i32_1 = arith.constant 0 : i32
    return %c0_i32, %c0_i32_0 : i32, i32
  }
  func.func @transform_2(%arg0: i32) -> (i32, i32) {
    %c0_i32 = arith.constant 0 : i32
    %c0_i32_0 = arith.constant 0 : i32
    %c0_i32_1 = arith.constant 0 : i32
    return %c0_i32, %c0_i32_0 : i32, i32
  }
  func.func @transform_3(%arg0: i32) -> (i32, i32) {
    %c0_i32 = arith.constant 0 : i32
    %c0_i32_0 = arith.constant 0 : i32
    %c0_i32_1 = arith.constant 0 : i32
    return %c0_i32, %c0_i32_0 : i32, i32
  }
  func.func @transform_4(%arg0: i32) -> (i32, i32) {
    %c0_i32 = arith.constant 0 : i32
    %c0_i32_0 = arith.constant 0 : i32
    %c0_i32_1 = arith.constant 0 : i32
    return %c0_i32, %c0_i32_0 : i32, i32
  }
  func.func @transform_5(%arg0: i32) -> (i32, i32) {
    %c0_i32 = arith.constant 0 : i32
    %c0_i32_0 = arith.constant 0 : i32
    return %arg0, %c0_i32 : i32, i32
  }
}

module attributes {stable_mosaic.version = 11 : i64} {
  func.func @_causal_attn_kernel(%arg0: i32, %arg1: i32, %arg2: memref<1x6x32xbf16, #tpu.memory_space<vmem>>, %arg3: memref<1x6x64xbf16, #tpu.memory_space<vmem>>, %arg4: memref<1x6x32xbf16, #tpu.memory_space<vmem>>, %arg5: memref<32x32xbf16, #tpu.memory_space<vmem>>, %arg6: memref<1x32xf32, #tpu.memory_space<vmem>>, %arg7: memref<1x6x32xbf16, #tpu.memory_space<vmem>>) attributes {dimension_semantics = [#tpu.dimension_semantics<parallel>, #tpu.dimension_semantics<parallel>], iteration_bounds = array<i64: 2, 1>, scalar_prefetch = 0 : i64, scratch_operands = 0 : i64, tpu.core_type = #tpu.core_type<tc>, window_params = [{transform_indices = @transform_0, window_bounds = array<i64: 1, 6, 32>}, {transform_indices = @transform_1, window_bounds = array<i64: 1, 6, 64>}, {transform_indices = @transform_2, window_bounds = array<i64: 1, 6, 32>}, {pipeline_mode = #tpu.pipeline_mode<synchronous>, transform_indices = @transform_3, window_bounds = array<i64: 32, 32>}, {pipeline_mode = #tpu.pipeline_mode<synchronous>, transform_indices = @transform_4, window_bounds = array<i64: 1, 32>}, {transform_indices = @transform_5, window_bounds = array<i64: 1, 6, 32>}]} {
    %c0 = arith.constant 0 : index
    %c0_0 = arith.constant 0 : index
    %c0_1 = arith.constant 0 : index
    %0 = vector.load %arg3[%c0, %c0_0, %c0_1] : memref<1x6x64xbf16, #tpu.memory_space<vmem>>, vector<1x6x64xbf16>
    %1 = vector.shape_cast %0 : vector<1x6x64xbf16> to vector<6x64xbf16>
    %c6_i32 = arith.constant 6 : i32
    %2 = arith.muli %arg1, %c6_i32 : i32
    %3 = tpu.iota {dimensions = array<i32: 0>} : vector<6x6xi32>
    %4 = vector.broadcast %2 : i32 to vector<6x6xi32>
    %5 = arith.addi %4, %3 : vector<6x6xi32>
    %6 = tpu.iota {dimensions = array<i32: 1>} : vector<6x6xi32>
    %7 = arith.cmpi sle, %6, %5 : vector<6x6xi32>
    %c0_2 = arith.constant 0 : index
    %c0_3 = arith.constant 0 : index
    %c0_4 = arith.constant 0 : index
    %8 = vector.load %arg2[%c0_2, %c0_3, %c0_4] : memref<1x6x32xbf16, #tpu.memory_space<vmem>>, vector<1x6x32xbf16>
    %9 = vector.shape_cast %8 : vector<1x6x32xbf16> to vector<6x32xbf16>
    %10 = vector.extract_strided_slice %1 {offsets = [0, 0], sizes = [6, 32], strides = [1, 1]} : vector<6x64xbf16> to vector<6x32xbf16>
    %11 = vector.extract_strided_slice %1 {offsets = [0, 32], sizes = [6, 32], strides = [1, 1]} : vector<6x64xbf16> to vector<6x32xbf16>
    %c0_5 = arith.constant 0 : index
    %c0_6 = arith.constant 0 : index
    %c0_7 = arith.constant 0 : index
    %12 = vector.load %arg4[%c0_5, %c0_6, %c0_7] : memref<1x6x32xbf16, #tpu.memory_space<vmem>>, vector<1x6x32xbf16>
    %13 = vector.shape_cast %12 : vector<1x6x32xbf16> to vector<6x32xbf16>
    %c0_8 = arith.constant 0 : index
    %c0_9 = arith.constant 0 : index
    %14 = vector.load %arg5[%c0_8, %c0_9] : memref<32x32xbf16, #tpu.memory_space<vmem>>, vector<32x32xbf16>
    %c0_10 = arith.constant 0 : index
    %c0_11 = arith.constant 0 : index
    %15 = vector.load %arg6[%c0_10, %c0_11] : memref<1x32xf32, #tpu.memory_space<vmem>>, vector<1x32xf32>
    %16 = vector.extract_strided_slice %9 {offsets = [0, 0], sizes = [6, 8], strides = [1, 1]} : vector<6x32xbf16> to vector<6x8xbf16>
    %17 = vector.extract_strided_slice %10 {offsets = [0, 0], sizes = [6, 8], strides = [1, 1]} : vector<6x32xbf16> to vector<6x8xbf16>
    %cst = arith.constant dense<0.000000e+00> : vector<6x6xf32>
    %18 = tpu.matmul %16, %17, %cst {dimension_numbers = #tpu.dot_dimension_numbers<[1], [1], [0], [0], [0, 0, 1, 0], [], []>} : vector<6x8xbf16>, vector<6x8xbf16>, vector<6x6xf32> -> vector<6x6xf32>
    %cst_12 = arith.constant -1.000000e+30 : f32
    %19 = vector.broadcast %cst_12 : f32 to vector<6x6xf32>
    %20 = arith.select %7, %18, %19 : vector<6x6xi1>, vector<6x6xf32>
    %cst_13 = arith.constant dense<0xFF800000> : vector<6xf32>
    %21 = vector.multi_reduction <maximumf>, %20, %cst_13 [1] : vector<6x6xf32> to vector<6xf32>
    %22 = vector.shape_cast %21 : vector<6xf32> to vector<6x1xf32>
    %23 = vector.broadcast %22 : vector<6x1xf32> to vector<6x6xf32>
    %24 = arith.subf %20, %23 : vector<6x6xf32>
    %25 = math.exp %24 : vector<6x6xf32>
    %cst_14 = arith.constant dense<0.000000e+00> : vector<6xf32>
    %26 = vector.multi_reduction <add>, %25, %cst_14 [1] : vector<6x6xf32> to vector<6xf32>
    %27 = vector.shape_cast %26 : vector<6xf32> to vector<6x1xf32>
    %28 = tpu.reciprocal %27 {approx = true} : vector<6x1xf32> -> vector<6x1xf32>
    %29 = vector.broadcast %28 : vector<6x1xf32> to vector<6x6xf32>
    %30 = arith.mulf %25, %29 : vector<6x6xf32>
    %31 = arith.truncf %30 : vector<6x6xf32> to vector<6x6xbf16>
    %32 = vector.extract_strided_slice %11 {offsets = [0, 0], sizes = [6, 8], strides = [1, 1]} : vector<6x32xbf16> to vector<6x8xbf16>
    %cst_15 = arith.constant dense<0.000000e+00> : vector<6x8xf32>
    %33 = tpu.matmul %31, %32, %cst_15 {dimension_numbers = #tpu.dot_dimension_numbers<[1], [0], [0], [1], [0, 0, 1, 1], [], []>} : vector<6x6xbf16>, vector<6x8xbf16>, vector<6x8xf32> -> vector<6x8xf32>
    %34 = vector.extract_strided_slice %9 {offsets = [0, 8], sizes = [6, 8], strides = [1, 1]} : vector<6x32xbf16> to vector<6x8xbf16>
    %35 = vector.extract_strided_slice %10 {offsets = [0, 8], sizes = [6, 8], strides = [1, 1]} : vector<6x32xbf16> to vector<6x8xbf16>
    %cst_16 = arith.constant dense<0.000000e+00> : vector<6x6xf32>
    %36 = tpu.matmul %34, %35, %cst_16 {dimension_numbers = #tpu.dot_dimension_numbers<[1], [1], [0], [0], [0, 0, 1, 0], [], []>} : vector<6x8xbf16>, vector<6x8xbf16>, vector<6x6xf32> -> vector<6x6xf32>
    %cst_17 = arith.constant -1.000000e+30 : f32
    %37 = vector.broadcast %cst_17 : f32 to vector<6x6xf32>
    %38 = arith.select %7, %36, %37 : vector<6x6xi1>, vector<6x6xf32>
    %cst_18 = arith.constant dense<0xFF800000> : vector<6xf32>
    %39 = vector.multi_reduction <maximumf>, %38, %cst_18 [1] : vector<6x6xf32> to vector<6xf32>
    %40 = vector.shape_cast %39 : vector<6xf32> to vector<6x1xf32>
    %41 = vector.broadcast %40 : vector<6x1xf32> to vector<6x6xf32>
    %42 = arith.subf %38, %41 : vector<6x6xf32>
    %43 = math.exp %42 : vector<6x6xf32>
    %cst_19 = arith.constant dense<0.000000e+00> : vector<6xf32>
    %44 = vector.multi_reduction <add>, %43, %cst_19 [1] : vector<6x6xf32> to vector<6xf32>
    %45 = vector.shape_cast %44 : vector<6xf32> to vector<6x1xf32>
    %46 = tpu.reciprocal %45 {approx = true} : vector<6x1xf32> -> vector<6x1xf32>
    %47 = vector.broadcast %46 : vector<6x1xf32> to vector<6x6xf32>
    %48 = arith.mulf %43, %47 : vector<6x6xf32>
    %49 = arith.truncf %48 : vector<6x6xf32> to vector<6x6xbf16>
    %50 = vector.extract_strided_slice %11 {offsets = [0, 8], sizes = [6, 8], strides = [1, 1]} : vector<6x32xbf16> to vector<6x8xbf16>
    %cst_20 = arith.constant dense<0.000000e+00> : vector<6x8xf32>
    %51 = tpu.matmul %49, %50, %cst_20 {dimension_numbers = #tpu.dot_dimension_numbers<[1], [0], [0], [1], [0, 0, 1, 1], [], []>} : vector<6x6xbf16>, vector<6x8xbf16>, vector<6x8xf32> -> vector<6x8xf32>
    %52 = vector.extract_strided_slice %9 {offsets = [0, 16], sizes = [6, 8], strides = [1, 1]} : vector<6x32xbf16> to vector<6x8xbf16>
    %53 = vector.extract_strided_slice %10 {offsets = [0, 16], sizes = [6, 8], strides = [1, 1]} : vector<6x32xbf16> to vector<6x8xbf16>
    %cst_21 = arith.constant dense<0.000000e+00> : vector<6x6xf32>
    %54 = tpu.matmul %52, %53, %cst_21 {dimension_numbers = #tpu.dot_dimension_numbers<[1], [1], [0], [0], [0, 0, 1, 0], [], []>} : vector<6x8xbf16>, vector<6x8xbf16>, vector<6x6xf32> -> vector<6x6xf32>
    %cst_22 = arith.constant -1.000000e+30 : f32
    %55 = vector.broadcast %cst_22 : f32 to vector<6x6xf32>
    %56 = arith.select %7, %54, %55 : vector<6x6xi1>, vector<6x6xf32>
    %cst_23 = arith.constant dense<0xFF800000> : vector<6xf32>
    %57 = vector.multi_reduction <maximumf>, %56, %cst_23 [1] : vector<6x6xf32> to vector<6xf32>
    %58 = vector.shape_cast %57 : vector<6xf32> to vector<6x1xf32>
    %59 = vector.broadcast %58 : vector<6x1xf32> to vector<6x6xf32>
    %60 = arith.subf %56, %59 : vector<6x6xf32>
    %61 = math.exp %60 : vector<6x6xf32>
    %cst_24 = arith.constant dense<0.000000e+00> : vector<6xf32>
    %62 = vector.multi_reduction <add>, %61, %cst_24 [1] : vector<6x6xf32> to vector<6xf32>
    %63 = vector.shape_cast %62 : vector<6xf32> to vector<6x1xf32>
    %64 = tpu.reciprocal %63 {approx = true} : vector<6x1xf32> -> vector<6x1xf32>
    %65 = vector.broadcast %64 : vector<6x1xf32> to vector<6x6xf32>
    %66 = arith.mulf %61, %65 : vector<6x6xf32>
    %67 = arith.truncf %66 : vector<6x6xf32> to vector<6x6xbf16>
    %68 = vector.extract_strided_slice %11 {offsets = [0, 16], sizes = [6, 8], strides = [1, 1]} : vector<6x32xbf16> to vector<6x8xbf16>
    %cst_25 = arith.constant dense<0.000000e+00> : vector<6x8xf32>
    %69 = tpu.matmul %67, %68, %cst_25 {dimension_numbers = #tpu.dot_dimension_numbers<[1], [0], [0], [1], [0, 0, 1, 1], [], []>} : vector<6x6xbf16>, vector<6x8xbf16>, vector<6x8xf32> -> vector<6x8xf32>
    %70 = vector.extract_strided_slice %9 {offsets = [0, 24], sizes = [6, 8], strides = [1, 1]} : vector<6x32xbf16> to vector<6x8xbf16>
    %71 = vector.extract_strided_slice %10 {offsets = [0, 24], sizes = [6, 8], strides = [1, 1]} : vector<6x32xbf16> to vector<6x8xbf16>
    %cst_26 = arith.constant dense<0.000000e+00> : vector<6x6xf32>
    %72 = tpu.matmul %70, %71, %cst_26 {dimension_numbers = #tpu.dot_dimension_numbers<[1], [1], [0], [0], [0, 0, 1, 0], [], []>} : vector<6x8xbf16>, vector<6x8xbf16>, vector<6x6xf32> -> vector<6x6xf32>
    %cst_27 = arith.constant -1.000000e+30 : f32
    %73 = vector.broadcast %cst_27 : f32 to vector<6x6xf32>
    %74 = arith.select %7, %72, %73 : vector<6x6xi1>, vector<6x6xf32>
    %cst_28 = arith.constant dense<0xFF800000> : vector<6xf32>
    %75 = vector.multi_reduction <maximumf>, %74, %cst_28 [1] : vector<6x6xf32> to vector<6xf32>
    %76 = vector.shape_cast %75 : vector<6xf32> to vector<6x1xf32>
    %77 = vector.broadcast %76 : vector<6x1xf32> to vector<6x6xf32>
    %78 = arith.subf %74, %77 : vector<6x6xf32>
    %79 = math.exp %78 : vector<6x6xf32>
    %cst_29 = arith.constant dense<0.000000e+00> : vector<6xf32>
    %80 = vector.multi_reduction <add>, %79, %cst_29 [1] : vector<6x6xf32> to vector<6xf32>
    %81 = vector.shape_cast %80 : vector<6xf32> to vector<6x1xf32>
    %82 = tpu.reciprocal %81 {approx = true} : vector<6x1xf32> -> vector<6x1xf32>
    %83 = vector.broadcast %82 : vector<6x1xf32> to vector<6x6xf32>
    %84 = arith.mulf %79, %83 : vector<6x6xf32>
    %85 = arith.truncf %84 : vector<6x6xf32> to vector<6x6xbf16>
    %86 = vector.extract_strided_slice %11 {offsets = [0, 24], sizes = [6, 8], strides = [1, 1]} : vector<6x32xbf16> to vector<6x8xbf16>
    %cst_30 = arith.constant dense<0.000000e+00> : vector<6x8xf32>
    %87 = tpu.matmul %85, %86, %cst_30 {dimension_numbers = #tpu.dot_dimension_numbers<[1], [0], [0], [1], [0, 0, 1, 1], [], []>} : vector<6x6xbf16>, vector<6x8xbf16>, vector<6x8xf32> -> vector<6x8xf32>
    %88 = tpu.concatenate %33, %51, %69, %87 in 1 : vector<6x8xf32>, vector<6x8xf32>, vector<6x8xf32>, vector<6x8xf32> -> vector<6x32xf32>
    %89 = arith.truncf %88 : vector<6x32xf32> to vector<6x32xbf16>
    %90 = arith.extf %13 : vector<6x32xbf16> to vector<6x32xf32>
    %cst_31 = arith.constant dense<0.000000e+00> : vector<6x32xf32>
    %91 = tpu.matmul %89, %14, %cst_31 {dimension_numbers = #tpu.dot_dimension_numbers<[1], [0], [0], [1], [0, 0, 1, 1], [], []>} : vector<6x32xbf16>, vector<32x32xbf16>, vector<6x32xf32> -> vector<6x32xf32>
    %92 = arith.addf %90, %91 : vector<6x32xf32>
    %93 = vector.broadcast %15 : vector<1x32xf32> to vector<6x32xf32>
    %94 = arith.addf %92, %93 : vector<6x32xf32>
    %95 = arith.truncf %94 : vector<6x32xf32> to vector<6x32xbf16>
    %c0_32 = arith.constant 0 : index
    %c0_33 = arith.constant 0 : index
    %c0_34 = arith.constant 0 : index
    %96 = vector.load %arg7[%c0_32, %c0_33, %c0_34] : memref<1x6x32xbf16, #tpu.memory_space<vmem>>, vector<1x6x32xbf16>
    %97 = vector.shape_cast %96 : vector<1x6x32xbf16> to vector<6x32xbf16>
    %98 = vector.shape_cast %95 : vector<6x32xbf16> to vector<1x6x32xbf16>
    tpu.vector_store %arg7[%c0_32, %c0_33, %c0_34], %98 {strides = array<i32>} : memref<1x6x32xbf16, #tpu.memory_space<vmem>>, vector<1x6x32xbf16>,
    return
  }
  func.func @transform_0(%arg0: i32, %arg1: i32) -> (i32, i32, i32) {
    %c0_i32 = arith.constant 0 : i32
    %c0_i32_0 = arith.constant 0 : i32
    return %arg0, %arg1, %c0_i32 : i32, i32, i32
  }
  func.func @transform_1(%arg0: i32, %arg1: i32) -> (i32, i32, i32) {
    %c0_i32 = arith.constant 0 : i32
    %c0_i32_0 = arith.constant 0 : i32
    %c0_i32_1 = arith.constant 0 : i32
    return %arg0, %c0_i32, %c0_i32_0 : i32, i32, i32
  }
  func.func @transform_2(%arg0: i32, %arg1: i32) -> (i32, i32, i32) {
    %c0_i32 = arith.constant 0 : i32
    %c0_i32_0 = arith.constant 0 : i32
    return %arg0, %arg1, %c0_i32 : i32, i32, i32
  }
  func.func @transform_3(%arg0: i32, %arg1: i32) -> (i32, i32) {
    %c0_i32 = arith.constant 0 : i32
    %c0_i32_0 = arith.constant 0 : i32
    %c0_i32_1 = arith.constant 0 : i32
    return %c0_i32, %c0_i32_0 : i32, i32
  }
  func.func @transform_4(%arg0: i32, %arg1: i32) -> (i32, i32) {
    %c0_i32 = arith.constant 0 : i32
    %c0_i32_0 = arith.constant 0 : i32
    %c0_i32_1 = arith.constant 0 : i32
    return %c0_i32, %c0_i32_0 : i32, i32
  }
  func.func @transform_5(%arg0: i32, %arg1: i32) -> (i32, i32, i32) {
    %c0_i32 = arith.constant 0 : i32
    %c0_i32_0 = arith.constant 0 : i32
    return %arg0, %arg1, %c0_i32 : i32, i32, i32
  }
}

module attributes {stable_mosaic.version = 11 : i64} {
  func.func @_ln_qkv_kernel(%arg0: i32, %arg1: memref<16x32xbf16, #tpu.memory_space<vmem>>, %arg2: memref<1x32xf32, #tpu.memory_space<vmem>>, %arg3: memref<1x32xf32, #tpu.memory_space<vmem>>, %arg4: memref<32x32xbf16, #tpu.memory_space<vmem>>, %arg5: memref<1x32xf32, #tpu.memory_space<vmem>>, %arg6: memref<32x64xbf16, #tpu.memory_space<vmem>>, %arg7: memref<1x64xf32, #tpu.memory_space<vmem>>, %arg8: memref<16x32xbf16, #tpu.memory_space<vmem>>, %arg9: memref<16x64xbf16, #tpu.memory_space<vmem>>) attributes {dimension_semantics = [#tpu.dimension_semantics<parallel>], iteration_bounds = array<i64: 1>, scalar_prefetch = 0 : i64, scratch_operands = 0 : i64, tpu.core_type = #tpu.core_type<tc>, window_params = [{transform_indices = @transform_0, window_bounds = array<i64: 16, 32>}, {pipeline_mode = #tpu.pipeline_mode<synchronous>, transform_indices = @transform_1, window_bounds = array<i64: 1, 32>}, {pipeline_mode = #tpu.pipeline_mode<synchronous>, transform_indices = @transform_2, window_bounds = array<i64: 1, 32>}, {pipeline_mode = #tpu.pipeline_mode<synchronous>, transform_indices = @transform_3, window_bounds = array<i64: 32, 32>}, {pipeline_mode = #tpu.pipeline_mode<synchronous>, transform_indices = @transform_4, window_bounds = array<i64: 1, 32>}, {pipeline_mode = #tpu.pipeline_mode<synchronous>, transform_indices = @transform_5, window_bounds = array<i64: 32, 64>}, {pipeline_mode = #tpu.pipeline_mode<synchronous>, transform_indices = @transform_6, window_bounds = array<i64: 1, 64>}, {transform_indices = @transform_7, window_bounds = array<i64: 16, 32>}, {transform_indices = @transform_8, window_bounds = array<i64: 16, 64>}]} {
    %c0 = arith.constant 0 : index
    %c0_0 = arith.constant 0 : index
    %0 = vector.load %arg1[%c0, %c0_0] : memref<16x32xbf16, #tpu.memory_space<vmem>>, vector<16x32xbf16>
    %1 = arith.extf %0 : vector<16x32xbf16> to vector<16x32xf32>
    %c0_1 = arith.constant 0 : index
    %c0_2 = arith.constant 0 : index
    %2 = vector.load %arg2[%c0_1, %c0_2] : memref<1x32xf32, #tpu.memory_space<vmem>>, vector<1x32xf32>
    %c0_3 = arith.constant 0 : index
    %c0_4 = arith.constant 0 : index
    %3 = vector.load %arg3[%c0_3, %c0_4] : memref<1x32xf32, #tpu.memory_space<vmem>>, vector<1x32xf32>
    %cst = arith.constant dense<0.000000e+00> : vector<16xf32>
    %4 = vector.multi_reduction <add>, %1, %cst [1] : vector<16x32xf32> to vector<16xf32>
    %5 = vector.shape_cast %4 : vector<16xf32> to vector<16x1xf32>
    %cst_5 = arith.constant 3.200000e+01 : f32
    %6 = vector.broadcast %cst_5 : f32 to vector<16x1xf32>
    %7 = arith.divf %5, %6 : vector<16x1xf32>
    %8 = vector.broadcast %7 : vector<16x1xf32> to vector<16x32xf32>
    %9 = arith.subf %1, %8 : vector<16x32xf32>
    %10 = arith.mulf %9, %9 : vector<16x32xf32>
    %cst_6 = arith.constant dense<0.000000e+00> : vector<16xf32>
    %11 = vector.multi_reduction <add>, %10, %cst_6 [1] : vector<16x32xf32> to vector<16xf32>
    %12 = vector.shape_cast %11 : vector<16xf32> to vector<16x1xf32>
    %cst_7 = arith.constant 3.200000e+01 : f32
    %13 = vector.broadcast %cst_7 : f32 to vector<16x1xf32>
    %14 = arith.divf %12, %13 : vector<16x1xf32>
    %15 = vector.broadcast %7 : vector<16x1xf32> to vector<16x32xf32>
    %16 = arith.subf %1, %15 : vector<16x32xf32>
    %cst_8 = arith.constant 9.99999996E-13 : f32
    %17 = vector.broadcast %cst_8 : f32 to vector<16x1xf32>
    %18 = arith.addf %14, %17 : vector<16x1xf32>
    %19 = math.rsqrt %18 : vector<16x1xf32>
    %20 = vector.broadcast %19 : vector<16x1xf32> to vector<16x32xf32>
    %21 = arith.mulf %16, %20 : vector<16x32xf32>
    %22 = vector.broadcast %2 : vector<1x32xf32> to vector<16x32xf32>
    %23 = arith.mulf %21, %22 : vector<16x32xf32>
    %24 = vector.broadcast %3 : vector<1x32xf32> to vector<16x32xf32>
    %25 = arith.addf %23, %24 : vector<16x32xf32>
    %26 = arith.truncf %25 : vector<16x32xf32> to vector<16x32xbf16>
    %c0_9 = arith.constant 0 : index
    %c0_10 = arith.constant 0 : index
    %27 = vector.load %arg4[%c0_9, %c0_10] : memref<32x32xbf16, #tpu.memory_space<vmem>>, vector<32x32xbf16>
    %cst_11 = arith.constant dense<0.000000e+00> : vector<16x32xf32>
    %28 = tpu.matmul %26, %27, %cst_11 {dimension_numbers = #tpu.dot_dimension_numbers<[1], [0], [0], [1], [0, 0, 1, 1], [], []>} : vector<16x32xbf16>, vector<32x32xbf16>, vector<16x32xf32> -> vector<16x32xf32>
    %c0_12 = arith.constant 0 : index
    %c0_13 = arith.constant 0 : index
    %29 = vector.load %arg5[%c0_12, %c0_13] : memref<1x32xf32, #tpu.memory_space<vmem>>, vector<1x32xf32>
    %30 = vector.broadcast %29 : vector<1x32xf32> to vector<16x32xf32>
    %31 = arith.addf %28, %30 : vector<16x32xf32>
    %cst_14 = arith.constant 0.353553385 : f32
    %32 = vector.broadcast %cst_14 : f32 to vector<16x32xf32>
    %33 = arith.mulf %31, %32 : vector<16x32xf32>
    %34 = arith.truncf %33 : vector<16x32xf32> to vector<16x32xbf16>
    %c0_15 = arith.constant 0 : index
    %c0_16 = arith.constant 0 : index
    %35 = vector.load %arg8[%c0_15, %c0_16] : memref<16x32xbf16, #tpu.memory_space<vmem>>, vector<16x32xbf16>
    tpu.vector_store %arg8[%c0_15, %c0_16], %34 {strides = array<i32>} : memref<16x32xbf16, #tpu.memory_space<vmem>>, vector<16x32xbf16>,
    %c0_17 = arith.constant 0 : index
    %c0_18 = arith.constant 0 : index
    %36 = vector.load %arg6[%c0_17, %c0_18] : memref<32x64xbf16, #tpu.memory_space<vmem>>, vector<32x64xbf16>
    %cst_19 = arith.constant dense<0.000000e+00> : vector<16x64xf32>
    %37 = tpu.matmul %26, %36, %cst_19 {dimension_numbers = #tpu.dot_dimension_numbers<[1], [0], [0], [1], [0, 0, 1, 1], [], []>} : vector<16x32xbf16>, vector<32x64xbf16>, vector<16x64xf32> -> vector<16x64xf32>
    %c0_20 = arith.constant 0 : index
    %c0_21 = arith.constant 0 : index
    %38 = vector.load %arg7[%c0_20, %c0_21] : memref<1x64xf32, #tpu.memory_space<vmem>>, vector<1x64xf32>
    %39 = vector.broadcast %38 : vector<1x64xf32> to vector<16x64xf32>
    %40 = arith.addf %37, %39 : vector<16x64xf32>
    %41 = arith.truncf %40 : vector<16x64xf32> to vector<16x64xbf16>
    %c0_22 = arith.constant 0 : index
    %c0_23 = arith.constant 0 : index
    %42 = vector.load %arg9[%c0_22, %c0_23] : memref<16x64xbf16, #tpu.memory_space<vmem>>, vector<16x64xbf16>
    tpu.vector_store %arg9[%c0_22, %c0_23], %41 {strides = array<i32>} : memref<16x64xbf16, #tpu.memory_space<vmem>>, vector<16x64xbf16>,
    return
  }
  func.func @transform_0(%arg0: i32) -> (i32, i32) {
    %c0_i32 = arith.constant 0 : i32
    %c0_i32_0 = arith.constant 0 : i32
    return %arg0, %c0_i32 : i32, i32
  }
  func.func @transform_1(%arg0: i32) -> (i32, i32) {
    %c0_i32 = arith.constant 0 : i32
    %c0_i32_0 = arith.constant 0 : i32
    %c0_i32_1 = arith.constant 0 : i32
    return %c0_i32, %c0_i32_0 : i32, i32
  }
  func.func @transform_2(%arg0: i32) -> (i32, i32) {
    %c0_i32 = arith.constant 0 : i32
    %c0_i32_0 = arith.constant 0 : i32
    %c0_i32_1 = arith.constant 0 : i32
    return %c0_i32, %c0_i32_0 : i32, i32
  }
  func.func @transform_3(%arg0: i32) -> (i32, i32) {
    %c0_i32 = arith.constant 0 : i32
    %c0_i32_0 = arith.constant 0 : i32
    %c0_i32_1 = arith.constant 0 : i32
    return %c0_i32, %c0_i32_0 : i32, i32
  }
  func.func @transform_4(%arg0: i32) -> (i32, i32) {
    %c0_i32 = arith.constant 0 : i32
    %c0_i32_0 = arith.constant 0 : i32
    %c0_i32_1 = arith.constant 0 : i32
    return %c0_i32, %c0_i32_0 : i32, i32
  }
  func.func @transform_5(%arg0: i32) -> (i32, i32) {
    %c0_i32 = arith.constant 0 : i32
    %c0_i32_0 = arith.constant 0 : i32
    %c0_i32_1 = arith.constant 0 : i32
    return %c0_i32, %c0_i32_0 : i32, i32
  }
  func.func @transform_6(%arg0: i32) -> (i32, i32) {
    %c0_i32 = arith.constant 0 : i32
    %c0_i32_0 = arith.constant 0 : i32
    %c0_i32_1 = arith.constant 0 : i32
    return %c0_i32, %c0_i32_0 : i32, i32
  }
  func.func @transform_7(%arg0: i32) -> (i32, i32) {
    %c0_i32 = arith.constant 0 : i32
    %c0_i32_0 = arith.constant 0 : i32
    return %arg0, %c0_i32 : i32, i32
  }
  func.func @transform_8(%arg0: i32) -> (i32, i32) {
    %c0_i32 = arith.constant 0 : i32
    %c0_i32_0 = arith.constant 0 : i32
    return %arg0, %c0_i32 : i32, i32
  }
}

module attributes {stable_mosaic.version = 11 : i64} {
  func.func @_len_attn_kernel(%arg0: i32, %arg1: i32, %arg2: memref<2xi32, #tpu.memory_space<smem>>, %arg3: memref<1x8x32xbf16, #tpu.memory_space<vmem>>, %arg4: memref<1x8x64xbf16, #tpu.memory_space<vmem>>, %arg5: memref<1x8x32xbf16, #tpu.memory_space<vmem>>, %arg6: memref<32x32xbf16, #tpu.memory_space<vmem>>, %arg7: memref<1x32xf32, #tpu.memory_space<vmem>>, %arg8: memref<1x8x32xbf16, #tpu.memory_space<vmem>>) attributes {dimension_semantics = [#tpu.dimension_semantics<parallel>, #tpu.dimension_semantics<parallel>], iteration_bounds = array<i64: 2, 1>, scalar_prefetch = 1 : i64, scratch_operands = 0 : i64, tpu.core_type = #tpu.core_type<tc>, window_params = [{transform_indices = @transform_0, window_bounds = array<i64: 1, 8, 32>}, {transform_indices = @transform_1, window_bounds = array<i64: 1, 8, 64>}, {transform_indices = @transform_2, window_bounds = array<i64: 1, 8, 32>}, {pipeline_mode = #tpu.pipeline_mode<synchronous>, transform_indices = @transform_3, window_bounds = array<i64: 32, 32>}, {pipeline_mode = #tpu.pipeline_mode<synchronous>, transform_indices = @transform_4, window_bounds = array<i64: 1, 32>}, {transform_indices = @transform_5, window_bounds = array<i64: 1, 8, 32>}]} {
    %c0 = arith.constant 0 : index
    %c0_0 = arith.constant 0 : index
    %c0_1 = arith.constant 0 : index
    %0 = vector.load %arg4[%c0, %c0_0, %c0_1] : memref<1x8x64xbf16, #tpu.memory_space<vmem>>, vector<1x8x64xbf16>
    %1 = vector.shape_cast %0 : vector<1x8x64xbf16> to vector<8x64xbf16>
    %2 = tpu.iota {dimensions = array<i32: 1>} : vector<8x8xi32>
    %3 = arith.index_cast %arg0 : i32 to index
    %4 = memref.load %arg2[%3] : memref<2xi32, #tpu.memory_space<smem>>
    %5 = vector.broadcast %4 : i32 to vector<8x8xi32>
    %6 = arith.cmpi slt, %2, %5 : vector<8x8xi32>
    %c0_2 = arith.constant 0 : index
    %c0_3 = arith.constant 0 : index
    %c0_4 = arith.constant 0 : index
    %7 = vector.load %arg3[%c0_2, %c0_3, %c0_4] : memref<1x8x32xbf16, #tpu.memory_space<vmem>>, vector<1x8x32xbf16>
    %8 = vector.shape_cast %7 : vector<1x8x32xbf16> to vector<8x32xbf16>
    %9 = vector.extract_strided_slice %1 {offsets = [0, 0], sizes = [8, 32], strides = [1, 1]} : vector<8x64xbf16> to vector<8x32xbf16>
    %10 = vector.extract_strided_slice %1 {offsets = [0, 32], sizes = [8, 32], strides = [1, 1]} : vector<8x64xbf16> to vector<8x32xbf16>
    %c0_5 = arith.constant 0 : index
    %c0_6 = arith.constant 0 : index
    %c0_7 = arith.constant 0 : index
    %11 = vector.load %arg5[%c0_5, %c0_6, %c0_7] : memref<1x8x32xbf16, #tpu.memory_space<vmem>>, vector<1x8x32xbf16>
    %12 = vector.shape_cast %11 : vector<1x8x32xbf16> to vector<8x32xbf16>
    %c0_8 = arith.constant 0 : index
    %c0_9 = arith.constant 0 : index
    %13 = vector.load %arg6[%c0_8, %c0_9] : memref<32x32xbf16, #tpu.memory_space<vmem>>, vector<32x32xbf16>
    %c0_10 = arith.constant 0 : index
    %c0_11 = arith.constant 0 : index
    %14 = vector.load %arg7[%c0_10, %c0_11] : memref<1x32xf32, #tpu.memory_space<vmem>>, vector<1x32xf32>
    %15 = vector.extract_strided_slice %8 {offsets = [0, 0], sizes = [8, 8], strides = [1, 1]} : vector<8x32xbf16> to vector<8x8xbf16>
    %16 = vector.extract_strided_slice %9 {offsets = [0, 0], sizes = [8, 8], strides = [1, 1]} : vector<8x32xbf16> to vector<8x8xbf16>
    %cst = arith.constant dense<0.000000e+00> : vector<8x8xf32>
    %17 = tpu.matmul %15, %16, %cst {dimension_numbers = #tpu.dot_dimension_numbers<[1], [1], [0], [0], [0, 0, 1, 0], [], []>} : vector<8x8xbf16>, vector<8x8xbf16>, vector<8x8xf32> -> vector<8x8xf32>
    %cst_12 = arith.constant -1.000000e+30 : f32
    %18 = vector.broadcast %cst_12 : f32 to vector<8x8xf32>
    %19 = arith.select %6, %17, %18 : vector<8x8xi1>, vector<8x8xf32>
    %cst_13 = arith.constant dense<0xFF800000> : vector<8xf32>
    %20 = vector.multi_reduction <maximumf>, %19, %cst_13 [1] : vector<8x8xf32> to vector<8xf32>
    %21 = vector.shape_cast %20 : vector<8xf32> to vector<8x1xf32>
    %22 = vector.broadcast %21 : vector<8x1xf32> to vector<8x8xf32>
    %23 = arith.subf %19, %22 : vector<8x8xf32>
    %24 = math.exp %23 : vector<8x8xf32>
    %cst_14 = arith.constant dense<0.000000e+00> : vector<8xf32>
    %25 = vector.multi_reduction <add>, %24, %cst_14 [1] : vector<8x8xf32> to vector<8xf32>
    %26 = vector.shape_cast %25 : vector<8xf32> to vector<8x1xf32>
    %27 = tpu.reciprocal %26 {approx = true} : vector<8x1xf32> -> vector<8x1xf32>
    %28 = vector.broadcast %27 : vector<8x1xf32> to vector<8x8xf32>
    %29 = arith.mulf %24, %28 : vector<8x8xf32>
    %30 = arith.truncf %29 : vector<8x8xf32> to vector<8x8xbf16>
    %31 = vector.extract_strided_slice %10 {offsets = [0, 0], sizes = [8, 8], strides = [1, 1]} : vector<8x32xbf16> to vector<8x8xbf16>
    %cst_15 = arith.constant dense<0.000000e+00> : vector<8x8xf32>
    %32 = tpu.matmul %30, %31, %cst_15 {dimension_numbers = #tpu.dot_dimension_numbers<[1], [0], [0], [1], [0, 0, 1, 1], [], []>} : vector<8x8xbf16>, vector<8x8xbf16>, vector<8x8xf32> -> vector<8x8xf32>
    %33 = vector.extract_strided_slice %8 {offsets = [0, 8], sizes = [8, 8], strides = [1, 1]} : vector<8x32xbf16> to vector<8x8xbf16>
    %34 = vector.extract_strided_slice %9 {offsets = [0, 8], sizes = [8, 8], strides = [1, 1]} : vector<8x32xbf16> to vector<8x8xbf16>
    %cst_16 = arith.constant dense<0.000000e+00> : vector<8x8xf32>
    %35 = tpu.matmul %33, %34, %cst_16 {dimension_numbers = #tpu.dot_dimension_numbers<[1], [1], [0], [0], [0, 0, 1, 0], [], []>} : vector<8x8xbf16>, vector<8x8xbf16>, vector<8x8xf32> -> vector<8x8xf32>
    %cst_17 = arith.constant -1.000000e+30 : f32
    %36 = vector.broadcast %cst_17 : f32 to vector<8x8xf32>
    %37 = arith.select %6, %35, %36 : vector<8x8xi1>, vector<8x8xf32>
    %cst_18 = arith.constant dense<0xFF800000> : vector<8xf32>
    %38 = vector.multi_reduction <maximumf>, %37, %cst_18 [1] : vector<8x8xf32> to vector<8xf32>
    %39 = vector.shape_cast %38 : vector<8xf32> to vector<8x1xf32>
    %40 = vector.broadcast %39 : vector<8x1xf32> to vector<8x8xf32>
    %41 = arith.subf %37, %40 : vector<8x8xf32>
    %42 = math.exp %41 : vector<8x8xf32>
    %cst_19 = arith.constant dense<0.000000e+00> : vector<8xf32>
    %43 = vector.multi_reduction <add>, %42, %cst_19 [1] : vector<8x8xf32> to vector<8xf32>
    %44 = vector.shape_cast %43 : vector<8xf32> to vector<8x1xf32>
    %45 = tpu.reciprocal %44 {approx = true} : vector<8x1xf32> -> vector<8x1xf32>
    %46 = vector.broadcast %45 : vector<8x1xf32> to vector<8x8xf32>
    %47 = arith.mulf %42, %46 : vector<8x8xf32>
    %48 = arith.truncf %47 : vector<8x8xf32> to vector<8x8xbf16>
    %49 = vector.extract_strided_slice %10 {offsets = [0, 8], sizes = [8, 8], strides = [1, 1]} : vector<8x32xbf16> to vector<8x8xbf16>
    %cst_20 = arith.constant dense<0.000000e+00> : vector<8x8xf32>
    %50 = tpu.matmul %48, %49, %cst_20 {dimension_numbers = #tpu.dot_dimension_numbers<[1], [0], [0], [1], [0, 0, 1, 1], [], []>} : vector<8x8xbf16>, vector<8x8xbf16>, vector<8x8xf32> -> vector<8x8xf32>
    %51 = vector.extract_strided_slice %8 {offsets = [0, 16], sizes = [8, 8], strides = [1, 1]} : vector<8x32xbf16> to vector<8x8xbf16>
    %52 = vector.extract_strided_slice %9 {offsets = [0, 16], sizes = [8, 8], strides = [1, 1]} : vector<8x32xbf16> to vector<8x8xbf16>
    %cst_21 = arith.constant dense<0.000000e+00> : vector<8x8xf32>
    %53 = tpu.matmul %51, %52, %cst_21 {dimension_numbers = #tpu.dot_dimension_numbers<[1], [1], [0], [0], [0, 0, 1, 0], [], []>} : vector<8x8xbf16>, vector<8x8xbf16>, vector<8x8xf32> -> vector<8x8xf32>
    %cst_22 = arith.constant -1.000000e+30 : f32
    %54 = vector.broadcast %cst_22 : f32 to vector<8x8xf32>
    %55 = arith.select %6, %53, %54 : vector<8x8xi1>, vector<8x8xf32>
    %cst_23 = arith.constant dense<0xFF800000> : vector<8xf32>
    %56 = vector.multi_reduction <maximumf>, %55, %cst_23 [1] : vector<8x8xf32> to vector<8xf32>
    %57 = vector.shape_cast %56 : vector<8xf32> to vector<8x1xf32>
    %58 = vector.broadcast %57 : vector<8x1xf32> to vector<8x8xf32>
    %59 = arith.subf %55, %58 : vector<8x8xf32>
    %60 = math.exp %59 : vector<8x8xf32>
    %cst_24 = arith.constant dense<0.000000e+00> : vector<8xf32>
    %61 = vector.multi_reduction <add>, %60, %cst_24 [1] : vector<8x8xf32> to vector<8xf32>
    %62 = vector.shape_cast %61 : vector<8xf32> to vector<8x1xf32>
    %63 = tpu.reciprocal %62 {approx = true} : vector<8x1xf32> -> vector<8x1xf32>
    %64 = vector.broadcast %63 : vector<8x1xf32> to vector<8x8xf32>
    %65 = arith.mulf %60, %64 : vector<8x8xf32>
    %66 = arith.truncf %65 : vector<8x8xf32> to vector<8x8xbf16>
    %67 = vector.extract_strided_slice %10 {offsets = [0, 16], sizes = [8, 8], strides = [1, 1]} : vector<8x32xbf16> to vector<8x8xbf16>
    %cst_25 = arith.constant dense<0.000000e+00> : vector<8x8xf32>
    %68 = tpu.matmul %66, %67, %cst_25 {dimension_numbers = #tpu.dot_dimension_numbers<[1], [0], [0], [1], [0, 0, 1, 1], [], []>} : vector<8x8xbf16>, vector<8x8xbf16>, vector<8x8xf32> -> vector<8x8xf32>
    %69 = vector.extract_strided_slice %8 {offsets = [0, 24], sizes = [8, 8], strides = [1, 1]} : vector<8x32xbf16> to vector<8x8xbf16>
    %70 = vector.extract_strided_slice %9 {offsets = [0, 24], sizes = [8, 8], strides = [1, 1]} : vector<8x32xbf16> to vector<8x8xbf16>
    %cst_26 = arith.constant dense<0.000000e+00> : vector<8x8xf32>
    %71 = tpu.matmul %69, %70, %cst_26 {dimension_numbers = #tpu.dot_dimension_numbers<[1], [1], [0], [0], [0, 0, 1, 0], [], []>} : vector<8x8xbf16>, vector<8x8xbf16>, vector<8x8xf32> -> vector<8x8xf32>
    %cst_27 = arith.constant -1.000000e+30 : f32
    %72 = vector.broadcast %cst_27 : f32 to vector<8x8xf32>
    %73 = arith.select %6, %71, %72 : vector<8x8xi1>, vector<8x8xf32>
    %cst_28 = arith.constant dense<0xFF800000> : vector<8xf32>
    %74 = vector.multi_reduction <maximumf>, %73, %cst_28 [1] : vector<8x8xf32> to vector<8xf32>
    %75 = vector.shape_cast %74 : vector<8xf32> to vector<8x1xf32>
    %76 = vector.broadcast %75 : vector<8x1xf32> to vector<8x8xf32>
    %77 = arith.subf %73, %76 : vector<8x8xf32>
    %78 = math.exp %77 : vector<8x8xf32>
    %cst_29 = arith.constant dense<0.000000e+00> : vector<8xf32>
    %79 = vector.multi_reduction <add>, %78, %cst_29 [1] : vector<8x8xf32> to vector<8xf32>
    %80 = vector.shape_cast %79 : vector<8xf32> to vector<8x1xf32>
    %81 = tpu.reciprocal %80 {approx = true} : vector<8x1xf32> -> vector<8x1xf32>
    %82 = vector.broadcast %81 : vector<8x1xf32> to vector<8x8xf32>
    %83 = arith.mulf %78, %82 : vector<8x8xf32>
    %84 = arith.truncf %83 : vector<8x8xf32> to vector<8x8xbf16>
    %85 = vector.extract_strided_slice %10 {offsets = [0, 24], sizes = [8, 8], strides = [1, 1]} : vector<8x32xbf16> to vector<8x8xbf16>
    %cst_30 = arith.constant dense<0.000000e+00> : vector<8x8xf32>
    %86 = tpu.matmul %84, %85, %cst_30 {dimension_numbers = #tpu.dot_dimension_numbers<[1], [0], [0], [1], [0, 0, 1, 1], [], []>} : vector<8x8xbf16>, vector<8x8xbf16>, vector<8x8xf32> -> vector<8x8xf32>
    %87 = tpu.concatenate %32, %50, %68, %86 in 1 : vector<8x8xf32>, vector<8x8xf32>, vector<8x8xf32>, vector<8x8xf32> -> vector<8x32xf32>
    %88 = arith.truncf %87 : vector<8x32xf32> to vector<8x32xbf16>
    %89 = arith.extf %12 : vector<8x32xbf16> to vector<8x32xf32>
    %cst_31 = arith.constant dense<0.000000e+00> : vector<8x32xf32>
    %90 = tpu.matmul %88, %13, %cst_31 {dimension_numbers = #tpu.dot_dimension_numbers<[1], [0], [0], [1], [0, 0, 1, 1], [], []>} : vector<8x32xbf16>, vector<32x32xbf16>, vector<8x32xf32> -> vector<8x32xf32>
    %91 = arith.addf %89, %90 : vector<8x32xf32>
    %92 = vector.broadcast %14 : vector<1x32xf32> to vector<8x32xf32>
    %93 = arith.addf %91, %92 : vector<8x32xf32>
    %94 = arith.truncf %93 : vector<8x32xf32> to vector<8x32xbf16>
    %c0_32 = arith.constant 0 : index
    %c0_33 = arith.constant 0 : index
    %c0_34 = arith.constant 0 : index
    %95 = vector.load %arg8[%c0_32, %c0_33, %c0_34] : memref<1x8x32xbf16, #tpu.memory_space<vmem>>, vector<1x8x32xbf16>
    %96 = vector.shape_cast %95 : vector<1x8x32xbf16> to vector<8x32xbf16>
    %97 = vector.shape_cast %94 : vector<8x32xbf16> to vector<1x8x32xbf16>
    tpu.vector_store %arg8[%c0_32, %c0_33, %c0_34], %97 {strides = array<i32>} : memref<1x8x32xbf16, #tpu.memory_space<vmem>>, vector<1x8x32xbf16>,
    return
  }
  func.func @transform_0(%arg0: i32, %arg1: i32, %arg2: memref<2xi32, #tpu.memory_space<smem>>) -> (i32, i32, i32) {
    %c0_i32 = arith.constant 0 : i32
    %c0_i32_0 = arith.constant 0 : i32
    return %arg0, %arg1, %c0_i32 : i32, i32, i32
  }
  func.func @transform_1(%arg0: i32, %arg1: i32, %arg2: memref<2xi32, #tpu.memory_space<smem>>) -> (i32, i32, i32) {
    %c0_i32 = arith.constant 0 : i32
    %c0_i32_0 = arith.constant 0 : i32
    %c0_i32_1 = arith.constant 0 : i32
    return %arg0, %c0_i32, %c0_i32_0 : i32, i32, i32
  }
  func.func @transform_2(%arg0: i32, %arg1: i32, %arg2: memref<2xi32, #tpu.memory_space<smem>>) -> (i32, i32, i32) {
    %c0_i32 = arith.constant 0 : i32
    %c0_i32_0 = arith.constant 0 : i32
    return %arg0, %arg1, %c0_i32 : i32, i32, i32
  }
  func.func @transform_3(%arg0: i32, %arg1: i32, %arg2: memref<2xi32, #tpu.memory_space<smem>>) -> (i32, i32) {
    %c0_i32 = arith.constant 0 : i32
    %c0_i32_0 = arith.constant 0 : i32
    %c0_i32_1 = arith.constant 0 : i32
    return %c0_i32, %c0_i32_0 : i32, i32
  }
  func.func @transform_4(%arg0: i32, %arg1: i32, %arg2: memref<2xi32, #tpu.memory_space<smem>>) -> (i32, i32) {
    %c0_i32 = arith.constant 0 : i32
    %c0_i32_0 = arith.constant 0 : i32
    %c0_i32_1 = arith.constant 0 : i32
    return %c0_i32, %c0_i32_0 : i32, i32
  }
  func.func @transform_5(%arg0: i32, %arg1: i32, %arg2: memref<2xi32, #tpu.memory_space<smem>>) -> (i32, i32, i32) {
    %c0_i32 = arith.constant 0 : i32
    %c0_i32_0 = arith.constant 0 : i32
    return %arg0, %arg1, %c0_i32 : i32, i32, i32
  }
}

module attributes {stable_mosaic.version = 11 : i64} {
  func.func @_ln_ffn_residual_kernel(%arg0: i32, %arg1: memref<16x32xbf16, #tpu.memory_space<vmem>>, %arg2: memref<1x32xf32, #tpu.memory_space<vmem>>, %arg3: memref<1x32xf32, #tpu.memory_space<vmem>>, %arg4: memref<32x64xbf16, #tpu.memory_space<vmem>>, %arg5: memref<1x64xf32, #tpu.memory_space<vmem>>, %arg6: memref<64x32xbf16, #tpu.memory_space<vmem>>, %arg7: memref<1x32xf32, #tpu.memory_space<vmem>>, %arg8: memref<16x32xbf16, #tpu.memory_space<vmem>>) attributes {dimension_semantics = [#tpu.dimension_semantics<parallel>], iteration_bounds = array<i64: 1>, scalar_prefetch = 0 : i64, scratch_operands = 0 : i64, tpu.core_type = #tpu.core_type<tc>, window_params = [{transform_indices = @transform_0, window_bounds = array<i64: 16, 32>}, {pipeline_mode = #tpu.pipeline_mode<synchronous>, transform_indices = @transform_1, window_bounds = array<i64: 1, 32>}, {pipeline_mode = #tpu.pipeline_mode<synchronous>, transform_indices = @transform_2, window_bounds = array<i64: 1, 32>}, {pipeline_mode = #tpu.pipeline_mode<synchronous>, transform_indices = @transform_3, window_bounds = array<i64: 32, 64>}, {pipeline_mode = #tpu.pipeline_mode<synchronous>, transform_indices = @transform_4, window_bounds = array<i64: 1, 64>}, {pipeline_mode = #tpu.pipeline_mode<synchronous>, transform_indices = @transform_5, window_bounds = array<i64: 64, 32>}, {pipeline_mode = #tpu.pipeline_mode<synchronous>, transform_indices = @transform_6, window_bounds = array<i64: 1, 32>}, {transform_indices = @transform_7, window_bounds = array<i64: 16, 32>}]} {
    %c0 = arith.constant 0 : index
    %c0_0 = arith.constant 0 : index
    %0 = vector.load %arg1[%c0, %c0_0] : memref<16x32xbf16, #tpu.memory_space<vmem>>, vector<16x32xbf16>
    %1 = arith.extf %0 : vector<16x32xbf16> to vector<16x32xf32>
    %c0_1 = arith.constant 0 : index
    %c0_2 = arith.constant 0 : index
    %2 = vector.load %arg2[%c0_1, %c0_2] : memref<1x32xf32, #tpu.memory_space<vmem>>, vector<1x32xf32>
    %c0_3 = arith.constant 0 : index
    %c0_4 = arith.constant 0 : index
    %3 = vector.load %arg3[%c0_3, %c0_4] : memref<1x32xf32, #tpu.memory_space<vmem>>, vector<1x32xf32>
    %cst = arith.constant dense<0.000000e+00> : vector<16xf32>
    %4 = vector.multi_reduction <add>, %1, %cst [1] : vector<16x32xf32> to vector<16xf32>
    %5 = vector.shape_cast %4 : vector<16xf32> to vector<16x1xf32>
    %cst_5 = arith.constant 3.200000e+01 : f32
    %6 = vector.broadcast %cst_5 : f32 to vector<16x1xf32>
    %7 = arith.divf %5, %6 : vector<16x1xf32>
    %8 = vector.broadcast %7 : vector<16x1xf32> to vector<16x32xf32>
    %9 = arith.subf %1, %8 : vector<16x32xf32>
    %10 = arith.mulf %9, %9 : vector<16x32xf32>
    %cst_6 = arith.constant dense<0.000000e+00> : vector<16xf32>
    %11 = vector.multi_reduction <add>, %10, %cst_6 [1] : vector<16x32xf32> to vector<16xf32>
    %12 = vector.shape_cast %11 : vector<16xf32> to vector<16x1xf32>
    %cst_7 = arith.constant 3.200000e+01 : f32
    %13 = vector.broadcast %cst_7 : f32 to vector<16x1xf32>
    %14 = arith.divf %12, %13 : vector<16x1xf32>
    %15 = vector.broadcast %7 : vector<16x1xf32> to vector<16x32xf32>
    %16 = arith.subf %1, %15 : vector<16x32xf32>
    %cst_8 = arith.constant 9.99999996E-13 : f32
    %17 = vector.broadcast %cst_8 : f32 to vector<16x1xf32>
    %18 = arith.addf %14, %17 : vector<16x1xf32>
    %19 = math.rsqrt %18 : vector<16x1xf32>
    %20 = vector.broadcast %19 : vector<16x1xf32> to vector<16x32xf32>
    %21 = arith.mulf %16, %20 : vector<16x32xf32>
    %22 = vector.broadcast %2 : vector<1x32xf32> to vector<16x32xf32>
    %23 = arith.mulf %21, %22 : vector<16x32xf32>
    %24 = vector.broadcast %3 : vector<1x32xf32> to vector<16x32xf32>
    %25 = arith.addf %23, %24 : vector<16x32xf32>
    %26 = arith.truncf %25 : vector<16x32xf32> to vector<16x32xbf16>
    %c0_9 = arith.constant 0 : index
    %c0_10 = arith.constant 0 : index
    %27 = vector.load %arg4[%c0_9, %c0_10] : memref<32x64xbf16, #tpu.memory_space<vmem>>, vector<32x64xbf16>
    %cst_11 = arith.constant dense<0.000000e+00> : vector<16x64xf32>
    %28 = tpu.matmul %26, %27, %cst_11 {dimension_numbers = #tpu.dot_dimension_numbers<[1], [0], [0], [1], [0, 0, 1, 1], [], []>} : vector<16x32xbf16>, vector<32x64xbf16>, vector<16x64xf32> -> vector<16x64xf32>
    %c0_12 = arith.constant 0 : index
    %c0_13 = arith.constant 0 : index
    %29 = vector.load %arg5[%c0_12, %c0_13] : memref<1x64xf32, #tpu.memory_space<vmem>>, vector<1x64xf32>
    %30 = vector.broadcast %29 : vector<1x64xf32> to vector<16x64xf32>
    %31 = arith.addf %28, %30 : vector<16x64xf32>
    %cst_14 = arith.constant 0.000000e+00 : f32
    %32 = vector.broadcast %cst_14 : f32 to vector<16x64xf32>
    %33 = arith.maximumf %31, %32 : vector<16x64xf32>
    %34 = arith.truncf %33 : vector<16x64xf32> to vector<16x64xbf16>
    %c0_15 = arith.constant 0 : index
    %c0_16 = arith.constant 0 : index
    %35 = vector.load %arg6[%c0_15, %c0_16] : memref<64x32xbf16, #tpu.memory_space<vmem>>, vector<64x32xbf16>
    %cst_17 = arith.constant dense<0.000000e+00> : vector<16x32xf32>
    %36 = tpu.matmul %34, %35, %cst_17 {dimension_numbers = #tpu.dot_dimension_numbers<[1], [0], [0], [1], [0, 0, 1, 1], [], []>} : vector<16x64xbf16>, vector<64x32xbf16>, vector<16x32xf32> -> vector<16x32xf32>
    %37 = arith.addf %1, %36 : vector<16x32xf32>
    %c0_18 = arith.constant 0 : index
    %c0_19 = arith.constant 0 : index
    %38 = vector.load %arg7[%c0_18, %c0_19] : memref<1x32xf32, #tpu.memory_space<vmem>>, vector<1x32xf32>
    %39 = vector.broadcast %38 : vector<1x32xf32> to vector<16x32xf32>
    %40 = arith.addf %37, %39 : vector<16x32xf32>
    %41 = arith.truncf %40 : vector<16x32xf32> to vector<16x32xbf16>
    %c0_20 = arith.constant 0 : index
    %c0_21 = arith.constant 0 : index
    %42 = vector.load %arg8[%c0_20, %c0_21] : memref<16x32xbf16, #tpu.memory_space<vmem>>, vector<16x32xbf16>
    tpu.vector_store %arg8[%c0_20, %c0_21], %41 {strides = array<i32>} : memref<16x32xbf16, #tpu.memory_space<vmem>>, vector<16x32xbf16>,
    return
  }
  func.func @transform_0(%arg0: i32) -> (i32, i32) {
    %c0_i32 = arith.constant 0 : i32
    %c0_i32_0 = arith.constant 0 : i32
    return %arg0, %c0_i32 : i32, i32
  }
  func.func @transform_1(%arg0: i32) -> (i32, i32) {
    %c0_i32 = arith.constant 0 : i32
    %c0_i32_0 = arith.constant 0 : i32
    %c0_i32_1 = arith.constant 0 : i32
    return %c0_i32, %c0_i32_0 : i32, i32
  }
  func.func @transform_2(%arg0: i32) -> (i32, i32) {
    %c0_i32 = arith.constant 0 : i32
    %c0_i32_0 = arith.constant 0 : i32
    %c0_i32_1 = arith.constant 0 : i32
    return %c0_i32, %c0_i32_0 : i32, i32
  }
  func.func @transform_3(%arg0: i32) -> (i32, i32) {
    %c0_i32 = arith.constant 0 : i32
    %c0_i32_0 = arith.constant 0 : i32
    %c0_i32_1 = arith.constant 0 : i32
    return %c0_i32, %c0_i32_0 : i32, i32
  }
  func.func @transform_4(%arg0: i32) -> (i32, i32) {
    %c0_i32 = arith.constant 0 : i32
    %c0_i32_0 = arith.constant 0 : i32
    %c0_i32_1 = arith.constant 0 : i32
    return %c0_i32, %c0_i32_0 : i32, i32
  }
  func.func @transform_5(%arg0: i32) -> (i32, i32) {
    %c0_i32 = arith.constant 0 : i32
    %c0_i32_0 = arith.constant 0 : i32
    %c0_i32_1 = arith.constant 0 : i32
    return %c0_i32, %c0_i32_0 : i32, i32
  }
  func.func @transform_6(%arg0: i32) -> (i32, i32) {
    %c0_i32 = arith.constant 0 : i32
    %c0_i32_0 = arith.constant 0 : i32
    %c0_i32_1 = arith.constant 0 : i32
    return %c0_i32, %c0_i32_0 : i32, i32
  }
  func.func @transform_7(%arg0: i32) -> (i32, i32) {
    %c0_i32 = arith.constant 0 : i32
    %c0_i32_0 = arith.constant 0 : i32
    return %arg0, %c0_i32 : i32, i32
  }
}

module attributes {stable_mosaic.version = 11 : i64} {
  func.func @_linear_kernel(%arg0: i32, %arg1: memref<16x32xbf16, #tpu.memory_space<vmem>>, %arg2: memref<32x64xbf16, #tpu.memory_space<vmem>>, %arg3: memref<1x64xf32, #tpu.memory_space<vmem>>, %arg4: memref<16x64xbf16, #tpu.memory_space<vmem>>) attributes {dimension_semantics = [#tpu.dimension_semantics<parallel>], iteration_bounds = array<i64: 1>, scalar_prefetch = 0 : i64, scratch_operands = 0 : i64, tpu.core_type = #tpu.core_type<tc>, window_params = [{transform_indices = @transform_0, window_bounds = array<i64: 16, 32>}, {pipeline_mode = #tpu.pipeline_mode<synchronous>, transform_indices = @transform_1, window_bounds = array<i64: 32, 64>}, {pipeline_mode = #tpu.pipeline_mode<synchronous>, transform_indices = @transform_2, window_bounds = array<i64: 1, 64>}, {transform_indices = @transform_3, window_bounds = array<i64: 16, 64>}]} {
    %c0 = arith.constant 0 : index
    %c0_0 = arith.constant 0 : index
    %0 = vector.load %arg1[%c0, %c0_0] : memref<16x32xbf16, #tpu.memory_space<vmem>>, vector<16x32xbf16>
    %c0_1 = arith.constant 0 : index
    %c0_2 = arith.constant 0 : index
    %1 = vector.load %arg2[%c0_1, %c0_2] : memref<32x64xbf16, #tpu.memory_space<vmem>>, vector<32x64xbf16>
    %cst = arith.constant dense<0.000000e+00> : vector<16x64xf32>
    %2 = tpu.matmul %0, %1, %cst {dimension_numbers = #tpu.dot_dimension_numbers<[1], [0], [0], [1], [0, 0, 1, 1], [], []>} : vector<16x32xbf16>, vector<32x64xbf16>, vector<16x64xf32> -> vector<16x64xf32>
    %c0_3 = arith.constant 0 : index
    %c0_4 = arith.constant 0 : index
    %3 = vector.load %arg3[%c0_3, %c0_4] : memref<1x64xf32, #tpu.memory_space<vmem>>, vector<1x64xf32>
    %4 = vector.broadcast %3 : vector<1x64xf32> to vector<16x64xf32>
    %5 = arith.addf %2, %4 : vector<16x64xf32>
    %6 = arith.truncf %5 : vector<16x64xf32> to vector<16x64xbf16>
    %c0_5 = arith.constant 0 : index
    %c0_6 = arith.constant 0 : index
    %7 = vector.load %arg4[%c0_5, %c0_6] : memref<16x64xbf16, #tpu.memory_space<vmem>>, vector<16x64xbf16>
    tpu.vector_store %arg4[%c0_5, %c0_6], %6 {strides = array<i32>} : memref<16x64xbf16, #tpu.memory_space<vmem>>, vector<16x64xbf16>,
    return
  }
  func.func @transform_0(%arg0: i32) -> (i32, i32) {
    %c0_i32 = arith.constant 0 : i32
    %c0_i32_0 = arith.constant 0 : i32
    return %arg0, %c0_i32 : i32, i32
  }
  func.func @transform_1(%arg0: i32) -> (i32, i32) {
    %c0_i32 = arith.constant 0 : i32
    %c0_i32_0 = arith.constant 0 : i32
    %c0_i32_1 = arith.constant 0 : i32
    return %c0_i32, %c0_i32_0 : i32, i32
  }
  func.func @transform_2(%arg0: i32) -> (i32, i32) {
    %c0_i32 = arith.constant 0 : i32
    %c0_i32_0 = arith.constant 0 : i32
    %c0_i32_1 = arith.constant 0 : i32
    return %c0_i32, %c0_i32_0 : i32, i32
  }
  func.func @transform_3(%arg0: i32) -> (i32, i32) {
    %c0_i32 = arith.constant 0 : i32
    %c0_i32_0 = arith.constant 0 : i32
    return %arg0, %c0_i32 : i32, i32
  }
}

module attributes {stable_mosaic.version = 11 : i64} {
  func.func @_ln_kernel(%arg0: i32, %arg1: memref<16x32xbf16, #tpu.memory_space<vmem>>, %arg2: memref<1x32xf32, #tpu.memory_space<vmem>>, %arg3: memref<1x32xf32, #tpu.memory_space<vmem>>, %arg4: memref<16x32xbf16, #tpu.memory_space<vmem>>) attributes {dimension_semantics = [#tpu.dimension_semantics<parallel>], iteration_bounds = array<i64: 1>, scalar_prefetch = 0 : i64, scratch_operands = 0 : i64, tpu.core_type = #tpu.core_type<tc>, window_params = [{transform_indices = @transform_0, window_bounds = array<i64: 16, 32>}, {pipeline_mode = #tpu.pipeline_mode<synchronous>, transform_indices = @transform_1, window_bounds = array<i64: 1, 32>}, {pipeline_mode = #tpu.pipeline_mode<synchronous>, transform_indices = @transform_2, window_bounds = array<i64: 1, 32>}, {transform_indices = @transform_3, window_bounds = array<i64: 16, 32>}]} {
    %c0 = arith.constant 0 : index
    %c0_0 = arith.constant 0 : index
    %0 = vector.load %arg1[%c0, %c0_0] : memref<16x32xbf16, #tpu.memory_space<vmem>>, vector<16x32xbf16>
    %1 = arith.extf %0 : vector<16x32xbf16> to vector<16x32xf32>
    %c0_1 = arith.constant 0 : index
    %c0_2 = arith.constant 0 : index
    %2 = vector.load %arg2[%c0_1, %c0_2] : memref<1x32xf32, #tpu.memory_space<vmem>>, vector<1x32xf32>
    %c0_3 = arith.constant 0 : index
    %c0_4 = arith.constant 0 : index
    %3 = vector.load %arg3[%c0_3, %c0_4] : memref<1x32xf32, #tpu.memory_space<vmem>>, vector<1x32xf32>
    %cst = arith.constant dense<0.000000e+00> : vector<16xf32>
    %4 = vector.multi_reduction <add>, %1, %cst [1] : vector<16x32xf32> to vector<16xf32>
    %5 = vector.shape_cast %4 : vector<16xf32> to vector<16x1xf32>
    %cst_5 = arith.constant 3.200000e+01 : f32
    %6 = vector.broadcast %cst_5 : f32 to vector<16x1xf32>
    %7 = arith.divf %5, %6 : vector<16x1xf32>
    %8 = vector.broadcast %7 : vector<16x1xf32> to vector<16x32xf32>
    %9 = arith.subf %1, %8 : vector<16x32xf32>
    %10 = arith.mulf %9, %9 : vector<16x32xf32>
    %cst_6 = arith.constant dense<0.000000e+00> : vector<16xf32>
    %11 = vector.multi_reduction <add>, %10, %cst_6 [1] : vector<16x32xf32> to vector<16xf32>
    %12 = vector.shape_cast %11 : vector<16xf32> to vector<16x1xf32>
    %cst_7 = arith.constant 3.200000e+01 : f32
    %13 = vector.broadcast %cst_7 : f32 to vector<16x1xf32>
    %14 = arith.divf %12, %13 : vector<16x1xf32>
    %15 = vector.broadcast %7 : vector<16x1xf32> to vector<16x32xf32>
    %16 = arith.subf %1, %15 : vector<16x32xf32>
    %cst_8 = arith.constant 9.99999996E-13 : f32
    %17 = vector.broadcast %cst_8 : f32 to vector<16x1xf32>
    %18 = arith.addf %14, %17 : vector<16x1xf32>
    %19 = math.rsqrt %18 : vector<16x1xf32>
    %20 = vector.broadcast %19 : vector<16x1xf32> to vector<16x32xf32>
    %21 = arith.mulf %16, %20 : vector<16x32xf32>
    %22 = vector.broadcast %2 : vector<1x32xf32> to vector<16x32xf32>
    %23 = arith.mulf %21, %22 : vector<16x32xf32>
    %24 = vector.broadcast %3 : vector<1x32xf32> to vector<16x32xf32>
    %25 = arith.addf %23, %24 : vector<16x32xf32>
    %26 = arith.truncf %25 : vector<16x32xf32> to vector<16x32xbf16>
    %c0_9 = arith.constant 0 : index
    %c0_10 = arith.constant 0 : index
    %27 = vector.load %arg4[%c0_9, %c0_10] : memref<16x32xbf16, #tpu.memory_space<vmem>>, vector<16x32xbf16>
    tpu.vector_store %arg4[%c0_9, %c0_10], %26 {strides = array<i32>} : memref<16x32xbf16, #tpu.memory_space<vmem>>, vector<16x32xbf16>,
    return
  }
  func.func @transform_0(%arg0: i32) -> (i32, i32) {
    %c0_i32 = arith.constant 0 : i32
    %c0_i32_0 = arith.constant 0 : i32
    return %arg0, %c0_i32 : i32, i32
  }
  func.func @transform_1(%arg0: i32) -> (i32, i32) {
    %c0_i32 = arith.constant 0 : i32
    %c0_i32_0 = arith.constant 0 : i32
    %c0_i32_1 = arith.constant 0 : i32
    return %c0_i32, %c0_i32_0 : i32, i32
  }
  func.func @transform_2(%arg0: i32) -> (i32, i32) {
    %c0_i32 = arith.constant 0 : i32
    %c0_i32_0 = arith.constant 0 : i32
    %c0_i32_1 = arith.constant 0 : i32
    return %c0_i32, %c0_i32_0 : i32, i32
  }
  func.func @transform_3(%arg0: i32) -> (i32, i32) {
    %c0_i32 = arith.constant 0 : i32
    %c0_i32_0 = arith.constant 0 : i32
    return %arg0, %c0_i32 : i32, i32
  }
}

module attributes {stable_mosaic.version = 11 : i64} {
  func.func @_ln_ffn_residual_kernel(%arg0: i32, %arg1: memref<12x32xbf16, #tpu.memory_space<vmem>>, %arg2: memref<1x32xf32, #tpu.memory_space<vmem>>, %arg3: memref<1x32xf32, #tpu.memory_space<vmem>>, %arg4: memref<32x64xbf16, #tpu.memory_space<vmem>>, %arg5: memref<1x64xf32, #tpu.memory_space<vmem>>, %arg6: memref<64x32xbf16, #tpu.memory_space<vmem>>, %arg7: memref<1x32xf32, #tpu.memory_space<vmem>>, %arg8: memref<12x32xbf16, #tpu.memory_space<vmem>>) attributes {dimension_semantics = [#tpu.dimension_semantics<parallel>], iteration_bounds = array<i64: 1>, scalar_prefetch = 0 : i64, scratch_operands = 0 : i64, tpu.core_type = #tpu.core_type<tc>, window_params = [{transform_indices = @transform_0, window_bounds = array<i64: 12, 32>}, {pipeline_mode = #tpu.pipeline_mode<synchronous>, transform_indices = @transform_1, window_bounds = array<i64: 1, 32>}, {pipeline_mode = #tpu.pipeline_mode<synchronous>, transform_indices = @transform_2, window_bounds = array<i64: 1, 32>}, {pipeline_mode = #tpu.pipeline_mode<synchronous>, transform_indices = @transform_3, window_bounds = array<i64: 32, 64>}, {pipeline_mode = #tpu.pipeline_mode<synchronous>, transform_indices = @transform_4, window_bounds = array<i64: 1, 64>}, {pipeline_mode = #tpu.pipeline_mode<synchronous>, transform_indices = @transform_5, window_bounds = array<i64: 64, 32>}, {pipeline_mode = #tpu.pipeline_mode<synchronous>, transform_indices = @transform_6, window_bounds = array<i64: 1, 32>}, {transform_indices = @transform_7, window_bounds = array<i64: 12, 32>}]} {
    %c0 = arith.constant 0 : index
    %c0_0 = arith.constant 0 : index
    %0 = vector.load %arg1[%c0, %c0_0] : memref<12x32xbf16, #tpu.memory_space<vmem>>, vector<12x32xbf16>
    %1 = arith.extf %0 : vector<12x32xbf16> to vector<12x32xf32>
    %c0_1 = arith.constant 0 : index
    %c0_2 = arith.constant 0 : index
    %2 = vector.load %arg2[%c0_1, %c0_2] : memref<1x32xf32, #tpu.memory_space<vmem>>, vector<1x32xf32>
    %c0_3 = arith.constant 0 : index
    %c0_4 = arith.constant 0 : index
    %3 = vector.load %arg3[%c0_3, %c0_4] : memref<1x32xf32, #tpu.memory_space<vmem>>, vector<1x32xf32>
    %cst = arith.constant dense<0.000000e+00> : vector<12xf32>
    %4 = vector.multi_reduction <add>, %1, %cst [1] : vector<12x32xf32> to vector<12xf32>
    %5 = vector.shape_cast %4 : vector<12xf32> to vector<12x1xf32>
    %cst_5 = arith.constant 3.200000e+01 : f32
    %6 = vector.broadcast %cst_5 : f32 to vector<12x1xf32>
    %7 = arith.divf %5, %6 : vector<12x1xf32>
    %8 = vector.broadcast %7 : vector<12x1xf32> to vector<12x32xf32>
    %9 = arith.subf %1, %8 : vector<12x32xf32>
    %10 = arith.mulf %9, %9 : vector<12x32xf32>
    %cst_6 = arith.constant dense<0.000000e+00> : vector<12xf32>
    %11 = vector.multi_reduction <add>, %10, %cst_6 [1] : vector<12x32xf32> to vector<12xf32>
    %12 = vector.shape_cast %11 : vector<12xf32> to vector<12x1xf32>
    %cst_7 = arith.constant 3.200000e+01 : f32
    %13 = vector.broadcast %cst_7 : f32 to vector<12x1xf32>
    %14 = arith.divf %12, %13 : vector<12x1xf32>
    %15 = vector.broadcast %7 : vector<12x1xf32> to vector<12x32xf32>
    %16 = arith.subf %1, %15 : vector<12x32xf32>
    %cst_8 = arith.constant 9.99999996E-13 : f32
    %17 = vector.broadcast %cst_8 : f32 to vector<12x1xf32>
    %18 = arith.addf %14, %17 : vector<12x1xf32>
    %19 = math.rsqrt %18 : vector<12x1xf32>
    %20 = vector.broadcast %19 : vector<12x1xf32> to vector<12x32xf32>
    %21 = arith.mulf %16, %20 : vector<12x32xf32>
    %22 = vector.broadcast %2 : vector<1x32xf32> to vector<12x32xf32>
    %23 = arith.mulf %21, %22 : vector<12x32xf32>
    %24 = vector.broadcast %3 : vector<1x32xf32> to vector<12x32xf32>
    %25 = arith.addf %23, %24 : vector<12x32xf32>
    %26 = arith.truncf %25 : vector<12x32xf32> to vector<12x32xbf16>
    %c0_9 = arith.constant 0 : index
    %c0_10 = arith.constant 0 : index
    %27 = vector.load %arg4[%c0_9, %c0_10] : memref<32x64xbf16, #tpu.memory_space<vmem>>, vector<32x64xbf16>
    %cst_11 = arith.constant dense<0.000000e+00> : vector<12x64xf32>
    %28 = tpu.matmul %26, %27, %cst_11 {dimension_numbers = #tpu.dot_dimension_numbers<[1], [0], [0], [1], [0, 0, 1, 1], [], []>} : vector<12x32xbf16>, vector<32x64xbf16>, vector<12x64xf32> -> vector<12x64xf32>
    %c0_12 = arith.constant 0 : index
    %c0_13 = arith.constant 0 : index
    %29 = vector.load %arg5[%c0_12, %c0_13] : memref<1x64xf32, #tpu.memory_space<vmem>>, vector<1x64xf32>
    %30 = vector.broadcast %29 : vector<1x64xf32> to vector<12x64xf32>
    %31 = arith.addf %28, %30 : vector<12x64xf32>
    %cst_14 = arith.constant 0.000000e+00 : f32
    %32 = vector.broadcast %cst_14 : f32 to vector<12x64xf32>
    %33 = arith.maximumf %31, %32 : vector<12x64xf32>
    %34 = arith.truncf %33 : vector<12x64xf32> to vector<12x64xbf16>
    %c0_15 = arith.constant 0 : index
    %c0_16 = arith.constant 0 : index
    %35 = vector.load %arg6[%c0_15, %c0_16] : memref<64x32xbf16, #tpu.memory_space<vmem>>, vector<64x32xbf16>
    %cst_17 = arith.constant dense<0.000000e+00> : vector<12x32xf32>
    %36 = tpu.matmul %34, %35, %cst_17 {dimension_numbers = #tpu.dot_dimension_numbers<[1], [0], [0], [1], [0, 0, 1, 1], [], []>} : vector<12x64xbf16>, vector<64x32xbf16>, vector<12x32xf32> -> vector<12x32xf32>
    %37 = arith.addf %1, %36 : vector<12x32xf32>
    %c0_18 = arith.constant 0 : index
    %c0_19 = arith.constant 0 : index
    %38 = vector.load %arg7[%c0_18, %c0_19] : memref<1x32xf32, #tpu.memory_space<vmem>>, vector<1x32xf32>
    %39 = vector.broadcast %38 : vector<1x32xf32> to vector<12x32xf32>
    %40 = arith.addf %37, %39 : vector<12x32xf32>
    %41 = arith.truncf %40 : vector<12x32xf32> to vector<12x32xbf16>
    %c0_20 = arith.constant 0 : index
    %c0_21 = arith.constant 0 : index
    %42 = vector.load %arg8[%c0_20, %c0_21] : memref<12x32xbf16, #tpu.memory_space<vmem>>, vector<12x32xbf16>
    tpu.vector_store %arg8[%c0_20, %c0_21], %41 {strides = array<i32>} : memref<12x32xbf16, #tpu.memory_space<vmem>>, vector<12x32xbf16>,
    return
  }
  func.func @transform_0(%arg0: i32) -> (i32, i32) {
    %c0_i32 = arith.constant 0 : i32
    %c0_i32_0 = arith.constant 0 : i32
    return %arg0, %c0_i32 : i32, i32
  }
  func.func @transform_1(%arg0: i32) -> (i32, i32) {
    %c0_i32 = arith.constant 0 : i32
    %c0_i32_0 = arith.constant 0 : i32
    %c0_i32_1 = arith.constant 0 : i32
    return %c0_i32, %c0_i32_0 : i32, i32
  }
  func.func @transform_2(%arg0: i32) -> (i32, i32) {
    %c0_i32 = arith.constant 0 : i32
    %c0_i32_0 = arith.constant 0 : i32
    %c0_i32_1 = arith.constant 0 : i32
    return %c0_i32, %c0_i32_0 : i32, i32
  }
  func.func @transform_3(%arg0: i32) -> (i32, i32) {
    %c0_i32 = arith.constant 0 : i32
    %c0_i32_0 = arith.constant 0 : i32
    %c0_i32_1 = arith.constant 0 : i32
    return %c0_i32, %c0_i32_0 : i32, i32
  }
  func.func @transform_4(%arg0: i32) -> (i32, i32) {
    %c0_i32 = arith.constant 0 : i32
    %c0_i32_0 = arith.constant 0 : i32
    %c0_i32_1 = arith.constant 0 : i32
    return %c0_i32, %c0_i32_0 : i32, i32
  }
  func.func @transform_5(%arg0: i32) -> (i32, i32) {
    %c0_i32 = arith.constant 0 : i32
    %c0_i32_0 = arith.constant 0 : i32
    %c0_i32_1 = arith.constant 0 : i32
    return %c0_i32, %c0_i32_0 : i32, i32
  }
  func.func @transform_6(%arg0: i32) -> (i32, i32) {
    %c0_i32 = arith.constant 0 : i32
    %c0_i32_0 = arith.constant 0 : i32
    %c0_i32_1 = arith.constant 0 : i32
    return %c0_i32, %c0_i32_0 : i32, i32
  }
  func.func @transform_7(%arg0: i32) -> (i32, i32) {
    %c0_i32 = arith.constant 0 : i32
    %c0_i32_0 = arith.constant 0 : i32
    return %arg0, %c0_i32 : i32, i32
  }
}

module attributes {stable_mosaic.version = 11 : i64} {
  func.func @_ln_kernel(%arg0: i32, %arg1: memref<12x32xbf16, #tpu.memory_space<vmem>>, %arg2: memref<1x32xf32, #tpu.memory_space<vmem>>, %arg3: memref<1x32xf32, #tpu.memory_space<vmem>>, %arg4: memref<12x32xbf16, #tpu.memory_space<vmem>>) attributes {dimension_semantics = [#tpu.dimension_semantics<parallel>], iteration_bounds = array<i64: 1>, scalar_prefetch = 0 : i64, scratch_operands = 0 : i64, tpu.core_type = #tpu.core_type<tc>, window_params = [{transform_indices = @transform_0, window_bounds = array<i64: 12, 32>}, {pipeline_mode = #tpu.pipeline_mode<synchronous>, transform_indices = @transform_1, window_bounds = array<i64: 1, 32>}, {pipeline_mode = #tpu.pipeline_mode<synchronous>, transform_indices = @transform_2, window_bounds = array<i64: 1, 32>}, {transform_indices = @transform_3, window_bounds = array<i64: 12, 32>}]} {
    %c0 = arith.constant 0 : index
    %c0_0 = arith.constant 0 : index
    %0 = vector.load %arg1[%c0, %c0_0] : memref<12x32xbf16, #tpu.memory_space<vmem>>, vector<12x32xbf16>
    %1 = arith.extf %0 : vector<12x32xbf16> to vector<12x32xf32>
    %c0_1 = arith.constant 0 : index
    %c0_2 = arith.constant 0 : index
    %2 = vector.load %arg2[%c0_1, %c0_2] : memref<1x32xf32, #tpu.memory_space<vmem>>, vector<1x32xf32>
    %c0_3 = arith.constant 0 : index
    %c0_4 = arith.constant 0 : index
    %3 = vector.load %arg3[%c0_3, %c0_4] : memref<1x32xf32, #tpu.memory_space<vmem>>, vector<1x32xf32>
    %cst = arith.constant dense<0.000000e+00> : vector<12xf32>
    %4 = vector.multi_reduction <add>, %1, %cst [1] : vector<12x32xf32> to vector<12xf32>
    %5 = vector.shape_cast %4 : vector<12xf32> to vector<12x1xf32>
    %cst_5 = arith.constant 3.200000e+01 : f32
    %6 = vector.broadcast %cst_5 : f32 to vector<12x1xf32>
    %7 = arith.divf %5, %6 : vector<12x1xf32>
    %8 = vector.broadcast %7 : vector<12x1xf32> to vector<12x32xf32>
    %9 = arith.subf %1, %8 : vector<12x32xf32>
    %10 = arith.mulf %9, %9 : vector<12x32xf32>
    %cst_6 = arith.constant dense<0.000000e+00> : vector<12xf32>
    %11 = vector.multi_reduction <add>, %10, %cst_6 [1] : vector<12x32xf32> to vector<12xf32>
    %12 = vector.shape_cast %11 : vector<12xf32> to vector<12x1xf32>
    %cst_7 = arith.constant 3.200000e+01 : f32
    %13 = vector.broadcast %cst_7 : f32 to vector<12x1xf32>
    %14 = arith.divf %12, %13 : vector<12x1xf32>
    %15 = vector.broadcast %7 : vector<12x1xf32> to vector<12x32xf32>
    %16 = arith.subf %1, %15 : vector<12x32xf32>
    %cst_8 = arith.constant 9.99999996E-13 : f32
    %17 = vector.broadcast %cst_8 : f32 to vector<12x1xf32>
    %18 = arith.addf %14, %17 : vector<12x1xf32>
    %19 = math.rsqrt %18 : vector<12x1xf32>
    %20 = vector.broadcast %19 : vector<12x1xf32> to vector<12x32xf32>
    %21 = arith.mulf %16, %20 : vector<12x32xf32>
    %22 = vector.broadcast %2 : vector<1x32xf32> to vector<12x32xf32>
    %23 = arith.mulf %21, %22 : vector<12x32xf32>
    %24 = vector.broadcast %3 : vector<1x32xf32> to vector<12x32xf32>
    %25 = arith.addf %23, %24 : vector<12x32xf32>
    %26 = arith.truncf %25 : vector<12x32xf32> to vector<12x32xbf16>
    %c0_9 = arith.constant 0 : index
    %c0_10 = arith.constant 0 : index
    %27 = vector.load %arg4[%c0_9, %c0_10] : memref<12x32xbf16, #tpu.memory_space<vmem>>, vector<12x32xbf16>
    tpu.vector_store %arg4[%c0_9, %c0_10], %26 {strides = array<i32>} : memref<12x32xbf16, #tpu.memory_space<vmem>>, vector<12x32xbf16>,
    return
  }
  func.func @transform_0(%arg0: i32) -> (i32, i32) {
    %c0_i32 = arith.constant 0 : i32
    %c0_i32_0 = arith.constant 0 : i32
    return %arg0, %c0_i32 : i32, i32
  }
  func.func @transform_1(%arg0: i32) -> (i32, i32) {
    %c0_i32 = arith.constant 0 : i32
    %c0_i32_0 = arith.constant 0 : i32
    %c0_i32_1 = arith.constant 0 : i32
    return %c0_i32, %c0_i32_0 : i32, i32
  }
  func.func @transform_2(%arg0: i32) -> (i32, i32) {
    %c0_i32 = arith.constant 0 : i32
    %c0_i32_0 = arith.constant 0 : i32
    %c0_i32_1 = arith.constant 0 : i32
    return %c0_i32, %c0_i32_0 : i32, i32
  }
  func.func @transform_3(%arg0: i32) -> (i32, i32) {
    %c0_i32 = arith.constant 0 : i32
    %c0_i32_0 = arith.constant 0 : i32
    return %arg0, %c0_i32 : i32, i32
  }
}

module attributes {stable_mosaic.version = 11 : i64} {
  func.func @_len_attn_kernel(%arg0: i32, %arg1: i32, %arg2: memref<2xi32, #tpu.memory_space<smem>>, %arg3: memref<1x6x32xbf16, #tpu.memory_space<vmem>>, %arg4: memref<1x8x64xbf16, #tpu.memory_space<vmem>>, %arg5: memref<1x6x32xbf16, #tpu.memory_space<vmem>>, %arg6: memref<32x32xbf16, #tpu.memory_space<vmem>>, %arg7: memref<1x32xf32, #tpu.memory_space<vmem>>, %arg8: memref<1x6x32xbf16, #tpu.memory_space<vmem>>) attributes {dimension_semantics = [#tpu.dimension_semantics<parallel>, #tpu.dimension_semantics<parallel>], iteration_bounds = array<i64: 2, 1>, scalar_prefetch = 1 : i64, scratch_operands = 0 : i64, tpu.core_type = #tpu.core_type<tc>, window_params = [{transform_indices = @transform_0, window_bounds = array<i64: 1, 6, 32>}, {transform_indices = @transform_1, window_bounds = array<i64: 1, 8, 64>}, {transform_indices = @transform_2, window_bounds = array<i64: 1, 6, 32>}, {pipeline_mode = #tpu.pipeline_mode<synchronous>, transform_indices = @transform_3, window_bounds = array<i64: 32, 32>}, {pipeline_mode = #tpu.pipeline_mode<synchronous>, transform_indices = @transform_4, window_bounds = array<i64: 1, 32>}, {transform_indices = @transform_5, window_bounds = array<i64: 1, 6, 32>}]} {
    %c0 = arith.constant 0 : index
    %c0_0 = arith.constant 0 : index
    %c0_1 = arith.constant 0 : index
    %0 = vector.load %arg4[%c0, %c0_0, %c0_1] : memref<1x8x64xbf16, #tpu.memory_space<vmem>>, vector<1x8x64xbf16>
    %1 = vector.shape_cast %0 : vector<1x8x64xbf16> to vector<8x64xbf16>
    %2 = tpu.iota {dimensions = array<i32: 1>} : vector<6x8xi32>
    %3 = arith.index_cast %arg0 : i32 to index
    %4 = memref.load %arg2[%3] : memref<2xi32, #tpu.memory_space<smem>>
    %5 = vector.broadcast %4 : i32 to vector<6x8xi32>
    %6 = arith.cmpi slt, %2, %5 : vector<6x8xi32>
    %c0_2 = arith.constant 0 : index
    %c0_3 = arith.constant 0 : index
    %c0_4 = arith.constant 0 : index
    %7 = vector.load %arg3[%c0_2, %c0_3, %c0_4] : memref<1x6x32xbf16, #tpu.memory_space<vmem>>, vector<1x6x32xbf16>
    %8 = vector.shape_cast %7 : vector<1x6x32xbf16> to vector<6x32xbf16>
    %9 = vector.extract_strided_slice %1 {offsets = [0, 0], sizes = [8, 32], strides = [1, 1]} : vector<8x64xbf16> to vector<8x32xbf16>
    %10 = vector.extract_strided_slice %1 {offsets = [0, 32], sizes = [8, 32], strides = [1, 1]} : vector<8x64xbf16> to vector<8x32xbf16>
    %c0_5 = arith.constant 0 : index
    %c0_6 = arith.constant 0 : index
    %c0_7 = arith.constant 0 : index
    %11 = vector.load %arg5[%c0_5, %c0_6, %c0_7] : memref<1x6x32xbf16, #tpu.memory_space<vmem>>, vector<1x6x32xbf16>
    %12 = vector.shape_cast %11 : vector<1x6x32xbf16> to vector<6x32xbf16>
    %c0_8 = arith.constant 0 : index
    %c0_9 = arith.constant 0 : index
    %13 = vector.load %arg6[%c0_8, %c0_9] : memref<32x32xbf16, #tpu.memory_space<vmem>>, vector<32x32xbf16>
    %c0_10 = arith.constant 0 : index
    %c0_11 = arith.constant 0 : index
    %14 = vector.load %arg7[%c0_10, %c0_11] : memref<1x32xf32, #tpu.memory_space<vmem>>, vector<1x32xf32>
    %15 = vector.extract_strided_slice %8 {offsets = [0, 0], sizes = [6, 8], strides = [1, 1]} : vector<6x32xbf16> to vector<6x8xbf16>
    %16 = vector.extract_strided_slice %9 {offsets = [0, 0], sizes = [8, 8], strides = [1, 1]} : vector<8x32xbf16> to vector<8x8xbf16>
    %cst = arith.constant dense<0.000000e+00> : vector<6x8xf32>
    %17 = tpu.matmul %15, %16, %cst {dimension_numbers = #tpu.dot_dimension_numbers<[1], [1], [0], [0], [0, 0, 1, 0], [], []>} : vector<6x8xbf16>, vector<8x8xbf16>, vector<6x8xf32> -> vector<6x8xf32>
    %cst_12 = arith.constant -1.000000e+30 : f32
    %18 = vector.broadcast %cst_12 : f32 to vector<6x8xf32>
    %19 = arith.select %6, %17, %18 : vector<6x8xi1>, vector<6x8xf32>
    %cst_13 = arith.constant dense<0xFF800000> : vector<6xf32>
    %20 = vector.multi_reduction <maximumf>, %19, %cst_13 [1] : vector<6x8xf32> to vector<6xf32>
    %21 = vector.shape_cast %20 : vector<6xf32> to vector<6x1xf32>
    %22 = vector.broadcast %21 : vector<6x1xf32> to vector<6x8xf32>
    %23 = arith.subf %19, %22 : vector<6x8xf32>
    %24 = math.exp %23 : vector<6x8xf32>
    %cst_14 = arith.constant dense<0.000000e+00> : vector<6xf32>
    %25 = vector.multi_reduction <add>, %24, %cst_14 [1] : vector<6x8xf32> to vector<6xf32>
    %26 = vector.shape_cast %25 : vector<6xf32> to vector<6x1xf32>
    %27 = tpu.reciprocal %26 {approx = true} : vector<6x1xf32> -> vector<6x1xf32>
    %28 = vector.broadcast %27 : vector<6x1xf32> to vector<6x8xf32>
    %29 = arith.mulf %24, %28 : vector<6x8xf32>
    %30 = arith.truncf %29 : vector<6x8xf32> to vector<6x8xbf16>
    %31 = vector.extract_strided_slice %10 {offsets = [0, 0], sizes = [8, 8], strides = [1, 1]} : vector<8x32xbf16> to vector<8x8xbf16>
    %cst_15 = arith.constant dense<0.000000e+00> : vector<6x8xf32>
    %32 = tpu.matmul %30, %31, %cst_15 {dimension_numbers = #tpu.dot_dimension_numbers<[1], [0], [0], [1], [0, 0, 1, 1], [], []>} : vector<6x8xbf16>, vector<8x8xbf16>, vector<6x8xf32> -> vector<6x8xf32>
    %33 = vector.extract_strided_slice %8 {offsets = [0, 8], sizes = [6, 8], strides = [1, 1]} : vector<6x32xbf16> to vector<6x8xbf16>
    %34 = vector.extract_strided_slice %9 {offsets = [0, 8], sizes = [8, 8], strides = [1, 1]} : vector<8x32xbf16> to vector<8x8xbf16>
    %cst_16 = arith.constant dense<0.000000e+00> : vector<6x8xf32>
    %35 = tpu.matmul %33, %34, %cst_16 {dimension_numbers = #tpu.dot_dimension_numbers<[1], [1], [0], [0], [0, 0, 1, 0], [], []>} : vector<6x8xbf16>, vector<8x8xbf16>, vector<6x8xf32> -> vector<6x8xf32>
    %cst_17 = arith.constant -1.000000e+30 : f32
    %36 = vector.broadcast %cst_17 : f32 to vector<6x8xf32>
    %37 = arith.select %6, %35, %36 : vector<6x8xi1>, vector<6x8xf32>
    %cst_18 = arith.constant dense<0xFF800000> : vector<6xf32>
    %38 = vector.multi_reduction <maximumf>, %37, %cst_18 [1] : vector<6x8xf32> to vector<6xf32>
    %39 = vector.shape_cast %38 : vector<6xf32> to vector<6x1xf32>
    %40 = vector.broadcast %39 : vector<6x1xf32> to vector<6x8xf32>
    %41 = arith.subf %37, %40 : vector<6x8xf32>
    %42 = math.exp %41 : vector<6x8xf32>
    %cst_19 = arith.constant dense<0.000000e+00> : vector<6xf32>
    %43 = vector.multi_reduction <add>, %42, %cst_19 [1] : vector<6x8xf32> to vector<6xf32>
    %44 = vector.shape_cast %43 : vector<6xf32> to vector<6x1xf32>
    %45 = tpu.reciprocal %44 {approx = true} : vector<6x1xf32> -> vector<6x1xf32>
    %46 = vector.broadcast %45 : vector<6x1xf32> to vector<6x8xf32>
    %47 = arith.mulf %42, %46 : vector<6x8xf32>
    %48 = arith.truncf %47 : vector<6x8xf32> to vector<6x8xbf16>
    %49 = vector.extract_strided_slice %10 {offsets = [0, 8], sizes = [8, 8], strides = [1, 1]} : vector<8x32xbf16> to vector<8x8xbf16>
    %cst_20 = arith.constant dense<0.000000e+00> : vector<6x8xf32>
    %50 = tpu.matmul %48, %49, %cst_20 {dimension_numbers = #tpu.dot_dimension_numbers<[1], [0], [0], [1], [0, 0, 1, 1], [], []>} : vector<6x8xbf16>, vector<8x8xbf16>, vector<6x8xf32> -> vector<6x8xf32>
    %51 = vector.extract_strided_slice %8 {offsets = [0, 16], sizes = [6, 8], strides = [1, 1]} : vector<6x32xbf16> to vector<6x8xbf16>
    %52 = vector.extract_strided_slice %9 {offsets = [0, 16], sizes = [8, 8], strides = [1, 1]} : vector<8x32xbf16> to vector<8x8xbf16>
    %cst_21 = arith.constant dense<0.000000e+00> : vector<6x8xf32>
    %53 = tpu.matmul %51, %52, %cst_21 {dimension_numbers = #tpu.dot_dimension_numbers<[1], [1], [0], [0], [0, 0, 1, 0], [], []>} : vector<6x8xbf16>, vector<8x8xbf16>, vector<6x8xf32> -> vector<6x8xf32>
    %cst_22 = arith.constant -1.000000e+30 : f32
    %54 = vector.broadcast %cst_22 : f32 to vector<6x8xf32>
    %55 = arith.select %6, %53, %54 : vector<6x8xi1>, vector<6x8xf32>
    %cst_23 = arith.constant dense<0xFF800000> : vector<6xf32>
    %56 = vector.multi_reduction <maximumf>, %55, %cst_23 [1] : vector<6x8xf32> to vector<6xf32>
    %57 = vector.shape_cast %56 : vector<6xf32> to vector<6x1xf32>
    %58 = vector.broadcast %57 : vector<6x1xf32> to vector<6x8xf32>
    %59 = arith.subf %55, %58 : vector<6x8xf32>
    %60 = math.exp %59 : vector<6x8xf32>
    %cst_24 = arith.constant dense<0.000000e+00> : vector<6xf32>
    %61 = vector.multi_reduction <add>, %60, %cst_24 [1] : vector<6x8xf32> to vector<6xf32>
    %62 = vector.shape_cast %61 : vector<6xf32> to vector<6x1xf32>
    %63 = tpu.reciprocal %62 {approx = true} : vector<6x1xf32> -> vector<6x1xf32>
    %64 = vector.broadcast %63 : vector<6x1xf32> to vector<6x8xf32>
    %65 = arith.mulf %60, %64 : vector<6x8xf32>
    %66 = arith.truncf %65 : vector<6x8xf32> to vector<6x8xbf16>
    %67 = vector.extract_strided_slice %10 {offsets = [0, 16], sizes = [8, 8], strides = [1, 1]} : vector<8x32xbf16> to vector<8x8xbf16>
    %cst_25 = arith.constant dense<0.000000e+00> : vector<6x8xf32>
    %68 = tpu.matmul %66, %67, %cst_25 {dimension_numbers = #tpu.dot_dimension_numbers<[1], [0], [0], [1], [0, 0, 1, 1], [], []>} : vector<6x8xbf16>, vector<8x8xbf16>, vector<6x8xf32> -> vector<6x8xf32>
    %69 = vector.extract_strided_slice %8 {offsets = [0, 24], sizes = [6, 8], strides = [1, 1]} : vector<6x32xbf16> to vector<6x8xbf16>
    %70 = vector.extract_strided_slice %9 {offsets = [0, 24], sizes = [8, 8], strides = [1, 1]} : vector<8x32xbf16> to vector<8x8xbf16>
    %cst_26 = arith.constant dense<0.000000e+00> : vector<6x8xf32>
    %71 = tpu.matmul %69, %70, %cst_26 {dimension_numbers = #tpu.dot_dimension_numbers<[1], [1], [0], [0], [0, 0, 1, 0], [], []>} : vector<6x8xbf16>, vector<8x8xbf16>, vector<6x8xf32> -> vector<6x8xf32>
    %cst_27 = arith.constant -1.000000e+30 : f32
    %72 = vector.broadcast %cst_27 : f32 to vector<6x8xf32>
    %73 = arith.select %6, %71, %72 : vector<6x8xi1>, vector<6x8xf32>
    %cst_28 = arith.constant dense<0xFF800000> : vector<6xf32>
    %74 = vector.multi_reduction <maximumf>, %73, %cst_28 [1] : vector<6x8xf32> to vector<6xf32>
    %75 = vector.shape_cast %74 : vector<6xf32> to vector<6x1xf32>
    %76 = vector.broadcast %75 : vector<6x1xf32> to vector<6x8xf32>
    %77 = arith.subf %73, %76 : vector<6x8xf32>
    %78 = math.exp %77 : vector<6x8xf32>
    %cst_29 = arith.constant dense<0.000000e+00> : vector<6xf32>
    %79 = vector.multi_reduction <add>, %78, %cst_29 [1] : vector<6x8xf32> to vector<6xf32>
    %80 = vector.shape_cast %79 : vector<6xf32> to vector<6x1xf32>
    %81 = tpu.reciprocal %80 {approx = true} : vector<6x1xf32> -> vector<6x1xf32>
    %82 = vector.broadcast %81 : vector<6x1xf32> to vector<6x8xf32>
    %83 = arith.mulf %78, %82 : vector<6x8xf32>
    %84 = arith.truncf %83 : vector<6x8xf32> to vector<6x8xbf16>
    %85 = vector.extract_strided_slice %10 {offsets = [0, 24], sizes = [8, 8], strides = [1, 1]} : vector<8x32xbf16> to vector<8x8xbf16>
    %cst_30 = arith.constant dense<0.000000e+00> : vector<6x8xf32>
    %86 = tpu.matmul %84, %85, %cst_30 {dimension_numbers = #tpu.dot_dimension_numbers<[1], [0], [0], [1], [0, 0, 1, 1], [], []>} : vector<6x8xbf16>, vector<8x8xbf16>, vector<6x8xf32> -> vector<6x8xf32>
    %87 = tpu.concatenate %32, %50, %68, %86 in 1 : vector<6x8xf32>, vector<6x8xf32>, vector<6x8xf32>, vector<6x8xf32> -> vector<6x32xf32>
    %88 = arith.truncf %87 : vector<6x32xf32> to vector<6x32xbf16>
    %89 = arith.extf %12 : vector<6x32xbf16> to vector<6x32xf32>
    %cst_31 = arith.constant dense<0.000000e+00> : vector<6x32xf32>
    %90 = tpu.matmul %88, %13, %cst_31 {dimension_numbers = #tpu.dot_dimension_numbers<[1], [0], [0], [1], [0, 0, 1, 1], [], []>} : vector<6x32xbf16>, vector<32x32xbf16>, vector<6x32xf32> -> vector<6x32xf32>
    %91 = arith.addf %89, %90 : vector<6x32xf32>
    %92 = vector.broadcast %14 : vector<1x32xf32> to vector<6x32xf32>
    %93 = arith.addf %91, %92 : vector<6x32xf32>
    %94 = arith.truncf %93 : vector<6x32xf32> to vector<6x32xbf16>
    %c0_32 = arith.constant 0 : index
    %c0_33 = arith.constant 0 : index
    %c0_34 = arith.constant 0 : index
    %95 = vector.load %arg8[%c0_32, %c0_33, %c0_34] : memref<1x6x32xbf16, #tpu.memory_space<vmem>>, vector<1x6x32xbf16>
    %96 = vector.shape_cast %95 : vector<1x6x32xbf16> to vector<6x32xbf16>
    %97 = vector.shape_cast %94 : vector<6x32xbf16> to vector<1x6x32xbf16>
    tpu.vector_store %arg8[%c0_32, %c0_33, %c0_34], %97 {strides = array<i32>} : memref<1x6x32xbf16, #tpu.memory_space<vmem>>, vector<1x6x32xbf16>,
    return
  }
  func.func @transform_0(%arg0: i32, %arg1: i32, %arg2: memref<2xi32, #tpu.memory_space<smem>>) -> (i32, i32, i32) {
    %c0_i32 = arith.constant 0 : i32
    %c0_i32_0 = arith.constant 0 : i32
    return %arg0, %arg1, %c0_i32 : i32, i32, i32
  }
  func.func @transform_1(%arg0: i32, %arg1: i32, %arg2: memref<2xi32, #tpu.memory_space<smem>>) -> (i32, i32, i32) {
    %c0_i32 = arith.constant 0 : i32
    %c0_i32_0 = arith.constant 0 : i32
    %c0_i32_1 = arith.constant 0 : i32
    return %arg0, %c0_i32, %c0_i32_0 : i32, i32, i32
  }
  func.func @transform_2(%arg0: i32, %arg1: i32, %arg2: memref<2xi32, #tpu.memory_space<smem>>) -> (i32, i32, i32) {
    %c0_i32 = arith.constant 0 : i32
    %c0_i32_0 = arith.constant 0 : i32
    return %arg0, %arg1, %c0_i32 : i32, i32, i32
  }
  func.func @transform_3(%arg0: i32, %arg1: i32, %arg2: memref<2xi32, #tpu.memory_space<smem>>) -> (i32, i32) {
    %c0_i32 = arith.constant 0 : i32
    %c0_i32_0 = arith.constant 0 : i32
    %c0_i32_1 = arith.constant 0 : i32
    return %c0_i32, %c0_i32_0 : i32, i32
  }
  func.func @transform_4(%arg0: i32, %arg1: i32, %arg2: memref<2xi32, #tpu.memory_space<smem>>) -> (i32, i32) {
    %c0_i32 = arith.constant 0 : i32
    %c0_i32_0 = arith.constant 0 : i32
    %c0_i32_1 = arith.constant 0 : i32
    return %c0_i32, %c0_i32_0 : i32, i32
  }
  func.func @transform_5(%arg0: i32, %arg1: i32, %arg2: memref<2xi32, #tpu.memory_space<smem>>) -> (i32, i32, i32) {
    %c0_i32 = arith.constant 0 : i32
    %c0_i32_0 = arith.constant 0 : i32
    return %arg0, %arg1, %c0_i32 : i32, i32, i32
  }
}

module attributes {stable_mosaic.version = 11 : i64} {
  func.func @_proj_loss_kernel(%arg0: i32, %arg1: i32, %arg2: memref<12x32xbf16, #tpu.memory_space<vmem>>, %arg3: memref<32x17xbf16, #tpu.memory_space<vmem>>, %arg4: memref<1x17xf32, #tpu.memory_space<vmem>>, %arg5: memref<12x1xi32, #tpu.memory_space<vmem>>, %arg6: memref<12x1xf32, #tpu.memory_space<vmem>>, %arg7: memref<12x1xi32, #tpu.memory_space<vmem>>, %arg8: memref<12x1xf32, #tpu.memory_space<vmem>>, %arg9: memref<12x1xf32, #tpu.memory_space<vmem>>, %arg10: memref<12x1xf32, #tpu.memory_space<vmem>>, %arg11: memref<12x1xf32, #tpu.memory_space<vmem>>, %arg12: memref<12x1xf32, #tpu.memory_space<vmem>>, %arg13: memref<12x1xi32, #tpu.memory_space<vmem>>) attributes {dimension_semantics = [#tpu.dimension_semantics<parallel>, #tpu.dimension_semantics<arbitrary>], iteration_bounds = array<i64: 1, 1>, scalar_prefetch = 0 : i64, scratch_operands = 6 : i64, tpu.core_type = #tpu.core_type<tc>, window_params = [{transform_indices = @transform_0, window_bounds = array<i64: 12, 32>}, {transform_indices = @transform_1, window_bounds = array<i64: 32, 17>}, {transform_indices = @transform_2, window_bounds = array<i64: 1, 17>}, {transform_indices = @transform_3, window_bounds = array<i64: 12, 1>}, {transform_indices = @transform_4, window_bounds = array<i64: 12, 1>}, {transform_indices = @transform_5, window_bounds = array<i64: 12, 1>}]} {
    %c0_i32 = arith.constant 0 : i32
    %0 = arith.cmpi eq, %arg1, %c0_i32 : i32
    %1 = arith.extui %0 : i1 to i32
    %c0_i32_0 = arith.constant 0 : i32
    %2 = arith.cmpi ne, %1, %c0_i32_0 : i32
    scf.if %2 {
      %cst_48 = arith.constant 0xFF800000 : f32
      %68 = vector.broadcast %cst_48 : f32 to vector<12x1xf32>
      %c0_49 = arith.constant 0 : index
      %c0_50 = arith.constant 0 : index
      %69 = vector.load %arg8[%c0_49, %c0_50] : memref<12x1xf32, #tpu.memory_space<vmem>>, vector<12x1xf32>
      tpu.vector_store %arg8[%c0_49, %c0_50], %68 {strides = array<i32>} : memref<12x1xf32, #tpu.memory_space<vmem>>, vector<12x1xf32>,
      %cst_51 = arith.constant 0.000000e+00 : f32
      %70 = vector.broadcast %cst_51 : f32 to vector<12x1xf32>
      %c0_52 = arith.constant 0 : index
      %c0_53 = arith.constant 0 : index
      %71 = vector.load %arg9[%c0_52, %c0_53] : memref<12x1xf32, #tpu.memory_space<vmem>>, vector<12x1xf32>
      tpu.vector_store %arg9[%c0_52, %c0_53], %70 {strides = array<i32>} : memref<12x1xf32, #tpu.memory_space<vmem>>, vector<12x1xf32>,
      %cst_54 = arith.constant 0.000000e+00 : f32
      %72 = vector.broadcast %cst_54 : f32 to vector<12x1xf32>
      %c0_55 = arith.constant 0 : index
      %c0_56 = arith.constant 0 : index
      %73 = vector.load %arg10[%c0_55, %c0_56] : memref<12x1xf32, #tpu.memory_space<vmem>>, vector<12x1xf32>
      tpu.vector_store %arg10[%c0_55, %c0_56], %72 {strides = array<i32>} : memref<12x1xf32, #tpu.memory_space<vmem>>, vector<12x1xf32>,
      %cst_57 = arith.constant 0.000000e+00 : f32
      %74 = vector.broadcast %cst_57 : f32 to vector<12x1xf32>
      %c0_58 = arith.constant 0 : index
      %c0_59 = arith.constant 0 : index
      %75 = vector.load %arg11[%c0_58, %c0_59] : memref<12x1xf32, #tpu.memory_space<vmem>>, vector<12x1xf32>
      tpu.vector_store %arg11[%c0_58, %c0_59], %74 {strides = array<i32>} : memref<12x1xf32, #tpu.memory_space<vmem>>, vector<12x1xf32>,
      %cst_60 = arith.constant 0xFF800000 : f32
      %76 = vector.broadcast %cst_60 : f32 to vector<12x1xf32>
      %c0_61 = arith.constant 0 : index
      %c0_62 = arith.constant 0 : index
      %77 = vector.load %arg12[%c0_61, %c0_62] : memref<12x1xf32, #tpu.memory_space<vmem>>, vector<12x1xf32>
      tpu.vector_store %arg12[%c0_61, %c0_62], %76 {strides = array<i32>} : memref<12x1xf32, #tpu.memory_space<vmem>>, vector<12x1xf32>,
      %c0_i32_63 = arith.constant 0 : i32
      %78 = vector.broadcast %c0_i32_63 : i32 to vector<12x1xi32>
      %c0_64 = arith.constant 0 : index
      %c0_65 = arith.constant 0 : index
      %79 = vector.load %arg13[%c0_64, %c0_65] : memref<12x1xi32, #tpu.memory_space<vmem>>, vector<12x1xi32>
      tpu.vector_store %arg13[%c0_64, %c0_65], %78 {strides = array<i32>} : memref<12x1xi32, #tpu.memory_space<vmem>>, vector<12x1xi32>,
    } else {
    }
    %c0 = arith.constant 0 : index
    %c0_1 = arith.constant 0 : index
    %3 = vector.load %arg2[%c0, %c0_1] : memref<12x32xbf16, #tpu.memory_space<vmem>>, vector<12x32xbf16>
    %c0_2 = arith.constant 0 : index
    %c0_3 = arith.constant 0 : index
    %4 = vector.load %arg3[%c0_2, %c0_3] : memref<32x17xbf16, #tpu.memory_space<vmem>>, vector<32x17xbf16>
    %cst = arith.constant dense<0.000000e+00> : vector<12x17xf32>
    %5 = tpu.matmul %3, %4, %cst {dimension_numbers = #tpu.dot_dimension_numbers<[1], [0], [0], [1], [0, 0, 1, 1], [], []>} : vector<12x32xbf16>, vector<32x17xbf16>, vector<12x17xf32> -> vector<12x17xf32>
    %c0_4 = arith.constant 0 : index
    %c0_5 = arith.constant 0 : index
    %6 = vector.load %arg4[%c0_4, %c0_5] : memref<1x17xf32, #tpu.memory_space<vmem>>, vector<1x17xf32>
    %7 = vector.broadcast %6 : vector<1x17xf32> to vector<12x17xf32>
    %8 = arith.addf %5, %7 : vector<12x17xf32>
    %c17_i32 = arith.constant 17 : i32
    %9 = arith.muli %arg1, %c17_i32 : i32
    %10 = tpu.iota {dimensions = array<i32: 1>} : vector<12x17xi32>
    %11 = vector.broadcast %9 : i32 to vector<12x17xi32>
    %12 = arith.addi %11, %10 : vector<12x17xi32>
    %c17_i32_6 = arith.constant 17 : i32
    %13 = vector.broadcast %c17_i32_6 : i32 to vector<12x17xi32>
    %14 = arith.cmpi slt, %12, %13 : vector<12x17xi32>
    %cst_7 = arith.constant 0xFF800000 : f32
    %15 = vector.broadcast %cst_7 : f32 to vector<12x17xf32>
    %16 = arith.select %14, %8, %15 : vector<12x17xi1>, vector<12x17xf32>
    %cst_8 = arith.constant dense<0xFF800000> : vector<12xf32>
    %17 = vector.multi_reduction <maximumf>, %16, %cst_8 [1] : vector<12x17xf32> to vector<12xf32>
    %18 = vector.shape_cast %17 : vector<12xf32> to vector<12x1xf32>
    %c0_9 = arith.constant 0 : index
    %c0_10 = arith.constant 0 : index
    %19 = vector.load %arg8[%c0_9, %c0_10] : memref<12x1xf32, #tpu.memory_space<vmem>>, vector<12x1xf32>
    %20 = arith.maximumf %19, %18 : vector<12x1xf32>
    %c0_11 = arith.constant 0 : index
    %c0_12 = arith.constant 0 : index
    %21 = vector.load %arg8[%c0_11, %c0_12] : memref<12x1xf32, #tpu.memory_space<vmem>>, vector<12x1xf32>
    %22 = arith.subf %21, %20 : vector<12x1xf32>
    %23 = math.exp %22 : vector<12x1xf32>
    %c0_13 = arith.constant 0 : index
    %c0_14 = arith.constant 0 : index
    %24 = vector.load %arg9[%c0_13, %c0_14] : memref<12x1xf32, #tpu.memory_space<vmem>>, vector<12x1xf32>
    %25 = arith.mulf %23, %24 : vector<12x1xf32>
    %26 = vector.broadcast %20 : vector<12x1xf32> to vector<12x17xf32>
    %27 = arith.subf %16, %26 : vector<12x17xf32>
    %28 = math.exp %27 : vector<12x17xf32>
    %cst_15 = arith.constant dense<0.000000e+00> : vector<12xf32>
    %29 = vector.multi_reduction <add>, %28, %cst_15 [1] : vector<12x17xf32> to vector<12xf32>
    %30 = vector.shape_cast %29 : vector<12xf32> to vector<12x1xf32>
    %31 = arith.addf %25, %30 : vector<12x1xf32>
    %c0_16 = arith.constant 0 : index
    %c0_17 = arith.constant 0 : index
    %32 = vector.load %arg9[%c0_16, %c0_17] : memref<12x1xf32, #tpu.memory_space<vmem>>, vector<12x1xf32>
    tpu.vector_store %arg9[%c0_16, %c0_17], %31 {strides = array<i32>} : memref<12x1xf32, #tpu.memory_space<vmem>>, vector<12x1xf32>,
    %c0_18 = arith.constant 0 : index
    %c0_19 = arith.constant 0 : index
    %33 = vector.load %arg8[%c0_18, %c0_19] : memref<12x1xf32, #tpu.memory_space<vmem>>, vector<12x1xf32>
    tpu.vector_store %arg8[%c0_18, %c0_19], %20 {strides = array<i32>} : memref<12x1xf32, #tpu.memory_space<vmem>>, vector<12x1xf32>,
    %c0_20 = arith.constant 0 : index
    %c0_21 = arith.constant 0 : index
    %34 = vector.load %arg10[%c0_20, %c0_21] : memref<12x1xf32, #tpu.memory_space<vmem>>, vector<12x1xf32>
    %cst_22 = arith.constant 0.000000e+00 : f32
    %35 = vector.broadcast %cst_22 : f32 to vector<12x17xf32>
    %36 = arith.select %14, %16, %35 : vector<12x17xi1>, vector<12x17xf32>
    %cst_23 = arith.constant dense<0.000000e+00> : vector<12xf32>
    %37 = vector.multi_reduction <add>, %36, %cst_23 [1] : vector<12x17xf32> to vector<12xf32>
    %38 = vector.shape_cast %37 : vector<12xf32> to vector<12x1xf32>
    %39 = arith.addf %34, %38 : vector<12x1xf32>
    %c0_24 = arith.constant 0 : index
    %c0_25 = arith.constant 0 : index
    %40 = vector.load %arg10[%c0_24, %c0_25] : memref<12x1xf32, #tpu.memory_space<vmem>>, vector<12x1xf32>
    tpu.vector_store %arg10[%c0_24, %c0_25], %39 {strides = array<i32>} : memref<12x1xf32, #tpu.memory_space<vmem>>, vector<12x1xf32>,
    %c0_26 = arith.constant 0 : index
    %c0_27 = arith.constant 0 : index
    %41 = vector.load %arg5[%c0_26, %c0_27] : memref<12x1xi32, #tpu.memory_space<vmem>>, vector<12x1xi32>
    %c0_28 = arith.constant 0 : index
    %c0_29 = arith.constant 0 : index
    %42 = vector.load %arg11[%c0_28, %c0_29] : memref<12x1xf32, #tpu.memory_space<vmem>>, vector<12x1xf32>
    %43 = vector.broadcast %41 : vector<12x1xi32> to vector<12x17xi32>
    %44 = arith.cmpi eq, %12, %43 : vector<12x17xi32>
    %cst_30 = arith.constant 0.000000e+00 : f32
    %45 = vector.broadcast %cst_30 : f32 to vector<12x17xf32>
    %46 = arith.select %44, %16, %45 : vector<12x17xi1>, vector<12x17xf32>
    %cst_31 = arith.constant dense<0.000000e+00> : vector<12xf32>
    %47 = vector.multi_reduction <add>, %46, %cst_31 [1] : vector<12x17xf32> to vector<12xf32>
    %48 = vector.shape_cast %47 : vector<12xf32> to vector<12x1xf32>
    %49 = arith.addf %42, %48 : vector<12x1xf32>
    %c0_32 = arith.constant 0 : index
    %c0_33 = arith.constant 0 : index
    %50 = vector.load %arg11[%c0_32, %c0_33] : memref<12x1xf32, #tpu.memory_space<vmem>>, vector<12x1xf32>
    tpu.vector_store %arg11[%c0_32, %c0_33], %49 {strides = array<i32>} : memref<12x1xf32, #tpu.memory_space<vmem>>, vector<12x1xf32>,
    %51 = vector.broadcast %18 : vector<12x1xf32> to vector<12x17xf32>
    %52 = arith.cmpf oeq, %16, %51 : vector<12x17xf32>
    %c17_i32_34 = arith.constant 17 : i32
    %53 = vector.broadcast %c17_i32_34 : i32 to vector<12x17xi32>
    %54 = arith.select %52, %12, %53 : vector<12x17xi1>, vector<12x17xi32>
    %cst_35 = arith.constant dense<2147483647> : vector<12xi32>
    %55 = vector.multi_reduction <minsi>, %54, %cst_35 [1] : vector<12x17xi32> to vector<12xi32>
    %56 = vector.shape_cast %55 : vector<12xi32> to vector<12x1xi32>
    %c0_36 = arith.constant 0 : index
    %c0_37 = arith.constant 0 : index
    %57 = vector.load %arg12[%c0_36, %c0_37] : memref<12x1xf32, #tpu.memory_space<vmem>>, vector<12x1xf32>
    %58 = arith.cmpf ogt, %18, %57 : vector<12x1xf32>
    %c0_38 = arith.constant 0 : index
    %c0_39 = arith.constant 0 : index
    %59 = vector.load %arg13[%c0_38, %c0_39] : memref<12x1xi32, #tpu.memory_space<vmem>>, vector<12x1xi32>
    %60 = arith.select %58, %56, %59 : vector<12x1xi1>, vector<12x1xi32>
    %c0_40 = arith.constant 0 : index
    %c0_41 = arith.constant 0 : index
    %61 = vector.load %arg13[%c0_40, %c0_41] : memref<12x1xi32, #tpu.memory_space<vmem>>, vector<12x1xi32>
    tpu.vector_store %arg13[%c0_40, %c0_41], %60 {strides = array<i32>} : memref<12x1xi32, #tpu.memory_space<vmem>>, vector<12x1xi32>,
    %c0_42 = arith.constant 0 : index
    %c0_43 = arith.constant 0 : index
    %62 = vector.load %arg12[%c0_42, %c0_43] : memref<12x1xf32, #tpu.memory_space<vmem>>, vector<12x1xf32>
    %63 = arith.select %58, %18, %62 : vector<12x1xi1>, vector<12x1xf32>
    %c0_44 = arith.constant 0 : index
    %c0_45 = arith.constant 0 : index
    %64 = vector.load %arg12[%c0_44, %c0_45] : memref<12x1xf32, #tpu.memory_space<vmem>>, vector<12x1xf32>
    tpu.vector_store %arg12[%c0_44, %c0_45], %63 {strides = array<i32>} : memref<12x1xf32, #tpu.memory_space<vmem>>, vector<12x1xf32>,
    %c0_i32_46 = arith.constant 0 : i32
    %65 = arith.cmpi eq, %arg1, %c0_i32_46 : i32
    %66 = arith.extui %65 : i1 to i32
    %c0_i32_47 = arith.constant 0 : i32
    %67 = arith.cmpi ne, %66, %c0_i32_47 : i32
    scf.if %67 {
      %c0_48 = arith.constant 0 : index
      %c0_49 = arith.constant 0 : index
      %68 = vector.load %arg8[%c0_48, %c0_49] : memref<12x1xf32, #tpu.memory_space<vmem>>, vector<12x1xf32>
      %c0_50 = arith.constant 0 : index
      %c0_51 = arith.constant 0 : index
      %69 = vector.load %arg9[%c0_50, %c0_51] : memref<12x1xf32, #tpu.memory_space<vmem>>, vector<12x1xf32>
      %70 = math.log %69 : vector<12x1xf32>
      %71 = arith.addf %68, %70 : vector<12x1xf32>
      %c0_52 = arith.constant 0 : index
      %c0_53 = arith.constant 0 : index
      %72 = vector.load %arg11[%c0_52, %c0_53] : memref<12x1xf32, #tpu.memory_space<vmem>>, vector<12x1xf32>
      %73 = arith.subf %72, %71 : vector<12x1xf32>
      %c0_54 = arith.constant 0 : index
      %c0_55 = arith.constant 0 : index
      %74 = vector.load %arg10[%c0_54, %c0_55] : memref<12x1xf32, #tpu.memory_space<vmem>>, vector<12x1xf32>
      %cst_56 = arith.constant 1.700000e+01 : f32
      %75 = vector.broadcast %cst_56 : f32 to vector<12x1xf32>
      %76 = arith.mulf %75, %71 : vector<12x1xf32>
      %77 = arith.subf %74, %76 : vector<12x1xf32>
      %cst_57 = arith.constant 0.899999976 : f32
      %78 = vector.broadcast %cst_57 : f32 to vector<12x1xf32>
      %79 = arith.mulf %78, %73 : vector<12x1xf32>
      %cst_58 = arith.constant -0.602341831 : f32
      %80 = vector.broadcast %cst_58 : f32 to vector<12x1xf32>
      %81 = arith.subf %80, %79 : vector<12x1xf32>
      %82 = arith.subf %77, %73 : vector<12x1xf32>
      %cst_59 = arith.constant 6.250000e-03 : f32
      %83 = vector.broadcast %cst_59 : f32 to vector<12x1xf32>
      %84 = arith.mulf %83, %82 : vector<12x1xf32>
      %85 = arith.subf %81, %84 : vector<12x1xf32>
      %c-1_i32 = arith.constant -1 : i32
      %86 = vector.broadcast %c-1_i32 : i32 to vector<12x1xi32>
      %87 = arith.cmpi eq, %41, %86 : vector<12x1xi32>
      %cst_60 = arith.constant 0.000000e+00 : f32
      %88 = vector.broadcast %cst_60 : f32 to vector<12x1xf32>
      %89 = arith.select %87, %88, %85 : vector<12x1xi1>, vector<12x1xf32>
      %c0_61 = arith.constant 0 : index
      %c0_62 = arith.constant 0 : index
      %90 = vector.load %arg6[%c0_61, %c0_62] : memref<12x1xf32, #tpu.memory_space<vmem>>, vector<12x1xf32>
      tpu.vector_store %arg6[%c0_61, %c0_62], %89 {strides = array<i32>} : memref<12x1xf32, #tpu.memory_space<vmem>>, vector<12x1xf32>,
      %c0_63 = arith.constant 0 : index
      %c0_64 = arith.constant 0 : index
      %91 = vector.load %arg13[%c0_63, %c0_64] : memref<12x1xi32, #tpu.memory_space<vmem>>, vector<12x1xi32>
      %c0_65 = arith.constant 0 : index
      %c0_66 = arith.constant 0 : index
      %92 = vector.load %arg7[%c0_65, %c0_66] : memref<12x1xi32, #tpu.memory_space<vmem>>, vector<12x1xi32>
      tpu.vector_store %arg7[%c0_65, %c0_66], %91 {strides = array<i32>} : memref<12x1xi32, #tpu.memory_space<vmem>>, vector<12x1xi32>,
    } else {
    }
    return
  }
  func.func @transform_0(%arg0: i32, %arg1: i32) -> (i32, i32) {
    %c0_i32 = arith.constant 0 : i32
    %c0_i32_0 = arith.constant 0 : i32
    return %arg0, %c0_i32 : i32, i32
  }
  func.func @transform_1(%arg0: i32, %arg1: i32) -> (i32, i32) {
    %c0_i32 = arith.constant 0 : i32
    %c0_i32_0 = arith.constant 0 : i32
    return %c0_i32, %arg1 : i32, i32
  }
  func.func @transform_2(%arg0: i32, %arg1: i32) -> (i32, i32) {
    %c0_i32 = arith.constant 0 : i32
    %c0_i32_0 = arith.constant 0 : i32
    return %c0_i32, %arg1 : i32, i32
  }
  func.func @transform_3(%arg0: i32, %arg1: i32) -> (i32, i32) {
    %c0_i32 = arith.constant 0 : i32
    %c0_i32_0 = arith.constant 0 : i32
    return %arg0, %c0_i32 : i32, i32
  }
  func.func @transform_4(%arg0: i32, %arg1: i32) -> (i32, i32) {
    %c0_i32 = arith.constant 0 : i32
    %c0_i32_0 = arith.constant 0 : i32
    return %arg0, %c0_i32 : i32, i32
  }
  func.func @transform_5(%arg0: i32, %arg1: i32) -> (i32, i32) {
    %c0_i32 = arith.constant 0 : i32
    %c0_i32_0 = arith.constant 0 : i32
    return %arg0, %c0_i32 : i32, i32
  }
}

</mosaic_0001>

<llo_original>
// kernel: _lambda_.28
$region0: #{_lambda_.28}
  #allocation0 [shape = 'u32[]', space=smem, size = 0x4, offset = 0x4, fixed_abs, tag = 'smem constant byte address 0x4 - core index']
  #allocation1 [shape = 'u32[144,128]{1,0:T(1,128)}', space=vmem, size = 0x12000, scoped, tag = 'internal scratch']
  %s0 = inlined_call_operand.vmem [shape: bf16[12,32], index: 0, kind: input, shape index: {}]
  %s1 = inlined_call_operand.vmem [shape: f32[1,32], index: 1, kind: input, shape index: {}]
  %s2 = inlined_call_operand.vmem [shape: f32[1,32], index: 2, kind: input, shape index: {}]
  %s3 = inlined_call_operand.vmem [shape: bf16[32,32], index: 3, kind: input, shape index: {}]
  %s4 = inlined_call_operand.vmem [shape: f32[1,32], index: 4, kind: input, shape index: {}]
  %s5 = inlined_call_operand.vmem [shape: bf16[32,64], index: 5, kind: input, shape index: {}]
  %s6 = inlined_call_operand.vmem [shape: f32[1,64], index: 6, kind: input, shape index: {}]
  %s7 = inlined_call_operand.vmem [shape: bf16[12,32], index: 7, kind: output, shape index: {0}]
  %s8 = inlined_call_operand.vmem [shape: bf16[12,64], index: 8, kind: output, shape index: {1}]
  %9 = xla_tuple %s7, %s8
  %s10 = sld [smem:[#allocation0]]
  $region46: #{_lambda_.28} parent=0
    _
  %s12 = ssub.s32 1, %s10
  %s13 = scalar_select 0, %s12, %s10
  // Predicated region
  $region2: #{_lambda_.28} parent=0 // pred_check
    _
  $region3: #{_lambda_.28} parent=0 // pred_check_branch
    %15 = sbr.rel (0) target = $region5
  $region4: #{_lambda_.28} parent=0 // pred_region
    _
  $region5: #{_lambda_.28} parent=0 // pred_fallthru
    _
  // Predicated region
  $region6: #{_lambda_.28} parent=0 // pred_check
    _
  $region7: #{_lambda_.28} parent=0 // pred_check_branch
    %17 = sbr.rel (0) target = $region9
  $region8: #{_lambda_.28} parent=0 // pred_region
    _
  $region9: #{_lambda_.28} parent=0 // pred_fallthru
    _
  // Predicated region
  $region10: #{_lambda_.28} parent=0 // pred_check
    _
  $region11: #{_lambda_.28} parent=0 // pred_check_branch
    %19 = sbr.rel (0) target = $region13
  $region12: #{_lambda_.28} parent=0 // pred_region
    _
  $region13: #{_lambda_.28} parent=0 // pred_fallthru
    _
  // Predicated region
  $region14: #{_lambda_.28} parent=0 // pred_check
    _
  $region15: #{_lambda_.28} parent=0 // pred_check_branch
    %21 = sbr.rel (0) target = $region17
  $region16: #{_lambda_.28} parent=0 // pred_region
    _
  $region17: #{_lambda_.28} parent=0 // pred_fallthru
    _
  // Predicated region
  $region18: #{_lambda_.28} parent=0 // pred_check
    _
  $region19: #{_lambda_.28} parent=0 // pred_check_branch
    %23 = sbr.rel (0) target = $region21
  $region20: #{_lambda_.28} parent=0 // pred_region
    _
  $region21: #{_lambda_.28} parent=0 // pred_fallthru
    _
  // Predicated region
  $region22: #{_lambda_.28} parent=0 // pred_check
    _
  $region23: #{_lambda_.28} parent=0 // pred_check_branch
    %25 = sbr.rel (0) target = $region25
  $region24: #{_lambda_.28} parent=0 // pred_region
    _
  $region25: #{_lambda_.28} parent=0 // pred_fallthru
    _
  // Predicated region
  $region26: #{_lambda_.28} parent=0 // pred_check
    _
  $region27: #{_lambda_.28} parent=0 // pred_check_branch
    %27 = sbr.rel (0) target = $region29
  $region28: #{_lambda_.28} parent=0 // pred_region
    _
  $region29: #{_lambda_.28} parent=0 // pred_fallthru
    _
  %v29 = vld [vmem:[%s0] sm:$0xf]
  %v30 = vld [vmem:[%s0 + $0x4] sm:$0x3]
  %v31 = vunpack.c.l.bf16 %v29
  %v32 = vunpack.c.l.bf16 %v30
  %v33 = vld [vmem:[%s1] sm:$0x1]
  %v34 = vld [vmem:[%s2] sm:$0x1]
  %vm35 = vcmask 261120
  %v36 = vsel %vm35, %v31, 0.0
  %37 = vadd.xlane.f32.xlu0 %v36
  %v38 = vpop.xlane.xlu0 %37
  %vm39 = vcmask 257024
  %v40 = vsel %vm39, %v32, 0.0
  %41 = vadd.xlane.f32.xlu0 %v40
  %v42 = vpop.xlane.xlu0 %41
  %v43 = vrcp.pop 32.0
  %v44 = vmul.f32 %v38, %v43
  %v45 = vmul.f32 %v42, %v43
  %v46 = vsub.f32 %v31, %v44
  %v47 = vsub.f32 %v32, %v45
  %v48 = vmul.f32 %v46, %v46
  %v49 = vmul.f32 %v47, %v47
  %v50 = vsel %vm35, %v48, 0.0
  %51 = vadd.xlane.f32.xlu0 %v50
  %v52 = vpop.xlane.xlu0 %51
  %v53 = vsel %vm39, %v49, 0.0
  %54 = vadd.xlane.f32.xlu0 %v53
  %v55 = vpop.xlane.xlu0 %54
  %v56 = vmul.f32 %v52, %v43
  %v57 = vmul.f32 %v55, %v43
  %v58 = vadd.f32 %v56, 1e-12
  %v59 = vadd.f32 %v57, 1e-12
  %v60 = vrsqrt.pop %v58
  %v61 = vrsqrt.pop %v59
  %v62 = vmul.f32 %v46, %v60
  %v63 = vmul.f32 %v47, %v61
  %v65 = vlaneseq
  %v66 = vshrl.u32 %v65, 7
  %v67 = vsub.s32 0, %v66
  %v68 = vrot.slane %v33, %v67
  %v70 = vmul.f32 %v62, %v68
  %v71 = vmul.f32 %v63, %v68
  %v73 = vlaneseq
  %v74 = vshrl.u32 %v73, 7
  %v75 = vsub.s32 0, %v74
  %v76 = vrot.slane %v34, %v75
  %v78 = vadd.f32 %v70, %v76
  %v79 = vadd.f32 %v71, %v76
  %v80 = vpack.c.bf16 %v79, %v78
  %v81 = vld [vmem:[%s3] sm:$0xf]
  %v82 = vld [vmem:[%s3 + $0x4] sm:$0xf]
  %v83 = vld [vmem:[%s3 + $0x8] sm:$0xf]
  %v84 = vld [vmem:[%s3 + $0xc] sm:$0xf]
  %v85 = vld [vmem:[%s4] sm:$0x1]
  %v87 = vlaneseq
  %v88 = vshrl.u32 %v87, 7
  %v89 = vsub.s32 0, %v88
  %v90 = vrot.slane %v85, %v89
  %v96 = vunpack.c.l.b16 %v81
  %v97 = vunpack.c.l.b16 %v82
  %v98 = vunpack.c.l.b16 %v83
  %v99 = vunpack.c.l.b16 %v84
  %v100 = vpack.c.b16 %v97, %v96
  %v101 = vpack.c.b16 %v99, %v98
  %v105 = vsel %vm35, %v80, 0
  %107 = vmatprep.subr.bf16.mxu0 0
  %108 = vmatpush1.bf16.msra.mxu0 %v100
  %109 = vmatprep.subr.bf16.mxu0 0
  %110 = vmatpush1.bf16.msra.mxu0 %v101
  %111 = vmatprep.subr.bf16.mxu0 0
  %112 = vmatpush1.bf16.msra.mxu0 0
  %113 = vmatprep.subr.bf16.mxu0 0
  %114 = vmatpush1.bf16.msra.mxu0 0
  %115 = vmatprep.subr.bf16.mxu0 0
  %116 = vmatpush1.bf16.msra.mxu0 0
  %117 = vmatprep.subr.bf16.mxu0 0
  %118 = vmatpush1.bf16.msra.mxu0 0
  %119 = vmatprep.subr.bf16.mxu0 0
  %120 = vmatpush1.bf16.msra.mxu0 0
  %121 = vmatprep.subr.bf16.mxu0 0
  %122 = vmatpush1.bf16.msra.mxu0 0
  %123 = vmatprep.subr.bf16.mxu0 0
  %124 = vmatpush1.bf16.msra.mxu0 0
  %125 = vmatprep.subr.bf16.mxu0 0
  %126 = vmatpush1.bf16.msra.mxu0 0
  %127 = vmatprep.subr.bf16.mxu0 0
  %128 = vmatpush1.bf16.msra.mxu0 0
  %129 = vmatprep.subr.bf16.mxu0 0
  %130 = vmatpush1.bf16.msra.mxu0 0
  %131 = vmatprep.subr.bf16.mxu0 0
  %132 = vmatpush1.bf16.msra.mxu0 0
  %133 = vmatprep.subr.bf16.mxu0 0
  %134 = vmatpush1.bf16.msra.mxu0 0
  %135 = vmatprep.subr.bf16.mxu0 0
  %136 = vmatpush1.bf16.msra.mxu0 0
  %137 = vmatprep.subr.bf16.mxu0 0
  %138 = vmatpush1.bf16.msra.mxu0 0
  %139 = vmatprep.mubr.bf16.mxu0 0
  %140 = vmatmul.mubr.bf16.gmra.mrb[0].mxu0 %v105
  %v141 = vpop.f32.mrb[0].mxu0
  %v142 = vadd.f32 %v90, %v141
  %v143 = vpop.f32.mrb[0].mxu0
  %v144 = vpop.f32.mrb[0].mxu0
  %v145 = vadd.f32 %v90, %v144
  %v146 = vpop.f32.mrb[0].mxu0
  %147 = vdwg.mxu0
  %v148 = vmul.f32 %v142, 0.35355338
  %v149 = vmul.f32 %v145, 0.35355338
  %v150 = vpack.c.bf16 %v149, %v148
  %v152 = vunpack.c.l.b16 %v150
  %v153 = vunpack.c.h.b16 %v150
  %v154 = vpack.c.b16 %v152, %v152
  %v155 = vpack.c.b16 %v153, %v153
  %158 = vst.msk [vmem:[%s7] sm:$0xf] %vm39, %v154
  %vm159 = vcmask 254976
  %160 = vst.msk [vmem:[%s7 + $0x4] sm:$0x3] %vm159, %v155
  %v161 = vld [vmem:[%s5] sm:$0xf]
  %v162 = vld [vmem:[%s5 + $0x4] sm:$0xf]
  %v163 = vld [vmem:[%s5 + $0x8] sm:$0xf]
  %v164 = vld [vmem:[%s5 + $0xc] sm:$0xf]
  %v165 = vld [vmem:[%s6] sm:$0x1]
  %v167 = vlaneseq
  %v168 = vshrl.u32 %v167, 7
  %v169 = vsub.s32 0, %v168
  %v170 = vrot.slane %v165, %v169
  %v176 = vunpack.c.l.b16 %v161
  %v177 = vunpack.c.l.b16 %v162
  %v178 = vunpack.c.l.b16 %v163
  %v179 = vunpack.c.l.b16 %v164
  %v180 = vpack.c.b16 %v177, %v176
  %v181 = vpack.c.b16 %v179, %v178
  %184 = vmatprep.subr.bf16.mxu0 0
  %185 = vmatpush1.bf16.msra.mxu0 %v180
  %186 = vmatprep.subr.bf16.mxu0 0
  %187 = vmatpush1.bf16.msra.mxu0 %v181
  %188 = vmatprep.subr.bf16.mxu0 0
  %189 = vmatpush1.bf16.msra.mxu0 0
  %190 = vmatprep.subr.bf16.mxu0 0
  %191 = vmatpush1.bf16.msra.mxu0 0
  %192 = vmatprep.subr.bf16.mxu0 0
  %193 = vmatpush1.bf16.msra.mxu0 0
  %194 = vmatprep.subr.bf16.mxu0 0
  %195 = vmatpush1.bf16.msra.mxu0 0
  %196 = vmatprep.subr.bf16.mxu0 0
  %197 = vmatpush1.bf16.msra.mxu0 0
  %198 = vmatprep.subr.bf16.mxu0 0
  %199 = vmatpush1.bf16.msra.mxu0 0
  %200 = vmatprep.subr.bf16.mxu0 0
  %201 = vmatpush1.bf16.msra.mxu0 0
  %202 = vmatprep.subr.bf16.mxu0 0
  %203 = vmatpush1.bf16.msra.mxu0 0
  %204 = vmatprep.subr.bf16.mxu0 0
  %205 = vmatpush1.bf16.msra.mxu0 0
  %206 = vmatprep.subr.bf16.mxu0 0
  %207 = vmatpush1.bf16.msra.mxu0 0
  %208 = vmatprep.subr.bf16.mxu0 0
  %209 = vmatpush1.bf16.msra.mxu0 0
  %210 = vmatprep.subr.bf16.mxu0 0
  %211 = vmatpush1.bf16.msra.mxu0 0
  %212 = vmatprep.subr.bf16.mxu0 0
  %213 = vmatpush1.bf16.msra.mxu0 0
  %214 = vmatprep.subr.bf16.mxu0 0
  %215 = vmatpush1.bf16.msra.mxu0 0
  %216 = vmatprep.mubr.bf16.mxu0 0
  %217 = vmatmul.mubr.bf16.gmra.mrb[0].mxu0 %v105
  %v218 = vpop.f32.mrb[0].mxu0
  %v219 = vadd.f32 %v170, %v218
  %v220 = vpop.f32.mrb[0].mxu0
  %v221 = vpop.f32.mrb[0].mxu0
  %v222 = vadd.f32 %v170, %v221
  %v223 = vpop.f32.mrb[0].mxu0
  %224 = vdwg.mxu0
  %v225 = vpack.c.bf16 %v222, %v219
  %v227 = vunpack.c.l.b16 %v225
  %v228 = vunpack.c.h.b16 %v225
  %v229 = vpack.c.b16 %v227, %v227
  %v230 = vpack.c.b16 %v228, %v228
  %vm233 = vcmask 519168
  %234 = vst.msk [vmem:[%s8] sm:$0xf] %vm233, %v229
  %vm235 = vcmask 517120
  %236 = vst.msk [vmem:[%s8 + $0x4] sm:$0x3] %vm235, %v230
  // Predicated region
  $region30: #{_lambda_.28} parent=0 // pred_check
    _
  $region31: #{_lambda_.28} parent=0 // pred_check_branch
    %238 = sbr.rel (0) target = $region33
  $region32: #{_lambda_.28} parent=0 // pred_region
    _
  $region33: #{_lambda_.28} parent=0 // pred_fallthru
    _
  // Predicated region
  $region34: #{_lambda_.28} parent=0 // pred_check
    _
  $region35: #{_lambda_.28} parent=0 // pred_check_branch
    %240 = sbr.rel (0) target = $region37
  $region36: #{_lambda_.28} parent=0 // pred_region
    _
  $region37: #{_lambda_.28} parent=0 // pred_fallthru
    _
  // Predicated region
  $region38: #{_lambda_.28} parent=0 // pred_check
    _
  $region39: #{_lambda_.28} parent=0 // pred_check_branch
    %242 = sbr.rel (0) target = $region41
  $region40: #{_lambda_.28} parent=0 // pred_region
    _
  $region41: #{_lambda_.28} parent=0 // pred_fallthru
    _
  // Predicated region
  $region42: #{_lambda_.28} parent=0 // pred_check
    _
  $region43: #{_lambda_.28} parent=0 // pred_check_branch
    %244 = sbr.rel (0) target = $region45
  $region44: #{_lambda_.28} parent=0 // pred_region
    _
  $region45: #{_lambda_.28} parent=0 // pred_fallthru
    _

// kernel: _lambda_.30
$region0: #{_lambda_.30}
  #allocation0 [shape = 'u32[]', space=smem, size = 0x4, offset = 0x4, fixed_abs, tag = 'smem constant byte address 0x4 - core index']
  #allocation1 [shape = 'u32[144,128]{1,0:T(1,128)}', space=vmem, size = 0x12000, scoped, tag = 'internal scratch']
  %s0 = inlined_call_operand.vmem [shape: bf16[12,32], index: 0, kind: input, shape index: {}]
  %s1 = inlined_call_operand.vmem [shape: f32[1,32], index: 1, kind: input, shape index: {}]
  %s2 = inlined_call_operand.vmem [shape: f32[1,32], index: 2, kind: input, shape index: {}]
  %s3 = inlined_call_operand.vmem [shape: bf16[32,32], index: 3, kind: input, shape index: {}]
  %s4 = inlined_call_operand.vmem [shape: f32[1,32], index: 4, kind: input, shape index: {}]
  %s5 = inlined_call_operand.vmem [shape: bf16[12,32], index: 5, kind: output, shape index: {}]
  %s6 = sld [smem:[#allocation0]]
  $region30: #{_lambda_.30} parent=0
    _
  %s8 = ssub.s32 1, %s6
  %s9 = scalar_select 0, %s8, %s6
  // Predicated region
  $region2: #{_lambda_.30} parent=0 // pred_check
    _
  $region3: #{_lambda_.30} parent=0 // pred_check_branch
    %11 = sbr.rel (0) target = $region5
  $region4: #{_lambda_.30} parent=0 // pred_region
    _
  $region5: #{_lambda_.30} parent=0 // pred_fallthru
    _
  // Predicated region
  $region6: #{_lambda_.30} parent=0 // pred_check
    _
  $region7: #{_lambda_.30} parent=0 // pred_check_branch
    %13 = sbr.rel (0) target = $region9
  $region8: #{_lambda_.30} parent=0 // pred_region
    _
  $region9: #{_lambda_.30} parent=0 // pred_fallthru
    _
  // Predicated region
  $region10: #{_lambda_.30} parent=0 // pred_check
    _
  $region11: #{_lambda_.30} parent=0 // pred_check_branch
    %15 = sbr.rel (0) target = $region13
  $region12: #{_lambda_.30} parent=0 // pred_region
    _
  $region13: #{_lambda_.30} parent=0 // pred_fallthru
    _
  // Predicated region
  $region14: #{_lambda_.30} parent=0 // pred_check
    _
  $region15: #{_lambda_.30} parent=0 // pred_check_branch
    %17 = sbr.rel (0) target = $region17
  $region16: #{_lambda_.30} parent=0 // pred_region
    _
  $region17: #{_lambda_.30} parent=0 // pred_fallthru
    _
  // Predicated region
  $region18: #{_lambda_.30} parent=0 // pred_check
    _
  $region19: #{_lambda_.30} parent=0 // pred_check_branch
    %19 = sbr.rel (0) target = $region21
  $region20: #{_lambda_.30} parent=0 // pred_region
    _
  $region21: #{_lambda_.30} parent=0 // pred_fallthru
    _
  %v21 = vld [vmem:[%s0] sm:$0xf]
  %v22 = vld [vmem:[%s0 + $0x4] sm:$0x3]
  %v23 = vunpack.c.l.bf16 %v21
  %v24 = vunpack.c.l.bf16 %v22
  %v25 = vld [vmem:[%s1] sm:$0x1]
  %v26 = vld [vmem:[%s2] sm:$0x1]
  %vm27 = vcmask 261120
  %v28 = vsel %vm27, %v23, 0.0
  %29 = vadd.xlane.f32.xlu0 %v28
  %v30 = vpop.xlane.xlu0 %29
  %vm31 = vcmask 257024
  %v32 = vsel %vm31, %v24, 0.0
  %33 = vadd.xlane.f32.xlu0 %v32
  %v34 = vpop.xlane.xlu0 %33
  %v35 = vrcp.pop 32.0
  %v36 = vmul.f32 %v30, %v35
  %v37 = vmul.f32 %v34, %v35
  %v38 = vsub.f32 %v23, %v36
  %v39 = vsub.f32 %v24, %v37
  %v40 = vmul.f32 %v38, %v38
  %v41 = vmul.f32 %v39, %v39
  %v42 = vsel %vm27, %v40, 0.0
  %43 = vadd.xlane.f32.xlu0 %v42
  %v44 = vpop.xlane.xlu0 %43
  %v45 = vsel %vm31, %v41, 0.0
  %46 = vadd.xlane.f32.xlu0 %v45
  %v47 = vpop.xlane.xlu0 %46
  %v48 = vmul.f32 %v44, %v35
  %v49 = vmul.f32 %v47, %v35
  %v50 = vadd.f32 %v48, 1e-12
  %v51 = vadd.f32 %v49, 1e-12
  %v52 = vrsqrt.pop %v50
  %v53 = vrsqrt.pop %v51
  %v54 = vmul.f32 %v38, %v52
  %v55 = vmul.f32 %v39, %v53
  %v57 = vlaneseq
  %v58 = vshrl.u32 %v57, 7
  %v59 = vsub.s32 0, %v58
  %v60 = vrot.slane %v25, %v59
  %v62 = vmul.f32 %v54, %v60
  %v63 = vmul.f32 %v55, %v60
  %v65 = vlaneseq
  %v66 = vshrl.u32 %v65, 7
  %v67 = vsub.s32 0, %v66
  %v68 = vrot.slane %v26, %v67
  %v70 = vadd.f32 %v62, %v68
  %v71 = vadd.f32 %v63, %v68
  %v72 = vpack.c.bf16 %v71, %v70
  %v73 = vld [vmem:[%s3] sm:$0xf]
  %v74 = vld [vmem:[%s3 + $0x4] sm:$0xf]
  %v75 = vld [vmem:[%s3 + $0x8] sm:$0xf]
  %v76 = vld [vmem:[%s3 + $0xc] sm:$0xf]
  %v77 = vld [vmem:[%s4] sm:$0x1]
  %v79 = vlaneseq
  %v80 = vshrl.u32 %v79, 7
  %v81 = vsub.s32 0, %v80
  %v82 = vrot.slane %v77, %v81
  %v88 = vunpack.c.l.b16 %v73
  %v89 = vunpack.c.l.b16 %v74
  %v90 = vunpack.c.l.b16 %v75
  %v91 = vunpack.c.l.b16 %v76
  %v92 = vpack.c.b16 %v89, %v88
  %v93 = vpack.c.b16 %v91, %v90
  %v97 = vsel %vm27, %v72, 0
  %99 = vmatprep.subr.bf16.mxu0 0
  %100 = vmatpush1.bf16.msra.mxu0 %v92
  %101 = vmatprep.subr.bf16.mxu0 0
  %102 = vmatpush1.bf16.msra.mxu0 %v93
  %103 = vmatprep.subr.bf16.mxu0 0
  %104 = vmatpush1.bf16.msra.mxu0 0
  %105 = vmatprep.subr.bf16.mxu0 0
  %106 = vmatpush1.bf16.msra.mxu0 0
  %107 = vmatprep.subr.bf16.mxu0 0
  %108 = vmatpush1.bf16.msra.mxu0 0
  %109 = vmatprep.subr.bf16.mxu0 0
  %110 = vmatpush1.bf16.msra.mxu0 0
  %111 = vmatprep.subr.bf16.mxu0 0
  %112 = vmatpush1.bf16.msra.mxu0 0
  %113 = vmatprep.subr.bf16.mxu0 0
  %114 = vmatpush1.bf16.msra.mxu0 0
  %115 = vmatprep.subr.bf16.mxu0 0
  %116 = vmatpush1.bf16.msra.mxu0 0
  %117 = vmatprep.subr.bf16.mxu0 0
  %118 = vmatpush1.bf16.msra.mxu0 0
  %119 = vmatprep.subr.bf16.mxu0 0
  %120 = vmatpush1.bf16.msra.mxu0 0
  %121 = vmatprep.subr.bf16.mxu0 0
  %122 = vmatpush1.bf16.msra.mxu0 0
  %123 = vmatprep.subr.bf16.mxu0 0
  %124 = vmatpush1.bf16.msra.mxu0 0
  %125 = vmatprep.subr.bf16.mxu0 0
  %126 = vmatpush1.bf16.msra.mxu0 0
  %127 = vmatprep.subr.bf16.mxu0 0
  %128 = vmatpush1.bf16.msra.mxu0 0
  %129 = vmatprep.subr.bf16.mxu0 0
  %130 = vmatpush1.bf16.msra.mxu0 0
  %131 = vmatprep.mubr.bf16.mxu0 0
  %132 = vmatmul.mubr.bf16.gmra.mrb[0].mxu0 %v97
  %v133 = vpop.f32.mrb[0].mxu0
  %v134 = vadd.f32 %v82, %v133
  %v135 = vpop.f32.mrb[0].mxu0
  %v136 = vpop.f32.mrb[0].mxu0
  %v137 = vadd.f32 %v82, %v136
  %v138 = vpop.f32.mrb[0].mxu0
  %139 = vdwg.mxu0
  %v140 = vmul.f32 %v134, 0.35355338
  %v141 = vmul.f32 %v137, 0.35355338
  %v142 = vpack.c.bf16 %v141, %v140
  %v144 = vunpack.c.l.b16 %v142
  %v145 = vunpack.c.h.b16 %v142
  %v146 = vpack.c.b16 %v144, %v144
  %v147 = vpack.c.b16 %v145, %v145
  %150 = vst.msk [vmem:[%s5] sm:$0xf] %vm31, %v146
  %vm151 = vcmask 254976
  %152 = vst.msk [vmem:[%s5 + $0x4] sm:$0x3] %vm151, %v147
  // Predicated region
  $region22: #{_lambda_.30} parent=0 // pred_check
    _
  $region23: #{_lambda_.30} parent=0 // pred_check_branch
    %154 = sbr.rel (0) target = $region25
  $region24: #{_lambda_.30} parent=0 // pred_region
    _
  $region25: #{_lambda_.30} parent=0 // pred_fallthru
    _
  // Predicated region
  $region26: #{_lambda_.30} parent=0 // pred_check
    _
  $region27: #{_lambda_.30} parent=0 // pred_check_branch
    %156 = sbr.rel (0) target = $region29
  $region28: #{_lambda_.30} parent=0 // pred_region
    _
  $region29: #{_lambda_.30} parent=0 // pred_fallthru
    _

// kernel: _lambda_.29
$region0: #{_lambda_.29}
  #allocation0 [shape = 'u32[]', space=smem, size = 0x4, offset = 0x4, fixed_abs, tag = 'smem constant byte address 0x4 - core index']
  #allocation1 [shape = 'u32[144,128]{1,0:T(1,128)}', space=vmem, size = 0x12000, scoped, tag = 'internal scratch']
  %s0 = inlined_call_operand.vmem [shape: bf16[2,6,32], index: 0, kind: input, shape index: {}]
  %s1 = inlined_call_operand.vmem [shape: bf16[2,6,64], index: 1, kind: input, shape index: {}]
  %s2 = inlined_call_operand.vmem [shape: bf16[2,6,32], index: 2, kind: input, shape index: {}]
  %s3 = inlined_call_operand.vmem [shape: bf16[32,32], index: 3, kind: input, shape index: {}]
  %s4 = inlined_call_operand.vmem [shape: f32[1,32], index: 4, kind: input, shape index: {}]
  %s5 = inlined_call_operand.vmem [shape: bf16[2,6,32], index: 5, kind: output, shape index: {}]
  %s6 = sld [smem:[#allocation0]]
  $region53: #{_lambda_.29} parent=0
    _
  %s8 = ssub.s32 1, %s6
  %s9 = scalar_select 0, %s8, %s6
  loop: start=0, step=1, limit=4
  $region2: #{_lambda_.29} parent=0 // loop_pre_header
    _
  $region3: #{_lambda_.29} parent=0 // loop_header
    %s11 = sphi 0, %s15
    %p12 = scmp.ge.s32.totalorder %s11, 4
    %s18 = sphi 0, %s30
    %s19 = sphi 0, %s26
    %s20 = sphi 0, %s18
    %s21 = sphi 0, %s19
    %s22 = sphi 0, %s20
    %s23 = sphi 0, %s21
    %s35 = sphi 0, %s37
    %s38 = sphi 0, %s35
    %s39 = sphi 0, %s38
    %s55 = sphi 0, %s39
    %s61 = sphi 0, %s63
    %s64 = sphi 0, %s61
    %s65 = sphi 0, %s64
    %s81 = sphi 0, %s65
    %s89 = sphi 0, %s91
    %s92 = sphi 0, %s89
    %s93 = sphi 0, %s92
    %s109 = sphi 0, %s93
    %s113 = sphi 0, %s113
    %s115 = sphi 0, %s113
    %s116 = sphi 0, %s115
    %s130 = sphi 0, %s116
    %s134 = sphi 0, %s134
    %s136 = sphi 0, %s134
    %s137 = sphi 0, %s136
    %s151 = sphi 0, %s137
    %s159 = sphi 0, %s161
    %s162 = sphi 0, %s159
    %s163 = sphi 0, %s162
    %s179 = sphi 0, %s163
  $region4: #{_lambda_.29} parent=0 // loop_header_branch
    %14 = sbr.rel (%p12) target = $region8
  $region5: #{_lambda_.29} parent=0 // loop_body
    %s16 = ssub.s32 %s11, 1
    %s17 = ssub.s32 %s11, 2
    %s24 = sadd.s32 1, %s19
    %p25 = scmp.ge.s32.totalorder %s24, 1
    %s26 = scalar_select %p25, 0, %s24
    %s27 = sadd.s32 1, %s18
    %s28 = scalar_select %p25, %s27, %s18
    %p29 = scmp.ge.s32.totalorder %s28, 2
    %s30 = scalar_select %p29, 0, %s28
    %s31 = ssub.s32 %s18, %s30
    %s32 = ssub.s32 %s19, %s26
    %s33 = sor.u32 %s31, %s32
    %p34 = scmp.eq.s32.totalorder %s33, 0
    %s36 = sadd.s32 %s35, 1
    %s37 = scalar_select %p34, %s35, %s36
    %p40 = pneg %p34
    %p41 = scmp.eq.s32.totalorder %s11, 1
    %p42 = por %p40, %p41
    %p43 = scmp.ne.s32.totalorder %s35, %s38
    %p44 = scmp.eq.s32.totalorder %s11, 0
    %p45 = por %p43, %p44
    %p46 = scmp.ne.s32.totalorder %s35, %s38
    %p47 = scmp.eq.s32.totalorder %s16, 1
    %p48 = por %p46, %p47
    %p49 = scmp.ne.s32.totalorder %s38, %s39
    %p50 = scmp.eq.s32.totalorder %s16, 0
    %p51 = por %p49, %p50
    %p52 = scmp.ne.s32.totalorder %s38, %s39
    %p53 = scmp.eq.s32.totalorder %s17, 1
    %p54 = por %p52, %p53
    %p56 = scmp.ne.s32.totalorder %s39, %s55
    %p57 = scmp.eq.s32.totalorder %s17, 0
    %p58 = por %p56, %p57
    %s59 = ssub.s32 %s18, %s30
    %p60 = scmp.eq.s32.totalorder %s59, 0
    %s62 = sadd.s32 %s61, 1
    %s63 = scalar_select %p60, %s61, %s62
    %p66 = pneg %p60
    %p67 = scmp.eq.s32.totalorder %s11, 1
    %p68 = por %p66, %p67
    %p69 = scmp.ne.s32.totalorder %s61, %s64
    %p70 = scmp.eq.s32.totalorder %s11, 0
    %p71 = por %p69, %p70
    %p72 = scmp.ne.s32.totalorder %s61, %s64
    %p73 = scmp.eq.s32.totalorder %s16, 1
    %p74 = por %p72, %p73
    %p75 = scmp.ne.s32.totalorder %s64, %s65
    %p76 = scmp.eq.s32.totalorder %s16, 0
    %p77 = por %p75, %p76
    %p78 = scmp.ne.s32.totalorder %s64, %s65
    %p79 = scmp.eq.s32.totalorder %s17, 1
    %p80 = por %p78, %p79
    %p82 = scmp.ne.s32.totalorder %s65, %s81
    %p83 = scmp.eq.s32.totalorder %s17, 0
    %p84 = por %p82, %p83
    %s85 = ssub.s32 %s18, %s30
    %s86 = ssub.s32 %s19, %s26
    %s87 = sor.u32 %s85, %s86
    %p88 = scmp.eq.s32.totalorder %s87, 0
    %s90 = sadd.s32 %s89, 1
    %s91 = scalar_select %p88, %s89, %s90
    %p94 = pneg %p88
    %p95 = scmp.eq.s32.totalorder %s11, 1
    %p96 = por %p94, %p95
    %p97 = scmp.ne.s32.totalorder %s89, %s92
    %p98 = scmp.eq.s32.totalorder %s11, 0
    %p99 = por %p97, %p98
    %p100 = scmp.ne.s32.totalorder %s89, %s92
    %p101 = scmp.eq.s32.totalorder %s16, 1
    %p102 = por %p100, %p101
    %p103 = scmp.ne.s32.totalorder %s92, %s93
    %p104 = scmp.eq.s32.totalorder %s16, 0
    %p105 = por %p103, %p104
    %p106 = scmp.ne.s32.totalorder %s92, %s93
    %p107 = scmp.eq.s32.totalorder %s17, 1
    %p108 = por %p106, %p107
    %p110 = scmp.ne.s32.totalorder %s93, %s109
    %p111 = scmp.eq.s32.totalorder %s17, 0
    %p112 = por %p110, %p111
    %s114 = sadd.s32 %s113, 1
    %p117 = scmp.eq.s32.totalorder %s11, 1
    %p118 = scmp.ne.s32.totalorder %s113, %s115
    %p119 = scmp.eq.s32.totalorder %s11, 0
    %p120 = por %p118, %p119
    %p121 = scmp.ne.s32.totalorder %s113, %s115
    %p122 = scmp.eq.s32.totalorder %s16, 1
    %p123 = por %p121, %p122
    %p124 = scmp.ne.s32.totalorder %s115, %s116
    %p125 = scmp.eq.s32.totalorder %s16, 0
    %p126 = por %p124, %p125
    %p127 = scmp.ne.s32.totalorder %s115, %s116
    %p128 = scmp.eq.s32.totalorder %s17, 1
    %p129 = por %p127, %p128
    %p131 = scmp.ne.s32.totalorder %s116, %s130
    %p132 = scmp.eq.s32.totalorder %s17, 0
    %p133 = por %p131, %p132
    %s135 = sadd.s32 %s134, 1
    %p138 = scmp.eq.s32.totalorder %s11, 1
    %p139 = scmp.ne.s32.totalorder %s134, %s136
    %p140 = scmp.eq.s32.totalorder %s11, 0
    %p141 = por %p139, %p140
    %p142 = scmp.ne.s32.totalorder %s134, %s136
    %p143 = scmp.eq.s32.totalorder %s16, 1
    %p144 = por %p142, %p143
    %p145 = scmp.ne.s32.totalorder %s136, %s137
    %p146 = scmp.eq.s32.totalorder %s16, 0
    %p147 = por %p145, %p146
    %p148 = scmp.ne.s32.totalorder %s136, %s137
    %p149 = scmp.eq.s32.totalorder %s17, 1
    %p150 = por %p148, %p149
    %p152 = scmp.ne.s32.totalorder %s137, %s151
    %p153 = scmp.eq.s32.totalorder %s17, 0
    %p154 = por %p152, %p153
    %s155 = ssub.s32 %s18, %s30
    %s156 = ssub.s32 %s19, %s26
    %s157 = sor.u32 %s155, %s156
    %p158 = scmp.eq.s32.totalorder %s157, 0
    %s160 = sadd.s32 %s159, 1
    %s161 = scalar_select %p158, %s159, %s160
    %p164 = pneg %p158
    %p165 = scmp.eq.s32.totalorder %s11, 1
    %p166 = por %p164, %p165
    %p167 = scmp.ne.s32.totalorder %s159, %s162
    %p168 = scmp.eq.s32.totalorder %s11, 0
    %p169 = por %p167, %p168
    %p170 = scmp.ne.s32.totalorder %s159, %s162
    %p171 = scmp.eq.s32.totalorder %s16, 1
    %p172 = por %p170, %p171
    %p173 = scmp.ne.s32.totalorder %s162, %s163
    %p174 = scmp.eq.s32.totalorder %s16, 0
    %p175 = por %p173, %p174
    %p176 = scmp.ne.s32.totalorder %s162, %s163
    %p177 = scmp.eq.s32.totalorder %s17, 1
    %p178 = por %p176, %p177
    %p180 = scmp.ne.s32.totalorder %s163, %s179
    %p181 = scmp.eq.s32.totalorder %s17, 0
    %p182 = por %p180, %p181
    %p183 = scmp.le.s32.totalorder 1, %s11
    %p184 = scmp.lt.s32.totalorder %s11, 3
    %p185 = pnand %p183, %p184
    %p186 = pneg %p185
    // Predicated region
    $region9: #{_lambda_.29} parent=5 // pred_check
      _
    $region10: #{_lambda_.29} parent=5 // pred_check_branch
      %188 = sbr.rel (%p185) target = $region12
    $region11: #{_lambda_.29} parent=5 // pred_region
      %s189 = ssub.s32 %s11, 1
      // Predicated region
      $region13: #{_lambda_.29} parent=11 // pred_check
        %p190 = pneg %p126
      $region14: #{_lambda_.29} parent=11 // pred_check_branch
        %192 = sbr.rel (%p190) target = $region16
      $region15: #{_lambda_.29} parent=11 // pred_region
        _
      $region16: #{_lambda_.29} parent=11 // pred_fallthru
        _
      // Predicated region
      $region17: #{_lambda_.29} parent=11 // pred_check
        %p193 = pneg %p147
      $region18: #{_lambda_.29} parent=11 // pred_check_branch
        %195 = sbr.rel (%p193) target = $region20
      $region19: #{_lambda_.29} parent=11 // pred_region
        _
      $region20: #{_lambda_.29} parent=11 // pred_fallthru
        _
    $region12: #{_lambda_.29} parent=5 // pred_fallthru
      _
    %p196 = scmp.lt.s32.totalorder %s11, 2
    // Predicated region
    $region21: #{_lambda_.29} parent=5 // pred_check
      %p197 = pneg %p196
    $region22: #{_lambda_.29} parent=5 // pred_check_branch
      %199 = sbr.rel (%p197) target = $region24
    $region23: #{_lambda_.29} parent=5 // pred_region
      // Predicated region
      $region25: #{_lambda_.29} parent=23 // pred_check
        %p200 = pneg %p45
      $region26: #{_lambda_.29} parent=23 // pred_check_branch
        %202 = sbr.rel (%p200) target = $region28
      $region27: #{_lambda_.29} parent=23 // pred_region
        %p203 = scmp.lt.s32.totalorder %s18, 1
        %s204 = scalar_select %p203, %s18, 1
        %p205 = scmp.lt.s32.totalorder %s19, 0
        %s206 = scalar_select %p205, %s19, 0
        %s207 = sadd.s32 %s206, %s204
        %s208 = smul.addr %s207, 4
        %s209 = scalar_lea.vmem %s0, %s208
      $region28: #{_lambda_.29} parent=23 // pred_fallthru
        _
      // Predicated region
      $region29: #{_lambda_.29} parent=23 // pred_check
        %p210 = pneg %p71
      $region30: #{_lambda_.29} parent=23 // pred_check_branch
        %212 = sbr.rel (%p210) target = $region32
      $region31: #{_lambda_.29} parent=23 // pred_region
        %p213 = scmp.lt.s32.totalorder %s18, 1
        %s214 = scalar_select %p213, %s18, 1
        %s215 = smul.addr %s214, 4
        %s216 = scalar_lea.vmem %s1, %s215
      $region32: #{_lambda_.29} parent=23 // pred_fallthru
        _
      // Predicated region
      $region33: #{_lambda_.29} parent=23 // pred_check
        %p217 = pneg %p99
      $region34: #{_lambda_.29} parent=23 // pred_check_branch
        %219 = sbr.rel (%p217) target = $region36
      $region35: #{_lambda_.29} parent=23 // pred_region
        %p220 = scmp.lt.s32.totalorder %s18, 1
        %s221 = scalar_select %p220, %s18, 1
        %p222 = scmp.lt.s32.totalorder %s19, 0
        %s223 = scalar_select %p222, %s19, 0
        %s224 = sadd.s32 %s223, %s221
        %s225 = smul.addr %s224, 4
        %s226 = scalar_lea.vmem %s2, %s225
      $region36: #{_lambda_.29} parent=23 // pred_fallthru
        _
    $region24: #{_lambda_.29} parent=5 // pred_fallthru
      _
    %p227 = scmp.le.s32.totalorder 1, %s11
    %p228 = scmp.lt.s32.totalorder %s11, 3
    %p229 = pnand %p227, %p228
    %p230 = pneg %p229
    // Predicated region
    $region37: #{_lambda_.29} parent=5 // pred_check
      _
    $region38: #{_lambda_.29} parent=5 // pred_check_branch
      %232 = sbr.rel (%p229) target = $region40
    $region39: #{_lambda_.29} parent=5 // pred_region
      %s233 = ssub.s32 %s11, 1
      %p234 = scmp.lt.s32.totalorder %s20, 1
      %s235 = scalar_select %p234, %s20, 1
      %p236 = scmp.lt.s32.totalorder %s21, 0
      %s237 = scalar_select %p236, %s21, 0
      %s238 = sadd.s32 %s237, %s235
      %s239 = smul.addr %s238, 4
      %s240 = scalar_lea.vmem %s0, %s239
      %p241 = pneg %p51
      %p242 = pneg %p48
      %p243 = scmp.lt.s32.totalorder %s20, 1
      %s244 = scalar_select %p243, %s20, 1
      %s245 = smul.addr %s244, 4
      %s246 = scalar_lea.vmem %s1, %s245
      %p247 = pneg %p77
      %p248 = pneg %p74
      %p249 = scmp.lt.s32.totalorder %s20, 1
      %s250 = scalar_select %p249, %s20, 1
      %p251 = scmp.lt.s32.totalorder %s21, 0
      %s252 = scalar_select %p251, %s21, 0
      %s253 = sadd.s32 %s252, %s250
      %s254 = smul.addr %s253, 4
      %s255 = scalar_lea.vmem %s2, %s254
      %p256 = pneg %p105
      %p257 = pneg %p102
      %p258 = pneg %p126
      %p259 = pneg %p123
      %p260 = pneg %p147
      %p261 = pneg %p144
      %p262 = pneg %p175
      %p263 = pneg %p172
      %p264 = scmp.lt.s32.totalorder %s20, 1
      %s265 = scalar_select %p264, %s20, 1
      %p266 = scmp.lt.s32.totalorder %s21, 0
      %s267 = scalar_select %p266, %s21, 0
      %s268 = sadd.s32 %s267, %s265
      %s269 = smul.addr %s268, 4
      %s270 = scalar_lea.vmem %s5, %s269
      %p271 = scmp.lt.s32.totalorder %s20, 1
      %s272 = scalar_select %p271, %s20, 1
      %p273 = scmp.lt.s32.totalorder %s21, 0
      %s274 = scalar_select %p273, %s21, 0
      %s275 = sadd.s32 %s274, %s272
      %s276 = smul.addr %s275, 4
      %s277 = scalar_lea.vmem %s0, %s276
      %p278 = scmp.lt.s32.totalorder %s20, 1
      %s279 = scalar_select %p278, %s20, 1
      %s280 = smul.addr %s279, 4
      %s281 = scalar_lea.vmem %s1, %s280
      %p282 = scmp.lt.s32.totalorder %s20, 1
      %s283 = scalar_select %p282, %s20, 1
      %p284 = scmp.lt.s32.totalorder %s21, 0
      %s285 = scalar_select %p284, %s21, 0
      %s286 = sadd.s32 %s285, %s283
      %s287 = smul.addr %s286, 4
      %s288 = scalar_lea.vmem %s2, %s287
      %p289 = scmp.lt.s32.totalorder %s20, 1
      %s290 = scalar_select %p289, %s20, 1
      %p291 = scmp.lt.s32.totalorder %s21, 0
      %s292 = scalar_select %p291, %s21, 0
      %s293 = sadd.s32 %s292, %s290
      %s294 = smul.addr %s293, 4
      %s295 = scalar_lea.vmem %s5, %s294
      %v297 = vld [vmem:[%s281] sm:$0x7]
      %s298 = smul.u32 %s21, 6
      %v299 = vlaneseq
      %v300 = vshrl.u32 %v299, 7
      %v301 = vstv %s298
      %v302 = vadd.s32 %v301, %v300
      %v303 = vlaneseq
      %v304 = vand.u32 %v303, 127
      %vm305 = vcmp.le.s32.totalorder %v304, %v302
      %v306 = vld [vmem:[%s277] sm:$0x7]
      %v307 = vld [vmem:[%s288] sm:$0x7]
      %v308 = vld [vmem:[%s3] sm:$0xf]
      %v309 = vld [vmem:[%s3 + $0x4] sm:$0xf]
      %v310 = vld [vmem:[%s3 + $0x8] sm:$0xf]
      %v311 = vld [vmem:[%s3 + $0xc] sm:$0xf]
      %v312 = vld [vmem:[%s4] sm:$0x1]
      %vm313 = vcmask 64512
      %v315 = vsel %vm313, %v306, 0
      %v318 = vsel %vm313, %v297, 0
      %320 = vmatprep.subr.bf16.mxu0 0
      %321 = vmatpush1.bf16.xpose.msra.mxu0 %v318
      %322 = vmatprep.subr.bf16.mxu0 0
      %323 = vmatpush1.bf16.xpose.msra.mxu0 0
      %324 = vmatprep.subr.bf16.mxu0 0
      %325 = vmatpush1.bf16.xpose.msra.mxu0 0
      %326 = vmatprep.subr.bf16.mxu0 0
      %327 = vmatpush1.bf16.xpose.msra.mxu0 0
      %328 = vmatprep.subr.bf16.mxu0 0
      %329 = vmatpush1.bf16.xpose.msra.mxu0 0
      %330 = vmatprep.subr.bf16.mxu0 0
      %331 = vmatpush1.bf16.xpose.msra.mxu0 0
      %332 = vmatprep.subr.bf16.mxu0 0
      %333 = vmatpush1.bf16.xpose.msra.mxu0 0
      %334 = vmatprep.subr.bf16.mxu0 0
      %335 = vmatpush1.bf16.xpose.msra.mxu0 0
      %336 = vmatprep.subr.bf16.mxu0 0
      %337 = vmatpush1.bf16.xpose.msra.mxu0 0
      %338 = vmatprep.subr.bf16.mxu0 0
      %339 = vmatpush1.bf16.xpose.msra.mxu0 0
      %340 = vmatprep.subr.bf16.mxu0 0
      %341 = vmatpush1.bf16.xpose.msra.mxu0 0
      %342 = vmatprep.subr.bf16.mxu0 0
      %343 = vmatpush1.bf16.xpose.msra.mxu0 0
      %344 = vmatprep.subr.bf16.mxu0 0
      %345 = vmatpush1.bf16.xpose.msra.mxu0 0
      %346 = vmatprep.subr.bf16.mxu0 0
      %347 = vmatpush1.bf16.xpose.msra.mxu0 0
      %348 = vmatprep.subr.bf16.mxu0 0
      %349 = vmatpush1.bf16.xpose.msra.mxu0 0
      %350 = vmatprep.subr.bf16.mxu0 0
      %351 = vmatpush1.bf16.xpose.msra.mxu0 0
      %352 = vmatprep.mubr.bf16.mxu0 0
      %353 = vmatmul.mubr.bf16.gmra.mrb[0].mxu0 %v315
      %v354 = vpop.f32.mrb[0].mxu0
      %v355 = vadd.f32 0.0, %v354
      %v356 = vpop.f32.mrb[0].mxu0
      %v357 = vpop.f32.mrb[0].mxu0
      %v358 = vpop.f32.mrb[0].mxu0
      %359 = vdwg.mxu0
      %v360 = vsel %vm305, %v355, -1e+30
      %vm361 = vcmask 46080
      %v362 = vsel %vm361, %v360, -inf
      %363 = vmax.xlane.f32.xlu0 %v362
      %v364 = vpop.xlane.xlu0 %363
      %v365 = vsub.f32 %v360, %v364
      %v366 = vmul.f32 %v365, 1.442695
      %v367 = vpow.pop %v366
      %v368 = vsel %vm361, %v367, 0.0
      %369 = vadd.xlane.f32.xlu0 %v368
      %v370 = vpop.xlane.xlu0 %369
      %v371 = vrcp.pop %v370
      %v372 = vmul.f32 %v367, %v371
      %v373 = vpack.c.bf16 %v372, %v372
      %v375 = vunpack.c.l.b16 %v297
      %v376 = vpack.c.b16 %v375, %v375
      %377 = vrot.lane.b32.xlu0 %v376, 96
      %v378 = vpop.permute.xlu0 %377
      %vm379 = vcmask 48128
      %v381 = vsel %vm379, %v373, 0
      %vm383 = vcmask 1042432
      %v385 = vsel %vm383, %v378, 0
      %387 = vmatprep.subr.bf16.mxu0 0
      %388 = vmatpush1.bf16.msra.mxu0 %v385
      %389 = vmatprep.subr.bf16.mxu0 0
      %390 = vmatpush1.bf16.msra.mxu0 0
      %391 = vmatprep.subr.bf16.mxu0 0
      %392 = vmatpush1.bf16.msra.mxu0 0
      %393 = vmatprep.subr.bf16.mxu0 0
      %394 = vmatpush1.bf16.msra.mxu0 0
      %395 = vmatprep.subr.bf16.mxu0 0
      %396 = vmatpush1.bf16.msra.mxu0 0
      %397 = vmatprep.subr.bf16.mxu0 0
      %398 = vmatpush1.bf16.msra.mxu0 0
      %399 = vmatprep.subr.bf16.mxu0 0
      %400 = vmatpush1.bf16.msra.mxu0 0
      %401 = vmatprep.subr.bf16.mxu0 0
      %402 = vmatpush1.bf16.msra.mxu0 0
      %403 = vmatprep.subr.bf16.mxu0 0
      %404 = vmatpush1.bf16.msra.mxu0 0
      %405 = vmatprep.subr.bf16.mxu0 0
      %406 = vmatpush1.bf16.msra.mxu0 0
      %407 = vmatprep.subr.bf16.mxu0 0
      %408 = vmatpush1.bf16.msra.mxu0 0
      %409 = vmatprep.subr.bf16.mxu0 0
      %410 = vmatpush1.bf16.msra.mxu0 0
      %411 = vmatprep.subr.bf16.mxu0 0
      %412 = vmatpush1.bf16.msra.mxu0 0
      %413 = vmatprep.subr.bf16.mxu0 0
      %414 = vmatpush1.bf16.msra.mxu0 0
      %415 = vmatprep.subr.bf16.mxu0 0
      %416 = vmatpush1.bf16.msra.mxu0 0
      %417 = vmatprep.subr.bf16.mxu0 0
      %418 = vmatpush1.bf16.msra.mxu0 0
      %419 = vmatprep.mubr.bf16.mxu0 0
      %420 = vmatmul.mubr.bf16.gmra.mrb[0].mxu0 %v381
      %v421 = vpop.f32.mrb[0].mxu0
      %v422 = vadd.f32 0.0, %v421
      %v423 = vpop.f32.mrb[0].mxu0
      %v424 = vpop.f32.mrb[0].mxu0
      %v425 = vpop.f32.mrb[0].mxu0
      %426 = vdwg.mxu0
      %v428 = vunpack.c.l.b16 %v306
      %v429 = vpack.c.b16 %v428, %v428
      %430 = vrot.lane.b32.xlu0 %v429, 120
      %v431 = vpop.permute.xlu0 %430
      %432 = vrot.lane.b32.xlu0 %v376, 120
      %v433 = vpop.permute.xlu0 %432
      %v435 = vsel %vm313, %v431, 0
      %v438 = vsel %vm313, %v433, 0
      %440 = vmatprep.subr.bf16.mxu0 0
      %441 = vmatpush1.bf16.xpose.msra.mxu0 %v438
      %442 = vmatprep.subr.bf16.mxu0 0
      %443 = vmatpush1.bf16.xpose.msra.mxu0 0
      %444 = vmatprep.subr.bf16.mxu0 0
      %445 = vmatpush1.bf16.xpose.msra.mxu0 0
      %446 = vmatprep.subr.bf16.mxu0 0
      %447 = vmatpush1.bf16.xpose.msra.mxu0 0
      %448 = vmatprep.subr.bf16.mxu0 0
      %449 = vmatpush1.bf16.xpose.msra.mxu0 0
      %450 = vmatprep.subr.bf16.mxu0 0
      %451 = vmatpush1.bf16.xpose.msra.mxu0 0
      %452 = vmatprep.subr.bf16.mxu0 0
      %453 = vmatpush1.bf16.xpose.msra.mxu0 0
      %454 = vmatprep.subr.bf16.mxu0 0
      %455 = vmatpush1.bf16.xpose.msra.mxu0 0
      %456 = vmatprep.subr.bf16.mxu0 0
      %457 = vmatpush1.bf16.xpose.msra.mxu0 0
      %458 = vmatprep.subr.bf16.mxu0 0
      %459 = vmatpush1.bf16.xpose.msra.mxu0 0
      %460 = vmatprep.subr.bf16.mxu0 0
      %461 = vmatpush1.bf16.xpose.msra.mxu0 0
      %462 = vmatprep.subr.bf16.mxu0 0
      %463 = vmatpush1.bf16.xpose.msra.mxu0 0
      %464 = vmatprep.subr.bf16.mxu0 0
      %465 = vmatpush1.bf16.xpose.msra.mxu0 0
      %466 = vmatprep.subr.bf16.mxu0 0
      %467 = vmatpush1.bf16.xpose.msra.mxu0 0
      %468 = vmatprep.subr.bf16.mxu0 0
      %469 = vmatpush1.bf16.xpose.msra.mxu0 0
      %470 = vmatprep.subr.bf16.mxu0 0
      %471 = vmatpush1.bf16.xpose.msra.mxu0 0
      %472 = vmatprep.mubr.bf16.mxu0 0
      %473 = vmatmul.mubr.bf16.gmra.mrb[0].mxu0 %v435
      %v474 = vpop.f32.mrb[0].mxu0
      %v475 = vadd.f32 0.0, %v474
      %v476 = vpop.f32.mrb[0].mxu0
      %v477 = vpop.f32.mrb[0].mxu0
      %v478 = vpop.f32.mrb[0].mxu0
      %479 = vdwg.mxu0
      %v480 = vsel %vm305, %v475, -1e+30
      %v481 = vsel %vm361, %v480, -inf
      %482 = vmax.xlane.f32.xlu0 %v481
      %v483 = vpop.xlane.xlu0 %482
      %v484 = vsub.f32 %v480, %v483
      %v485 = vmul.f32 %v484, 1.442695
      %v486 = vpow.pop %v485
      %v487 = vsel %vm361, %v486, 0.0
      %488 = vadd.xlane.f32.xlu0 %v487
      %v489 = vpop.xlane.xlu0 %488
      %v490 = vrcp.pop %v489
      %v491 = vmul.f32 %v486, %v490
      %v492 = vpack.c.bf16 %v491, %v491
      %493 = vrot.lane.b32.xlu0 %v376, 88
      %v494 = vpop.permute.xlu0 %493
      %v496 = vsel %vm379, %v492, 0
      %v499 = vsel %vm383, %v494, 0
      %501 = vmatprep.subr.bf16.mxu0 0
      %502 = vmatpush1.bf16.msra.mxu0 %v499
      %503 = vmatprep.subr.bf16.mxu0 0
      %504 = vmatpush1.bf16.msra.mxu0 0
      %505 = vmatprep.subr.bf16.mxu0 0
      %506 = vmatpush1.bf16.msra.mxu0 0
      %507 = vmatprep.subr.bf16.mxu0 0
      %508 = vmatpush1.bf16.msra.mxu0 0
      %509 = vmatprep.subr.bf16.mxu0 0
      %510 = vmatpush1.bf16.msra.mxu0 0
      %511 = vmatprep.subr.bf16.mxu0 0
      %512 = vmatpush1.bf16.msra.mxu0 0
      %513 = vmatprep.subr.bf16.mxu0 0
      %514 = vmatpush1.bf16.msra.mxu0 0
      %515 = vmatprep.subr.bf16.mxu0 0
      %516 = vmatpush1.bf16.msra.mxu0 0
      %517 = vmatprep.subr.bf16.mxu0 0
      %518 = vmatpush1.bf16.msra.mxu0 0
      %519 = vmatprep.subr.bf16.mxu0 0
      %520 = vmatpush1.bf16.msra.mxu0 0
      %521 = vmatprep.subr.bf16.mxu0 0
      %522 = vmatpush1.bf16.msra.mxu0 0
      %523 = vmatprep.subr.bf16.mxu0 0
      %524 = vmatpush1.bf16.msra.mxu0 0
      %525 = vmatprep.subr.bf16.mxu0 0
      %526 = vmatpush1.bf16.msra.mxu0 0
      %527 = vmatprep.subr.bf16.mxu0 0
      %528 = vmatpush1.bf16.msra.mxu0 0
      %529 = vmatprep.subr.bf16.mxu0 0
      %530 = vmatpush1.bf16.msra.mxu0 0
      %531 = vmatprep.subr.bf16.mxu0 0
      %532 = vmatpush1.bf16.msra.mxu0 0
      %533 = vmatprep.mubr.bf16.mxu0 0
      %534 = vmatmul.mubr.bf16.gmra.mrb[0].mxu0 %v496
      %v535 = vpop.f32.mrb[0].mxu0
      %v536 = vadd.f32 0.0, %v535
      %v537 = vpop.f32.mrb[0].mxu0
      %v538 = vpop.f32.mrb[0].mxu0
      %v539 = vpop.f32.mrb[0].mxu0
      %540 = vdwg.mxu0
      %541 = vrot.lane.b32.xlu0 %v429, 112
      %v542 = vpop.permute.xlu0 %541
      %543 = vrot.lane.b32.xlu0 %v376, 112
      %v544 = vpop.permute.xlu0 %543
      %v546 = vsel %vm313, %v542, 0
      %v549 = vsel %vm313, %v544, 0
      %551 = vmatprep.subr.bf16.mxu0 0
      %552 = vmatpush1.bf16.xpose.msra.mxu0 %v549
      %553 = vmatprep.subr.bf16.mxu0 0
      %554 = vmatpush1.bf16.xpose.msra.mxu0 0
      %555 = vmatprep.subr.bf16.mxu0 0
      %556 = vmatpush1.bf16.xpose.msra.mxu0 0
      %557 = vmatprep.subr.bf16.mxu0 0
      %558 = vmatpush1.bf16.xpose.msra.mxu0 0
      %559 = vmatprep.subr.bf16.mxu0 0
      %560 = vmatpush1.bf16.xpose.msra.mxu0 0
      %561 = vmatprep.subr.bf16.mxu0 0
      %562 = vmatpush1.bf16.xpose.msra.mxu0 0
      %563 = vmatprep.subr.bf16.mxu0 0
      %564 = vmatpush1.bf16.xpose.msra.mxu0 0
      %565 = vmatprep.subr.bf16.mxu0 0
      %566 = vmatpush1.bf16.xpose.msra.mxu0 0
      %567 = vmatprep.subr.bf16.mxu0 0
      %568 = vmatpush1.bf16.xpose.msra.mxu0 0
      %569 = vmatprep.subr.bf16.mxu0 0
      %570 = vmatpush1.bf16.xpose.msra.mxu0 0
      %571 = vmatprep.subr.bf16.mxu0 0
      %572 = vmatpush1.bf16.xpose.msra.mxu0 0
      %573 = vmatprep.subr.bf16.mxu0 0
      %574 = vmatpush1.bf16.xpose.msra.mxu0 0
      %575 = vmatprep.subr.bf16.mxu0 0
      %576 = vmatpush1.bf16.xpose.msra.mxu0 0
      %577 = vmatprep.subr.bf16.mxu0 0
      %578 = vmatpush1.bf16.xpose.msra.mxu0 0
      %579 = vmatprep.subr.bf16.mxu0 0
      %580 = vmatpush1.bf16.xpose.msra.mxu0 0
      %581 = vmatprep.subr.bf16.mxu0 0
      %582 = vmatpush1.bf16.xpose.msra.mxu0 0
      %583 = vmatprep.mubr.bf16.mxu0 0
      %584 = vmatmul.mubr.bf16.gmra.mrb[0].mxu0 %v546
      %v585 = vpop.f32.mrb[0].mxu0
      %v586 = vadd.f32 0.0, %v585
      %v587 = vpop.f32.mrb[0].mxu0
      %v588 = vpop.f32.mrb[0].mxu0
      %v589 = vpop.f32.mrb[0].mxu0
      %590 = vdwg.mxu0
      %v591 = vsel %vm305, %v586, -1e+30
      %v592 = vsel %vm361, %v591, -inf
      %593 = vmax.xlane.f32.xlu0 %v592
      %v594 = vpop.xlane.xlu0 %593
      %v595 = vsub.f32 %v591, %v594
      %v596 = vmul.f32 %v595, 1.442695
      %v597 = vpow.pop %v596
      %v598 = vsel %vm361, %v597, 0.0
      %599 = vadd.xlane.f32.xlu0 %v598
      %v600 = vpop.xlane.xlu0 %599
      %v601 = vrcp.pop %v600
      %v602 = vmul.f32 %v597, %v601
      %v603 = vpack.c.bf16 %v602, %v602
      %604 = vrot.lane.b32.xlu0 %v376, 80
      %v605 = vpop.permute.xlu0 %604
      %v607 = vsel %vm379, %v603, 0
      %v610 = vsel %vm383, %v605, 0
      %612 = vmatprep.subr.bf16.mxu0 0
      %613 = vmatpush1.bf16.msra.mxu0 %v610
      %614 = vmatprep.subr.bf16.mxu0 0
      %615 = vmatpush1.bf16.msra.mxu0 0
      %616 = vmatprep.subr.bf16.mxu0 0
      %617 = vmatpush1.bf16.msra.mxu0 0
      %618 = vmatprep.subr.bf16.mxu0 0
      %619 = vmatpush1.bf16.msra.mxu0 0
      %620 = vmatprep.subr.bf16.mxu0 0
      %621 = vmatpush1.bf16.msra.mxu0 0
      %622 = vmatprep.subr.bf16.mxu0 0
      %623 = vmatpush1.bf16.msra.mxu0 0
      %624 = vmatprep.subr.bf16.mxu0 0
      %625 = vmatpush1.bf16.msra.mxu0 0
      %626 = vmatprep.subr.bf16.mxu0 0
      %627 = vmatpush1.bf16.msra.mxu0 0
      %628 = vmatprep.subr.bf16.mxu0 0
      %629 = vmatpush1.bf16.msra.mxu0 0
      %630 = vmatprep.subr.bf16.mxu0 0
      %631 = vmatpush1.bf16.msra.mxu0 0
      %632 = vmatprep.subr.bf16.mxu0 0
      %633 = vmatpush1.bf16.msra.mxu0 0
      %634 = vmatprep.subr.bf16.mxu0 0
      %635 = vmatpush1.bf16.msra.mxu0 0
      %636 = vmatprep.subr.bf16.mxu0 0
      %637 = vmatpush1.bf16.msra.mxu0 0
      %638 = vmatprep.subr.bf16.mxu0 0
      %639 = vmatpush1.bf16.msra.mxu0 0
      %640 = vmatprep.subr.bf16.mxu0 0
      %641 = vmatpush1.bf16.msra.mxu0 0
      %642 = vmatprep.subr.bf16.mxu0 0
      %643 = vmatpush1.bf16.msra.mxu0 0
      %644 = vmatprep.mubr.bf16.mxu0 0
      %645 = vmatmul.mubr.bf16.gmra.mrb[0].mxu0 %v607
      %v646 = vpop.f32.mrb[0].mxu0
      %v647 = vadd.f32 0.0, %v646
      %v648 = vpop.f32.mrb[0].mxu0
      %v649 = vpop.f32.mrb[0].mxu0
      %v650 = vpop.f32.mrb[0].mxu0
      %651 = vdwg.mxu0
      %652 = vrot.lane.b32.xlu0 %v429, 104
      %v653 = vpop.permute.xlu0 %652
      %654 = vrot.lane.b32.xlu0 %v376, 104
      %v655 = vpop.permute.xlu0 %654
      %v657 = vsel %vm313, %v653, 0
      %v660 = vsel %vm313, %v655, 0
      %662 = vmatprep.subr.bf16.mxu0 0
      %663 = vmatpush1.bf16.xpose.msra.mxu0 %v660
      %664 = vmatprep.subr.bf16.mxu0 0
      %665 = vmatpush1.bf16.xpose.msra.mxu0 0
      %666 = vmatprep.subr.bf16.mxu0 0
      %667 = vmatpush1.bf16.xpose.msra.mxu0 0
      %668 = vmatprep.subr.bf16.mxu0 0
      %669 = vmatpush1.bf16.xpose.msra.mxu0 0
      %670 = vmatprep.subr.bf16.mxu0 0
      %671 = vmatpush1.bf16.xpose.msra.mxu0 0
      %672 = vmatprep.subr.bf16.mxu0 0
      %673 = vmatpush1.bf16.xpose.msra.mxu0 0
      %674 = vmatprep.subr.bf16.mxu0 0
      %675 = vmatpush1.bf16.xpose.msra.mxu0 0
      %676 = vmatprep.subr.bf16.mxu0 0
      %677 = vmatpush1.bf16.xpose.msra.mxu0 0
      %678 = vmatprep.subr.bf16.mxu0 0
      %679 = vmatpush1.bf16.xpose.msra.mxu0 0
      %680 = vmatprep.subr.bf16.mxu0 0
      %681 = vmatpush1.bf16.xpose.msra.mxu0 0
      %682 = vmatprep.subr.bf16.mxu0 0
      %683 = vmatpush1.bf16.xpose.msra.mxu0 0
      %684 = vmatprep.subr.bf16.mxu0 0
      %685 = vmatpush1.bf16.xpose.msra.mxu0 0
      %686 = vmatprep.subr.bf16.mxu0 0
      %687 = vmatpush1.bf16.xpose.msra.mxu0 0
      %688 = vmatprep.subr.bf16.mxu0 0
      %689 = vmatpush1.bf16.xpose.msra.mxu0 0
      %690 = vmatprep.subr.bf16.mxu0 0
      %691 = vmatpush1.bf16.xpose.msra.mxu0 0
      %692 = vmatprep.subr.bf16.mxu0 0
      %693 = vmatpush1.bf16.xpose.msra.mxu0 0
      %694 = vmatprep.mubr.bf16.mxu0 0
      %695 = vmatmul.mubr.bf16.gmra.mrb[0].mxu0 %v657
      %v696 = vpop.f32.mrb[0].mxu0
      %v697 = vadd.f32 0.0, %v696
      %v698 = vpop.f32.mrb[0].mxu0
      %v699 = vpop.f32.mrb[0].mxu0
      %v700 = vpop.f32.mrb[0].mxu0
      %701 = vdwg.mxu0
      %v702 = vsel %vm305, %v697, -1e+30
      %v703 = vsel %vm361, %v702, -inf
      %704 = vmax.xlane.f32.xlu0 %v703
      %v705 = vpop.xlane.xlu0 %704
      %v706 = vsub.f32 %v702, %v705
      %v707 = vmul.f32 %v706, 1.442695
      %v708 = vpow.pop %v707
      %v709 = vsel %vm361, %v708, 0.0
      %710 = vadd.xlane.f32.xlu0 %v709
      %v711 = vpop.xlane.xlu0 %710
      %v712 = vrcp.pop %v711
      %v713 = vmul.f32 %v708, %v712
      %v714 = vpack.c.bf16 %v713, %v713
      %715 = vrot.lane.b32.xlu0 %v376, 72
      %v716 = vpop.permute.xlu0 %715
      %v718 = vsel %vm379, %v714, 0
      %v721 = vsel %vm383, %v716, 0
      %723 = vmatprep.subr.bf16.mxu0 0
      %724 = vmatpush1.bf16.msra.mxu0 %v721
      %725 = vmatprep.subr.bf16.mxu0 0
      %726 = vmatpush1.bf16.msra.mxu0 0
      %727 = vmatprep.subr.bf16.mxu0 0
      %728 = vmatpush1.bf16.msra.mxu0 0
      %729 = vmatprep.subr.bf16.mxu0 0
      %730 = vmatpush1.bf16.msra.mxu0 0
      %731 = vmatprep.subr.bf16.mxu0 0
      %732 = vmatpush1.bf16.msra.mxu0 0
      %733 = vmatprep.subr.bf16.mxu0 0
      %734 = vmatpush1.bf16.msra.mxu0 0
      %735 = vmatprep.subr.bf16.mxu0 0
      %736 = vmatpush1.bf16.msra.mxu0 0
      %737 = vmatprep.subr.bf16.mxu0 0
      %738 = vmatpush1.bf16.msra.mxu0 0
      %739 = vmatprep.subr.bf16.mxu0 0
      %740 = vmatpush1.bf16.msra.mxu0 0
      %741 = vmatprep.subr.bf16.mxu0 0
      %742 = vmatpush1.bf16.msra.mxu0 0
      %743 = vmatprep.subr.bf16.mxu0 0
      %744 = vmatpush1.bf16.msra.mxu0 0
      %745 = vmatprep.subr.bf16.mxu0 0
      %746 = vmatpush1.bf16.msra.mxu0 0
      %747 = vmatprep.subr.bf16.mxu0 0
      %748 = vmatpush1.bf16.msra.mxu0 0
      %749 = vmatprep.subr.bf16.mxu0 0
      %750 = vmatpush1.bf16.msra.mxu0 0
      %751 = vmatprep.subr.bf16.mxu0 0
      %752 = vmatpush1.bf16.msra.mxu0 0
      %753 = vmatprep.subr.bf16.mxu0 0
      %754 = vmatpush1.bf16.msra.mxu0 0
      %755 = vmatprep.mubr.bf16.mxu0 0
      %756 = vmatmul.mubr.bf16.gmra.mrb[0].mxu0 %v718
      %v757 = vpop.f32.mrb[0].mxu0
      %v758 = vadd.f32 0.0, %v757
      %v759 = vpop.f32.mrb[0].mxu0
      %v760 = vpop.f32.mrb[0].mxu0
      %v761 = vpop.f32.mrb[0].mxu0
      %762 = vdwg.mxu0
      %764 = vrot.lane.b32.xlu0 %v536, 8
      %v765 = vpop.permute.xlu0 %764
      %768 = vrot.lane.b32.xlu0 %v647, 16
      %v769 = vpop.permute.xlu0 %768
      %772 = vrot.lane.b32.xlu0 %v758, 24
      %v773 = vpop.permute.xlu0 %772
      %v775 = vsel %vm313, %v422, %v765
      %vm776 = vcmask 130048
      %v777 = vsel %vm776, %v775, %v769
      %vm778 = vcmask 195584
      %v779 = vsel %vm778, %v777, %v773
      %v780 = vpack.c.bf16 %v779, %v779
      %v781 = vunpack.c.l.bf16 %v307
      %v786 = vunpack.c.l.b16 %v308
      %v787 = vunpack.c.l.b16 %v309
      %v788 = vunpack.c.l.b16 %v310
      %v789 = vunpack.c.l.b16 %v311
      %v790 = vpack.c.b16 %v787, %v786
      %v791 = vpack.c.b16 %v789, %v788
      %vm794 = vcmask 261120
      %v796 = vsel %vm794, %v780, 0
      %798 = vmatprep.subr.bf16.mxu0 0
      %799 = vmatpush1.bf16.msra.mxu0 %v790
      %800 = vmatprep.subr.bf16.mxu0 0
      %801 = vmatpush1.bf16.msra.mxu0 %v791
      %802 = vmatprep.subr.bf16.mxu0 0
      %803 = vmatpush1.bf16.msra.mxu0 0
      %804 = vmatprep.subr.bf16.mxu0 0
      %805 = vmatpush1.bf16.msra.mxu0 0
      %806 = vmatprep.subr.bf16.mxu0 0
      %807 = vmatpush1.bf16.msra.mxu0 0
      %808 = vmatprep.subr.bf16.mxu0 0
      %809 = vmatpush1.bf16.msra.mxu0 0
      %810 = vmatprep.subr.bf16.mxu0 0
      %811 = vmatpush1.bf16.msra.mxu0 0
      %812 = vmatprep.subr.bf16.mxu0 0
      %813 = vmatpush1.bf16.msra.mxu0 0
      %814 = vmatprep.subr.bf16.mxu0 0
      %815 = vmatpush1.bf16.msra.mxu0 0
      %816 = vmatprep.subr.bf16.mxu0 0
      %817 = vmatpush1.bf16.msra.mxu0 0
      %818 = vmatprep.subr.bf16.mxu0 0
      %819 = vmatpush1.bf16.msra.mxu0 0
      %820 = vmatprep.subr.bf16.mxu0 0
      %821 = vmatpush1.bf16.msra.mxu0 0
      %822 = vmatprep.subr.bf16.mxu0 0
      %823 = vmatpush1.bf16.msra.mxu0 0
      %824 = vmatprep.subr.bf16.mxu0 0
      %825 = vmatpush1.bf16.msra.mxu0 0
      %826 = vmatprep.subr.bf16.mxu0 0
      %827 = vmatpush1.bf16.msra.mxu0 0
      %828 = vmatprep.subr.bf16.mxu0 0
      %829 = vmatpush1.bf16.msra.mxu0 0
      %830 = vmatprep.mubr.bf16.mxu0 0
      %831 = vmatmul.mubr.bf16.gmra.mrb[0].mxu0 %v796
      %v832 = vpop.f32.mrb[0].mxu0
      %v833 = vadd.f32 0.0, %v832
      %v834 = vpop.f32.mrb[0].mxu0
      %v835 = vpop.f32.mrb[0].mxu0
      %v836 = vpop.f32.mrb[0].mxu0
      %837 = vdwg.mxu0
      %v838 = vadd.f32 %v781, %v833
      %v840 = vlaneseq
      %v841 = vshrl.u32 %v840, 7
      %v842 = vsub.s32 0, %v841
      %v843 = vrot.slane %v312, %v842
      %v845 = vadd.f32 %v838, %v843
      %v846 = vpack.c.bf16 %v845, %v845
      %vm847 = vcmask 256000
      %848 = vst.msk [vmem:[%s295] sm:$0x7] %vm847, %v846
      %p849 = scmp.lt.s32.totalorder %s20, 1
      %s850 = scalar_select %p849, %s20, 1
      %p851 = scmp.lt.s32.totalorder %s21, 0
      %s852 = scalar_select %p851, %s21, 0
      %s853 = sadd.s32 %s852, %s850
      %s854 = smul.addr %s853, 4
      %s855 = scalar_lea.vmem %s5, %s854
      // Predicated region
      $region41: #{_lambda_.29} parent=39 // pred_check
        %p856 = pneg %p172
      $region42: #{_lambda_.29} parent=39 // pred_check_branch
        %858 = sbr.rel (%p856) target = $region44
      $region43: #{_lambda_.29} parent=39 // pred_region
        _
      $region44: #{_lambda_.29} parent=39 // pred_fallthru
        _
    $region40: #{_lambda_.29} parent=5 // pred_fallthru
      _
    %p859 = scmp.le.s32.totalorder 2, %s11
    // Predicated region
    $region45: #{_lambda_.29} parent=5 // pred_check
      %p860 = pneg %p859
    $region46: #{_lambda_.29} parent=5 // pred_check_branch
      %862 = sbr.rel (%p860) target = $region48
    $region47: #{_lambda_.29} parent=5 // pred_region
      %s863 = ssub.s32 %s11, 2
      // Predicated region
      $region49: #{_lambda_.29} parent=47 // pred_check
        %p864 = pneg %p178
      $region50: #{_lambda_.29} parent=47 // pred_check_branch
        %866 = sbr.rel (%p864) target = $region52
      $region51: #{_lambda_.29} parent=47 // pred_region
        %p867 = scmp.lt.s32.totalorder %s22, 1
        %s868 = scalar_select %p867, %s22, 1
        %p869 = scmp.lt.s32.totalorder %s23, 0
        %s870 = scalar_select %p869, %s23, 0
        %s871 = sadd.s32 %s870, %s868
        %s872 = smul.addr %s871, 4
        %s873 = scalar_lea.vmem %s5, %s872
      $region52: #{_lambda_.29} parent=47 // pred_fallthru
        _
    $region48: #{_lambda_.29} parent=5 // pred_fallthru
      _
  $region6: #{_lambda_.29} parent=0 // loop_footer
    %s15 = sadd.s32 1, %s11
  $region7: #{_lambda_.29} parent=0 // loop_footer_branch
    %10 = sbr.rel target = $region3
  $region8: #{_lambda_.29} parent=0 // loop_exit
    _

// kernel: _lambda_.21
$region0: #{_lambda_.21}
  #allocation0 [shape = 'u32[]', space=smem, size = 0x4, offset = 0x4, fixed_abs, tag = 'smem constant byte address 0x4 - core index']
  #allocation1 [shape = 'u32[144,128]{1,0:T(1,128)}', space=vmem, size = 0x12000, scoped, tag = 'internal scratch']
  %s0 = inlined_call_operand.vmem [shape: bf16[16,32], index: 0, kind: input, shape index: {}]
  %s1 = inlined_call_operand.vmem [shape: f32[1,32], index: 1, kind: input, shape index: {}]
  %s2 = inlined_call_operand.vmem [shape: f32[1,32], index: 2, kind: input, shape index: {}]
  %s3 = inlined_call_operand.vmem [shape: bf16[32,32], index: 3, kind: input, shape index: {}]
  %s4 = inlined_call_operand.vmem [shape: f32[1,32], index: 4, kind: input, shape index: {}]
  %s5 = inlined_call_operand.vmem [shape: bf16[32,64], index: 5, kind: input, shape index: {}]
  %s6 = inlined_call_operand.vmem [shape: f32[1,64], index: 6, kind: input, shape index: {}]
  %s7 = inlined_call_operand.vmem [shape: bf16[16,32], index: 7, kind: output, shape index: {0}]
  %s8 = inlined_call_operand.vmem [shape: bf16[16,64], index: 8, kind: output, shape index: {1}]
  %9 = xla_tuple %s7, %s8
  %s10 = sld [smem:[#allocation0]]
  $region46: #{_lambda_.21} parent=0
    _
  %s12 = ssub.s32 1, %s10
  %s13 = scalar_select 0, %s12, %s10
  // Predicated region
  $region2: #{_lambda_.21} parent=0 // pred_check
    _
  $region3: #{_lambda_.21} parent=0 // pred_check_branch
    %15 = sbr.rel (0) target = $region5
  $region4: #{_lambda_.21} parent=0 // pred_region
    _
  $region5: #{_lambda_.21} parent=0 // pred_fallthru
    _
  // Predicated region
  $region6: #{_lambda_.21} parent=0 // pred_check
    _
  $region7: #{_lambda_.21} parent=0 // pred_check_branch
    %17 = sbr.rel (0) target = $region9
  $region8: #{_lambda_.21} parent=0 // pred_region
    _
  $region9: #{_lambda_.21} parent=0 // pred_fallthru
    _
  // Predicated region
  $region10: #{_lambda_.21} parent=0 // pred_check
    _
  $region11: #{_lambda_.21} parent=0 // pred_check_branch
    %19 = sbr.rel (0) target = $region13
  $region12: #{_lambda_.21} parent=0 // pred_region
    _
  $region13: #{_lambda_.21} parent=0 // pred_fallthru
    _
  // Predicated region
  $region14: #{_lambda_.21} parent=0 // pred_check
    _
  $region15: #{_lambda_.21} parent=0 // pred_check_branch
    %21 = sbr.rel (0) target = $region17
  $region16: #{_lambda_.21} parent=0 // pred_region
    _
  $region17: #{_lambda_.21} parent=0 // pred_fallthru
    _
  // Predicated region
  $region18: #{_lambda_.21} parent=0 // pred_check
    _
  $region19: #{_lambda_.21} parent=0 // pred_check_branch
    %23 = sbr.rel (0) target = $region21
  $region20: #{_lambda_.21} parent=0 // pred_region
    _
  $region21: #{_lambda_.21} parent=0 // pred_fallthru
    _
  // Predicated region
  $region22: #{_lambda_.21} parent=0 // pred_check
    _
  $region23: #{_lambda_.21} parent=0 // pred_check_branch
    %25 = sbr.rel (0) target = $region25
  $region24: #{_lambda_.21} parent=0 // pred_region
    _
  $region25: #{_lambda_.21} parent=0 // pred_fallthru
    _
  // Predicated region
  $region26: #{_lambda_.21} parent=0 // pred_check
    _
  $region27: #{_lambda_.21} parent=0 // pred_check_branch
    %27 = sbr.rel (0) target = $region29
  $region28: #{_lambda_.21} parent=0 // pred_region
    _
  $region29: #{_lambda_.21} parent=0 // pred_fallthru
    _
  %v29 = vld [vmem:[%s0] sm:$0xf]
  %v30 = vld [vmem:[%s0 + $0x4] sm:$0xf]
  %v31 = vunpack.c.l.bf16 %v29
  %v32 = vunpack.c.l.bf16 %v30
  %v33 = vld [vmem:[%s1] sm:$0x1]
  %v34 = vld [vmem:[%s2] sm:$0x1]
  %vm35 = vcmask 261120
  %v36 = vsel %vm35, %v31, 0.0
  %37 = vadd.xlane.f32.xlu0 %v36
  %v38 = vpop.xlane.xlu0 %37
  %v39 = vsel %vm35, %v32, 0.0
  %40 = vadd.xlane.f32.xlu0 %v39
  %v41 = vpop.xlane.xlu0 %40
  %v42 = vrcp.pop 32.0
  %v43 = vmul.f32 %v38, %v42
  %v44 = vmul.f32 %v41, %v42
  %v45 = vsub.f32 %v31, %v43
  %v46 = vsub.f32 %v32, %v44
  %v47 = vmul.f32 %v45, %v45
  %v48 = vmul.f32 %v46, %v46
  %v49 = vsel %vm35, %v47, 0.0
  %50 = vadd.xlane.f32.xlu0 %v49
  %v51 = vpop.xlane.xlu0 %50
  %v52 = vsel %vm35, %v48, 0.0
  %53 = vadd.xlane.f32.xlu0 %v52
  %v54 = vpop.xlane.xlu0 %53
  %v55 = vmul.f32 %v51, %v42
  %v56 = vmul.f32 %v54, %v42
  %v57 = vadd.f32 %v55, 1e-12
  %v58 = vadd.f32 %v56, 1e-12
  %v59 = vrsqrt.pop %v57
  %v60 = vrsqrt.pop %v58
  %v61 = vmul.f32 %v45, %v59
  %v62 = vmul.f32 %v46, %v60
  %v64 = vlaneseq
  %v65 = vshrl.u32 %v64, 7
  %v66 = vsub.s32 0, %v65
  %v67 = vrot.slane %v33, %v66
  %v69 = vmul.f32 %v61, %v67
  %v70 = vmul.f32 %v62, %v67
  %v72 = vlaneseq
  %v73 = vshrl.u32 %v72, 7
  %v74 = vsub.s32 0, %v73
  %v75 = vrot.slane %v34, %v74
  %v77 = vadd.f32 %v69, %v75
  %v78 = vadd.f32 %v70, %v75
  %v79 = vpack.c.bf16 %v78, %v77
  %v80 = vld [vmem:[%s3] sm:$0xf]
  %v81 = vld [vmem:[%s3 + $0x4] sm:$0xf]
  %v82 = vld [vmem:[%s3 + $0x8] sm:$0xf]
  %v83 = vld [vmem:[%s3 + $0xc] sm:$0xf]
  %v84 = vld [vmem:[%s4] sm:$0x1]
  %v86 = vlaneseq
  %v87 = vshrl.u32 %v86, 7
  %v88 = vsub.s32 0, %v87
  %v89 = vrot.slane %v84, %v88
  %v95 = vunpack.c.l.b16 %v80
  %v96 = vunpack.c.l.b16 %v81
  %v97 = vunpack.c.l.b16 %v82
  %v98 = vunpack.c.l.b16 %v83
  %v99 = vpack.c.b16 %v96, %v95
  %v100 = vpack.c.b16 %v98, %v97
  %v104 = vsel %vm35, %v79, 0
  %106 = vmatprep.subr.bf16.mxu0 0
  %107 = vmatpush1.bf16.msra.mxu0 %v99
  %108 = vmatprep.subr.bf16.mxu0 0
  %109 = vmatpush1.bf16.msra.mxu0 %v100
  %110 = vmatprep.subr.bf16.mxu0 0
  %111 = vmatpush1.bf16.msra.mxu0 0
  %112 = vmatprep.subr.bf16.mxu0 0
  %113 = vmatpush1.bf16.msra.mxu0 0
  %114 = vmatprep.subr.bf16.mxu0 0
  %115 = vmatpush1.bf16.msra.mxu0 0
  %116 = vmatprep.subr.bf16.mxu0 0
  %117 = vmatpush1.bf16.msra.mxu0 0
  %118 = vmatprep.subr.bf16.mxu0 0
  %119 = vmatpush1.bf16.msra.mxu0 0
  %120 = vmatprep.subr.bf16.mxu0 0
  %121 = vmatpush1.bf16.msra.mxu0 0
  %122 = vmatprep.subr.bf16.mxu0 0
  %123 = vmatpush1.bf16.msra.mxu0 0
  %124 = vmatprep.subr.bf16.mxu0 0
  %125 = vmatpush1.bf16.msra.mxu0 0
  %126 = vmatprep.subr.bf16.mxu0 0
  %127 = vmatpush1.bf16.msra.mxu0 0
  %128 = vmatprep.subr.bf16.mxu0 0
  %129 = vmatpush1.bf16.msra.mxu0 0
  %130 = vmatprep.subr.bf16.mxu0 0
  %131 = vmatpush1.bf16.msra.mxu0 0
  %132 = vmatprep.subr.bf16.mxu0 0
  %133 = vmatpush1.bf16.msra.mxu0 0
  %134 = vmatprep.subr.bf16.mxu0 0
  %135 = vmatpush1.bf16.msra.mxu0 0
  %136 = vmatprep.subr.bf16.mxu0 0
  %137 = vmatpush1.bf16.msra.mxu0 0
  %138 = vmatprep.mubr.bf16.mxu0 0
  %139 = vmatmul.mubr.bf16.gmra.mrb[0].mxu0 %v104
  %v140 = vpop.f32.mrb[0].mxu0
  %v141 = vadd.f32 %v89, %v140
  %v142 = vpop.f32.mrb[0].mxu0
  %v143 = vpop.f32.mrb[0].mxu0
  %v144 = vadd.f32 %v89, %v143
  %v145 = vpop.f32.mrb[0].mxu0
  %146 = vdwg.mxu0
  %v147 = vmul.f32 %v141, 0.35355338
  %v148 = vmul.f32 %v144, 0.35355338
  %v149 = vpack.c.bf16 %v148, %v147
  %v151 = vunpack.c.l.b16 %v149
  %v152 = vunpack.c.h.b16 %v149
  %v153 = vpack.c.b16 %v151, %v151
  %v154 = vpack.c.b16 %v152, %v152
  %vm157 = vcmask 257024
  %158 = vst.msk [vmem:[%s7] sm:$0xf] %vm157, %v153
  %159 = vst.msk [vmem:[%s7 + $0x4] sm:$0xf] %vm157, %v154
  %v160 = vld [vmem:[%s5] sm:$0xf]
  %v161 = vld [vmem:[%s5 + $0x4] sm:$0xf]
  %v162 = vld [vmem:[%s5 + $0x8] sm:$0xf]
  %v163 = vld [vmem:[%s5 + $0xc] sm:$0xf]
  %v164 = vld [vmem:[%s6] sm:$0x1]
  %v166 = vlaneseq
  %v167 = vshrl.u32 %v166, 7
  %v168 = vsub.s32 0, %v167
  %v169 = vrot.slane %v164, %v168
  %v175 = vunpack.c.l.b16 %v160
  %v176 = vunpack.c.l.b16 %v161
  %v177 = vunpack.c.l.b16 %v162
  %v178 = vunpack.c.l.b16 %v163
  %v179 = vpack.c.b16 %v176, %v175
  %v180 = vpack.c.b16 %v178, %v177
  %183 = vmatprep.subr.bf16.mxu0 0
  %184 = vmatpush1.bf16.msra.mxu0 %v179
  %185 = vmatprep.subr.bf16.mxu0 0
  %186 = vmatpush1.bf16.msra.mxu0 %v180
  %187 = vmatprep.subr.bf16.mxu0 0
  %188 = vmatpush1.bf16.msra.mxu0 0
  %189 = vmatprep.subr.bf16.mxu0 0
  %190 = vmatpush1.bf16.msra.mxu0 0
  %191 = vmatprep.subr.bf16.mxu0 0
  %192 = vmatpush1.bf16.msra.mxu0 0
  %193 = vmatprep.subr.bf16.mxu0 0
  %194 = vmatpush1.bf16.msra.mxu0 0
  %195 = vmatprep.subr.bf16.mxu0 0
  %196 = vmatpush1.bf16.msra.mxu0 0
  %197 = vmatprep.subr.bf16.mxu0 0
  %198 = vmatpush1.bf16.msra.mxu0 0
  %199 = vmatprep.subr.bf16.mxu0 0
  %200 = vmatpush1.bf16.msra.mxu0 0
  %201 = vmatprep.subr.bf16.mxu0 0
  %202 = vmatpush1.bf16.msra.mxu0 0
  %203 = vmatprep.subr.bf16.mxu0 0
  %204 = vmatpush1.bf16.msra.mxu0 0
  %205 = vmatprep.subr.bf16.mxu0 0
  %206 = vmatpush1.bf16.msra.mxu0 0
  %207 = vmatprep.subr.bf16.mxu0 0
  %208 = vmatpush1.bf16.msra.mxu0 0
  %209 = vmatprep.subr.bf16.mxu0 0
  %210 = vmatpush1.bf16.msra.mxu0 0
  %211 = vmatprep.subr.bf16.mxu0 0
  %212 = vmatpush1.bf16.msra.mxu0 0
  %213 = vmatprep.subr.bf16.mxu0 0
  %214 = vmatpush1.bf16.msra.mxu0 0
  %215 = vmatprep.mubr.bf16.mxu0 0
  %216 = vmatmul.mubr.bf16.gmra.mrb[0].mxu0 %v104
  %v217 = vpop.f32.mrb[0].mxu0
  %v218 = vadd.f32 %v169, %v217
  %v219 = vpop.f32.mrb[0].mxu0
  %v220 = vpop.f32.mrb[0].mxu0
  %v221 = vadd.f32 %v169, %v220
  %v222 = vpop.f32.mrb[0].mxu0
  %223 = vdwg.mxu0
  %v224 = vpack.c.bf16 %v221, %v218
  %v226 = vunpack.c.l.b16 %v224
  %v227 = vunpack.c.h.b16 %v224
  %v228 = vpack.c.b16 %v226, %v226
  %v229 = vpack.c.b16 %v227, %v227
  %vm232 = vcmask 519168
  %233 = vst.msk [vmem:[%s8] sm:$0xf] %vm232, %v228
  %234 = vst.msk [vmem:[%s8 + $0x4] sm:$0xf] %vm232, %v229
  // Predicated region
  $region30: #{_lambda_.21} parent=0 // pred_check
    _
  $region31: #{_lambda_.21} parent=0 // pred_check_branch
    %236 = sbr.rel (0) target = $region33
  $region32: #{_lambda_.21} parent=0 // pred_region
    _
  $region33: #{_lambda_.21} parent=0 // pred_fallthru
    _
  // Predicated region
  $region34: #{_lambda_.21} parent=0 // pred_check
    _
  $region35: #{_lambda_.21} parent=0 // pred_check_branch
    %238 = sbr.rel (0) target = $region37
  $region36: #{_lambda_.21} parent=0 // pred_region
    _
  $region37: #{_lambda_.21} parent=0 // pred_fallthru
    _
  // Predicated region
  $region38: #{_lambda_.21} parent=0 // pred_check
    _
  $region39: #{_lambda_.21} parent=0 // pred_check_branch
    %240 = sbr.rel (0) target = $region41
  $region40: #{_lambda_.21} parent=0 // pred_region
    _
  $region41: #{_lambda_.21} parent=0 // pred_fallthru
    _
  // Predicated region
  $region42: #{_lambda_.21} parent=0 // pred_check
    _
  $region43: #{_lambda_.21} parent=0 // pred_check_branch
    %242 = sbr.rel (0) target = $region45
  $region44: #{_lambda_.21} parent=0 // pred_region
    _
  $region45: #{_lambda_.21} parent=0 // pred_fallthru
    _

// kernel: _lambda_.23
$region0: #{_lambda_.23}
  #allocation0 [shape = 'u32[]', space=smem, size = 0x4, offset = 0x4, fixed_abs, tag = 'smem constant byte address 0x4 - core index']
  #allocation1 [shape = 'u32[144,128]{1,0:T(1,128)}', space=vmem, size = 0x12000, scoped, tag = 'internal scratch']
  %s0 = inlined_call_operand.vmem [shape: bf16[16,32], index: 0, kind: input, shape index: {}]
  %s1 = inlined_call_operand.vmem [shape: f32[1,32], index: 1, kind: input, shape index: {}]
  %s2 = inlined_call_operand.vmem [shape: f32[1,32], index: 2, kind: input, shape index: {}]
  %s3 = inlined_call_operand.vmem [shape: bf16[32,64], index: 3, kind: input, shape index: {}]
  %s4 = inlined_call_operand.vmem [shape: f32[1,64], index: 4, kind: input, shape index: {}]
  %s5 = inlined_call_operand.vmem [shape: bf16[64,32], index: 5, kind: input, shape index: {}]
  %s6 = inlined_call_operand.vmem [shape: f32[1,32], index: 6, kind: input, shape index: {}]
  %s7 = inlined_call_operand.vmem [shape: bf16[16,32], index: 7, kind: output, shape index: {}]
  %s8 = sld [smem:[#allocation0]]
  $region38: #{_lambda_.23} parent=0
    _
  %s10 = ssub.s32 1, %s8
  %s11 = scalar_select 0, %s10, %s8
  // Predicated region
  $region2: #{_lambda_.23} parent=0 // pred_check
    _
  $region3: #{_lambda_.23} parent=0 // pred_check_branch
    %13 = sbr.rel (0) target = $region5
  $region4: #{_lambda_.23} parent=0 // pred_region
    _
  $region5: #{_lambda_.23} parent=0 // pred_fallthru
    _
  // Predicated region
  $region6: #{_lambda_.23} parent=0 // pred_check
    _
  $region7: #{_lambda_.23} parent=0 // pred_check_branch
    %15 = sbr.rel (0) target = $region9
  $region8: #{_lambda_.23} parent=0 // pred_region
    _
  $region9: #{_lambda_.23} parent=0 // pred_fallthru
    _
  // Predicated region
  $region10: #{_lambda_.23} parent=0 // pred_check
    _
  $region11: #{_lambda_.23} parent=0 // pred_check_branch
    %17 = sbr.rel (0) target = $region13
  $region12: #{_lambda_.23} parent=0 // pred_region
    _
  $region13: #{_lambda_.23} parent=0 // pred_fallthru
    _
  // Predicated region
  $region14: #{_lambda_.23} parent=0 // pred_check
    _
  $region15: #{_lambda_.23} parent=0 // pred_check_branch
    %19 = sbr.rel (0) target = $region17
  $region16: #{_lambda_.23} parent=0 // pred_region
    _
  $region17: #{_lambda_.23} parent=0 // pred_fallthru
    _
  // Predicated region
  $region18: #{_lambda_.23} parent=0 // pred_check
    _
  $region19: #{_lambda_.23} parent=0 // pred_check_branch
    %21 = sbr.rel (0) target = $region21
  $region20: #{_lambda_.23} parent=0 // pred_region
    _
  $region21: #{_lambda_.23} parent=0 // pred_fallthru
    _
  // Predicated region
  $region22: #{_lambda_.23} parent=0 // pred_check
    _
  $region23: #{_lambda_.23} parent=0 // pred_check_branch
    %23 = sbr.rel (0) target = $region25
  $region24: #{_lambda_.23} parent=0 // pred_region
    _
  $region25: #{_lambda_.23} parent=0 // pred_fallthru
    _
  // Predicated region
  $region26: #{_lambda_.23} parent=0 // pred_check
    _
  $region27: #{_lambda_.23} parent=0 // pred_check_branch
    %25 = sbr.rel (0) target = $region29
  $region28: #{_lambda_.23} parent=0 // pred_region
    _
  $region29: #{_lambda_.23} parent=0 // pred_fallthru
    _
  %v27 = vld [vmem:[%s0] sm:$0xf]
  %v28 = vld [vmem:[%s0 + $0x4] sm:$0xf]
  %v29 = vunpack.c.l.bf16 %v27
  %v30 = vunpack.c.l.bf16 %v28
  %v31 = vld [vmem:[%s1] sm:$0x1]
  %v32 = vld [vmem:[%s2] sm:$0x1]
  %vm33 = vcmask 261120
  %v34 = vsel %vm33, %v29, 0.0
  %35 = vadd.xlane.f32.xlu0 %v34
  %v36 = vpop.xlane.xlu0 %35
  %v37 = vsel %vm33, %v30, 0.0
  %38 = vadd.xlane.f32.xlu0 %v37
  %v39 = vpop.xlane.xlu0 %38
  %v40 = vrcp.pop 32.0
  %v41 = vmul.f32 %v36, %v40
  %v42 = vmul.f32 %v39, %v40
  %v43 = vsub.f32 %v29, %v41
  %v44 = vsub.f32 %v30, %v42
  %v45 = vmul.f32 %v43, %v43
  %v46 = vmul.f32 %v44, %v44
  %v47 = vsel %vm33, %v45, 0.0
  %48 = vadd.xlane.f32.xlu0 %v47
  %v49 = vpop.xlane.xlu0 %48
  %v50 = vsel %vm33, %v46, 0.0
  %51 = vadd.xlane.f32.xlu0 %v50
  %v52 = vpop.xlane.xlu0 %51
  %v53 = vmul.f32 %v49, %v40
  %v54 = vmul.f32 %v52, %v40
  %v55 = vadd.f32 %v53, 1e-12
  %v56 = vadd.f32 %v54, 1e-12
  %v57 = vrsqrt.pop %v55
  %v58 = vrsqrt.pop %v56
  %v59 = vmul.f32 %v43, %v57
  %v60 = vmul.f32 %v44, %v58
  %v62 = vlaneseq
  %v63 = vshrl.u32 %v62, 7
  %v64 = vsub.s32 0, %v63
  %v65 = vrot.slane %v31, %v64
  %v67 = vmul.f32 %v59, %v65
  %v68 = vmul.f32 %v60, %v65
  %v70 = vlaneseq
  %v71 = vshrl.u32 %v70, 7
  %v72 = vsub.s32 0, %v71
  %v73 = vrot.slane %v32, %v72
  %v75 = vadd.f32 %v67, %v73
  %v76 = vadd.f32 %v68, %v73
  %v77 = vpack.c.bf16 %v76, %v75
  %v78 = vld [vmem:[%s3] sm:$0xf]
  %v79 = vld [vmem:[%s3 + $0x4] sm:$0xf]
  %v80 = vld [vmem:[%s3 + $0x8] sm:$0xf]
  %v81 = vld [vmem:[%s3 + $0xc] sm:$0xf]
  %v82 = vld [vmem:[%s4] sm:$0x1]
  %v84 = vlaneseq
  %v85 = vshrl.u32 %v84, 7
  %v86 = vsub.s32 0, %v85
  %v87 = vrot.slane %v82, %v86
  %v93 = vunpack.c.l.b16 %v78
  %v94 = vunpack.c.l.b16 %v79
  %v95 = vunpack.c.l.b16 %v80
  %v96 = vunpack.c.l.b16 %v81
  %v97 = vpack.c.b16 %v94, %v93
  %v98 = vpack.c.b16 %v96, %v95
  %v102 = vsel %vm33, %v77, 0
  %104 = vmatprep.subr.bf16.mxu0 0
  %105 = vmatpush1.bf16.msra.mxu0 %v97
  %106 = vmatprep.subr.bf16.mxu0 0
  %107 = vmatpush1.bf16.msra.mxu0 %v98
  %108 = vmatprep.subr.bf16.mxu0 0
  %109 = vmatpush1.bf16.msra.mxu0 0
  %110 = vmatprep.subr.bf16.mxu0 0
  %111 = vmatpush1.bf16.msra.mxu0 0
  %112 = vmatprep.subr.bf16.mxu0 0
  %113 = vmatpush1.bf16.msra.mxu0 0
  %114 = vmatprep.subr.bf16.mxu0 0
  %115 = vmatpush1.bf16.msra.mxu0 0
  %116 = vmatprep.subr.bf16.mxu0 0
  %117 = vmatpush1.bf16.msra.mxu0 0
  %118 = vmatprep.subr.bf16.mxu0 0
  %119 = vmatpush1.bf16.msra.mxu0 0
  %120 = vmatprep.subr.bf16.mxu0 0
  %121 = vmatpush1.bf16.msra.mxu0 0
  %122 = vmatprep.subr.bf16.mxu0 0
  %123 = vmatpush1.bf16.msra.mxu0 0
  %124 = vmatprep.subr.bf16.mxu0 0
  %125 = vmatpush1.bf16.msra.mxu0 0
  %126 = vmatprep.subr.bf16.mxu0 0
  %127 = vmatpush1.bf16.msra.mxu0 0
  %128 = vmatprep.subr.bf16.mxu0 0
  %129 = vmatpush1.bf16.msra.mxu0 0
  %130 = vmatprep.subr.bf16.mxu0 0
  %131 = vmatpush1.bf16.msra.mxu0 0
  %132 = vmatprep.subr.bf16.mxu0 0
  %133 = vmatpush1.bf16.msra.mxu0 0
  %134 = vmatprep.subr.bf16.mxu0 0
  %135 = vmatpush1.bf16.msra.mxu0 0
  %136 = vmatprep.mubr.bf16.mxu0 0
  %137 = vmatmul.mubr.bf16.gmra.mrb[0].mxu0 %v102
  %v138 = vpop.f32.mrb[0].mxu0
  %v139 = vadd.f32 %v87, %v138
  %v140 = vpop.f32.mrb[0].mxu0
  %v141 = vpop.f32.mrb[0].mxu0
  %v142 = vadd.f32 %v87, %v141
  %v143 = vpop.f32.mrb[0].mxu0
  %144 = vdwg.mxu0
  %v145 = vmax.f32 %v139, 0.0
  %v146 = vmax.f32 %v142, 0.0
  %v147 = vpack.c.bf16 %v146, %v145
  %v148 = vld [vmem:[%s5] sm:$0xf]
  %v149 = vld [vmem:[%s5 + $0x4] sm:$0xf]
  %v150 = vld [vmem:[%s5 + $0x8] sm:$0xf]
  %v151 = vld [vmem:[%s5 + $0xc] sm:$0xf]
  %v152 = vld [vmem:[%s5 + $0x10] sm:$0xf]
  %v153 = vld [vmem:[%s5 + $0x14] sm:$0xf]
  %v154 = vld [vmem:[%s5 + $0x18] sm:$0xf]
  %v155 = vld [vmem:[%s5 + $0x1c] sm:$0xf]
  %v164 = vunpack.c.l.b16 %v148
  %v165 = vunpack.c.l.b16 %v149
  %v166 = vunpack.c.l.b16 %v150
  %v167 = vunpack.c.l.b16 %v151
  %v168 = vunpack.c.l.b16 %v152
  %v169 = vunpack.c.l.b16 %v153
  %v170 = vunpack.c.l.b16 %v154
  %v171 = vunpack.c.l.b16 %v155
  %v172 = vpack.c.b16 %v165, %v164
  %v173 = vpack.c.b16 %v167, %v166
  %v174 = vpack.c.b16 %v169, %v168
  %v175 = vpack.c.b16 %v171, %v170
  %vm180 = vcmask 523264
  %v182 = vsel %vm180, %v147, 0
  %184 = vmatprep.subr.bf16.mxu0 0
  %185 = vmatpush1.bf16.msra.mxu0 %v172
  %186 = vmatprep.subr.bf16.mxu0 0
  %187 = vmatpush1.bf16.msra.mxu0 %v173
  %188 = vmatprep.subr.bf16.mxu0 0
  %189 = vmatpush1.bf16.msra.mxu0 %v174
  %190 = vmatprep.subr.bf16.mxu0 0
  %191 = vmatpush1.bf16.msra.mxu0 %v175
  %192 = vmatprep.subr.bf16.mxu0 0
  %193 = vmatpush1.bf16.msra.mxu0 0
  %194 = vmatprep.subr.bf16.mxu0 0
  %195 = vmatpush1.bf16.msra.mxu0 0
  %196 = vmatprep.subr.bf16.mxu0 0
  %197 = vmatpush1.bf16.msra.mxu0 0
  %198 = vmatprep.subr.bf16.mxu0 0
  %199 = vmatpush1.bf16.msra.mxu0 0
  %200 = vmatprep.subr.bf16.mxu0 0
  %201 = vmatpush1.bf16.msra.mxu0 0
  %202 = vmatprep.subr.bf16.mxu0 0
  %203 = vmatpush1.bf16.msra.mxu0 0
  %204 = vmatprep.subr.bf16.mxu0 0
  %205 = vmatpush1.bf16.msra.mxu0 0
  %206 = vmatprep.subr.bf16.mxu0 0
  %207 = vmatpush1.bf16.msra.mxu0 0
  %208 = vmatprep.subr.bf16.mxu0 0
  %209 = vmatpush1.bf16.msra.mxu0 0
  %210 = vmatprep.subr.bf16.mxu0 0
  %211 = vmatpush1.bf16.msra.mxu0 0
  %212 = vmatprep.subr.bf16.mxu0 0
  %213 = vmatpush1.bf16.msra.mxu0 0
  %214 = vmatprep.subr.bf16.mxu0 0
  %215 = vmatpush1.bf16.msra.mxu0 0
  %216 = vmatprep.mubr.bf16.mxu0 0
  %217 = vmatmul.mubr.bf16.gmra.mrb[0].mxu0 %v182
  %v218 = vpop.f32.mrb[0].mxu0
  %v219 = vadd.f32 0.0, %v218
  %v220 = vpop.f32.mrb[0].mxu0
  %v221 = vpop.f32.mrb[0].mxu0
  %v222 = vadd.f32 0.0, %v221
  %v223 = vpop.f32.mrb[0].mxu0
  %224 = vdwg.mxu0
  %v225 = vadd.f32 %v29, %v219
  %v226 = vadd.f32 %v30, %v222
  %v227 = vld [vmem:[%s6] sm:$0x1]
  %v229 = vlaneseq
  %v230 = vshrl.u32 %v229, 7
  %v231 = vsub.s32 0, %v230
  %v232 = vrot.slane %v227, %v231
  %v234 = vadd.f32 %v225, %v232
  %v235 = vadd.f32 %v226, %v232
  %v236 = vpack.c.bf16 %v235, %v234
  %v238 = vunpack.c.l.b16 %v236
  %v239 = vunpack.c.h.b16 %v236
  %v240 = vpack.c.b16 %v238, %v238
  %v241 = vpack.c.b16 %v239, %v239
  %vm244 = vcmask 257024
  %245 = vst.msk [vmem:[%s7] sm:$0xf] %vm244, %v240
  %246 = vst.msk [vmem:[%s7 + $0x4] sm:$0xf] %vm244, %v241
  // Predicated region
  $region30: #{_lambda_.23} parent=0 // pred_check
    _
  $region31: #{_lambda_.23} parent=0 // pred_check_branch
    %248 = sbr.rel (0) target = $region33
  $region32: #{_lambda_.23} parent=0 // pred_region
    _
  $region33: #{_lambda_.23} parent=0 // pred_fallthru
    _
  // Predicated region
  $region34: #{_lambda_.23} parent=0 // pred_check
    _
  $region35: #{_lambda_.23} parent=0 // pred_check_branch
    %250 = sbr.rel (0) target = $region37
  $region36: #{_lambda_.23} parent=0 // pred_region
    _
  $region37: #{_lambda_.23} parent=0 // pred_fallthru
    _

// kernel: _lambda_.31
$region0: #{_lambda_.31}
  #allocation0 [shape = 'u32[]', space=smem, size = 0x4, offset = 0x4, fixed_abs, tag = 'smem constant byte address 0x4 - core index']
  #allocation1 [shape = 'u32[144,128]{1,0:T(1,128)}', space=vmem, size = 0x12000, scoped, tag = 'internal scratch']
  %s0 = inlined_call_operand.vmem [shape: bf16[16,32], index: 0, kind: input, shape index: {}]
  %s1 = inlined_call_operand.vmem [shape: bf16[32,64], index: 1, kind: input, shape index: {}]
  %s2 = inlined_call_operand.vmem [shape: f32[1,64], index: 2, kind: input, shape index: {}]
  %s3 = inlined_call_operand.vmem [shape: bf16[16,64], index: 3, kind: output, shape index: {}]
  %s4 = sld [smem:[#allocation0]]
  $region22: #{_lambda_.31} parent=0
    _
  %s6 = ssub.s32 1, %s4
  %s7 = scalar_select 0, %s6, %s4
  // Predicated region
  $region2: #{_lambda_.31} parent=0 // pred_check
    _
  $region3: #{_lambda_.31} parent=0 // pred_check_branch
    %9 = sbr.rel (0) target = $region5
  $region4: #{_lambda_.31} parent=0 // pred_region
    _
  $region5: #{_lambda_.31} parent=0 // pred_fallthru
    _
  // Predicated region
  $region6: #{_lambda_.31} parent=0 // pred_check
    _
  $region7: #{_lambda_.31} parent=0 // pred_check_branch
    %11 = sbr.rel (0) target = $region9
  $region8: #{_lambda_.31} parent=0 // pred_region
    _
  $region9: #{_lambda_.31} parent=0 // pred_fallthru
    _
  // Predicated region
  $region10: #{_lambda_.31} parent=0 // pred_check
    _
  $region11: #{_lambda_.31} parent=0 // pred_check_branch
    %13 = sbr.rel (0) target = $region13
  $region12: #{_lambda_.31} parent=0 // pred_region
    _
  $region13: #{_lambda_.31} parent=0 // pred_fallthru
    _
  %v15 = vld [vmem:[%s0] sm:$0xf]
  %v16 = vld [vmem:[%s0 + $0x4] sm:$0xf]
  %v17 = vld [vmem:[%s1] sm:$0xf]
  %v18 = vld [vmem:[%s1 + $0x4] sm:$0xf]
  %v19 = vld [vmem:[%s1 + $0x8] sm:$0xf]
  %v20 = vld [vmem:[%s1 + $0xc] sm:$0xf]
  %v21 = vld [vmem:[%s2] sm:$0x1]
  %v23 = vlaneseq
  %v24 = vshrl.u32 %v23, 7
  %v25 = vsub.s32 0, %v24
  %v26 = vrot.slane %v21, %v25
  %v30 = vunpack.c.l.b16 %v15
  %v31 = vunpack.c.l.b16 %v16
  %v32 = vpack.c.b16 %v31, %v30
  %v37 = vunpack.c.l.b16 %v17
  %v38 = vunpack.c.l.b16 %v18
  %v39 = vunpack.c.l.b16 %v19
  %v40 = vunpack.c.l.b16 %v20
  %v41 = vpack.c.b16 %v38, %v37
  %v42 = vpack.c.b16 %v40, %v39
  %vm45 = vcmask 261120
  %v47 = vsel %vm45, %v32, 0
  %49 = vmatprep.subr.bf16.mxu0 0
  %50 = vmatpush1.bf16.msra.mxu0 %v41
  %51 = vmatprep.subr.bf16.mxu0 0
  %52 = vmatpush1.bf16.msra.mxu0 %v42
  %53 = vmatprep.subr.bf16.mxu0 0
  %54 = vmatpush1.bf16.msra.mxu0 0
  %55 = vmatprep.subr.bf16.mxu0 0
  %56 = vmatpush1.bf16.msra.mxu0 0
  %57 = vmatprep.subr.bf16.mxu0 0
  %58 = vmatpush1.bf16.msra.mxu0 0
  %59 = vmatprep.subr.bf16.mxu0 0
  %60 = vmatpush1.bf16.msra.mxu0 0
  %61 = vmatprep.subr.bf16.mxu0 0
  %62 = vmatpush1.bf16.msra.mxu0 0
  %63 = vmatprep.subr.bf16.mxu0 0
  %64 = vmatpush1.bf16.msra.mxu0 0
  %65 = vmatprep.subr.bf16.mxu0 0
  %66 = vmatpush1.bf16.msra.mxu0 0
  %67 = vmatprep.subr.bf16.mxu0 0
  %68 = vmatpush1.bf16.msra.mxu0 0
  %69 = vmatprep.subr.bf16.mxu0 0
  %70 = vmatpush1.bf16.msra.mxu0 0
  %71 = vmatprep.subr.bf16.mxu0 0
  %72 = vmatpush1.bf16.msra.mxu0 0
  %73 = vmatprep.subr.bf16.mxu0 0
  %74 = vmatpush1.bf16.msra.mxu0 0
  %75 = vmatprep.subr.bf16.mxu0 0
  %76 = vmatpush1.bf16.msra.mxu0 0
  %77 = vmatprep.subr.bf16.mxu0 0
  %78 = vmatpush1.bf16.msra.mxu0 0
  %79 = vmatprep.subr.bf16.mxu0 0
  %80 = vmatpush1.bf16.msra.mxu0 0
  %81 = vmatprep.mubr.bf16.mxu0 0
  %82 = vmatmul.mubr.bf16.gmra.mrb[0].mxu0 %v47
  %v83 = vpop.f32.mrb[0].mxu0
  %v84 = vadd.f32 %v26, %v83
  %v85 = vpop.f32.mrb[0].mxu0
  %v86 = vpop.f32.mrb[0].mxu0
  %v87 = vadd.f32 %v26, %v86
  %v88 = vpop.f32.mrb[0].mxu0
  %89 = vdwg.mxu0
  %v90 = vpack.c.bf16 %v87, %v84
  %v92 = vunpack.c.l.b16 %v90
  %v93 = vunpack.c.h.b16 %v90
  %v94 = vpack.c.b16 %v92, %v92
  %v95 = vpack.c.b16 %v93, %v93
  %vm98 = vcmask 519168
  %99 = vst.msk [vmem:[%s3] sm:$0xf] %vm98, %v94
  %100 = vst.msk [vmem:[%s3 + $0x4] sm:$0xf] %vm98, %v95
  // Predicated region
  $region14: #{_lambda_.31} parent=0 // pred_check
    _
  $region15: #{_lambda_.31} parent=0 // pred_check_branch
    %102 = sbr.rel (0) target = $region17
  $region16: #{_lambda_.31} parent=0 // pred_region
    _
  $region17: #{_lambda_.31} parent=0 // pred_fallthru
    _
  // Predicated region
  $region18: #{_lambda_.31} parent=0 // pred_check
    _
  $region19: #{_lambda_.31} parent=0 // pred_check_branch
    %104 = sbr.rel (0) target = $region21
  $region20: #{_lambda_.31} parent=0 // pred_region
    _
  $region21: #{_lambda_.31} parent=0 // pred_fallthru
    _

// kernel: _lambda_.27
$region0: #{_lambda_.27}
  #allocation0 [shape = 'u32[]', space=smem, size = 0x4, offset = 0x4, fixed_abs, tag = 'smem constant byte address 0x4 - core index']
  #allocation1 [shape = 'u32[144,128]{1,0:T(1,128)}', space=vmem, size = 0x12000, scoped, tag = 'internal scratch']
  %s0 = inlined_call_operand.vmem [shape: bf16[16,32], index: 0, kind: input, shape index: {}]
  %s1 = inlined_call_operand.vmem [shape: f32[1,32], index: 1, kind: input, shape index: {}]
  %s2 = inlined_call_operand.vmem [shape: f32[1,32], index: 2, kind: input, shape index: {}]
  %s3 = inlined_call_operand.vmem [shape: bf16[16,32], index: 3, kind: output, shape index: {}]
  %s4 = sld [smem:[#allocation0]]
  $region22: #{_lambda_.27} parent=0
    _
  %s6 = ssub.s32 1, %s4
  %s7 = scalar_select 0, %s6, %s4
  // Predicated region
  $region2: #{_lambda_.27} parent=0 // pred_check
    _
  $region3: #{_lambda_.27} parent=0 // pred_check_branch
    %9 = sbr.rel (0) target = $region5
  $region4: #{_lambda_.27} parent=0 // pred_region
    _
  $region5: #{_lambda_.27} parent=0 // pred_fallthru
    _
  // Predicated region
  $region6: #{_lambda_.27} parent=0 // pred_check
    _
  $region7: #{_lambda_.27} parent=0 // pred_check_branch
    %11 = sbr.rel (0) target = $region9
  $region8: #{_lambda_.27} parent=0 // pred_region
    _
  $region9: #{_lambda_.27} parent=0 // pred_fallthru
    _
  // Predicated region
  $region10: #{_lambda_.27} parent=0 // pred_check
    _
  $region11: #{_lambda_.27} parent=0 // pred_check_branch
    %13 = sbr.rel (0) target = $region13
  $region12: #{_lambda_.27} parent=0 // pred_region
    _
  $region13: #{_lambda_.27} parent=0 // pred_fallthru
    _
  %v14 = vld [vmem:[%s0] sm:$0xf]
  %v15 = vld [vmem:[%s0 + $0x4] sm:$0xf]
  %v16 = vunpack.c.l.bf16 %v14
  %v17 = vunpack.c.l.bf16 %v15
  %v18 = vld [vmem:[%s1] sm:$0x1]
  %v19 = vld [vmem:[%s2] sm:$0x1]
  %vm20 = vcmask 261120
  %v21 = vsel %vm20, %v16, 0.0
  %22 = vadd.xlane.f32.xlu0 %v21
  %v23 = vpop.xlane.xlu0 %22
  %v24 = vsel %vm20, %v17, 0.0
  %25 = vadd.xlane.f32.xlu0 %v24
  %v26 = vpop.xlane.xlu0 %25
  %v27 = vrcp.pop 32.0
  %v28 = vmul.f32 %v23, %v27
  %v29 = vmul.f32 %v26, %v27
  %v30 = vsub.f32 %v16, %v28
  %v31 = vsub.f32 %v17, %v29
  %v32 = vmul.f32 %v30, %v30
  %v33 = vmul.f32 %v31, %v31
  %v34 = vsel %vm20, %v32, 0.0
  %35 = vadd.xlane.f32.xlu0 %v34
  %v36 = vpop.xlane.xlu0 %35
  %v37 = vsel %vm20, %v33, 0.0
  %38 = vadd.xlane.f32.xlu0 %v37
  %v39 = vpop.xlane.xlu0 %38
  %v40 = vmul.f32 %v36, %v27
  %v41 = vmul.f32 %v39, %v27
  %v42 = vadd.f32 %v40, 1e-12
  %v43 = vadd.f32 %v41, 1e-12
  %v44 = vrsqrt.pop %v42
  %v45 = vrsqrt.pop %v43
  %v46 = vmul.f32 %v30, %v44
  %v47 = vmul.f32 %v31, %v45
  %v49 = vlaneseq
  %v50 = vshrl.u32 %v49, 7
  %v51 = vsub.s32 0, %v50
  %v52 = vrot.slane %v18, %v51
  %v54 = vmul.f32 %v46, %v52
  %v55 = vmul.f32 %v47, %v52
  %v57 = vlaneseq
  %v58 = vshrl.u32 %v57, 7
  %v59 = vsub.s32 0, %v58
  %v60 = vrot.slane %v19, %v59
  %v62 = vadd.f32 %v54, %v60
  %v63 = vadd.f32 %v55, %v60
  %v64 = vpack.c.bf16 %v63, %v62
  %v66 = vunpack.c.l.b16 %v64
  %v67 = vunpack.c.h.b16 %v64
  %v68 = vpack.c.b16 %v66, %v66
  %v69 = vpack.c.b16 %v67, %v67
  %vm72 = vcmask 257024
  %73 = vst.msk [vmem:[%s3] sm:$0xf] %vm72, %v68
  %74 = vst.msk [vmem:[%s3 + $0x4] sm:$0xf] %vm72, %v69
  // Predicated region
  $region14: #{_lambda_.27} parent=0 // pred_check
    _
  $region15: #{_lambda_.27} parent=0 // pred_check_branch
    %76 = sbr.rel (0) target = $region17
  $region16: #{_lambda_.27} parent=0 // pred_region
    _
  $region17: #{_lambda_.27} parent=0 // pred_fallthru
    _
  // Predicated region
  $region18: #{_lambda_.27} parent=0 // pred_check
    _
  $region19: #{_lambda_.27} parent=0 // pred_check_branch
    %78 = sbr.rel (0) target = $region21
  $region20: #{_lambda_.27} parent=0 // pred_region
    _
  $region21: #{_lambda_.27} parent=0 // pred_fallthru
    _

// kernel: _lambda_.22
$region0: #{_lambda_.22}
  #allocation0 [shape = 'u32[]', space=smem, size = 0x4, offset = 0x4, fixed_abs, tag = 'smem constant byte address 0x4 - core index']
  #allocation1 [shape = 'u32[144,128]{1,0:T(1,128)}', space=vmem, size = 0x12000, scoped, tag = 'internal scratch']
  #allocation2 [shape = 's32[1]{0}', space=sflag, size = 0x4, scoped, tag = 'scoped memory for _lambda_.22']
  #allocation3 [shape = 'u8[512]{0}', space=smem, size = 0x200, scoped, tag = 'prefetched SMEM operand 0']
  %s0 = inlined_call_operand.vmem [shape: s32[2], index: 0, kind: input, shape index: {}]
  %s1 = inlined_call_operand.vmem [shape: bf16[2,8,32], index: 1, kind: input, shape index: {}]
  %s2 = inlined_call_operand.vmem [shape: bf16[2,8,64], index: 2, kind: input, shape index: {}]
  %s3 = inlined_call_operand.vmem [shape: bf16[2,8,32], index: 3, kind: input, shape index: {}]
  %s4 = inlined_call_operand.vmem [shape: bf16[32,32], index: 4, kind: input, shape index: {}]
  %s5 = inlined_call_operand.vmem [shape: f32[1,32], index: 5, kind: input, shape index: {}]
  %s6 = inlined_call_operand.vmem [shape: bf16[2,8,32], index: 6, kind: output, shape index: {}]
  %s7 = sld [smem:[#allocation0]]
  $region53: #{_lambda_.22} parent=0
    _
  %s9 = ssub.s32 1, %s7
  %s10 = scalar_select 0, %s9, %s7
  %s11 = sshll.u32 %s0, 4
  %s12 = int_to_ptr.vmem [resolvable:$true] %s11
  %14 = dma.vmem_to_smem %s12, 16, [#allocation3], [#allocation2]
  %15 = dma.done [#allocation2], 16
  %16 = sfence
  loop: start=0, step=1, limit=4
  $region2: #{_lambda_.22} parent=0 // loop_pre_header
    _
  $region3: #{_lambda_.22} parent=0 // loop_header
    %s18 = sphi 0, %s22
    %p19 = scmp.ge.s32.totalorder %s18, 4
    %s25 = sphi 0, %s37
    %s26 = sphi 0, %s33
    %s27 = sphi 0, %s25
    %s28 = sphi 0, %s26
    %s29 = sphi 0, %s27
    %s30 = sphi 0, %s28
    %s42 = sphi 0, %s44
    %s45 = sphi 0, %s42
    %s46 = sphi 0, %s45
    %s62 = sphi 0, %s46
    %s68 = sphi 0, %s70
    %s71 = sphi 0, %s68
    %s72 = sphi 0, %s71
    %s88 = sphi 0, %s72
    %s96 = sphi 0, %s98
    %s99 = sphi 0, %s96
    %s100 = sphi 0, %s99
    %s116 = sphi 0, %s100
    %s120 = sphi 0, %s120
    %s122 = sphi 0, %s120
    %s123 = sphi 0, %s122
    %s137 = sphi 0, %s123
    %s141 = sphi 0, %s141
    %s143 = sphi 0, %s141
    %s144 = sphi 0, %s143
    %s158 = sphi 0, %s144
    %s166 = sphi 0, %s168
    %s169 = sphi 0, %s166
    %s170 = sphi 0, %s169
    %s186 = sphi 0, %s170
  $region4: #{_lambda_.22} parent=0 // loop_header_branch
    %21 = sbr.rel (%p19) target = $region8
  $region5: #{_lambda_.22} parent=0 // loop_body
    %s23 = ssub.s32 %s18, 1
    %s24 = ssub.s32 %s18, 2
    %s31 = sadd.s32 1, %s26
    %p32 = scmp.ge.s32.totalorder %s31, 1
    %s33 = scalar_select %p32, 0, %s31
    %s34 = sadd.s32 1, %s25
    %s35 = scalar_select %p32, %s34, %s25
    %p36 = scmp.ge.s32.totalorder %s35, 2
    %s37 = scalar_select %p36, 0, %s35
    %s38 = ssub.s32 %s25, %s37
    %s39 = ssub.s32 %s26, %s33
    %s40 = sor.u32 %s38, %s39
    %p41 = scmp.eq.s32.totalorder %s40, 0
    %s43 = sadd.s32 %s42, 1
    %s44 = scalar_select %p41, %s42, %s43
    %p47 = pneg %p41
    %p48 = scmp.eq.s32.totalorder %s18, 1
    %p49 = por %p47, %p48
    %p50 = scmp.ne.s32.totalorder %s42, %s45
    %p51 = scmp.eq.s32.totalorder %s18, 0
    %p52 = por %p50, %p51
    %p53 = scmp.ne.s32.totalorder %s42, %s45
    %p54 = scmp.eq.s32.totalorder %s23, 1
    %p55 = por %p53, %p54
    %p56 = scmp.ne.s32.totalorder %s45, %s46
    %p57 = scmp.eq.s32.totalorder %s23, 0
    %p58 = por %p56, %p57
    %p59 = scmp.ne.s32.totalorder %s45, %s46
    %p60 = scmp.eq.s32.totalorder %s24, 1
    %p61 = por %p59, %p60
    %p63 = scmp.ne.s32.totalorder %s46, %s62
    %p64 = scmp.eq.s32.totalorder %s24, 0
    %p65 = por %p63, %p64
    %s66 = ssub.s32 %s25, %s37
    %p67 = scmp.eq.s32.totalorder %s66, 0
    %s69 = sadd.s32 %s68, 1
    %s70 = scalar_select %p67, %s68, %s69
    %p73 = pneg %p67
    %p74 = scmp.eq.s32.totalorder %s18, 1
    %p75 = por %p73, %p74
    %p76 = scmp.ne.s32.totalorder %s68, %s71
    %p77 = scmp.eq.s32.totalorder %s18, 0
    %p78 = por %p76, %p77
    %p79 = scmp.ne.s32.totalorder %s68, %s71
    %p80 = scmp.eq.s32.totalorder %s23, 1
    %p81 = por %p79, %p80
    %p82 = scmp.ne.s32.totalorder %s71, %s72
    %p83 = scmp.eq.s32.totalorder %s23, 0
    %p84 = por %p82, %p83
    %p85 = scmp.ne.s32.totalorder %s71, %s72
    %p86 = scmp.eq.s32.totalorder %s24, 1
    %p87 = por %p85, %p86
    %p89 = scmp.ne.s32.totalorder %s72, %s88
    %p90 = scmp.eq.s32.totalorder %s24, 0
    %p91 = por %p89, %p90
    %s92 = ssub.s32 %s25, %s37
    %s93 = ssub.s32 %s26, %s33
    %s94 = sor.u32 %s92, %s93
    %p95 = scmp.eq.s32.totalorder %s94, 0
    %s97 = sadd.s32 %s96, 1
    %s98 = scalar_select %p95, %s96, %s97
    %p101 = pneg %p95
    %p102 = scmp.eq.s32.totalorder %s18, 1
    %p103 = por %p101, %p102
    %p104 = scmp.ne.s32.totalorder %s96, %s99
    %p105 = scmp.eq.s32.totalorder %s18, 0
    %p106 = por %p104, %p105
    %p107 = scmp.ne.s32.totalorder %s96, %s99
    %p108 = scmp.eq.s32.totalorder %s23, 1
    %p109 = por %p107, %p108
    %p110 = scmp.ne.s32.totalorder %s99, %s100
    %p111 = scmp.eq.s32.totalorder %s23, 0
    %p112 = por %p110, %p111
    %p113 = scmp.ne.s32.totalorder %s99, %s100
    %p114 = scmp.eq.s32.totalorder %s24, 1
    %p115 = por %p113, %p114
    %p117 = scmp.ne.s32.totalorder %s100, %s116
    %p118 = scmp.eq.s32.totalorder %s24, 0
    %p119 = por %p117, %p118
    %s121 = sadd.s32 %s120, 1
    %p124 = scmp.eq.s32.totalorder %s18, 1
    %p125 = scmp.ne.s32.totalorder %s120, %s122
    %p126 = scmp.eq.s32.totalorder %s18, 0
    %p127 = por %p125, %p126
    %p128 = scmp.ne.s32.totalorder %s120, %s122
    %p129 = scmp.eq.s32.totalorder %s23, 1
    %p130 = por %p128, %p129
    %p131 = scmp.ne.s32.totalorder %s122, %s123
    %p132 = scmp.eq.s32.totalorder %s23, 0
    %p133 = por %p131, %p132
    %p134 = scmp.ne.s32.totalorder %s122, %s123
    %p135 = scmp.eq.s32.totalorder %s24, 1
    %p136 = por %p134, %p135
    %p138 = scmp.ne.s32.totalorder %s123, %s137
    %p139 = scmp.eq.s32.totalorder %s24, 0
    %p140 = por %p138, %p139
    %s142 = sadd.s32 %s141, 1
    %p145 = scmp.eq.s32.totalorder %s18, 1
    %p146 = scmp.ne.s32.totalorder %s141, %s143
    %p147 = scmp.eq.s32.totalorder %s18, 0
    %p148 = por %p146, %p147
    %p149 = scmp.ne.s32.totalorder %s141, %s143
    %p150 = scmp.eq.s32.totalorder %s23, 1
    %p151 = por %p149, %p150
    %p152 = scmp.ne.s32.totalorder %s143, %s144
    %p153 = scmp.eq.s32.totalorder %s23, 0
    %p154 = por %p152, %p153
    %p155 = scmp.ne.s32.totalorder %s143, %s144
    %p156 = scmp.eq.s32.totalorder %s24, 1
    %p157 = por %p155, %p156
    %p159 = scmp.ne.s32.totalorder %s144, %s158
    %p160 = scmp.eq.s32.totalorder %s24, 0
    %p161 = por %p159, %p160
    %s162 = ssub.s32 %s25, %s37
    %s163 = ssub.s32 %s26, %s33
    %s164 = sor.u32 %s162, %s163
    %p165 = scmp.eq.s32.totalorder %s164, 0
    %s167 = sadd.s32 %s166, 1
    %s168 = scalar_select %p165, %s166, %s167
    %p171 = pneg %p165
    %p172 = scmp.eq.s32.totalorder %s18, 1
    %p173 = por %p171, %p172
    %p174 = scmp.ne.s32.totalorder %s166, %s169
    %p175 = scmp.eq.s32.totalorder %s18, 0
    %p176 = por %p174, %p175
    %p177 = scmp.ne.s32.totalorder %s166, %s169
    %p178 = scmp.eq.s32.totalorder %s23, 1
    %p179 = por %p177, %p178
    %p180 = scmp.ne.s32.totalorder %s169, %s170
    %p181 = scmp.eq.s32.totalorder %s23, 0
    %p182 = por %p180, %p181
    %p183 = scmp.ne.s32.totalorder %s169, %s170
    %p184 = scmp.eq.s32.totalorder %s24, 1
    %p185 = por %p183, %p184
    %p187 = scmp.ne.s32.totalorder %s170, %s186
    %p188 = scmp.eq.s32.totalorder %s24, 0
    %p189 = por %p187, %p188
    %p190 = scmp.le.s32.totalorder 1, %s18
    %p191 = scmp.lt.s32.totalorder %s18, 3
    %p192 = pnand %p190, %p191
    %p193 = pneg %p192
    // Predicated region
    $region9: #{_lambda_.22} parent=5 // pred_check
      _
    $region10: #{_lambda_.22} parent=5 // pred_check_branch
      %195 = sbr.rel (%p192) target = $region12
    $region11: #{_lambda_.22} parent=5 // pred_region
      %s196 = ssub.s32 %s18, 1
      // Predicated region
      $region13: #{_lambda_.22} parent=11 // pred_check
        %p197 = pneg %p133
      $region14: #{_lambda_.22} parent=11 // pred_check_branch
        %199 = sbr.rel (%p197) target = $region16
      $region15: #{_lambda_.22} parent=11 // pred_region
        _
      $region16: #{_lambda_.22} parent=11 // pred_fallthru
        _
      // Predicated region
      $region17: #{_lambda_.22} parent=11 // pred_check
        %p200 = pneg %p154
      $region18: #{_lambda_.22} parent=11 // pred_check_branch
        %202 = sbr.rel (%p200) target = $region20
      $region19: #{_lambda_.22} parent=11 // pred_region
        _
      $region20: #{_lambda_.22} parent=11 // pred_fallthru
        _
    $region12: #{_lambda_.22} parent=5 // pred_fallthru
      _
    %p203 = scmp.lt.s32.totalorder %s18, 2
    // Predicated region
    $region21: #{_lambda_.22} parent=5 // pred_check
      %p204 = pneg %p203
    $region22: #{_lambda_.22} parent=5 // pred_check_branch
      %206 = sbr.rel (%p204) target = $region24
    $region23: #{_lambda_.22} parent=5 // pred_region
      // Predicated region
      $region25: #{_lambda_.22} parent=23 // pred_check
        %p207 = pneg %p52
      $region26: #{_lambda_.22} parent=23 // pred_check_branch
        %209 = sbr.rel (%p207) target = $region28
      $region27: #{_lambda_.22} parent=23 // pred_region
        %p210 = scmp.lt.s32.totalorder %s25, 1
        %s211 = scalar_select %p210, %s25, 1
        %p212 = scmp.lt.s32.totalorder %s26, 0
        %s213 = scalar_select %p212, %s26, 0
        %s214 = sadd.s32 %s213, %s211
        %s215 = smul.addr %s214, 4
        %s216 = scalar_lea.vmem %s1, %s215
      $region28: #{_lambda_.22} parent=23 // pred_fallthru
        _
      // Predicated region
      $region29: #{_lambda_.22} parent=23 // pred_check
        %p217 = pneg %p78
      $region30: #{_lambda_.22} parent=23 // pred_check_branch
        %219 = sbr.rel (%p217) target = $region32
      $region31: #{_lambda_.22} parent=23 // pred_region
        %p220 = scmp.lt.s32.totalorder %s25, 1
        %s221 = scalar_select %p220, %s25, 1
        %s222 = smul.addr %s221, 4
        %s223 = scalar_lea.vmem %s2, %s222
      $region32: #{_lambda_.22} parent=23 // pred_fallthru
        _
      // Predicated region
      $region33: #{_lambda_.22} parent=23 // pred_check
        %p224 = pneg %p106
      $region34: #{_lambda_.22} parent=23 // pred_check_branch
        %226 = sbr.rel (%p224) target = $region36
      $region35: #{_lambda_.22} parent=23 // pred_region
        %p227 = scmp.lt.s32.totalorder %s25, 1
        %s228 = scalar_select %p227, %s25, 1
        %p229 = scmp.lt.s32.totalorder %s26, 0
        %s230 = scalar_select %p229, %s26, 0
        %s231 = sadd.s32 %s230, %s228
        %s232 = smul.addr %s231, 4
        %s233 = scalar_lea.vmem %s3, %s232
      $region36: #{_lambda_.22} parent=23 // pred_fallthru
        _
    $region24: #{_lambda_.22} parent=5 // pred_fallthru
      _
    %p234 = scmp.le.s32.totalorder 1, %s18
    %p235 = scmp.lt.s32.totalorder %s18, 3
    %p236 = pnand %p234, %p235
    %p237 = pneg %p236
    // Predicated region
    $region37: #{_lambda_.22} parent=5 // pred_check
      _
    $region38: #{_lambda_.22} parent=5 // pred_check_branch
      %239 = sbr.rel (%p236) target = $region40
    $region39: #{_lambda_.22} parent=5 // pred_region
      %s240 = ssub.s32 %s18, 1
      %p241 = scmp.lt.s32.totalorder %s27, 1
      %s242 = scalar_select %p241, %s27, 1
      %p243 = scmp.lt.s32.totalorder %s28, 0
      %s244 = scalar_select %p243, %s28, 0
      %s245 = sadd.s32 %s244, %s242
      %s246 = smul.addr %s245, 4
      %s247 = scalar_lea.vmem %s1, %s246
      %p248 = pneg %p58
      %p249 = pneg %p55
      %p250 = scmp.lt.s32.totalorder %s27, 1
      %s251 = scalar_select %p250, %s27, 1
      %s252 = smul.addr %s251, 4
      %s253 = scalar_lea.vmem %s2, %s252
      %p254 = pneg %p84
      %p255 = pneg %p81
      %p256 = scmp.lt.s32.totalorder %s27, 1
      %s257 = scalar_select %p256, %s27, 1
      %p258 = scmp.lt.s32.totalorder %s28, 0
      %s259 = scalar_select %p258, %s28, 0
      %s260 = sadd.s32 %s259, %s257
      %s261 = smul.addr %s260, 4
      %s262 = scalar_lea.vmem %s3, %s261
      %p263 = pneg %p112
      %p264 = pneg %p109
      %p265 = pneg %p133
      %p266 = pneg %p130
      %p267 = pneg %p154
      %p268 = pneg %p151
      %p269 = pneg %p182
      %p270 = pneg %p179
      %p271 = scmp.lt.s32.totalorder %s27, 1
      %s272 = scalar_select %p271, %s27, 1
      %p273 = scmp.lt.s32.totalorder %s28, 0
      %s274 = scalar_select %p273, %s28, 0
      %s275 = sadd.s32 %s274, %s272
      %s276 = smul.addr %s275, 4
      %s277 = scalar_lea.vmem %s6, %s276
      %p278 = scmp.lt.s32.totalorder %s27, 1
      %s279 = scalar_select %p278, %s27, 1
      %p280 = scmp.lt.s32.totalorder %s28, 0
      %s281 = scalar_select %p280, %s28, 0
      %s282 = sadd.s32 %s281, %s279
      %s283 = smul.addr %s282, 4
      %s284 = scalar_lea.vmem %s1, %s283
      %p285 = scmp.lt.s32.totalorder %s27, 1
      %s286 = scalar_select %p285, %s27, 1
      %s287 = smul.addr %s286, 4
      %s288 = scalar_lea.vmem %s2, %s287
      %p289 = scmp.lt.s32.totalorder %s27, 1
      %s290 = scalar_select %p289, %s27, 1
      %p291 = scmp.lt.s32.totalorder %s28, 0
      %s292 = scalar_select %p291, %s28, 0
      %s293 = sadd.s32 %s292, %s290
      %s294 = smul.addr %s293, 4
      %s295 = scalar_lea.vmem %s3, %s294
      %p296 = scmp.lt.s32.totalorder %s27, 1
      %s297 = scalar_select %p296, %s27, 1
      %p298 = scmp.lt.s32.totalorder %s28, 0
      %s299 = scalar_select %p298, %s28, 0
      %s300 = sadd.s32 %s299, %s297
      %s301 = smul.addr %s300, 4
      %s302 = scalar_lea.vmem %s6, %s301
      %v304 = vld [vmem:[%s288] sm:$0xf]
      %v305 = vlaneseq
      %v306 = vand.u32 %v305, 127
      %s307 = sld [smem:[#allocation3 + %s27]]
      %v308 = vstv %s307
      %vm309 = vcmp.lt.s32.totalorder %v306, %v308
      %v310 = vld [vmem:[%s284] sm:$0xf]
      %v311 = vld [vmem:[%s295] sm:$0xf]
      %v312 = vld [vmem:[%s4] sm:$0xf]
      %v313 = vld [vmem:[%s4 + $0x4] sm:$0xf]
      %v314 = vld [vmem:[%s4 + $0x8] sm:$0xf]
      %v315 = vld [vmem:[%s4 + $0xc] sm:$0xf]
      %v316 = vld [vmem:[%s5] sm:$0x1]
      %vm317 = vcmask 64512
      %v319 = vsel %vm317, %v310, 0
      %v322 = vsel %vm317, %v304, 0
      %324 = vmatprep.subr.bf16.mxu0 0
      %325 = vmatpush1.bf16.xpose.msra.mxu0 %v322
      %326 = vmatprep.subr.bf16.mxu0 0
      %327 = vmatpush1.bf16.xpose.msra.mxu0 0
      %328 = vmatprep.subr.bf16.mxu0 0
      %329 = vmatpush1.bf16.xpose.msra.mxu0 0
      %330 = vmatprep.subr.bf16.mxu0 0
      %331 = vmatpush1.bf16.xpose.msra.mxu0 0
      %332 = vmatprep.subr.bf16.mxu0 0
      %333 = vmatpush1.bf16.xpose.msra.mxu0 0
      %334 = vmatprep.subr.bf16.mxu0 0
      %335 = vmatpush1.bf16.xpose.msra.mxu0 0
      %336 = vmatprep.subr.bf16.mxu0 0
      %337 = vmatpush1.bf16.xpose.msra.mxu0 0
      %338 = vmatprep.subr.bf16.mxu0 0
      %339 = vmatpush1.bf16.xpose.msra.mxu0 0
      %340 = vmatprep.subr.bf16.mxu0 0
      %341 = vmatpush1.bf16.xpose.msra.mxu0 0
      %342 = vmatprep.subr.bf16.mxu0 0
      %343 = vmatpush1.bf16.xpose.msra.mxu0 0
      %344 = vmatprep.subr.bf16.mxu0 0
      %345 = vmatpush1.bf16.xpose.msra.mxu0 0
      %346 = vmatprep.subr.bf16.mxu0 0
      %347 = vmatpush1.bf16.xpose.msra.mxu0 0
      %348 = vmatprep.subr.bf16.mxu0 0
      %349 = vmatpush1.bf16.xpose.msra.mxu0 0
      %350 = vmatprep.subr.bf16.mxu0 0
      %351 = vmatpush1.bf16.xpose.msra.mxu0 0
      %352 = vmatprep.subr.bf16.mxu0 0
      %353 = vmatpush1.bf16.xpose.msra.mxu0 0
      %354 = vmatprep.subr.bf16.mxu0 0
      %355 = vmatpush1.bf16.xpose.msra.mxu0 0
      %356 = vmatprep.mubr.bf16.mxu0 0
      %357 = vmatmul.mubr.bf16.gmra.mrb[0].mxu0 %v319
      %v358 = vpop.f32.mrb[0].mxu0
      %v359 = vadd.f32 0.0, %v358
      %v360 = vpop.f32.mrb[0].mxu0
      %v361 = vpop.f32.mrb[0].mxu0
      %v362 = vpop.f32.mrb[0].mxu0
      %363 = vdwg.mxu0
      %v364 = vsel %vm309, %v359, -1e+30
      %v365 = vsel %vm317, %v364, -inf
      %366 = vmax.xlane.f32.xlu0 %v365
      %v367 = vpop.xlane.xlu0 %366
      %v368 = vsub.f32 %v364, %v367
      %v369 = vmul.f32 %v368, 1.442695
      %v370 = vpow.pop %v369
      %v371 = vsel %vm317, %v370, 0.0
      %372 = vadd.xlane.f32.xlu0 %v371
      %v373 = vpop.xlane.xlu0 %372
      %v374 = vrcp.pop %v373
      %v375 = vmul.f32 %v370, %v374
      %v376 = vpack.c.bf16 %v375, %v375
      %v378 = vunpack.c.l.b16 %v304
      %v379 = vpack.c.b16 %v378, %v378
      %380 = vrot.lane.b32.xlu0 %v379, 96
      %v381 = vpop.permute.xlu0 %380
      %v383 = vsel %vm317, %v376, 0
      %vm385 = vcmask 1043456
      %v387 = vsel %vm385, %v381, 0
      %389 = vmatprep.subr.bf16.mxu0 0
      %390 = vmatpush1.bf16.msra.mxu0 %v387
      %391 = vmatprep.subr.bf16.mxu0 0
      %392 = vmatpush1.bf16.msra.mxu0 0
      %393 = vmatprep.subr.bf16.mxu0 0
      %394 = vmatpush1.bf16.msra.mxu0 0
      %395 = vmatprep.subr.bf16.mxu0 0
      %396 = vmatpush1.bf16.msra.mxu0 0
      %397 = vmatprep.subr.bf16.mxu0 0
      %398 = vmatpush1.bf16.msra.mxu0 0
      %399 = vmatprep.subr.bf16.mxu0 0
      %400 = vmatpush1.bf16.msra.mxu0 0
      %401 = vmatprep.subr.bf16.mxu0 0
      %402 = vmatpush1.bf16.msra.mxu0 0
      %403 = vmatprep.subr.bf16.mxu0 0
      %404 = vmatpush1.bf16.msra.mxu0 0
      %405 = vmatprep.subr.bf16.mxu0 0
      %406 = vmatpush1.bf16.msra.mxu0 0
      %407 = vmatprep.subr.bf16.mxu0 0
      %408 = vmatpush1.bf16.msra.mxu0 0
      %409 = vmatprep.subr.bf16.mxu0 0
      %410 = vmatpush1.bf16.msra.mxu0 0
      %411 = vmatprep.subr.bf16.mxu0 0
      %412 = vmatpush1.bf16.msra.mxu0 0
      %413 = vmatprep.subr.bf16.mxu0 0
      %414 = vmatpush1.bf16.msra.mxu0 0
      %415 = vmatprep.subr.bf16.mxu0 0
      %416 = vmatpush1.bf16.msra.mxu0 0
      %417 = vmatprep.subr.bf16.mxu0 0
      %418 = vmatpush1.bf16.msra.mxu0 0
      %419 = vmatprep.subr.bf16.mxu0 0
      %420 = vmatpush1.bf16.msra.mxu0 0
      %421 = vmatprep.mubr.bf16.mxu0 0
      %422 = vmatmul.mubr.bf16.gmra.mrb[0].mxu0 %v383
      %v423 = vpop.f32.mrb[0].mxu0
      %v424 = vadd.f32 0.0, %v423
      %v425 = vpop.f32.mrb[0].mxu0
      %v426 = vpop.f32.mrb[0].mxu0
      %v427 = vpop.f32.mrb[0].mxu0
      %428 = vdwg.mxu0
      %v430 = vunpack.c.l.b16 %v310
      %v431 = vpack.c.b16 %v430, %v430
      %432 = vrot.lane.b32.xlu0 %v431, 120
      %v433 = vpop.permute.xlu0 %432
      %434 = vrot.lane.b32.xlu0 %v379, 120
      %v435 = vpop.permute.xlu0 %434
      %v437 = vsel %vm317, %v433, 0
      %v440 = vsel %vm317, %v435, 0
      %442 = vmatprep.subr.bf16.mxu0 0
      %443 = vmatpush1.bf16.xpose.msra.mxu0 %v440
      %444 = vmatprep.subr.bf16.mxu0 0
      %445 = vmatpush1.bf16.xpose.msra.mxu0 0
      %446 = vmatprep.subr.bf16.mxu0 0
      %447 = vmatpush1.bf16.xpose.msra.mxu0 0
      %448 = vmatprep.subr.bf16.mxu0 0
      %449 = vmatpush1.bf16.xpose.msra.mxu0 0
      %450 = vmatprep.subr.bf16.mxu0 0
      %451 = vmatpush1.bf16.xpose.msra.mxu0 0
      %452 = vmatprep.subr.bf16.mxu0 0
      %453 = vmatpush1.bf16.xpose.msra.mxu0 0
      %454 = vmatprep.subr.bf16.mxu0 0
      %455 = vmatpush1.bf16.xpose.msra.mxu0 0
      %456 = vmatprep.subr.bf16.mxu0 0
      %457 = vmatpush1.bf16.xpose.msra.mxu0 0
      %458 = vmatprep.subr.bf16.mxu0 0
      %459 = vmatpush1.bf16.xpose.msra.mxu0 0
      %460 = vmatprep.subr.bf16.mxu0 0
      %461 = vmatpush1.bf16.xpose.msra.mxu0 0
      %462 = vmatprep.subr.bf16.mxu0 0
      %463 = vmatpush1.bf16.xpose.msra.mxu0 0
      %464 = vmatprep.subr.bf16.mxu0 0
      %465 = vmatpush1.bf16.xpose.msra.mxu0 0
      %466 = vmatprep.subr.bf16.mxu0 0
      %467 = vmatpush1.bf16.xpose.msra.mxu0 0
      %468 = vmatprep.subr.bf16.mxu0 0
      %469 = vmatpush1.bf16.xpose.msra.mxu0 0
      %470 = vmatprep.subr.bf16.mxu0 0
      %471 = vmatpush1.bf16.xpose.msra.mxu0 0
      %472 = vmatprep.subr.bf16.mxu0 0
      %473 = vmatpush1.bf16.xpose.msra.mxu0 0
      %474 = vmatprep.mubr.bf16.mxu0 0
      %475 = vmatmul.mubr.bf16.gmra.mrb[0].mxu0 %v437
      %v476 = vpop.f32.mrb[0].mxu0
      %v477 = vadd.f32 0.0, %v476
      %v478 = vpop.f32.mrb[0].mxu0
      %v479 = vpop.f32.mrb[0].mxu0
      %v480 = vpop.f32.mrb[0].mxu0
      %481 = vdwg.mxu0
      %v482 = vsel %vm309, %v477, -1e+30
      %v483 = vsel %vm317, %v482, -inf
      %484 = vmax.xlane.f32.xlu0 %v483
      %v485 = vpop.xlane.xlu0 %484
      %v486 = vsub.f32 %v482, %v485
      %v487 = vmul.f32 %v486, 1.442695
      %v488 = vpow.pop %v487
      %v489 = vsel %vm317, %v488, 0.0
      %490 = vadd.xlane.f32.xlu0 %v489
      %v491 = vpop.xlane.xlu0 %490
      %v492 = vrcp.pop %v491
      %v493 = vmul.f32 %v488, %v492
      %v494 = vpack.c.bf16 %v493, %v493
      %495 = vrot.lane.b32.xlu0 %v379, 88
      %v496 = vpop.permute.xlu0 %495
      %v498 = vsel %vm317, %v494, 0
      %v501 = vsel %vm385, %v496, 0
      %503 = vmatprep.subr.bf16.mxu0 0
      %504 = vmatpush1.bf16.msra.mxu0 %v501
      %505 = vmatprep.subr.bf16.mxu0 0
      %506 = vmatpush1.bf16.msra.mxu0 0
      %507 = vmatprep.subr.bf16.mxu0 0
      %508 = vmatpush1.bf16.msra.mxu0 0
      %509 = vmatprep.subr.bf16.mxu0 0
      %510 = vmatpush1.bf16.msra.mxu0 0
      %511 = vmatprep.subr.bf16.mxu0 0
      %512 = vmatpush1.bf16.msra.mxu0 0
      %513 = vmatprep.subr.bf16.mxu0 0
      %514 = vmatpush1.bf16.msra.mxu0 0
      %515 = vmatprep.subr.bf16.mxu0 0
      %516 = vmatpush1.bf16.msra.mxu0 0
      %517 = vmatprep.subr.bf16.mxu0 0
      %518 = vmatpush1.bf16.msra.mxu0 0
      %519 = vmatprep.subr.bf16.mxu0 0
      %520 = vmatpush1.bf16.msra.mxu0 0
      %521 = vmatprep.subr.bf16.mxu0 0
      %522 = vmatpush1.bf16.msra.mxu0 0
      %523 = vmatprep.subr.bf16.mxu0 0
      %524 = vmatpush1.bf16.msra.mxu0 0
      %525 = vmatprep.subr.bf16.mxu0 0
      %526 = vmatpush1.bf16.msra.mxu0 0
      %527 = vmatprep.subr.bf16.mxu0 0
      %528 = vmatpush1.bf16.msra.mxu0 0
      %529 = vmatprep.subr.bf16.mxu0 0
      %530 = vmatpush1.bf16.msra.mxu0 0
      %531 = vmatprep.subr.bf16.mxu0 0
      %532 = vmatpush1.bf16.msra.mxu0 0
      %533 = vmatprep.subr.bf16.mxu0 0
      %534 = vmatpush1.bf16.msra.mxu0 0
      %535 = vmatprep.mubr.bf16.mxu0 0
      %536 = vmatmul.mubr.bf16.gmra.mrb[0].mxu0 %v498
      %v537 = vpop.f32.mrb[0].mxu0
      %v538 = vadd.f32 0.0, %v537
      %v539 = vpop.f32.mrb[0].mxu0
      %v540 = vpop.f32.mrb[0].mxu0
      %v541 = vpop.f32.mrb[0].mxu0
      %542 = vdwg.mxu0
      %543 = vrot.lane.b32.xlu0 %v431, 112
      %v544 = vpop.permute.xlu0 %543
      %545 = vrot.lane.b32.xlu0 %v379, 112
      %v546 = vpop.permute.xlu0 %545
      %v548 = vsel %vm317, %v544, 0
      %v551 = vsel %vm317, %v546, 0
      %553 = vmatprep.subr.bf16.mxu0 0
      %554 = vmatpush1.bf16.xpose.msra.mxu0 %v551
      %555 = vmatprep.subr.bf16.mxu0 0
      %556 = vmatpush1.bf16.xpose.msra.mxu0 0
      %557 = vmatprep.subr.bf16.mxu0 0
      %558 = vmatpush1.bf16.xpose.msra.mxu0 0
      %559 = vmatprep.subr.bf16.mxu0 0
      %560 = vmatpush1.bf16.xpose.msra.mxu0 0
      %561 = vmatprep.subr.bf16.mxu0 0
      %562 = vmatpush1.bf16.xpose.msra.mxu0 0
      %563 = vmatprep.subr.bf16.mxu0 0
      %564 = vmatpush1.bf16.xpose.msra.mxu0 0
      %565 = vmatprep.subr.bf16.mxu0 0
      %566 = vmatpush1.bf16.xpose.msra.mxu0 0
      %567 = vmatprep.subr.bf16.mxu0 0
      %568 = vmatpush1.bf16.xpose.msra.mxu0 0
      %569 = vmatprep.subr.bf16.mxu0 0
      %570 = vmatpush1.bf16.xpose.msra.mxu0 0
      %571 = vmatprep.subr.bf16.mxu0 0
      %572 = vmatpush1.bf16.xpose.msra.mxu0 0
      %573 = vmatprep.subr.bf16.mxu0 0
      %574 = vmatpush1.bf16.xpose.msra.mxu0 0
      %575 = vmatprep.subr.bf16.mxu0 0
      %576 = vmatpush1.bf16.xpose.msra.mxu0 0
      %577 = vmatprep.subr.bf16.mxu0 0
      %578 = vmatpush1.bf16.xpose.msra.mxu0 0
      %579 = vmatprep.subr.bf16.mxu0 0
      %580 = vmatpush1.bf16.xpose.msra.mxu0 0
      %581 = vmatprep.subr.bf16.mxu0 0
      %582 = vmatpush1.bf16.xpose.msra.mxu0 0
      %583 = vmatprep.subr.bf16.mxu0 0
      %584 = vmatpush1.bf16.xpose.msra.mxu0 0
      %585 = vmatprep.mubr.bf16.mxu0 0
      %586 = vmatmul.mubr.bf16.gmra.mrb[0].mxu0 %v548
      %v587 = vpop.f32.mrb[0].mxu0
      %v588 = vadd.f32 0.0, %v587
      %v589 = vpop.f32.mrb[0].mxu0
      %v590 = vpop.f32.mrb[0].mxu0
      %v591 = vpop.f32.mrb[0].mxu0
      %592 = vdwg.mxu0
      %v593 = vsel %vm309, %v588, -1e+30
      %v594 = vsel %vm317, %v593, -inf
      %595 = vmax.xlane.f32.xlu0 %v594
      %v596 = vpop.xlane.xlu0 %595
      %v597 = vsub.f32 %v593, %v596
      %v598 = vmul.f32 %v597, 1.442695
      %v599 = vpow.pop %v598
      %v600 = vsel %vm317, %v599, 0.0
      %601 = vadd.xlane.f32.xlu0 %v600
      %v602 = vpop.xlane.xlu0 %601
      %v603 = vrcp.pop %v602
      %v604 = vmul.f32 %v599, %v603
      %v605 = vpack.c.bf16 %v604, %v604
      %606 = vrot.lane.b32.xlu0 %v379, 80
      %v607 = vpop.permute.xlu0 %606
      %v609 = vsel %vm317, %v605, 0
      %v612 = vsel %vm385, %v607, 0
      %614 = vmatprep.subr.bf16.mxu0 0
      %615 = vmatpush1.bf16.msra.mxu0 %v612
      %616 = vmatprep.subr.bf16.mxu0 0
      %617 = vmatpush1.bf16.msra.mxu0 0
      %618 = vmatprep.subr.bf16.mxu0 0
      %619 = vmatpush1.bf16.msra.mxu0 0
      %620 = vmatprep.subr.bf16.mxu0 0
      %621 = vmatpush1.bf16.msra.mxu0 0
      %622 = vmatprep.subr.bf16.mxu0 0
      %623 = vmatpush1.bf16.msra.mxu0 0
      %624 = vmatprep.subr.bf16.mxu0 0
      %625 = vmatpush1.bf16.msra.mxu0 0
      %626 = vmatprep.subr.bf16.mxu0 0
      %627 = vmatpush1.bf16.msra.mxu0 0
      %628 = vmatprep.subr.bf16.mxu0 0
      %629 = vmatpush1.bf16.msra.mxu0 0
      %630 = vmatprep.subr.bf16.mxu0 0
      %631 = vmatpush1.bf16.msra.mxu0 0
      %632 = vmatprep.subr.bf16.mxu0 0
      %633 = vmatpush1.bf16.msra.mxu0 0
      %634 = vmatprep.subr.bf16.mxu0 0
      %635 = vmatpush1.bf16.msra.mxu0 0
      %636 = vmatprep.subr.bf16.mxu0 0
      %637 = vmatpush1.bf16.msra.mxu0 0
      %638 = vmatprep.subr.bf16.mxu0 0
      %639 = vmatpush1.bf16.msra.mxu0 0
      %640 = vmatprep.subr.bf16.mxu0 0
      %641 = vmatpush1.bf16.msra.mxu0 0
      %642 = vmatprep.subr.bf16.mxu0 0
      %643 = vmatpush1.bf16.msra.mxu0 0
      %644 = vmatprep.subr.bf16.mxu0 0
      %645 = vmatpush1.bf16.msra.mxu0 0
      %646 = vmatprep.mubr.bf16.mxu0 0
      %647 = vmatmul.mubr.bf16.gmra.mrb[0].mxu0 %v609
      %v648 = vpop.f32.mrb[0].mxu0
      %v649 = vadd.f32 0.0, %v648
      %v650 = vpop.f32.mrb[0].mxu0
      %v651 = vpop.f32.mrb[0].mxu0
      %v652 = vpop.f32.mrb[0].mxu0
      %653 = vdwg.mxu0
      %654 = vrot.lane.b32.xlu0 %v431, 104
      %v655 = vpop.permute.xlu0 %654
      %656 = vrot.lane.b32.xlu0 %v379, 104
      %v657 = vpop.permute.xlu0 %656
      %v659 = vsel %vm317, %v655, 0
      %v662 = vsel %vm317, %v657, 0
      %664 = vmatprep.subr.bf16.mxu0 0
      %665 = vmatpush1.bf16.xpose.msra.mxu0 %v662
      %666 = vmatprep.subr.bf16.mxu0 0
      %667 = vmatpush1.bf16.xpose.msra.mxu0 0
      %668 = vmatprep.subr.bf16.mxu0 0
      %669 = vmatpush1.bf16.xpose.msra.mxu0 0
      %670 = vmatprep.subr.bf16.mxu0 0
      %671 = vmatpush1.bf16.xpose.msra.mxu0 0
      %672 = vmatprep.subr.bf16.mxu0 0
      %673 = vmatpush1.bf16.xpose.msra.mxu0 0
      %674 = vmatprep.subr.bf16.mxu0 0
      %675 = vmatpush1.bf16.xpose.msra.mxu0 0
      %676 = vmatprep.subr.bf16.mxu0 0
      %677 = vmatpush1.bf16.xpose.msra.mxu0 0
      %678 = vmatprep.subr.bf16.mxu0 0
      %679 = vmatpush1.bf16.xpose.msra.mxu0 0
      %680 = vmatprep.subr.bf16.mxu0 0
      %681 = vmatpush1.bf16.xpose.msra.mxu0 0
      %682 = vmatprep.subr.bf16.mxu0 0
      %683 = vmatpush1.bf16.xpose.msra.mxu0 0
      %684 = vmatprep.subr.bf16.mxu0 0
      %685 = vmatpush1.bf16.xpose.msra.mxu0 0
      %686 = vmatprep.subr.bf16.mxu0 0
      %687 = vmatpush1.bf16.xpose.msra.mxu0 0
      %688 = vmatprep.subr.bf16.mxu0 0
      %689 = vmatpush1.bf16.xpose.msra.mxu0 0
      %690 = vmatprep.subr.bf16.mxu0 0
      %691 = vmatpush1.bf16.xpose.msra.mxu0 0
      %692 = vmatprep.subr.bf16.mxu0 0
      %693 = vmatpush1.bf16.xpose.msra.mxu0 0
      %694 = vmatprep.subr.bf16.mxu0 0
      %695 = vmatpush1.bf16.xpose.msra.mxu0 0
      %696 = vmatprep.mubr.bf16.mxu0 0
      %697 = vmatmul.mubr.bf16.gmra.mrb[0].mxu0 %v659
      %v698 = vpop.f32.mrb[0].mxu0
      %v699 = vadd.f32 0.0, %v698
      %v700 = vpop.f32.mrb[0].mxu0
      %v701 = vpop.f32.mrb[0].mxu0
      %v702 = vpop.f32.mrb[0].mxu0
      %703 = vdwg.mxu0
      %v704 = vsel %vm309, %v699, -1e+30
      %v705 = vsel %vm317, %v704, -inf
      %706 = vmax.xlane.f32.xlu0 %v705
      %v707 = vpop.xlane.xlu0 %706
      %v708 = vsub.f32 %v704, %v707
      %v709 = vmul.f32 %v708, 1.442695
      %v710 = vpow.pop %v709
      %v711 = vsel %vm317, %v710, 0.0
      %712 = vadd.xlane.f32.xlu0 %v711
      %v713 = vpop.xlane.xlu0 %712
      %v714 = vrcp.pop %v713
      %v715 = vmul.f32 %v710, %v714
      %v716 = vpack.c.bf16 %v715, %v715
      %717 = vrot.lane.b32.xlu0 %v379, 72
      %v718 = vpop.permute.xlu0 %717
      %v720 = vsel %vm317, %v716, 0
      %v723 = vsel %vm385, %v718, 0
      %725 = vmatprep.subr.bf16.mxu0 0
      %726 = vmatpush1.bf16.msra.mxu0 %v723
      %727 = vmatprep.subr.bf16.mxu0 0
      %728 = vmatpush1.bf16.msra.mxu0 0
      %729 = vmatprep.subr.bf16.mxu0 0
      %730 = vmatpush1.bf16.msra.mxu0 0
      %731 = vmatprep.subr.bf16.mxu0 0
      %732 = vmatpush1.bf16.msra.mxu0 0
      %733 = vmatprep.subr.bf16.mxu0 0
      %734 = vmatpush1.bf16.msra.mxu0 0
      %735 = vmatprep.subr.bf16.mxu0 0
      %736 = vmatpush1.bf16.msra.mxu0 0
      %737 = vmatprep.subr.bf16.mxu0 0
      %738 = vmatpush1.bf16.msra.mxu0 0
      %739 = vmatprep.subr.bf16.mxu0 0
      %740 = vmatpush1.bf16.msra.mxu0 0
      %741 = vmatprep.subr.bf16.mxu0 0
      %742 = vmatpush1.bf16.msra.mxu0 0
      %743 = vmatprep.subr.bf16.mxu0 0
      %744 = vmatpush1.bf16.msra.mxu0 0
      %745 = vmatprep.subr.bf16.mxu0 0
      %746 = vmatpush1.bf16.msra.mxu0 0
      %747 = vmatprep.subr.bf16.mxu0 0
      %748 = vmatpush1.bf16.msra.mxu0 0
      %749 = vmatprep.subr.bf16.mxu0 0
      %750 = vmatpush1.bf16.msra.mxu0 0
      %751 = vmatprep.subr.bf16.mxu0 0
      %752 = vmatpush1.bf16.msra.mxu0 0
      %753 = vmatprep.subr.bf16.mxu0 0
      %754 = vmatpush1.bf16.msra.mxu0 0
      %755 = vmatprep.subr.bf16.mxu0 0
      %756 = vmatpush1.bf16.msra.mxu0 0
      %757 = vmatprep.mubr.bf16.mxu0 0
      %758 = vmatmul.mubr.bf16.gmra.mrb[0].mxu0 %v720
      %v759 = vpop.f32.mrb[0].mxu0
      %v760 = vadd.f32 0.0, %v759
      %v761 = vpop.f32.mrb[0].mxu0
      %v762 = vpop.f32.mrb[0].mxu0
      %v763 = vpop.f32.mrb[0].mxu0
      %764 = vdwg.mxu0
      %766 = vrot.lane.b32.xlu0 %v538, 8
      %v767 = vpop.permute.xlu0 %766
      %770 = vrot.lane.b32.xlu0 %v649, 16
      %v771 = vpop.permute.xlu0 %770
      %774 = vrot.lane.b32.xlu0 %v760, 24
      %v775 = vpop.permute.xlu0 %774
      %v777 = vsel %vm317, %v424, %v767
      %vm778 = vcmask 130048
      %v779 = vsel %vm778, %v777, %v771
      %vm780 = vcmask 195584
      %v781 = vsel %vm780, %v779, %v775
      %v782 = vpack.c.bf16 %v781, %v781
      %v783 = vunpack.c.l.bf16 %v311
      %v788 = vunpack.c.l.b16 %v312
      %v789 = vunpack.c.l.b16 %v313
      %v790 = vunpack.c.l.b16 %v314
      %v791 = vunpack.c.l.b16 %v315
      %v792 = vpack.c.b16 %v789, %v788
      %v793 = vpack.c.b16 %v791, %v790
      %vm796 = vcmask 261120
      %v798 = vsel %vm796, %v782, 0
      %800 = vmatprep.subr.bf16.mxu0 0
      %801 = vmatpush1.bf16.msra.mxu0 %v792
      %802 = vmatprep.subr.bf16.mxu0 0
      %803 = vmatpush1.bf16.msra.mxu0 %v793
      %804 = vmatprep.subr.bf16.mxu0 0
      %805 = vmatpush1.bf16.msra.mxu0 0
      %806 = vmatprep.subr.bf16.mxu0 0
      %807 = vmatpush1.bf16.msra.mxu0 0
      %808 = vmatprep.subr.bf16.mxu0 0
      %809 = vmatpush1.bf16.msra.mxu0 0
      %810 = vmatprep.subr.bf16.mxu0 0
      %811 = vmatpush1.bf16.msra.mxu0 0
      %812 = vmatprep.subr.bf16.mxu0 0
      %813 = vmatpush1.bf16.msra.mxu0 0
      %814 = vmatprep.subr.bf16.mxu0 0
      %815 = vmatpush1.bf16.msra.mxu0 0
      %816 = vmatprep.subr.bf16.mxu0 0
      %817 = vmatpush1.bf16.msra.mxu0 0
      %818 = vmatprep.subr.bf16.mxu0 0
      %819 = vmatpush1.bf16.msra.mxu0 0
      %820 = vmatprep.subr.bf16.mxu0 0
      %821 = vmatpush1.bf16.msra.mxu0 0
      %822 = vmatprep.subr.bf16.mxu0 0
      %823 = vmatpush1.bf16.msra.mxu0 0
      %824 = vmatprep.subr.bf16.mxu0 0
      %825 = vmatpush1.bf16.msra.mxu0 0
      %826 = vmatprep.subr.bf16.mxu0 0
      %827 = vmatpush1.bf16.msra.mxu0 0
      %828 = vmatprep.subr.bf16.mxu0 0
      %829 = vmatpush1.bf16.msra.mxu0 0
      %830 = vmatprep.subr.bf16.mxu0 0
      %831 = vmatpush1.bf16.msra.mxu0 0
      %832 = vmatprep.mubr.bf16.mxu0 0
      %833 = vmatmul.mubr.bf16.gmra.mrb[0].mxu0 %v798
      %v834 = vpop.f32.mrb[0].mxu0
      %v835 = vadd.f32 0.0, %v834
      %v836 = vpop.f32.mrb[0].mxu0
      %v837 = vpop.f32.mrb[0].mxu0
      %v838 = vpop.f32.mrb[0].mxu0
      %839 = vdwg.mxu0
      %v840 = vadd.f32 %v783, %v835
      %v842 = vlaneseq
      %v843 = vshrl.u32 %v842, 7
      %v844 = vsub.s32 0, %v843
      %v845 = vrot.slane %v316, %v844
      %v847 = vadd.f32 %v840, %v845
      %v848 = vpack.c.bf16 %v847, %v847
      %vm849 = vcmask 257024
      %850 = vst.msk [vmem:[%s302] sm:$0xf] %vm849, %v848
      %p851 = scmp.lt.s32.totalorder %s27, 1
      %s852 = scalar_select %p851, %s27, 1
      %p853 = scmp.lt.s32.totalorder %s28, 0
      %s854 = scalar_select %p853, %s28, 0
      %s855 = sadd.s32 %s854, %s852
      %s856 = smul.addr %s855, 4
      %s857 = scalar_lea.vmem %s6, %s856
      // Predicated region
      $region41: #{_lambda_.22} parent=39 // pred_check
        %p858 = pneg %p179
      $region42: #{_lambda_.22} parent=39 // pred_check_branch
        %860 = sbr.rel (%p858) target = $region44
      $region43: #{_lambda_.22} parent=39 // pred_region
        _
      $region44: #{_lambda_.22} parent=39 // pred_fallthru
        _
    $region40: #{_lambda_.22} parent=5 // pred_fallthru
      _
    %p861 = scmp.le.s32.totalorder 2, %s18
    // Predicated region
    $region45: #{_lambda_.22} parent=5 // pred_check
      %p862 = pneg %p861
    $region46: #{_lambda_.22} parent=5 // pred_check_branch
      %864 = sbr.rel (%p862) target = $region48
    $region47: #{_lambda_.22} parent=5 // pred_region
      %s865 = ssub.s32 %s18, 2
      // Predicated region
      $region49: #{_lambda_.22} parent=47 // pred_check
        %p866 = pneg %p185
      $region50: #{_lambda_.22} parent=47 // pred_check_branch
        %868 = sbr.rel (%p866) target = $region52
      $region51: #{_lambda_.22} parent=47 // pred_region
        %p869 = scmp.lt.s32.totalorder %s29, 1
        %s870 = scalar_select %p869, %s29, 1
        %p871 = scmp.lt.s32.totalorder %s30, 0
        %s872 = scalar_select %p871, %s30, 0
        %s873 = sadd.s32 %s872, %s870
        %s874 = smul.addr %s873, 4
        %s875 = scalar_lea.vmem %s6, %s874
      $region52: #{_lambda_.22} parent=47 // pred_fallthru
        _
    $region48: #{_lambda_.22} parent=5 // pred_fallthru
      _
  $region6: #{_lambda_.22} parent=0 // loop_footer
    %s22 = sadd.s32 1, %s18
  $region7: #{_lambda_.22} parent=0 // loop_footer_branch
    %17 = sbr.rel target = $region3
  $region8: #{_lambda_.22} parent=0 // loop_exit
    _

// kernel: _lambda_.40
$region0: #{_lambda_.40}
  #allocation0 [shape = 'u32[]', space=smem, size = 0x4, offset = 0x4, fixed_abs, tag = 'smem constant byte address 0x4 - core index']
  #allocation1 [shape = 'u32[144,128]{1,0:T(1,128)}', space=vmem, size = 0x12000, scoped, tag = 'internal scratch']
  %s0 = inlined_call_operand.vmem [shape: bf16[12,32], index: 0, kind: input, shape index: {}]
  %s1 = inlined_call_operand.vmem [shape: f32[1,32], index: 1, kind: input, shape index: {}]
  %s2 = inlined_call_operand.vmem [shape: f32[1,32], index: 2, kind: input, shape index: {}]
  %s3 = inlined_call_operand.vmem [shape: bf16[12,32], index: 3, kind: output, shape index: {}]
  %s4 = sld [smem:[#allocation0]]
  $region22: #{_lambda_.40} parent=0
    _
  %s6 = ssub.s32 1, %s4
  %s7 = scalar_select 0, %s6, %s4
  // Predicated region
  $region2: #{_lambda_.40} parent=0 // pred_check
    _
  $region3: #{_lambda_.40} parent=0 // pred_check_branch
    %9 = sbr.rel (0) target = $region5
  $region4: #{_lambda_.40} parent=0 // pred_region
    _
  $region5: #{_lambda_.40} parent=0 // pred_fallthru
    _
  // Predicated region
  $region6: #{_lambda_.40} parent=0 // pred_check
    _
  $region7: #{_lambda_.40} parent=0 // pred_check_branch
    %11 = sbr.rel (0) target = $region9
  $region8: #{_lambda_.40} parent=0 // pred_region
    _
  $region9: #{_lambda_.40} parent=0 // pred_fallthru
    _
  // Predicated region
  $region10: #{_lambda_.40} parent=0 // pred_check
    _
  $region11: #{_lambda_.40} parent=0 // pred_check_branch
    %13 = sbr.rel (0) target = $region13
  $region12: #{_lambda_.40} parent=0 // pred_region
    _
  $region13: #{_lambda_.40} parent=0 // pred_fallthru
    _
  %v14 = vld [vmem:[%s0] sm:$0xf]
  %v15 = vld [vmem:[%s0 + $0x4] sm:$0x3]
  %v16 = vunpack.c.l.bf16 %v14
  %v17 = vunpack.c.l.bf16 %v15
  %v18 = vld [vmem:[%s1] sm:$0x1]
  %v19 = vld [vmem:[%s2] sm:$0x1]
  %vm20 = vcmask 261120
  %v21 = vsel %vm20, %v16, 0.0
  %22 = vadd.xlane.f32.xlu0 %v21
  %v23 = vpop.xlane.xlu0 %22
  %vm24 = vcmask 257024
  %v25 = vsel %vm24, %v17, 0.0
  %26 = vadd.xlane.f32.xlu0 %v25
  %v27 = vpop.xlane.xlu0 %26
  %v28 = vrcp.pop 32.0
  %v29 = vmul.f32 %v23, %v28
  %v30 = vmul.f32 %v27, %v28
  %v31 = vsub.f32 %v16, %v29
  %v32 = vsub.f32 %v17, %v30
  %v33 = vmul.f32 %v31, %v31
  %v34 = vmul.f32 %v32, %v32
  %v35 = vsel %vm20, %v33, 0.0
  %36 = vadd.xlane.f32.xlu0 %v35
  %v37 = vpop.xlane.xlu0 %36
  %v38 = vsel %vm24, %v34, 0.0
  %39 = vadd.xlane.f32.xlu0 %v38
  %v40 = vpop.xlane.xlu0 %39
  %v41 = vmul.f32 %v37, %v28
  %v42 = vmul.f32 %v40, %v28
  %v43 = vadd.f32 %v41, 1e-12
  %v44 = vadd.f32 %v42, 1e-12
  %v45 = vrsqrt.pop %v43
  %v46 = vrsqrt.pop %v44
  %v47 = vmul.f32 %v31, %v45
  %v48 = vmul.f32 %v32, %v46
  %v50 = vlaneseq
  %v51 = vshrl.u32 %v50, 7
  %v52 = vsub.s32 0, %v51
  %v53 = vrot.slane %v18, %v52
  %v55 = vmul.f32 %v47, %v53
  %v56 = vmul.f32 %v48, %v53
  %v58 = vlaneseq
  %v59 = vshrl.u32 %v58, 7
  %v60 = vsub.s32 0, %v59
  %v61 = vrot.slane %v19, %v60
  %v63 = vadd.f32 %v55, %v61
  %v64 = vadd.f32 %v56, %v61
  %v65 = vpack.c.bf16 %v64, %v63
  %v67 = vunpack.c.l.b16 %v65
  %v68 = vunpack.c.h.b16 %v65
  %v69 = vpack.c.b16 %v67, %v67
  %v70 = vpack.c.b16 %v68, %v68
  %73 = vst.msk [vmem:[%s3] sm:$0xf] %vm24, %v69
  %vm74 = vcmask 254976
  %75 = vst.msk [vmem:[%s3 + $0x4] sm:$0x3] %vm74, %v70
  // Predicated region
  $region14: #{_lambda_.40} parent=0 // pred_check
    _
  $region15: #{_lambda_.40} parent=0 // pred_check_branch
    %77 = sbr.rel (0) target = $region17
  $region16: #{_lambda_.40} parent=0 // pred_region
    _
  $region17: #{_lambda_.40} parent=0 // pred_fallthru
    _
  // Predicated region
  $region18: #{_lambda_.40} parent=0 // pred_check
    _
  $region19: #{_lambda_.40} parent=0 // pred_check_branch
    %79 = sbr.rel (0) target = $region21
  $region20: #{_lambda_.40} parent=0 // pred_region
    _
  $region21: #{_lambda_.40} parent=0 // pred_fallthru
    _

// kernel: _lambda_.33
$region0: #{_lambda_.33}
  #allocation0 [shape = 'u32[]', space=smem, size = 0x4, offset = 0x4, fixed_abs, tag = 'smem constant byte address 0x4 - core index']
  #allocation1 [shape = 'u32[144,128]{1,0:T(1,128)}', space=vmem, size = 0x12000, scoped, tag = 'internal scratch']
  %s0 = inlined_call_operand.vmem [shape: bf16[12,32], index: 0, kind: input, shape index: {}]
  %s1 = inlined_call_operand.vmem [shape: f32[1,32], index: 1, kind: input, shape index: {}]
  %s2 = inlined_call_operand.vmem [shape: f32[1,32], index: 2, kind: input, shape index: {}]
  %s3 = inlined_call_operand.vmem [shape: bf16[32,64], index: 3, kind: input, shape index: {}]
  %s4 = inlined_call_operand.vmem [shape: f32[1,64], index: 4, kind: input, shape index: {}]
  %s5 = inlined_call_operand.vmem [shape: bf16[64,32], index: 5, kind: input, shape index: {}]
  %s6 = inlined_call_operand.vmem [shape: f32[1,32], index: 6, kind: input, shape index: {}]
  %s7 = inlined_call_operand.vmem [shape: bf16[12,32], index: 7, kind: output, shape index: {}]
  %s8 = sld [smem:[#allocation0]]
  $region38: #{_lambda_.33} parent=0
    _
  %s10 = ssub.s32 1, %s8
  %s11 = scalar_select 0, %s10, %s8
  // Predicated region
  $region2: #{_lambda_.33} parent=0 // pred_check
    _
  $region3: #{_lambda_.33} parent=0 // pred_check_branch
    %13 = sbr.rel (0) target = $region5
  $region4: #{_lambda_.33} parent=0 // pred_region
    _
  $region5: #{_lambda_.33} parent=0 // pred_fallthru
    _
  // Predicated region
  $region6: #{_lambda_.33} parent=0 // pred_check
    _
  $region7: #{_lambda_.33} parent=0 // pred_check_branch
    %15 = sbr.rel (0) target = $region9
  $region8: #{_lambda_.33} parent=0 // pred_region
    _
  $region9: #{_lambda_.33} parent=0 // pred_fallthru
    _
  // Predicated region
  $region10: #{_lambda_.33} parent=0 // pred_check
    _
  $region11: #{_lambda_.33} parent=0 // pred_check_branch
    %17 = sbr.rel (0) target = $region13
  $region12: #{_lambda_.33} parent=0 // pred_region
    _
  $region13: #{_lambda_.33} parent=0 // pred_fallthru
    _
  // Predicated region
  $region14: #{_lambda_.33} parent=0 // pred_check
    _
  $region15: #{_lambda_.33} parent=0 // pred_check_branch
    %19 = sbr.rel (0) target = $region17
  $region16: #{_lambda_.33} parent=0 // pred_region
    _
  $region17: #{_lambda_.33} parent=0 // pred_fallthru
    _
  // Predicated region
  $region18: #{_lambda_.33} parent=0 // pred_check
    _
  $region19: #{_lambda_.33} parent=0 // pred_check_branch
    %21 = sbr.rel (0) target = $region21
  $region20: #{_lambda_.33} parent=0 // pred_region
    _
  $region21: #{_lambda_.33} parent=0 // pred_fallthru
    _
  // Predicated region
  $region22: #{_lambda_.33} parent=0 // pred_check
    _
  $region23: #{_lambda_.33} parent=0 // pred_check_branch
    %23 = sbr.rel (0) target = $region25
  $region24: #{_lambda_.33} parent=0 // pred_region
    _
  $region25: #{_lambda_.33} parent=0 // pred_fallthru
    _
  // Predicated region
  $region26: #{_lambda_.33} parent=0 // pred_check
    _
  $region27: #{_lambda_.33} parent=0 // pred_check_branch
    %25 = sbr.rel (0) target = $region29
  $region28: #{_lambda_.33} parent=0 // pred_region
    _
  $region29: #{_lambda_.33} parent=0 // pred_fallthru
    _
  %v27 = vld [vmem:[%s0] sm:$0xf]
  %v28 = vld [vmem:[%s0 + $0x4] sm:$0x3]
  %v29 = vunpack.c.l.bf16 %v27
  %v30 = vunpack.c.l.bf16 %v28
  %v31 = vld [vmem:[%s1] sm:$0x1]
  %v32 = vld [vmem:[%s2] sm:$0x1]
  %vm33 = vcmask 261120
  %v34 = vsel %vm33, %v29, 0.0
  %35 = vadd.xlane.f32.xlu0 %v34
  %v36 = vpop.xlane.xlu0 %35
  %vm37 = vcmask 257024
  %v38 = vsel %vm37, %v30, 0.0
  %39 = vadd.xlane.f32.xlu0 %v38
  %v40 = vpop.xlane.xlu0 %39
  %v41 = vrcp.pop 32.0
  %v42 = vmul.f32 %v36, %v41
  %v43 = vmul.f32 %v40, %v41
  %v44 = vsub.f32 %v29, %v42
  %v45 = vsub.f32 %v30, %v43
  %v46 = vmul.f32 %v44, %v44
  %v47 = vmul.f32 %v45, %v45
  %v48 = vsel %vm33, %v46, 0.0
  %49 = vadd.xlane.f32.xlu0 %v48
  %v50 = vpop.xlane.xlu0 %49
  %v51 = vsel %vm37, %v47, 0.0
  %52 = vadd.xlane.f32.xlu0 %v51
  %v53 = vpop.xlane.xlu0 %52
  %v54 = vmul.f32 %v50, %v41
  %v55 = vmul.f32 %v53, %v41
  %v56 = vadd.f32 %v54, 1e-12
  %v57 = vadd.f32 %v55, 1e-12
  %v58 = vrsqrt.pop %v56
  %v59 = vrsqrt.pop %v57
  %v60 = vmul.f32 %v44, %v58
  %v61 = vmul.f32 %v45, %v59
  %v63 = vlaneseq
  %v64 = vshrl.u32 %v63, 7
  %v65 = vsub.s32 0, %v64
  %v66 = vrot.slane %v31, %v65
  %v68 = vmul.f32 %v60, %v66
  %v69 = vmul.f32 %v61, %v66
  %v71 = vlaneseq
  %v72 = vshrl.u32 %v71, 7
  %v73 = vsub.s32 0, %v72
  %v74 = vrot.slane %v32, %v73
  %v76 = vadd.f32 %v68, %v74
  %v77 = vadd.f32 %v69, %v74
  %v78 = vpack.c.bf16 %v77, %v76
  %v79 = vld [vmem:[%s3] sm:$0xf]
  %v80 = vld [vmem:[%s3 + $0x4] sm:$0xf]
  %v81 = vld [vmem:[%s3 + $0x8] sm:$0xf]
  %v82 = vld [vmem:[%s3 + $0xc] sm:$0xf]
  %v83 = vld [vmem:[%s4] sm:$0x1]
  %v85 = vlaneseq
  %v86 = vshrl.u32 %v85, 7
  %v87 = vsub.s32 0, %v86
  %v88 = vrot.slane %v83, %v87
  %v94 = vunpack.c.l.b16 %v79
  %v95 = vunpack.c.l.b16 %v80
  %v96 = vunpack.c.l.b16 %v81
  %v97 = vunpack.c.l.b16 %v82
  %v98 = vpack.c.b16 %v95, %v94
  %v99 = vpack.c.b16 %v97, %v96
  %v103 = vsel %vm33, %v78, 0
  %105 = vmatprep.subr.bf16.mxu0 0
  %106 = vmatpush1.bf16.msra.mxu0 %v98
  %107 = vmatprep.subr.bf16.mxu0 0
  %108 = vmatpush1.bf16.msra.mxu0 %v99
  %109 = vmatprep.subr.bf16.mxu0 0
  %110 = vmatpush1.bf16.msra.mxu0 0
  %111 = vmatprep.subr.bf16.mxu0 0
  %112 = vmatpush1.bf16.msra.mxu0 0
  %113 = vmatprep.subr.bf16.mxu0 0
  %114 = vmatpush1.bf16.msra.mxu0 0
  %115 = vmatprep.subr.bf16.mxu0 0
  %116 = vmatpush1.bf16.msra.mxu0 0
  %117 = vmatprep.subr.bf16.mxu0 0
  %118 = vmatpush1.bf16.msra.mxu0 0
  %119 = vmatprep.subr.bf16.mxu0 0
  %120 = vmatpush1.bf16.msra.mxu0 0
  %121 = vmatprep.subr.bf16.mxu0 0
  %122 = vmatpush1.bf16.msra.mxu0 0
  %123 = vmatprep.subr.bf16.mxu0 0
  %124 = vmatpush1.bf16.msra.mxu0 0
  %125 = vmatprep.subr.bf16.mxu0 0
  %126 = vmatpush1.bf16.msra.mxu0 0
  %127 = vmatprep.subr.bf16.mxu0 0
  %128 = vmatpush1.bf16.msra.mxu0 0
  %129 = vmatprep.subr.bf16.mxu0 0
  %130 = vmatpush1.bf16.msra.mxu0 0
  %131 = vmatprep.subr.bf16.mxu0 0
  %132 = vmatpush1.bf16.msra.mxu0 0
  %133 = vmatprep.subr.bf16.mxu0 0
  %134 = vmatpush1.bf16.msra.mxu0 0
  %135 = vmatprep.subr.bf16.mxu0 0
  %136 = vmatpush1.bf16.msra.mxu0 0
  %137 = vmatprep.mubr.bf16.mxu0 0
  %138 = vmatmul.mubr.bf16.gmra.mrb[0].mxu0 %v103
  %v139 = vpop.f32.mrb[0].mxu0
  %v140 = vadd.f32 %v88, %v139
  %v141 = vpop.f32.mrb[0].mxu0
  %v142 = vpop.f32.mrb[0].mxu0
  %v143 = vadd.f32 %v88, %v142
  %v144 = vpop.f32.mrb[0].mxu0
  %145 = vdwg.mxu0
  %v146 = vmax.f32 %v140, 0.0
  %v147 = vmax.f32 %v143, 0.0
  %v148 = vpack.c.bf16 %v147, %v146
  %v149 = vld [vmem:[%s5] sm:$0xf]
  %v150 = vld [vmem:[%s5 + $0x4] sm:$0xf]
  %v151 = vld [vmem:[%s5 + $0x8] sm:$0xf]
  %v152 = vld [vmem:[%s5 + $0xc] sm:$0xf]
  %v153 = vld [vmem:[%s5 + $0x10] sm:$0xf]
  %v154 = vld [vmem:[%s5 + $0x14] sm:$0xf]
  %v155 = vld [vmem:[%s5 + $0x18] sm:$0xf]
  %v156 = vld [vmem:[%s5 + $0x1c] sm:$0xf]
  %v165 = vunpack.c.l.b16 %v149
  %v166 = vunpack.c.l.b16 %v150
  %v167 = vunpack.c.l.b16 %v151
  %v168 = vunpack.c.l.b16 %v152
  %v169 = vunpack.c.l.b16 %v153
  %v170 = vunpack.c.l.b16 %v154
  %v171 = vunpack.c.l.b16 %v155
  %v172 = vunpack.c.l.b16 %v156
  %v173 = vpack.c.b16 %v166, %v165
  %v174 = vpack.c.b16 %v168, %v167
  %v175 = vpack.c.b16 %v170, %v169
  %v176 = vpack.c.b16 %v172, %v171
  %vm181 = vcmask 523264
  %v183 = vsel %vm181, %v148, 0
  %185 = vmatprep.subr.bf16.mxu0 0
  %186 = vmatpush1.bf16.msra.mxu0 %v173
  %187 = vmatprep.subr.bf16.mxu0 0
  %188 = vmatpush1.bf16.msra.mxu0 %v174
  %189 = vmatprep.subr.bf16.mxu0 0
  %190 = vmatpush1.bf16.msra.mxu0 %v175
  %191 = vmatprep.subr.bf16.mxu0 0
  %192 = vmatpush1.bf16.msra.mxu0 %v176
  %193 = vmatprep.subr.bf16.mxu0 0
  %194 = vmatpush1.bf16.msra.mxu0 0
  %195 = vmatprep.subr.bf16.mxu0 0
  %196 = vmatpush1.bf16.msra.mxu0 0
  %197 = vmatprep.subr.bf16.mxu0 0
  %198 = vmatpush1.bf16.msra.mxu0 0
  %199 = vmatprep.subr.bf16.mxu0 0
  %200 = vmatpush1.bf16.msra.mxu0 0
  %201 = vmatprep.subr.bf16.mxu0 0
  %202 = vmatpush1.bf16.msra.mxu0 0
  %203 = vmatprep.subr.bf16.mxu0 0
  %204 = vmatpush1.bf16.msra.mxu0 0
  %205 = vmatprep.subr.bf16.mxu0 0
  %206 = vmatpush1.bf16.msra.mxu0 0
  %207 = vmatprep.subr.bf16.mxu0 0
  %208 = vmatpush1.bf16.msra.mxu0 0
  %209 = vmatprep.subr.bf16.mxu0 0
  %210 = vmatpush1.bf16.msra.mxu0 0
  %211 = vmatprep.subr.bf16.mxu0 0
  %212 = vmatpush1.bf16.msra.mxu0 0
  %213 = vmatprep.subr.bf16.mxu0 0
  %214 = vmatpush1.bf16.msra.mxu0 0
  %215 = vmatprep.subr.bf16.mxu0 0
  %216 = vmatpush1.bf16.msra.mxu0 0
  %217 = vmatprep.mubr.bf16.mxu0 0
  %218 = vmatmul.mubr.bf16.gmra.mrb[0].mxu0 %v183
  %v219 = vpop.f32.mrb[0].mxu0
  %v220 = vadd.f32 0.0, %v219
  %v221 = vpop.f32.mrb[0].mxu0
  %v222 = vpop.f32.mrb[0].mxu0
  %v223 = vadd.f32 0.0, %v222
  %v224 = vpop.f32.mrb[0].mxu0
  %225 = vdwg.mxu0
  %v226 = vadd.f32 %v29, %v220
  %v227 = vadd.f32 %v30, %v223
  %v228 = vld [vmem:[%s6] sm:$0x1]
  %v230 = vlaneseq
  %v231 = vshrl.u32 %v230, 7
  %v232 = vsub.s32 0, %v231
  %v233 = vrot.slane %v228, %v232
  %v235 = vadd.f32 %v226, %v233
  %v236 = vadd.f32 %v227, %v233
  %v237 = vpack.c.bf16 %v236, %v235
  %v239 = vunpack.c.l.b16 %v237
  %v240 = vunpack.c.h.b16 %v237
  %v241 = vpack.c.b16 %v239, %v239
  %v242 = vpack.c.b16 %v240, %v240
  %245 = vst.msk [vmem:[%s7] sm:$0xf] %vm37, %v241
  %vm246 = vcmask 254976
  %247 = vst.msk [vmem:[%s7 + $0x4] sm:$0x3] %vm246, %v242
  // Predicated region
  $region30: #{_lambda_.33} parent=0 // pred_check
    _
  $region31: #{_lambda_.33} parent=0 // pred_check_branch
    %249 = sbr.rel (0) target = $region33
  $region32: #{_lambda_.33} parent=0 // pred_region
    _
  $region33: #{_lambda_.33} parent=0 // pred_fallthru
    _
  // Predicated region
  $region34: #{_lambda_.33} parent=0 // pred_check
    _
  $region35: #{_lambda_.33} parent=0 // pred_check_branch
    %251 = sbr.rel (0) target = $region37
  $region36: #{_lambda_.33} parent=0 // pred_region
    _
  $region37: #{_lambda_.33} parent=0 // pred_fallthru
    _

// kernel: _lambda_.32
$region0: #{_lambda_.32}
  #allocation0 [shape = 'u32[]', space=smem, size = 0x4, offset = 0x4, fixed_abs, tag = 'smem constant byte address 0x4 - core index']
  #allocation1 [shape = 'u32[144,128]{1,0:T(1,128)}', space=vmem, size = 0x12000, scoped, tag = 'internal scratch']
  #allocation2 [shape = 's32[1]{0}', space=sflag, size = 0x4, scoped, tag = 'scoped memory for _lambda_.32']
  #allocation3 [shape = 'u8[512]{0}', space=smem, size = 0x200, scoped, tag = 'prefetched SMEM operand 0']
  %s0 = inlined_call_operand.vmem [shape: s32[2], index: 0, kind: input, shape index: {}]
  %s1 = inlined_call_operand.vmem [shape: bf16[2,6,32], index: 1, kind: input, shape index: {}]
  %s2 = inlined_call_operand.vmem [shape: bf16[2,8,64], index: 2, kind: input, shape index: {}]
  %s3 = inlined_call_operand.vmem [shape: bf16[2,6,32], index: 3, kind: input, shape index: {}]
  %s4 = inlined_call_operand.vmem [shape: bf16[32,32], index: 4, kind: input, shape index: {}]
  %s5 = inlined_call_operand.vmem [shape: f32[1,32], index: 5, kind: input, shape index: {}]
  %s6 = inlined_call_operand.vmem [shape: bf16[2,6,32], index: 6, kind: output, shape index: {}]
  %s7 = sld [smem:[#allocation0]]
  $region53: #{_lambda_.32} parent=0
    _
  %s9 = ssub.s32 1, %s7
  %s10 = scalar_select 0, %s9, %s7
  %s11 = sshll.u32 %s0, 4
  %s12 = int_to_ptr.vmem [resolvable:$true] %s11
  %14 = dma.vmem_to_smem %s12, 16, [#allocation3], [#allocation2]
  %15 = dma.done [#allocation2], 16
  %16 = sfence
  loop: start=0, step=1, limit=4
  $region2: #{_lambda_.32} parent=0 // loop_pre_header
    _
  $region3: #{_lambda_.32} parent=0 // loop_header
    %s18 = sphi 0, %s22
    %p19 = scmp.ge.s32.totalorder %s18, 4
    %s25 = sphi 0, %s37
    %s26 = sphi 0, %s33
    %s27 = sphi 0, %s25
    %s28 = sphi 0, %s26
    %s29 = sphi 0, %s27
    %s30 = sphi 0, %s28
    %s42 = sphi 0, %s44
    %s45 = sphi 0, %s42
    %s46 = sphi 0, %s45
    %s62 = sphi 0, %s46
    %s68 = sphi 0, %s70
    %s71 = sphi 0, %s68
    %s72 = sphi 0, %s71
    %s88 = sphi 0, %s72
    %s96 = sphi 0, %s98
    %s99 = sphi 0, %s96
    %s100 = sphi 0, %s99
    %s116 = sphi 0, %s100
    %s120 = sphi 0, %s120
    %s122 = sphi 0, %s120
    %s123 = sphi 0, %s122
    %s137 = sphi 0, %s123
    %s141 = sphi 0, %s141
    %s143 = sphi 0, %s141
    %s144 = sphi 0, %s143
    %s158 = sphi 0, %s144
    %s166 = sphi 0, %s168
    %s169 = sphi 0, %s166
    %s170 = sphi 0, %s169
    %s186 = sphi 0, %s170
  $region4: #{_lambda_.32} parent=0 // loop_header_branch
    %21 = sbr.rel (%p19) target = $region8
  $region5: #{_lambda_.32} parent=0 // loop_body
    %s23 = ssub.s32 %s18, 1
    %s24 = ssub.s32 %s18, 2
    %s31 = sadd.s32 1, %s26
    %p32 = scmp.ge.s32.totalorder %s31, 1
    %s33 = scalar_select %p32, 0, %s31
    %s34 = sadd.s32 1, %s25
    %s35 = scalar_select %p32, %s34, %s25
    %p36 = scmp.ge.s32.totalorder %s35, 2
    %s37 = scalar_select %p36, 0, %s35
    %s38 = ssub.s32 %s25, %s37
    %s39 = ssub.s32 %s26, %s33
    %s40 = sor.u32 %s38, %s39
    %p41 = scmp.eq.s32.totalorder %s40, 0
    %s43 = sadd.s32 %s42, 1
    %s44 = scalar_select %p41, %s42, %s43
    %p47 = pneg %p41
    %p48 = scmp.eq.s32.totalorder %s18, 1
    %p49 = por %p47, %p48
    %p50 = scmp.ne.s32.totalorder %s42, %s45
    %p51 = scmp.eq.s32.totalorder %s18, 0
    %p52 = por %p50, %p51
    %p53 = scmp.ne.s32.totalorder %s42, %s45
    %p54 = scmp.eq.s32.totalorder %s23, 1
    %p55 = por %p53, %p54
    %p56 = scmp.ne.s32.totalorder %s45, %s46
    %p57 = scmp.eq.s32.totalorder %s23, 0
    %p58 = por %p56, %p57
    %p59 = scmp.ne.s32.totalorder %s45, %s46
    %p60 = scmp.eq.s32.totalorder %s24, 1
    %p61 = por %p59, %p60
    %p63 = scmp.ne.s32.totalorder %s46, %s62
    %p64 = scmp.eq.s32.totalorder %s24, 0
    %p65 = por %p63, %p64
    %s66 = ssub.s32 %s25, %s37
    %p67 = scmp.eq.s32.totalorder %s66, 0
    %s69 = sadd.s32 %s68, 1
    %s70 = scalar_select %p67, %s68, %s69
    %p73 = pneg %p67
    %p74 = scmp.eq.s32.totalorder %s18, 1
    %p75 = por %p73, %p74
    %p76 = scmp.ne.s32.totalorder %s68, %s71
    %p77 = scmp.eq.s32.totalorder %s18, 0
    %p78 = por %p76, %p77
    %p79 = scmp.ne.s32.totalorder %s68, %s71
    %p80 = scmp.eq.s32.totalorder %s23, 1
    %p81 = por %p79, %p80
    %p82 = scmp.ne.s32.totalorder %s71, %s72
    %p83 = scmp.eq.s32.totalorder %s23, 0
    %p84 = por %p82, %p83
    %p85 = scmp.ne.s32.totalorder %s71, %s72
    %p86 = scmp.eq.s32.totalorder %s24, 1
    %p87 = por %p85, %p86
    %p89 = scmp.ne.s32.totalorder %s72, %s88
    %p90 = scmp.eq.s32.totalorder %s24, 0
    %p91 = por %p89, %p90
    %s92 = ssub.s32 %s25, %s37
    %s93 = ssub.s32 %s26, %s33
    %s94 = sor.u32 %s92, %s93
    %p95 = scmp.eq.s32.totalorder %s94, 0
    %s97 = sadd.s32 %s96, 1
    %s98 = scalar_select %p95, %s96, %s97
    %p101 = pneg %p95
    %p102 = scmp.eq.s32.totalorder %s18, 1
    %p103 = por %p101, %p102
    %p104 = scmp.ne.s32.totalorder %s96, %s99
    %p105 = scmp.eq.s32.totalorder %s18, 0
    %p106 = por %p104, %p105
    %p107 = scmp.ne.s32.totalorder %s96, %s99
    %p108 = scmp.eq.s32.totalorder %s23, 1
    %p109 = por %p107, %p108
    %p110 = scmp.ne.s32.totalorder %s99, %s100
    %p111 = scmp.eq.s32.totalorder %s23, 0
    %p112 = por %p110, %p111
    %p113 = scmp.ne.s32.totalorder %s99, %s100
    %p114 = scmp.eq.s32.totalorder %s24, 1
    %p115 = por %p113, %p114
    %p117 = scmp.ne.s32.totalorder %s100, %s116
    %p118 = scmp.eq.s32.totalorder %s24, 0
    %p119 = por %p117, %p118
    %s121 = sadd.s32 %s120, 1
    %p124 = scmp.eq.s32.totalorder %s18, 1
    %p125 = scmp.ne.s32.totalorder %s120, %s122
    %p126 = scmp.eq.s32.totalorder %s18, 0
    %p127 = por %p125, %p126
    %p128 = scmp.ne.s32.totalorder %s120, %s122
    %p129 = scmp.eq.s32.totalorder %s23, 1
    %p130 = por %p128, %p129
    %p131 = scmp.ne.s32.totalorder %s122, %s123
    %p132 = scmp.eq.s32.totalorder %s23, 0
    %p133 = por %p131, %p132
    %p134 = scmp.ne.s32.totalorder %s122, %s123
    %p135 = scmp.eq.s32.totalorder %s24, 1
    %p136 = por %p134, %p135
    %p138 = scmp.ne.s32.totalorder %s123, %s137
    %p139 = scmp.eq.s32.totalorder %s24, 0
    %p140 = por %p138, %p139
    %s142 = sadd.s32 %s141, 1
    %p145 = scmp.eq.s32.totalorder %s18, 1
    %p146 = scmp.ne.s32.totalorder %s141, %s143
    %p147 = scmp.eq.s32.totalorder %s18, 0
    %p148 = por %p146, %p147
    %p149 = scmp.ne.s32.totalorder %s141, %s143
    %p150 = scmp.eq.s32.totalorder %s23, 1
    %p151 = por %p149, %p150
    %p152 = scmp.ne.s32.totalorder %s143, %s144
    %p153 = scmp.eq.s32.totalorder %s23, 0
    %p154 = por %p152, %p153
    %p155 = scmp.ne.s32.totalorder %s143, %s144
    %p156 = scmp.eq.s32.totalorder %s24, 1
    %p157 = por %p155, %p156
    %p159 = scmp.ne.s32.totalorder %s144, %s158
    %p160 = scmp.eq.s32.totalorder %s24, 0
    %p161 = por %p159, %p160
    %s162 = ssub.s32 %s25, %s37
    %s163 = ssub.s32 %s26, %s33
    %s164 = sor.u32 %s162, %s163
    %p165 = scmp.eq.s32.totalorder %s164, 0
    %s167 = sadd.s32 %s166, 1
    %s168 = scalar_select %p165, %s166, %s167
    %p171 = pneg %p165
    %p172 = scmp.eq.s32.totalorder %s18, 1
    %p173 = por %p171, %p172
    %p174 = scmp.ne.s32.totalorder %s166, %s169
    %p175 = scmp.eq.s32.totalorder %s18, 0
    %p176 = por %p174, %p175
    %p177 = scmp.ne.s32.totalorder %s166, %s169
    %p178 = scmp.eq.s32.totalorder %s23, 1
    %p179 = por %p177, %p178
    %p180 = scmp.ne.s32.totalorder %s169, %s170
    %p181 = scmp.eq.s32.totalorder %s23, 0
    %p182 = por %p180, %p181
    %p183 = scmp.ne.s32.totalorder %s169, %s170
    %p184 = scmp.eq.s32.totalorder %s24, 1
    %p185 = por %p183, %p184
    %p187 = scmp.ne.s32.totalorder %s170, %s186
    %p188 = scmp.eq.s32.totalorder %s24, 0
    %p189 = por %p187, %p188
    %p190 = scmp.le.s32.totalorder 1, %s18
    %p191 = scmp.lt.s32.totalorder %s18, 3
    %p192 = pnand %p190, %p191
    %p193 = pneg %p192
    // Predicated region
    $region9: #{_lambda_.32} parent=5 // pred_check
      _
    $region10: #{_lambda_.32} parent=5 // pred_check_branch
      %195 = sbr.rel (%p192) target = $region12
    $region11: #{_lambda_.32} parent=5 // pred_region
      %s196 = ssub.s32 %s18, 1
      // Predicated region
      $region13: #{_lambda_.32} parent=11 // pred_check
        %p197 = pneg %p133
      $region14: #{_lambda_.32} parent=11 // pred_check_branch
        %199 = sbr.rel (%p197) target = $region16
      $region15: #{_lambda_.32} parent=11 // pred_region
        _
      $region16: #{_lambda_.32} parent=11 // pred_fallthru
        _
      // Predicated region
      $region17: #{_lambda_.32} parent=11 // pred_check
        %p200 = pneg %p154
      $region18: #{_lambda_.32} parent=11 // pred_check_branch
        %202 = sbr.rel (%p200) target = $region20
      $region19: #{_lambda_.32} parent=11 // pred_region
        _
      $region20: #{_lambda_.32} parent=11 // pred_fallthru
        _
    $region12: #{_lambda_.32} parent=5 // pred_fallthru
      _
    %p203 = scmp.lt.s32.totalorder %s18, 2
    // Predicated region
    $region21: #{_lambda_.32} parent=5 // pred_check
      %p204 = pneg %p203
    $region22: #{_lambda_.32} parent=5 // pred_check_branch
      %206 = sbr.rel (%p204) target = $region24
    $region23: #{_lambda_.32} parent=5 // pred_region
      // Predicated region
      $region25: #{_lambda_.32} parent=23 // pred_check
        %p207 = pneg %p52
      $region26: #{_lambda_.32} parent=23 // pred_check_branch
        %209 = sbr.rel (%p207) target = $region28
      $region27: #{_lambda_.32} parent=23 // pred_region
        %p210 = scmp.lt.s32.totalorder %s25, 1
        %s211 = scalar_select %p210, %s25, 1
        %p212 = scmp.lt.s32.totalorder %s26, 0
        %s213 = scalar_select %p212, %s26, 0
        %s214 = sadd.s32 %s213, %s211
        %s215 = smul.addr %s214, 4
        %s216 = scalar_lea.vmem %s1, %s215
      $region28: #{_lambda_.32} parent=23 // pred_fallthru
        _
      // Predicated region
      $region29: #{_lambda_.32} parent=23 // pred_check
        %p217 = pneg %p78
      $region30: #{_lambda_.32} parent=23 // pred_check_branch
        %219 = sbr.rel (%p217) target = $region32
      $region31: #{_lambda_.32} parent=23 // pred_region
        %p220 = scmp.lt.s32.totalorder %s25, 1
        %s221 = scalar_select %p220, %s25, 1
        %s222 = smul.addr %s221, 4
        %s223 = scalar_lea.vmem %s2, %s222
      $region32: #{_lambda_.32} parent=23 // pred_fallthru
        _
      // Predicated region
      $region33: #{_lambda_.32} parent=23 // pred_check
        %p224 = pneg %p106
      $region34: #{_lambda_.32} parent=23 // pred_check_branch
        %226 = sbr.rel (%p224) target = $region36
      $region35: #{_lambda_.32} parent=23 // pred_region
        %p227 = scmp.lt.s32.totalorder %s25, 1
        %s228 = scalar_select %p227, %s25, 1
        %p229 = scmp.lt.s32.totalorder %s26, 0
        %s230 = scalar_select %p229, %s26, 0
        %s231 = sadd.s32 %s230, %s228
        %s232 = smul.addr %s231, 4
        %s233 = scalar_lea.vmem %s3, %s232
      $region36: #{_lambda_.32} parent=23 // pred_fallthru
        _
    $region24: #{_lambda_.32} parent=5 // pred_fallthru
      _
    %p234 = scmp.le.s32.totalorder 1, %s18
    %p235 = scmp.lt.s32.totalorder %s18, 3
    %p236 = pnand %p234, %p235
    %p237 = pneg %p236
    // Predicated region
    $region37: #{_lambda_.32} parent=5 // pred_check
      _
    $region38: #{_lambda_.32} parent=5 // pred_check_branch
      %239 = sbr.rel (%p236) target = $region40
    $region39: #{_lambda_.32} parent=5 // pred_region
      %s240 = ssub.s32 %s18, 1
      %p241 = scmp.lt.s32.totalorder %s27, 1
      %s242 = scalar_select %p241, %s27, 1
      %p243 = scmp.lt.s32.totalorder %s28, 0
      %s244 = scalar_select %p243, %s28, 0
      %s245 = sadd.s32 %s244, %s242
      %s246 = smul.addr %s245, 4
      %s247 = scalar_lea.vmem %s1, %s246
      %p248 = pneg %p58
      %p249 = pneg %p55
      %p250 = scmp.lt.s32.totalorder %s27, 1
      %s251 = scalar_select %p250, %s27, 1
      %s252 = smul.addr %s251, 4
      %s253 = scalar_lea.vmem %s2, %s252
      %p254 = pneg %p84
      %p255 = pneg %p81
      %p256 = scmp.lt.s32.totalorder %s27, 1
      %s257 = scalar_select %p256, %s27, 1
      %p258 = scmp.lt.s32.totalorder %s28, 0
      %s259 = scalar_select %p258, %s28, 0
      %s260 = sadd.s32 %s259, %s257
      %s261 = smul.addr %s260, 4
      %s262 = scalar_lea.vmem %s3, %s261
      %p263 = pneg %p112
      %p264 = pneg %p109
      %p265 = pneg %p133
      %p266 = pneg %p130
      %p267 = pneg %p154
      %p268 = pneg %p151
      %p269 = pneg %p182
      %p270 = pneg %p179
      %p271 = scmp.lt.s32.totalorder %s27, 1
      %s272 = scalar_select %p271, %s27, 1
      %p273 = scmp.lt.s32.totalorder %s28, 0
      %s274 = scalar_select %p273, %s28, 0
      %s275 = sadd.s32 %s274, %s272
      %s276 = smul.addr %s275, 4
      %s277 = scalar_lea.vmem %s6, %s276
      %p278 = scmp.lt.s32.totalorder %s27, 1
      %s279 = scalar_select %p278, %s27, 1
      %p280 = scmp.lt.s32.totalorder %s28, 0
      %s281 = scalar_select %p280, %s28, 0
      %s282 = sadd.s32 %s281, %s279
      %s283 = smul.addr %s282, 4
      %s284 = scalar_lea.vmem %s1, %s283
      %p285 = scmp.lt.s32.totalorder %s27, 1
      %s286 = scalar_select %p285, %s27, 1
      %s287 = smul.addr %s286, 4
      %s288 = scalar_lea.vmem %s2, %s287
      %p289 = scmp.lt.s32.totalorder %s27, 1
      %s290 = scalar_select %p289, %s27, 1
      %p291 = scmp.lt.s32.totalorder %s28, 0
      %s292 = scalar_select %p291, %s28, 0
      %s293 = sadd.s32 %s292, %s290
      %s294 = smul.addr %s293, 4
      %s295 = scalar_lea.vmem %s3, %s294
      %p296 = scmp.lt.s32.totalorder %s27, 1
      %s297 = scalar_select %p296, %s27, 1
      %p298 = scmp.lt.s32.totalorder %s28, 0
      %s299 = scalar_select %p298, %s28, 0
      %s300 = sadd.s32 %s299, %s297
      %s301 = smul.addr %s300, 4
      %s302 = scalar_lea.vmem %s6, %s301
      %v304 = vld [vmem:[%s288] sm:$0xf]
      %v305 = vlaneseq
      %v306 = vand.u32 %v305, 127
      %s307 = sld [smem:[#allocation3 + %s27]]
      %v308 = vstv %s307
      %vm309 = vcmp.lt.s32.totalorder %v306, %v308
      %v310 = vld [vmem:[%s284] sm:$0x7]
      %v311 = vld [vmem:[%s295] sm:$0x7]
      %v312 = vld [vmem:[%s4] sm:$0xf]
      %v313 = vld [vmem:[%s4 + $0x4] sm:$0xf]
      %v314 = vld [vmem:[%s4 + $0x8] sm:$0xf]
      %v315 = vld [vmem:[%s4 + $0xc] sm:$0xf]
      %v316 = vld [vmem:[%s5] sm:$0x1]
      %vm317 = vcmask 64512
      %v319 = vsel %vm317, %v310, 0
      %v322 = vsel %vm317, %v304, 0
      %324 = vmatprep.subr.bf16.mxu0 0
      %325 = vmatpush1.bf16.xpose.msra.mxu0 %v322
      %326 = vmatprep.subr.bf16.mxu0 0
      %327 = vmatpush1.bf16.xpose.msra.mxu0 0
      %328 = vmatprep.subr.bf16.mxu0 0
      %329 = vmatpush1.bf16.xpose.msra.mxu0 0
      %330 = vmatprep.subr.bf16.mxu0 0
      %331 = vmatpush1.bf16.xpose.msra.mxu0 0
      %332 = vmatprep.subr.bf16.mxu0 0
      %333 = vmatpush1.bf16.xpose.msra.mxu0 0
      %334 = vmatprep.subr.bf16.mxu0 0
      %335 = vmatpush1.bf16.xpose.msra.mxu0 0
      %336 = vmatprep.subr.bf16.mxu0 0
      %337 = vmatpush1.bf16.xpose.msra.mxu0 0
      %338 = vmatprep.subr.bf16.mxu0 0
      %339 = vmatpush1.bf16.xpose.msra.mxu0 0
      %340 = vmatprep.subr.bf16.mxu0 0
      %341 = vmatpush1.bf16.xpose.msra.mxu0 0
      %342 = vmatprep.subr.bf16.mxu0 0
      %343 = vmatpush1.bf16.xpose.msra.mxu0 0
      %344 = vmatprep.subr.bf16.mxu0 0
      %345 = vmatpush1.bf16.xpose.msra.mxu0 0
      %346 = vmatprep.subr.bf16.mxu0 0
      %347 = vmatpush1.bf16.xpose.msra.mxu0 0
      %348 = vmatprep.subr.bf16.mxu0 0
      %349 = vmatpush1.bf16.xpose.msra.mxu0 0
      %350 = vmatprep.subr.bf16.mxu0 0
      %351 = vmatpush1.bf16.xpose.msra.mxu0 0
      %352 = vmatprep.subr.bf16.mxu0 0
      %353 = vmatpush1.bf16.xpose.msra.mxu0 0
      %354 = vmatprep.subr.bf16.mxu0 0
      %355 = vmatpush1.bf16.xpose.msra.mxu0 0
      %356 = vmatprep.mubr.bf16.mxu0 0
      %357 = vmatmul.mubr.bf16.gmra.mrb[0].mxu0 %v319
      %v358 = vpop.f32.mrb[0].mxu0
      %v359 = vadd.f32 0.0, %v358
      %v360 = vpop.f32.mrb[0].mxu0
      %v361 = vpop.f32.mrb[0].mxu0
      %v362 = vpop.f32.mrb[0].mxu0
      %363 = vdwg.mxu0
      %v364 = vsel %vm309, %v359, -1e+30
      %vm365 = vcmask 62464
      %v366 = vsel %vm365, %v364, -inf
      %367 = vmax.xlane.f32.xlu0 %v366
      %v368 = vpop.xlane.xlu0 %367
      %v369 = vsub.f32 %v364, %v368
      %v370 = vmul.f32 %v369, 1.442695
      %v371 = vpow.pop %v370
      %v372 = vsel %vm365, %v371, 0.0
      %373 = vadd.xlane.f32.xlu0 %v372
      %v374 = vpop.xlane.xlu0 %373
      %v375 = vrcp.pop %v374
      %v376 = vmul.f32 %v371, %v375
      %v377 = vpack.c.bf16 %v376, %v376
      %v379 = vunpack.c.l.b16 %v304
      %v380 = vpack.c.b16 %v379, %v379
      %381 = vrot.lane.b32.xlu0 %v380, 96
      %v382 = vpop.permute.xlu0 %381
      %v384 = vsel %vm317, %v377, 0
      %vm386 = vcmask 1043456
      %v388 = vsel %vm386, %v382, 0
      %390 = vmatprep.subr.bf16.mxu0 0
      %391 = vmatpush1.bf16.msra.mxu0 %v388
      %392 = vmatprep.subr.bf16.mxu0 0
      %393 = vmatpush1.bf16.msra.mxu0 0
      %394 = vmatprep.subr.bf16.mxu0 0
      %395 = vmatpush1.bf16.msra.mxu0 0
      %396 = vmatprep.subr.bf16.mxu0 0
      %397 = vmatpush1.bf16.msra.mxu0 0
      %398 = vmatprep.subr.bf16.mxu0 0
      %399 = vmatpush1.bf16.msra.mxu0 0
      %400 = vmatprep.subr.bf16.mxu0 0
      %401 = vmatpush1.bf16.msra.mxu0 0
      %402 = vmatprep.subr.bf16.mxu0 0
      %403 = vmatpush1.bf16.msra.mxu0 0
      %404 = vmatprep.subr.bf16.mxu0 0
      %405 = vmatpush1.bf16.msra.mxu0 0
      %406 = vmatprep.subr.bf16.mxu0 0
      %407 = vmatpush1.bf16.msra.mxu0 0
      %408 = vmatprep.subr.bf16.mxu0 0
      %409 = vmatpush1.bf16.msra.mxu0 0
      %410 = vmatprep.subr.bf16.mxu0 0
      %411 = vmatpush1.bf16.msra.mxu0 0
      %412 = vmatprep.subr.bf16.mxu0 0
      %413 = vmatpush1.bf16.msra.mxu0 0
      %414 = vmatprep.subr.bf16.mxu0 0
      %415 = vmatpush1.bf16.msra.mxu0 0
      %416 = vmatprep.subr.bf16.mxu0 0
      %417 = vmatpush1.bf16.msra.mxu0 0
      %418 = vmatprep.subr.bf16.mxu0 0
      %419 = vmatpush1.bf16.msra.mxu0 0
      %420 = vmatprep.subr.bf16.mxu0 0
      %421 = vmatpush1.bf16.msra.mxu0 0
      %422 = vmatprep.mubr.bf16.mxu0 0
      %423 = vmatmul.mubr.bf16.gmra.mrb[0].mxu0 %v384
      %v424 = vpop.f32.mrb[0].mxu0
      %v425 = vadd.f32 0.0, %v424
      %v426 = vpop.f32.mrb[0].mxu0
      %v427 = vpop.f32.mrb[0].mxu0
      %v428 = vpop.f32.mrb[0].mxu0
      %429 = vdwg.mxu0
      %v431 = vunpack.c.l.b16 %v310
      %v432 = vpack.c.b16 %v431, %v431
      %433 = vrot.lane.b32.xlu0 %v432, 120
      %v434 = vpop.permute.xlu0 %433
      %435 = vrot.lane.b32.xlu0 %v380, 120
      %v436 = vpop.permute.xlu0 %435
      %v438 = vsel %vm317, %v434, 0
      %v441 = vsel %vm317, %v436, 0
      %443 = vmatprep.subr.bf16.mxu0 0
      %444 = vmatpush1.bf16.xpose.msra.mxu0 %v441
      %445 = vmatprep.subr.bf16.mxu0 0
      %446 = vmatpush1.bf16.xpose.msra.mxu0 0
      %447 = vmatprep.subr.bf16.mxu0 0
      %448 = vmatpush1.bf16.xpose.msra.mxu0 0
      %449 = vmatprep.subr.bf16.mxu0 0
      %450 = vmatpush1.bf16.xpose.msra.mxu0 0
      %451 = vmatprep.subr.bf16.mxu0 0
      %452 = vmatpush1.bf16.xpose.msra.mxu0 0
      %453 = vmatprep.subr.bf16.mxu0 0
      %454 = vmatpush1.bf16.xpose.msra.mxu0 0
      %455 = vmatprep.subr.bf16.mxu0 0
      %456 = vmatpush1.bf16.xpose.msra.mxu0 0
      %457 = vmatprep.subr.bf16.mxu0 0
      %458 = vmatpush1.bf16.xpose.msra.mxu0 0
      %459 = vmatprep.subr.bf16.mxu0 0
      %460 = vmatpush1.bf16.xpose.msra.mxu0 0
      %461 = vmatprep.subr.bf16.mxu0 0
      %462 = vmatpush1.bf16.xpose.msra.mxu0 0
      %463 = vmatprep.subr.bf16.mxu0 0
      %464 = vmatpush1.bf16.xpose.msra.mxu0 0
      %465 = vmatprep.subr.bf16.mxu0 0
      %466 = vmatpush1.bf16.xpose.msra.mxu0 0
      %467 = vmatprep.subr.bf16.mxu0 0
      %468 = vmatpush1.bf16.xpose.msra.mxu0 0
      %469 = vmatprep.subr.bf16.mxu0 0
      %470 = vmatpush1.bf16.xpose.msra.mxu0 0
      %471 = vmatprep.subr.bf16.mxu0 0
      %472 = vmatpush1.bf16.xpose.msra.mxu0 0
      %473 = vmatprep.subr.bf16.mxu0 0
      %474 = vmatpush1.bf16.xpose.msra.mxu0 0
      %475 = vmatprep.mubr.bf16.mxu0 0
      %476 = vmatmul.mubr.bf16.gmra.mrb[0].mxu0 %v438
      %v477 = vpop.f32.mrb[0].mxu0
      %v478 = vadd.f32 0.0, %v477
      %v479 = vpop.f32.mrb[0].mxu0
      %v480 = vpop.f32.mrb[0].mxu0
      %v481 = vpop.f32.mrb[0].mxu0
      %482 = vdwg.mxu0
      %v483 = vsel %vm309, %v478, -1e+30
      %v484 = vsel %vm365, %v483, -inf
      %485 = vmax.xlane.f32.xlu0 %v484
      %v486 = vpop.xlane.xlu0 %485
      %v487 = vsub.f32 %v483, %v486
      %v488 = vmul.f32 %v487, 1.442695
      %v489 = vpow.pop %v488
      %v490 = vsel %vm365, %v489, 0.0
      %491 = vadd.xlane.f32.xlu0 %v490
      %v492 = vpop.xlane.xlu0 %491
      %v493 = vrcp.pop %v492
      %v494 = vmul.f32 %v489, %v493
      %v495 = vpack.c.bf16 %v494, %v494
      %496 = vrot.lane.b32.xlu0 %v380, 88
      %v497 = vpop.permute.xlu0 %496
      %v499 = vsel %vm317, %v495, 0
      %v502 = vsel %vm386, %v497, 0
      %504 = vmatprep.subr.bf16.mxu0 0
      %505 = vmatpush1.bf16.msra.mxu0 %v502
      %506 = vmatprep.subr.bf16.mxu0 0
      %507 = vmatpush1.bf16.msra.mxu0 0
      %508 = vmatprep.subr.bf16.mxu0 0
      %509 = vmatpush1.bf16.msra.mxu0 0
      %510 = vmatprep.subr.bf16.mxu0 0
      %511 = vmatpush1.bf16.msra.mxu0 0
      %512 = vmatprep.subr.bf16.mxu0 0
      %513 = vmatpush1.bf16.msra.mxu0 0
      %514 = vmatprep.subr.bf16.mxu0 0
      %515 = vmatpush1.bf16.msra.mxu0 0
      %516 = vmatprep.subr.bf16.mxu0 0
      %517 = vmatpush1.bf16.msra.mxu0 0
      %518 = vmatprep.subr.bf16.mxu0 0
      %519 = vmatpush1.bf16.msra.mxu0 0
      %520 = vmatprep.subr.bf16.mxu0 0
      %521 = vmatpush1.bf16.msra.mxu0 0
      %522 = vmatprep.subr.bf16.mxu0 0
      %523 = vmatpush1.bf16.msra.mxu0 0
      %524 = vmatprep.subr.bf16.mxu0 0
      %525 = vmatpush1.bf16.msra.mxu0 0
      %526 = vmatprep.subr.bf16.mxu0 0
      %527 = vmatpush1.bf16.msra.mxu0 0
      %528 = vmatprep.subr.bf16.mxu0 0
      %529 = vmatpush1.bf16.msra.mxu0 0
      %530 = vmatprep.subr.bf16.mxu0 0
      %531 = vmatpush1.bf16.msra.mxu0 0
      %532 = vmatprep.subr.bf16.mxu0 0
      %533 = vmatpush1.bf16.msra.mxu0 0
      %534 = vmatprep.subr.bf16.mxu0 0
      %535 = vmatpush1.bf16.msra.mxu0 0
      %536 = vmatprep.mubr.bf16.mxu0 0
      %537 = vmatmul.mubr.bf16.gmra.mrb[0].mxu0 %v499
      %v538 = vpop.f32.mrb[0].mxu0
      %v539 = vadd.f32 0.0, %v538
      %v540 = vpop.f32.mrb[0].mxu0
      %v541 = vpop.f32.mrb[0].mxu0
      %v542 = vpop.f32.mrb[0].mxu0
      %543 = vdwg.mxu0
      %544 = vrot.lane.b32.xlu0 %v432, 112
      %v545 = vpop.permute.xlu0 %544
      %546 = vrot.lane.b32.xlu0 %v380, 112
      %v547 = vpop.permute.xlu0 %546
      %v549 = vsel %vm317, %v545, 0
      %v552 = vsel %vm317, %v547, 0
      %554 = vmatprep.subr.bf16.mxu0 0
      %555 = vmatpush1.bf16.xpose.msra.mxu0 %v552
      %556 = vmatprep.subr.bf16.mxu0 0
      %557 = vmatpush1.bf16.xpose.msra.mxu0 0
      %558 = vmatprep.subr.bf16.mxu0 0
      %559 = vmatpush1.bf16.xpose.msra.mxu0 0
      %560 = vmatprep.subr.bf16.mxu0 0
      %561 = vmatpush1.bf16.xpose.msra.mxu0 0
      %562 = vmatprep.subr.bf16.mxu0 0
      %563 = vmatpush1.bf16.xpose.msra.mxu0 0
      %564 = vmatprep.subr.bf16.mxu0 0
      %565 = vmatpush1.bf16.xpose.msra.mxu0 0
      %566 = vmatprep.subr.bf16.mxu0 0
      %567 = vmatpush1.bf16.xpose.msra.mxu0 0
      %568 = vmatprep.subr.bf16.mxu0 0
      %569 = vmatpush1.bf16.xpose.msra.mxu0 0
      %570 = vmatprep.subr.bf16.mxu0 0
      %571 = vmatpush1.bf16.xpose.msra.mxu0 0
      %572 = vmatprep.subr.bf16.mxu0 0
      %573 = vmatpush1.bf16.xpose.msra.mxu0 0
      %574 = vmatprep.subr.bf16.mxu0 0
      %575 = vmatpush1.bf16.xpose.msra.mxu0 0
      %576 = vmatprep.subr.bf16.mxu0 0
      %577 = vmatpush1.bf16.xpose.msra.mxu0 0
      %578 = vmatprep.subr.bf16.mxu0 0
      %579 = vmatpush1.bf16.xpose.msra.mxu0 0
      %580 = vmatprep.subr.bf16.mxu0 0
      %581 = vmatpush1.bf16.xpose.msra.mxu0 0
      %582 = vmatprep.subr.bf16.mxu0 0
      %583 = vmatpush1.bf16.xpose.msra.mxu0 0
      %584 = vmatprep.subr.bf16.mxu0 0
      %585 = vmatpush1.bf16.xpose.msra.mxu0 0
      %586 = vmatprep.mubr.bf16.mxu0 0
      %587 = vmatmul.mubr.bf16.gmra.mrb[0].mxu0 %v549
      %v588 = vpop.f32.mrb[0].mxu0
      %v589 = vadd.f32 0.0, %v588
      %v590 = vpop.f32.mrb[0].mxu0
      %v591 = vpop.f32.mrb[0].mxu0
      %v592 = vpop.f32.mrb[0].mxu0
      %593 = vdwg.mxu0
      %v594 = vsel %vm309, %v589, -1e+30
      %v595 = vsel %vm365, %v594, -inf
      %596 = vmax.xlane.f32.xlu0 %v595
      %v597 = vpop.xlane.xlu0 %596
      %v598 = vsub.f32 %v594, %v597
      %v599 = vmul.f32 %v598, 1.442695
      %v600 = vpow.pop %v599
      %v601 = vsel %vm365, %v600, 0.0
      %602 = vadd.xlane.f32.xlu0 %v601
      %v603 = vpop.xlane.xlu0 %602
      %v604 = vrcp.pop %v603
      %v605 = vmul.f32 %v600, %v604
      %v606 = vpack.c.bf16 %v605, %v605
      %607 = vrot.lane.b32.xlu0 %v380, 80
      %v608 = vpop.permute.xlu0 %607
      %v610 = vsel %vm317, %v606, 0
      %v613 = vsel %vm386, %v608, 0
      %615 = vmatprep.subr.bf16.mxu0 0
      %616 = vmatpush1.bf16.msra.mxu0 %v613
      %617 = vmatprep.subr.bf16.mxu0 0
      %618 = vmatpush1.bf16.msra.mxu0 0
      %619 = vmatprep.subr.bf16.mxu0 0
      %620 = vmatpush1.bf16.msra.mxu0 0
      %621 = vmatprep.subr.bf16.mxu0 0
      %622 = vmatpush1.bf16.msra.mxu0 0
      %623 = vmatprep.subr.bf16.mxu0 0
      %624 = vmatpush1.bf16.msra.mxu0 0
      %625 = vmatprep.subr.bf16.mxu0 0
      %626 = vmatpush1.bf16.msra.mxu0 0
      %627 = vmatprep.subr.bf16.mxu0 0
      %628 = vmatpush1.bf16.msra.mxu0 0
      %629 = vmatprep.subr.bf16.mxu0 0
      %630 = vmatpush1.bf16.msra.mxu0 0
      %631 = vmatprep.subr.bf16.mxu0 0
      %632 = vmatpush1.bf16.msra.mxu0 0
      %633 = vmatprep.subr.bf16.mxu0 0
      %634 = vmatpush1.bf16.msra.mxu0 0
      %635 = vmatprep.subr.bf16.mxu0 0
      %636 = vmatpush1.bf16.msra.mxu0 0
      %637 = vmatprep.subr.bf16.mxu0 0
      %638 = vmatpush1.bf16.msra.mxu0 0
      %639 = vmatprep.subr.bf16.mxu0 0
      %640 = vmatpush1.bf16.msra.mxu0 0
      %641 = vmatprep.subr.bf16.mxu0 0
      %642 = vmatpush1.bf16.msra.mxu0 0
      %643 = vmatprep.subr.bf16.mxu0 0
      %644 = vmatpush1.bf16.msra.mxu0 0
      %645 = vmatprep.subr.bf16.mxu0 0
      %646 = vmatpush1.bf16.msra.mxu0 0
      %647 = vmatprep.mubr.bf16.mxu0 0
      %648 = vmatmul.mubr.bf16.gmra.mrb[0].mxu0 %v610
      %v649 = vpop.f32.mrb[0].mxu0
      %v650 = vadd.f32 0.0, %v649
      %v651 = vpop.f32.mrb[0].mxu0
      %v652 = vpop.f32.mrb[0].mxu0
      %v653 = vpop.f32.mrb[0].mxu0
      %654 = vdwg.mxu0
      %655 = vrot.lane.b32.xlu0 %v432, 104
      %v656 = vpop.permute.xlu0 %655
      %657 = vrot.lane.b32.xlu0 %v380, 104
      %v658 = vpop.permute.xlu0 %657
      %v660 = vsel %vm317, %v656, 0
      %v663 = vsel %vm317, %v658, 0
      %665 = vmatprep.subr.bf16.mxu0 0
      %666 = vmatpush1.bf16.xpose.msra.mxu0 %v663
      %667 = vmatprep.subr.bf16.mxu0 0
      %668 = vmatpush1.bf16.xpose.msra.mxu0 0
      %669 = vmatprep.subr.bf16.mxu0 0
      %670 = vmatpush1.bf16.xpose.msra.mxu0 0
      %671 = vmatprep.subr.bf16.mxu0 0
      %672 = vmatpush1.bf16.xpose.msra.mxu0 0
      %673 = vmatprep.subr.bf16.mxu0 0
      %674 = vmatpush1.bf16.xpose.msra.mxu0 0
      %675 = vmatprep.subr.bf16.mxu0 0
      %676 = vmatpush1.bf16.xpose.msra.mxu0 0
      %677 = vmatprep.subr.bf16.mxu0 0
      %678 = vmatpush1.bf16.xpose.msra.mxu0 0
      %679 = vmatprep.subr.bf16.mxu0 0
      %680 = vmatpush1.bf16.xpose.msra.mxu0 0
      %681 = vmatprep.subr.bf16.mxu0 0
      %682 = vmatpush1.bf16.xpose.msra.mxu0 0
      %683 = vmatprep.subr.bf16.mxu0 0
      %684 = vmatpush1.bf16.xpose.msra.mxu0 0
      %685 = vmatprep.subr.bf16.mxu0 0
      %686 = vmatpush1.bf16.xpose.msra.mxu0 0
      %687 = vmatprep.subr.bf16.mxu0 0
      %688 = vmatpush1.bf16.xpose.msra.mxu0 0
      %689 = vmatprep.subr.bf16.mxu0 0
      %690 = vmatpush1.bf16.xpose.msra.mxu0 0
      %691 = vmatprep.subr.bf16.mxu0 0
      %692 = vmatpush1.bf16.xpose.msra.mxu0 0
      %693 = vmatprep.subr.bf16.mxu0 0
      %694 = vmatpush1.bf16.xpose.msra.mxu0 0
      %695 = vmatprep.subr.bf16.mxu0 0
      %696 = vmatpush1.bf16.xpose.msra.mxu0 0
      %697 = vmatprep.mubr.bf16.mxu0 0
      %698 = vmatmul.mubr.bf16.gmra.mrb[0].mxu0 %v660
      %v699 = vpop.f32.mrb[0].mxu0
      %v700 = vadd.f32 0.0, %v699
      %v701 = vpop.f32.mrb[0].mxu0
      %v702 = vpop.f32.mrb[0].mxu0
      %v703 = vpop.f32.mrb[0].mxu0
      %704 = vdwg.mxu0
      %v705 = vsel %vm309, %v700, -1e+30
      %v706 = vsel %vm365, %v705, -inf
      %707 = vmax.xlane.f32.xlu0 %v706
      %v708 = vpop.xlane.xlu0 %707
      %v709 = vsub.f32 %v705, %v708
      %v710 = vmul.f32 %v709, 1.442695
      %v711 = vpow.pop %v710
      %v712 = vsel %vm365, %v711, 0.0
      %713 = vadd.xlane.f32.xlu0 %v712
      %v714 = vpop.xlane.xlu0 %713
      %v715 = vrcp.pop %v714
      %v716 = vmul.f32 %v711, %v715
      %v717 = vpack.c.bf16 %v716, %v716
      %718 = vrot.lane.b32.xlu0 %v380, 72
      %v719 = vpop.permute.xlu0 %718
      %v721 = vsel %vm317, %v717, 0
      %v724 = vsel %vm386, %v719, 0
      %726 = vmatprep.subr.bf16.mxu0 0
      %727 = vmatpush1.bf16.msra.mxu0 %v724
      %728 = vmatprep.subr.bf16.mxu0 0
      %729 = vmatpush1.bf16.msra.mxu0 0
      %730 = vmatprep.subr.bf16.mxu0 0
      %731 = vmatpush1.bf16.msra.mxu0 0
      %732 = vmatprep.subr.bf16.mxu0 0
      %733 = vmatpush1.bf16.msra.mxu0 0
      %734 = vmatprep.subr.bf16.mxu0 0
      %735 = vmatpush1.bf16.msra.mxu0 0
      %736 = vmatprep.subr.bf16.mxu0 0
      %737 = vmatpush1.bf16.msra.mxu0 0
      %738 = vmatprep.subr.bf16.mxu0 0
      %739 = vmatpush1.bf16.msra.mxu0 0
      %740 = vmatprep.subr.bf16.mxu0 0
      %741 = vmatpush1.bf16.msra.mxu0 0
      %742 = vmatprep.subr.bf16.mxu0 0
      %743 = vmatpush1.bf16.msra.mxu0 0
      %744 = vmatprep.subr.bf16.mxu0 0
      %745 = vmatpush1.bf16.msra.mxu0 0
      %746 = vmatprep.subr.bf16.mxu0 0
      %747 = vmatpush1.bf16.msra.mxu0 0
      %748 = vmatprep.subr.bf16.mxu0 0
      %749 = vmatpush1.bf16.msra.mxu0 0
      %750 = vmatprep.subr.bf16.mxu0 0
      %751 = vmatpush1.bf16.msra.mxu0 0
      %752 = vmatprep.subr.bf16.mxu0 0
      %753 = vmatpush1.bf16.msra.mxu0 0
      %754 = vmatprep.subr.bf16.mxu0 0
      %755 = vmatpush1.bf16.msra.mxu0 0
      %756 = vmatprep.subr.bf16.mxu0 0
      %757 = vmatpush1.bf16.msra.mxu0 0
      %758 = vmatprep.mubr.bf16.mxu0 0
      %759 = vmatmul.mubr.bf16.gmra.mrb[0].mxu0 %v721
      %v760 = vpop.f32.mrb[0].mxu0
      %v761 = vadd.f32 0.0, %v760
      %v762 = vpop.f32.mrb[0].mxu0
      %v763 = vpop.f32.mrb[0].mxu0
      %v764 = vpop.f32.mrb[0].mxu0
      %765 = vdwg.mxu0
      %767 = vrot.lane.b32.xlu0 %v539, 8
      %v768 = vpop.permute.xlu0 %767
      %771 = vrot.lane.b32.xlu0 %v650, 16
      %v772 = vpop.permute.xlu0 %771
      %775 = vrot.lane.b32.xlu0 %v761, 24
      %v776 = vpop.permute.xlu0 %775
      %v778 = vsel %vm317, %v425, %v768
      %vm779 = vcmask 130048
      %v780 = vsel %vm779, %v778, %v772
      %vm781 = vcmask 195584
      %v782 = vsel %vm781, %v780, %v776
      %v783 = vpack.c.bf16 %v782, %v782
      %v784 = vunpack.c.l.bf16 %v311
      %v789 = vunpack.c.l.b16 %v312
      %v790 = vunpack.c.l.b16 %v313
      %v791 = vunpack.c.l.b16 %v314
      %v792 = vunpack.c.l.b16 %v315
      %v793 = vpack.c.b16 %v790, %v789
      %v794 = vpack.c.b16 %v792, %v791
      %vm797 = vcmask 261120
      %v799 = vsel %vm797, %v783, 0
      %801 = vmatprep.subr.bf16.mxu0 0
      %802 = vmatpush1.bf16.msra.mxu0 %v793
      %803 = vmatprep.subr.bf16.mxu0 0
      %804 = vmatpush1.bf16.msra.mxu0 %v794
      %805 = vmatprep.subr.bf16.mxu0 0
      %806 = vmatpush1.bf16.msra.mxu0 0
      %807 = vmatprep.subr.bf16.mxu0 0
      %808 = vmatpush1.bf16.msra.mxu0 0
      %809 = vmatprep.subr.bf16.mxu0 0
      %810 = vmatpush1.bf16.msra.mxu0 0
      %811 = vmatprep.subr.bf16.mxu0 0
      %812 = vmatpush1.bf16.msra.mxu0 0
      %813 = vmatprep.subr.bf16.mxu0 0
      %814 = vmatpush1.bf16.msra.mxu0 0
      %815 = vmatprep.subr.bf16.mxu0 0
      %816 = vmatpush1.bf16.msra.mxu0 0
      %817 = vmatprep.subr.bf16.mxu0 0
      %818 = vmatpush1.bf16.msra.mxu0 0
      %819 = vmatprep.subr.bf16.mxu0 0
      %820 = vmatpush1.bf16.msra.mxu0 0
      %821 = vmatprep.subr.bf16.mxu0 0
      %822 = vmatpush1.bf16.msra.mxu0 0
      %823 = vmatprep.subr.bf16.mxu0 0
      %824 = vmatpush1.bf16.msra.mxu0 0
      %825 = vmatprep.subr.bf16.mxu0 0
      %826 = vmatpush1.bf16.msra.mxu0 0
      %827 = vmatprep.subr.bf16.mxu0 0
      %828 = vmatpush1.bf16.msra.mxu0 0
      %829 = vmatprep.subr.bf16.mxu0 0
      %830 = vmatpush1.bf16.msra.mxu0 0
      %831 = vmatprep.subr.bf16.mxu0 0
      %832 = vmatpush1.bf16.msra.mxu0 0
      %833 = vmatprep.mubr.bf16.mxu0 0
      %834 = vmatmul.mubr.bf16.gmra.mrb[0].mxu0 %v799
      %v835 = vpop.f32.mrb[0].mxu0
      %v836 = vadd.f32 0.0, %v835
      %v837 = vpop.f32.mrb[0].mxu0
      %v838 = vpop.f32.mrb[0].mxu0
      %v839 = vpop.f32.mrb[0].mxu0
      %840 = vdwg.mxu0
      %v841 = vadd.f32 %v784, %v836
      %v843 = vlaneseq
      %v844 = vshrl.u32 %v843, 7
      %v845 = vsub.s32 0, %v844
      %v846 = vrot.slane %v316, %v845
      %v848 = vadd.f32 %v841, %v846
      %v849 = vpack.c.bf16 %v848, %v848
      %vm850 = vcmask 256000
      %851 = vst.msk [vmem:[%s302] sm:$0x7] %vm850, %v849
      %p852 = scmp.lt.s32.totalorder %s27, 1
      %s853 = scalar_select %p852, %s27, 1
      %p854 = scmp.lt.s32.totalorder %s28, 0
      %s855 = scalar_select %p854, %s28, 0
      %s856 = sadd.s32 %s855, %s853
      %s857 = smul.addr %s856, 4
      %s858 = scalar_lea.vmem %s6, %s857
      // Predicated region
      $region41: #{_lambda_.32} parent=39 // pred_check
        %p859 = pneg %p179
      $region42: #{_lambda_.32} parent=39 // pred_check_branch
        %861 = sbr.rel (%p859) target = $region44
      $region43: #{_lambda_.32} parent=39 // pred_region
        _
      $region44: #{_lambda_.32} parent=39 // pred_fallthru
        _
    $region40: #{_lambda_.32} parent=5 // pred_fallthru
      _
    %p862 = scmp.le.s32.totalorder 2, %s18
    // Predicated region
    $region45: #{_lambda_.32} parent=5 // pred_check
      %p863 = pneg %p862
    $region46: #{_lambda_.32} parent=5 // pred_check_branch
      %865 = sbr.rel (%p863) target = $region48
    $region47: #{_lambda_.32} parent=5 // pred_region
      %s866 = ssub.s32 %s18, 2
      // Predicated region
      $region49: #{_lambda_.32} parent=47 // pred_check
        %p867 = pneg %p185
      $region50: #{_lambda_.32} parent=47 // pred_check_branch
        %869 = sbr.rel (%p867) target = $region52
      $region51: #{_lambda_.32} parent=47 // pred_region
        %p870 = scmp.lt.s32.totalorder %s29, 1
        %s871 = scalar_select %p870, %s29, 1
        %p872 = scmp.lt.s32.totalorder %s30, 0
        %s873 = scalar_select %p872, %s30, 0
        %s874 = sadd.s32 %s873, %s871
        %s875 = smul.addr %s874, 4
        %s876 = scalar_lea.vmem %s6, %s875
      $region52: #{_lambda_.32} parent=47 // pred_fallthru
        _
    $region48: #{_lambda_.32} parent=5 // pred_fallthru
      _
  $region6: #{_lambda_.32} parent=0 // loop_footer
    %s22 = sadd.s32 1, %s18
  $region7: #{_lambda_.32} parent=0 // loop_footer_branch
    %17 = sbr.rel target = $region3
  $region8: #{_lambda_.32} parent=0 // loop_exit
    _

// kernel: _lambda_.41
$region0: #{_lambda_.41}
  #allocation0 [shape = 'u32[]', space=smem, size = 0x4, offset = 0x4, fixed_abs, tag = 'smem constant byte address 0x4 - core index']
  #allocation1 [shape = 'u32[144,128]{1,0:T(1,128)}', space=vmem, size = 0x12000, scoped, tag = 'internal scratch']
  #allocation2 [shape = 'f32[12,1]{1,0:T(8,128)}', space=vmem, size = 0x2000, scoped, tag = 'scratch operand']
  #allocation3 [shape = 'f32[12,1]{1,0:T(8,128)}', space=vmem, size = 0x2000, scoped, tag = 'scratch operand']
  #allocation4 [shape = 'f32[12,1]{1,0:T(8,128)}', space=vmem, size = 0x2000, scoped, tag = 'scratch operand']
  #allocation5 [shape = 'f32[12,1]{1,0:T(8,128)}', space=vmem, size = 0x2000, scoped, tag = 'scratch operand']
  #allocation6 [shape = 'f32[12,1]{1,0:T(8,128)}', space=vmem, size = 0x2000, scoped, tag = 'scratch operand']
  #allocation7 [shape = 's32[12,1]{1,0:T(8,128)}', space=vmem, size = 0x2000, scoped, tag = 'scratch operand']
  %s0 = inlined_call_operand.vmem [shape: bf16[12,32], index: 0, kind: input, shape index: {}]
  %s1 = inlined_call_operand.vmem [shape: bf16[32,17], index: 1, kind: input, shape index: {}]
  %s2 = inlined_call_operand.vmem [shape: f32[1,17], index: 2, kind: input, shape index: {}]
  %s3 = inlined_call_operand.vmem [shape: s32[12,1], index: 3, kind: input, shape index: {}]
  %s4 = inlined_call_operand.vmem [shape: f32[12,1], index: 4, kind: output, shape index: {0}]
  %s5 = inlined_call_operand.vmem [shape: s32[12,1], index: 5, kind: output, shape index: {1}]
  %6 = xla_tuple %s4, %s5
  %s7 = sld [smem:[#allocation0]]
  $region42: #{_lambda_.41} parent=0
    _
  %s9 = ssub.s32 1, %s7
  %s10 = scalar_select 0, %s9, %s7
  // Predicated region
  $region2: #{_lambda_.41} parent=0 // pred_check
    _
  $region3: #{_lambda_.41} parent=0 // pred_check_branch
    %12 = sbr.rel (0) target = $region5
  $region4: #{_lambda_.41} parent=0 // pred_region
    _
  $region5: #{_lambda_.41} parent=0 // pred_fallthru
    _
  // Predicated region
  $region6: #{_lambda_.41} parent=0 // pred_check
    _
  $region7: #{_lambda_.41} parent=0 // pred_check_branch
    %14 = sbr.rel (0) target = $region9
  $region8: #{_lambda_.41} parent=0 // pred_region
    _
  $region9: #{_lambda_.41} parent=0 // pred_fallthru
    _
  // Predicated region
  $region10: #{_lambda_.41} parent=0 // pred_check
    _
  $region11: #{_lambda_.41} parent=0 // pred_check_branch
    %16 = sbr.rel (0) target = $region13
  $region12: #{_lambda_.41} parent=0 // pred_region
    _
  $region13: #{_lambda_.41} parent=0 // pred_fallthru
    _
  // Predicated region
  $region14: #{_lambda_.41} parent=0 // pred_check
    _
  $region15: #{_lambda_.41} parent=0 // pred_check_branch
    %18 = sbr.rel (0) target = $region17
  $region16: #{_lambda_.41} parent=0 // pred_region
    _
  $region17: #{_lambda_.41} parent=0 // pred_fallthru
    _
  %p20 = scmp.eq.s32.totalorder 0, 0
  // Predicated region
  $region18: #{_lambda_.41} parent=0 // pred_check
    %p21 = pneg %p20
  $region19: #{_lambda_.41} parent=0 // pred_check_branch
    %23 = sbr.rel (%p21) target = $region21
  $region20: #{_lambda_.41} parent=0 // pred_region
    %vm24 = vcmask 7168
    %25 = vst.msk [vmem:[#allocation2] sm:$0xff] %vm24, -inf
    %vm26 = vcmask 3072
    %27 = vst.msk [vmem:[#allocation2 + $0x8] sm:$0xf] %vm26, -inf
    %28 = vst.msk [vmem:[#allocation3] sm:$0xff] %vm24, 0.0
    %29 = vst.msk [vmem:[#allocation3 + $0x8] sm:$0xf] %vm26, 0.0
    %30 = vst.msk [vmem:[#allocation4] sm:$0xff] %vm24, 0.0
    %31 = vst.msk [vmem:[#allocation4 + $0x8] sm:$0xf] %vm26, 0.0
    %32 = vst.msk [vmem:[#allocation5] sm:$0xff] %vm24, 0.0
    %33 = vst.msk [vmem:[#allocation5 + $0x8] sm:$0xf] %vm26, 0.0
    %34 = vst.msk [vmem:[#allocation6] sm:$0xff] %vm24, -inf
    %35 = vst.msk [vmem:[#allocation6 + $0x8] sm:$0xf] %vm26, -inf
    %36 = vst.msk [vmem:[#allocation7] sm:$0xff] %vm24, 0
    %37 = vst.msk [vmem:[#allocation7 + $0x8] sm:$0xf] %vm26, 0
  $region21: #{_lambda_.41} parent=0 // pred_fallthru
    _
  %v38 = vld [vmem:[%s0] sm:$0xf]
  %v39 = vld [vmem:[%s0 + $0x4] sm:$0x3]
  %v40 = vld [vmem:[%s1] sm:$0xf]
  %v41 = vld [vmem:[%s1 + $0x4] sm:$0xf]
  %v42 = vld [vmem:[%s1 + $0x8] sm:$0xf]
  %v43 = vld [vmem:[%s1 + $0xc] sm:$0xf]
  %v44 = vld [vmem:[%s2] sm:$0x1]
  %v46 = vlaneseq
  %v47 = vshrl.u32 %v46, 7
  %v48 = vsub.s32 0, %v47
  %v49 = vrot.slane %v44, %v48
  %v53 = vunpack.c.l.b16 %v38
  %v54 = vunpack.c.l.b16 %v39
  %v55 = vpack.c.b16 %v54, %v53
  %v60 = vunpack.c.l.b16 %v40
  %v61 = vunpack.c.l.b16 %v41
  %v62 = vunpack.c.l.b16 %v42
  %v63 = vunpack.c.l.b16 %v43
  %v64 = vpack.c.b16 %v61, %v60
  %v65 = vpack.c.b16 %v63, %v62
  %vm68 = vcmask 261120
  %v70 = vsel %vm68, %v55, 0
  %72 = vmatprep.subr.bf16.mxu0 0
  %73 = vmatpush1.bf16.msra.mxu0 %v64
  %74 = vmatprep.subr.bf16.mxu0 0
  %75 = vmatpush1.bf16.msra.mxu0 %v65
  %76 = vmatprep.subr.bf16.mxu0 0
  %77 = vmatpush1.bf16.msra.mxu0 0
  %78 = vmatprep.subr.bf16.mxu0 0
  %79 = vmatpush1.bf16.msra.mxu0 0
  %80 = vmatprep.subr.bf16.mxu0 0
  %81 = vmatpush1.bf16.msra.mxu0 0
  %82 = vmatprep.subr.bf16.mxu0 0
  %83 = vmatpush1.bf16.msra.mxu0 0
  %84 = vmatprep.subr.bf16.mxu0 0
  %85 = vmatpush1.bf16.msra.mxu0 0
  %86 = vmatprep.subr.bf16.mxu0 0
  %87 = vmatpush1.bf16.msra.mxu0 0
  %88 = vmatprep.subr.bf16.mxu0 0
  %89 = vmatpush1.bf16.msra.mxu0 0
  %90 = vmatprep.subr.bf16.mxu0 0
  %91 = vmatpush1.bf16.msra.mxu0 0
  %92 = vmatprep.subr.bf16.mxu0 0
  %93 = vmatpush1.bf16.msra.mxu0 0
  %94 = vmatprep.subr.bf16.mxu0 0
  %95 = vmatpush1.bf16.msra.mxu0 0
  %96 = vmatprep.subr.bf16.mxu0 0
  %97 = vmatpush1.bf16.msra.mxu0 0
  %98 = vmatprep.subr.bf16.mxu0 0
  %99 = vmatpush1.bf16.msra.mxu0 0
  %100 = vmatprep.subr.bf16.mxu0 0
  %101 = vmatpush1.bf16.msra.mxu0 0
  %102 = vmatprep.subr.bf16.mxu0 0
  %103 = vmatpush1.bf16.msra.mxu0 0
  %104 = vmatprep.mubr.bf16.mxu0 0
  %105 = vmatmul.mubr.bf16.gmra.mrb[0].mxu0 %v70
  %v106 = vpop.f32.mrb[0].mxu0
  %v107 = vadd.f32 %v49, %v106
  %v108 = vpop.f32.mrb[0].mxu0
  %v109 = vpop.f32.mrb[0].mxu0
  %v110 = vadd.f32 %v49, %v109
  %v111 = vpop.f32.mrb[0].mxu0
  %112 = vdwg.mxu0
  %s113 = smul.u32 0, 17
  %v114 = vlaneseq
  %v115 = vand.u32 %v114, 127
  %v116 = vstv %s113
  %v117 = vadd.s32 %v116, %v115
  %vm118 = vcmp.lt.s32.totalorder %v117, 17
  %v119 = vsel %vm118, %v107, -inf
  %v120 = vsel %vm118, %v110, -inf
  %vm121 = vcmask 138240
  %v122 = vsel %vm121, %v119, -inf
  %123 = vmax.xlane.f32.xlu0 %v122
  %v124 = vpop.xlane.xlu0 %123
  %vm125 = vcmask 134144
  %v126 = vsel %vm125, %v120, -inf
  %127 = vmax.xlane.f32.xlu0 %v126
  %v128 = vpop.xlane.xlu0 %127
  %v129 = vld [vmem:[#allocation2] sm:$0xff]
  %v130 = vld [vmem:[#allocation2 + $0x8] sm:$0xf]
  %v131 = vmax.f32 %v129, %v124
  %v132 = vmax.f32 %v130, %v128
  %v133 = vsub.f32 %v129, %v131
  %v134 = vsub.f32 %v130, %v132
  %v135 = vmul.f32 %v133, 1.442695
  %v136 = vpow.pop %v135
  %v137 = vmul.f32 %v134, 1.442695
  %v138 = vpow.pop %v137
  %v139 = vld [vmem:[#allocation3] sm:$0xff]
  %v140 = vld [vmem:[#allocation3 + $0x8] sm:$0xf]
  %v141 = vmul.f32 %v136, %v139
  %v142 = vmul.f32 %v138, %v140
  %144 = vset.pattern.permute.xlu0 0
  %145 = vperm.xlu0 %144, %v131
  %v146 = vpop.permute.xlu0 %145
  %149 = vset.pattern.permute.xlu0 0
  %150 = vperm.xlu0 %149, %v132
  %v151 = vpop.permute.xlu0 %150
  %v153 = vsub.f32 %v119, %v146
  %v154 = vsub.f32 %v120, %v151
  %v155 = vmul.f32 %v153, 1.442695
  %v156 = vpow.pop %v155
  %v157 = vmul.f32 %v154, 1.442695
  %v158 = vpow.pop %v157
  %v159 = vsel %vm121, %v156, 0.0
  %160 = vadd.xlane.f32.xlu0 %v159
  %v161 = vpop.xlane.xlu0 %160
  %v162 = vsel %vm125, %v158, 0.0
  %163 = vadd.xlane.f32.xlu0 %v162
  %v164 = vpop.xlane.xlu0 %163
  %v165 = vadd.f32 %v141, %v161
  %v166 = vadd.f32 %v142, %v164
  %vm167 = vcmask 7168
  %168 = vst.msk [vmem:[#allocation3] sm:$0xff] %vm167, %v165
  %vm169 = vcmask 3072
  %170 = vst.msk [vmem:[#allocation3 + $0x8] sm:$0xf] %vm169, %v166
  %171 = vst.msk [vmem:[#allocation2] sm:$0xff] %vm167, %v131
  %172 = vst.msk [vmem:[#allocation2 + $0x8] sm:$0xf] %vm169, %v132
  %v173 = vld [vmem:[#allocation4] sm:$0xff]
  %v174 = vld [vmem:[#allocation4 + $0x8] sm:$0xf]
  %v175 = vsel %vm118, %v107, 0.0
  %v176 = vsel %vm118, %v110, 0.0
  %v177 = vsel %vm121, %v175, 0.0
  %178 = vadd.xlane.f32.xlu0 %v177
  %v179 = vpop.xlane.xlu0 %178
  %v180 = vsel %vm125, %v176, 0.0
  %181 = vadd.xlane.f32.xlu0 %v180
  %v182 = vpop.xlane.xlu0 %181
  %v183 = vadd.f32 %v173, %v179
  %v184 = vadd.f32 %v174, %v182
  %185 = vst.msk [vmem:[#allocation4] sm:$0xff] %vm167, %v183
  %186 = vst.msk [vmem:[#allocation4 + $0x8] sm:$0xf] %vm169, %v184
  %v187 = vld [vmem:[%s3] sm:$0xff]
  %v188 = vld [vmem:[%s3 + $0x8] sm:$0xf]
  %v189 = vld [vmem:[#allocation5] sm:$0xff]
  %v190 = vld [vmem:[#allocation5 + $0x8] sm:$0xf]
  %191 = vset.pattern.permute.xlu0 0
  %192 = vperm.xlu0 %191, %v187
  %v193 = vpop.permute.xlu0 %192
  %194 = vset.pattern.permute.xlu0 0
  %195 = vperm.xlu0 %194, %v188
  %v196 = vpop.permute.xlu0 %195
  %vm197 = vcmp.eq.s32.totalorder %v117, %v193
  %vm198 = vcmp.eq.s32.totalorder %v117, %v196
  %v199 = vsel %vm197, %v119, 0.0
  %v200 = vsel %vm198, %v120, 0.0
  %v201 = vsel %vm121, %v199, 0.0
  %202 = vadd.xlane.f32.xlu0 %v201
  %v203 = vpop.xlane.xlu0 %202
  %v204 = vsel %vm125, %v200, 0.0
  %205 = vadd.xlane.f32.xlu0 %v204
  %v206 = vpop.xlane.xlu0 %205
  %v207 = vadd.f32 %v189, %v203
  %v208 = vadd.f32 %v190, %v206
  %209 = vst.msk [vmem:[#allocation5] sm:$0xff] %vm167, %v207
  %210 = vst.msk [vmem:[#allocation5 + $0x8] sm:$0xf] %vm169, %v208
  %vm211 = vcmp.eq.f32.partialorder %v119, %v124
  %vm212 = vcmp.eq.f32.partialorder %v120, %v128
  %v213 = vsel %vm211, %v117, 17
  %v214 = vsel %vm212, %v117, 17
  %v215 = vsel %vm121, %v213, 2147483647
  %v216 = vand.u32 %v215, 65535
  %v217 = vshra.s32 %v215, 16
  %v218 = vcvt.s32.f32 %v216
  %v219 = vcvt.s32.f32 %v217
  %220 = vmin.xlane.f32.xlu0 %v219
  %v221 = vpop.xlane.xlu0 %220
  %vm222 = vcmp.eq.f32.partialorder %v219, %v221
  %v223 = vsel %vm222, %v218, inf
  %224 = vmin.xlane.f32.xlu0 %v223
  %v225 = vpop.xlane.xlu0 %224
  %v226 = vcvt.f32.s32 %v225
  %v227 = vcvt.f32.s32 %v221
  %v228 = vshll.u32 %v227, 16
  %v229 = vadd.s32 %v228, %v226
  %v230 = vsel %vm125, %v214, 2147483647
  %v231 = vand.u32 %v230, 65535
  %v232 = vshra.s32 %v230, 16
  %v233 = vcvt.s32.f32 %v231
  %v234 = vcvt.s32.f32 %v232
  %235 = vmin.xlane.f32.xlu0 %v234
  %v236 = vpop.xlane.xlu0 %235
  %vm237 = vcmp.eq.f32.partialorder %v234, %v236
  %v238 = vsel %vm237, %v233, inf
  %239 = vmin.xlane.f32.xlu0 %v238
  %v240 = vpop.xlane.xlu0 %239
  %v241 = vcvt.f32.s32 %v240
  %v242 = vcvt.f32.s32 %v236
  %v243 = vshll.u32 %v242, 16
  %v244 = vadd.s32 %v243, %v241
  %v245 = vld [vmem:[#allocation6] sm:$0xff]
  %v246 = vld [vmem:[#allocation6 + $0x8] sm:$0xf]
  %vm247 = vcmp.gt.f32.partialorder %v124, %v245
  %vm248 = vcmp.gt.f32.partialorder %v128, %v246
  %v249 = vld [vmem:[#allocation7] sm:$0xff]
  %v250 = vld [vmem:[#allocation7 + $0x8] sm:$0xf]
  %v251 = vsel %vm247, %v229, %v249
  %v252 = vsel %vm248, %v244, %v250
  %253 = vst.msk [vmem:[#allocation7] sm:$0xff] %vm167, %v251
  %254 = vst.msk [vmem:[#allocation7 + $0x8] sm:$0xf] %vm169, %v252
  %v255 = vld [vmem:[#allocation6] sm:$0xff]
  %v256 = vld [vmem:[#allocation6 + $0x8] sm:$0xf]
  %v257 = vsel %vm247, %v124, %v255
  %v258 = vsel %vm248, %v128, %v256
  %259 = vst.msk [vmem:[#allocation6] sm:$0xff] %vm167, %v257
  %260 = vst.msk [vmem:[#allocation6 + $0x8] sm:$0xf] %vm169, %v258
  // Predicated region
  $region22: #{_lambda_.41} parent=0 // pred_check
    %p261 = pneg %p20
  $region23: #{_lambda_.41} parent=0 // pred_check_branch
    %263 = sbr.rel (%p261) target = $region25
  $region24: #{_lambda_.41} parent=0 // pred_region
    %v264 = vld [vmem:[#allocation2] sm:$0xff]
    %v265 = vld [vmem:[#allocation2 + $0x8] sm:$0xf]
    %v266 = vld [vmem:[#allocation3] sm:$0xff]
    %v267 = vld [vmem:[#allocation3 + $0x8] sm:$0xf]
    %v268 = vlog2.pop %v266
    %v269 = vmul.f32 %v268, 0.6931472
    %v270 = vlog2.pop %v267
    %v271 = vmul.f32 %v270, 0.6931472
    %v272 = vadd.f32 %v264, %v269
    %v273 = vadd.f32 %v265, %v271
    %v274 = vld [vmem:[#allocation5] sm:$0xff]
    %v275 = vld [vmem:[#allocation5 + $0x8] sm:$0xf]
    %v276 = vsub.f32 %v274, %v272
    %v277 = vsub.f32 %v275, %v273
    %v278 = vld [vmem:[#allocation4] sm:$0xff]
    %v279 = vld [vmem:[#allocation4 + $0x8] sm:$0xf]
    %v280 = vmul.f32 %v272, 17.0
    %v281 = vmul.f32 %v273, 17.0
    %v282 = vsub.f32 %v278, %v280
    %v283 = vsub.f32 %v279, %v281
    %v284 = vmul.f32 %v276, 0.9
    %v285 = vmul.f32 %v277, 0.9
    %v286 = vsub.f32 -0.60234183, %v284
    %v287 = vsub.f32 -0.60234183, %v285
    %v288 = vsub.f32 %v282, %v276
    %v289 = vsub.f32 %v283, %v277
    %v290 = vmul.f32 %v288, 0.00625
    %v291 = vmul.f32 %v289, 0.00625
    %v292 = vsub.f32 %v286, %v290
    %v293 = vsub.f32 %v287, %v291
    %vm294 = vcmp.eq.s32.totalorder %v187, 4294967295
    %vm295 = vcmp.eq.s32.totalorder %v188, 4294967295
    %v296 = vsel %vm294, 0.0, %v292
    %v297 = vsel %vm295, 0.0, %v293
    %298 = vst.msk [vmem:[%s4] sm:$0xff] %vm167, %v296
    %299 = vst.msk [vmem:[%s4 + $0x8] sm:$0xf] %vm169, %v297
    %v300 = vld [vmem:[#allocation7] sm:$0xff]
    %v301 = vld [vmem:[#allocation7 + $0x8] sm:$0xf]
    %302 = vst.msk [vmem:[%s5] sm:$0xff] %vm167, %v300
    %303 = vst.msk [vmem:[%s5 + $0x8] sm:$0xf] %vm169, %v301
  $region25: #{_lambda_.41} parent=0 // pred_fallthru
    _
  // Predicated region
  $region26: #{_lambda_.41} parent=0 // pred_check
    _
  $region27: #{_lambda_.41} parent=0 // pred_check_branch
    %305 = sbr.rel (0) target = $region29
  $region28: #{_lambda_.41} parent=0 // pred_region
    _
  $region29: #{_lambda_.41} parent=0 // pred_fallthru
    _
  // Predicated region
  $region30: #{_lambda_.41} parent=0 // pred_check
    _
  $region31: #{_lambda_.41} parent=0 // pred_check_branch
    %307 = sbr.rel (0) target = $region33
  $region32: #{_lambda_.41} parent=0 // pred_region
    _
  $region33: #{_lambda_.41} parent=0 // pred_fallthru
    _
  // Predicated region
  $region34: #{_lambda_.41} parent=0 // pred_check
    _
  $region35: #{_lambda_.41} parent=0 // pred_check_branch
    %309 = sbr.rel (0) target = $region37
  $region36: #{_lambda_.41} parent=0 // pred_region
    _
  $region37: #{_lambda_.41} parent=0 // pred_fallthru
    _
  // Predicated region
  $region38: #{_lambda_.41} parent=0 // pred_check
    _
  $region39: #{_lambda_.41} parent=0 // pred_check_branch
    %311 = sbr.rel (0) target = $region41
  $region40: #{_lambda_.41} parent=0 // pred_region
    _
  $region41: #{_lambda_.41} parent=0 // pred_fallthru
    _

</llo_original>
